<compile_context>
chip_gen: v7x
topology: tpu7x:2x2x1
jax: 0.10.0
libtpu: 0.0.40
codegen_flags: <defaults>
</compile_context>

<pallas_src>
import functools

import jax
import jax.numpy as jnp
from jax.experimental import pallas as pl
from jax.experimental.pallas import tpu as pltpu

EPS = 1e-5
NEG_SLOPE = 0.2
VMEM_LIMIT = 32 * 1024 * 1024  # safe on v5e/v6e/v7x; kernels use << this


def _round_up(x, m):
    return ((x + m - 1) // m) * m


# --------------------------- tiled GEMM kernel ------------------------------

def _gemm_kernel(a_ref, b_ref, bias_ref, o_ref, acc_ref, *, act):
    k = pl.program_id(2)

    @pl.when(k == 0)
    def _():
        acc_ref[...] = jnp.zeros_like(acc_ref)

    acc_ref[...] += jnp.dot(a_ref[...], b_ref[...],
                            preferred_element_type=jnp.float32)

    @pl.when(k == pl.num_programs(2) - 1)
    def _():
        y = acc_ref[...] + bias_ref[...]
        if act == "leaky_relu":
            y = jnp.where(y >= 0.0, y, NEG_SLOPE * y)
        o_ref[...] = y.astype(o_ref.dtype)


def gemm_bias_act(a, b, bias, act=None, tm=256, tn=256, tk=512):
    """(M,K) @ (K,N) + bias(N,) with optional fused activation.

    bf16 operands / f32 accumulation, tiled + pipelined on the MXU.
    Dims are padded to tile multiples (lane-dense output), result is sliced.
    """
    M, K = a.shape
    K2, N = b.shape
    assert K == K2

    tm = min(tm, _round_up(M, 8))
    tn = min(tn, _round_up(N, 128))
    tk = min(tk, _round_up(K, 128))
    Mp, Np, Kp = _round_up(M, tm), _round_up(N, tn), _round_up(K, tk)

    a_p = a.astype(jnp.bfloat16)
    if (Mp, Kp) != (M, K):
        a_p = jnp.pad(a_p, ((0, Mp - M), (0, Kp - K)))
    b_p = b.astype(jnp.bfloat16)
    if (Kp, Np) != (K, N):
        b_p = jnp.pad(b_p, ((0, Kp - K), (0, Np - N)))
    bias_p = bias.astype(jnp.float32).reshape(1, N)
    if Np != N:
        bias_p = jnp.pad(bias_p, ((0, 0), (0, Np - N)))

    grid = (Mp // tm, Np // tn, Kp // tk)
    cost = pl.CostEstimate(
        flops=2 * Mp * Np * Kp,
        transcendentals=0,
        bytes_accessed=Mp * Kp * 2 + Kp * Np * 2 + Mp * Np * 4 + Np * 4,
    )

    out = pl.pallas_call(
        functools.partial(_gemm_kernel, act=act),
        grid=grid,
        out_shape=jax.ShapeDtypeStruct((Mp, Np), jnp.float32),
        in_specs=[
            pl.BlockSpec((tm, tk), lambda i, j, k: (i, k)),
            pl.BlockSpec((tk, tn), lambda i, j, k: (k, j)),
            pl.BlockSpec((1, tn), lambda i, j, k: (0, j)),
        ],
        out_specs=pl.BlockSpec((tm, tn), lambda i, j, k: (i, j)),
        scratch_shapes=[pltpu.VMEM((tm, tn), jnp.float32)],
        compiler_params=pltpu.CompilerParams(
            dimension_semantics=("parallel", "parallel", "arbitrary"),
            vmem_limit_bytes=VMEM_LIMIT),
        cost_estimate=cost,
    )(a_p, b_p, bias_p)

    if (Mp, Np) != (M, N):
        out = out[:M, :N]
    return out


# ---------------- spatially-tiled InstanceNorm + LeakyReLU ------------------

def _in_stats_kernel(x_ref, sum_ref, sumsq_ref):
    j = pl.program_id(1)

    @pl.when(j == 0)
    def _():
        sum_ref[...] = jnp.zeros_like(sum_ref)
        sumsq_ref[...] = jnp.zeros_like(sumsq_ref)

    x = x_ref[...]                                      # (1, ts, C) f32
    sum_ref[...] += jnp.sum(x, axis=1, keepdims=True)
    sumsq_ref[...] += jnp.sum(x * x, axis=1, keepdims=True)


def _in_norm_kernel(x_ref, sum_ref, sumsq_ref, o_ref, *, inv_hw):
    x = x_ref[...]                                      # (1, ts, C)
    mean = sum_ref[...] * inv_hw                        # (1, 1, C)
    var = sumsq_ref[...] * inv_hw - mean * mean         # biased variance
    y = (x - mean) * jax.lax.rsqrt(var + EPS)
    o_ref[...] = jnp.where(y >= 0.0, y, NEG_SLOPE * y)  # fused LeakyReLU


def _spatial_tile(hw, cap=2048):
    """Largest spatial tile (multiple of 8, divisor of hw) <= cap, else full."""
    if hw <= cap or hw % 8 != 0:
        return hw
    best = 8
    d = 8
    while d <= cap:
        if hw % d == 0:
            best = d
        d += 8
    return best


def instance_norm_leaky(x_nhwc):
    n, h, w, c = x_nhwc.shape
    hw = h * w
    x = x_nhwc.reshape(n, hw, c)
    ts = _spatial_tile(hw)
    s_grid = hw // ts

    sums, sumsqs = pl.pallas_call(
        _in_stats_kernel,
        grid=(n, s_grid),
        out_shape=(jax.ShapeDtypeStruct((n, 1, c), jnp.float32),
                   jax.ShapeDtypeStruct((n, 1, c), jnp.float32)),
        in_specs=[pl.BlockSpec((1, ts, c), lambda i, j: (i, j, 0))],
        out_specs=(pl.BlockSpec((1, 1, c), lambda i, j: (i, 0, 0)),
                   pl.BlockSpec((1, 1, c), lambda i, j: (i, 0, 0))),
        compiler_params=pltpu.CompilerParams(
            dimension_semantics=("parallel", "arbitrary"),
            vmem_limit_bytes=VMEM_LIMIT),
    )(x)

    y = pl.pallas_call(
        functools.partial(_in_norm_kernel, inv_hw=1.0 / hw),
        grid=(n, s_grid),
        out_shape=jax.ShapeDtypeStruct((n, hw, c), jnp.float32),
        in_specs=[
            pl.BlockSpec((1, ts, c), lambda i, j: (i, j, 0)),
            pl.BlockSpec((1, 1, c), lambda i, j: (i, 0, 0)),
            pl.BlockSpec((1, 1, c), lambda i, j: (i, 0, 0)),
        ],
        out_specs=pl.BlockSpec((1, ts, c), lambda i, j: (i, j, 0)),
        compiler_params=pltpu.CompilerParams(
            dimension_semantics=("parallel", "parallel"),
            vmem_limit_bytes=VMEM_LIMIT),
    )(x, sums, sumsqs)
    return y.reshape(n, h, w, c)


# ------------------------------ conv glue -----------------------------------

def extract_patches(x, k, stride):
    """padded NHWC -> (N, Ho, Wo, k*k*C), taps flattened in (kh, kw, C) order."""
    n, h, w, c = x.shape
    ho = (h - k) // stride + 1
    wo = (w - k) // stride + 1
    cols = []
    for i in range(k):
        for j in range(k):
            cols.append(
                x[:, i:i + stride * (ho - 1) + 1:stride,
                     j:j + stride * (wo - 1) + 1:stride, :]
            )
    return jnp.concatenate(cols, axis=-1), ho, wo


def conv2d(x, w, b, stride, padding, act=None):
    """x: NHWC f32.  w: PyTorch layout (Cout, Cin, kh, kw).  Zero padding."""
    if padding:
        x = jnp.pad(x, ((0, 0), (padding, padding), (padding, padding), (0, 0)))
    cout, cin, kh, kw = w.shape
    patches, ho, wo = extract_patches(x, kh, stride)
    n = x.shape[0]
    a = patches.reshape(n * ho * wo, kh * kw * cin)
    wm = jnp.transpose(w, (2, 3, 1, 0)).reshape(kh * kw * cin, cout)
    y = gemm_bias_act(a, wm, b, act=act)
    return y.reshape(n, ho, wo, cout)


# --------------------------- parameters / model -----------------------------

def _init_conv(key, cout, cin, k):
    wkey, bkey = jax.random.split(key)
    fan_in = cin * k * k
    bound = 1.0 / jnp.sqrt(jnp.float32(fan_in))
    w = jax.random.uniform(wkey, (cout, cin, k, k), jnp.float32, -bound, bound)
    b = jax.random.uniform(bkey, (cout,), jnp.float32, -bound, bound)
    return w, b


def init_discriminator_params(key, channels):
    keys = jax.random.split(key, 5)
    p = {}
    p["l1_w"], p["l1_b"] = _init_conv(keys[0], 64, channels, 4)
    p["l2_w"], p["l2_b"] = _init_conv(keys[1], 128, 64, 4)
    p["l3_w"], p["l3_b"] = _init_conv(keys[2], 256, 128, 4)
    p["l4_w"], p["l4_b"] = _init_conv(keys[3], 512, 256, 4)
    p["l5_w"], p["l5_b"] = _init_conv(keys[4], 1, 512, 4)
    return p


@jax.jit
def discriminator_forward(x_nchw, params):
    x = jnp.transpose(x_nchw, (0, 2, 3, 1)).astype(jnp.float32)   # -> NHWC

    # block 1: conv s2 + LeakyReLU (no norm) -- activation fused in GEMM
    x = conv2d(x, params["l1_w"], params["l1_b"], stride=2, padding=1,
               act="leaky_relu")

    # block 2: conv s2 + IN + LeakyReLU
    x = conv2d(x, params["l2_w"], params["l2_b"], stride=2, padding=1)
    x = instance_norm_leaky(x)

    # block 3: conv s2 + IN + LeakyReLU
    x = conv2d(x, params["l3_w"], params["l3_b"], stride=2, padding=1)
    x = instance_norm_leaky(x)

    # block 4: conv s1 + IN + LeakyReLU
    x = conv2d(x, params["l4_w"], params["l4_b"], stride=1, padding=1)
    x = instance_norm_leaky(x)

    # head: conv s1 -> 1 channel (GEMM N padded to 128 for lane-dense stores)
    x = conv2d(x, params["l5_w"], params["l5_b"], stride=1, padding=1)

    return jnp.transpose(x, (0, 3, 1, 2))    # back to NCHW


# ---------------------------------- main -------------------------------------

if __name__ == "__main__":
    key = jax.random.PRNGKey(0)
    pkey, xkey = jax.random.split(key)

    channels = 3
    params = init_discriminator_params(pkey, channels)

    # spatial=32 is the smallest nice size that survives the 5-layer stack
    # (32 -> 16 -> 8 -> 4 -> 3 -> 2); NCHW like the PyTorch module.
    x = jax.random.normal(xkey, (2, channels, 32, 32), jnp.float32)

    out = discriminator_forward(x, params)
    out = jax.block_until_ready(out)

    assert out.shape == (2, 1, 2, 2), out.shape
    assert bool(jnp.all(jnp.isfinite(out)))
    print("KERNEL_OK")
</pallas_src>

<mosaic_0001>
module attributes {stable_mosaic.version = 11 : i64} {
  func.func @_gemm_kernel(%arg0: i32, %arg1: i32, %arg2: i32, %arg3: memref<256x128xbf16, #tpu.memory_space<vmem>>, %arg4: memref<128x128xbf16, #tpu.memory_space<vmem>>, %arg5: memref<1x128xf32, #tpu.memory_space<vmem>>, %arg6: memref<256x128xf32, #tpu.memory_space<vmem>>, %arg7: memref<256x128xf32, #tpu.memory_space<vmem>>) attributes {dimension_semantics = [#tpu.dimension_semantics<parallel>, #tpu.dimension_semantics<parallel>, #tpu.dimension_semantics<arbitrary>], iteration_bounds = array<i64: 2, 1, 1>, scalar_prefetch = 0 : i64, scratch_operands = 1 : i64, tpu.core_type = #tpu.core_type<tc>, window_params = [{transform_indices = @transform_0, window_bounds = array<i64: 256, 128>}, {transform_indices = @transform_1, window_bounds = array<i64: 128, 128>}, {transform_indices = @transform_2, window_bounds = array<i64: 1, 128>}, {transform_indices = @transform_3, window_bounds = array<i64: 256, 128>}]} {
    %c0_i32 = arith.constant 0 : i32
    %0 = arith.cmpi eq, %arg2, %c0_i32 : i32
    %1 = arith.extui %0 : i1 to i32
    %c0_i32_0 = arith.constant 0 : i32
    %2 = arith.cmpi ne, %1, %c0_i32_0 : i32
    scf.if %2 {
      %cst_10 = arith.constant 0.000000e+00 : f32
      %12 = vector.broadcast %cst_10 : f32 to vector<256x128xf32>
      %c0_11 = arith.constant 0 : index
      %c0_12 = arith.constant 0 : index
      %13 = vector.load %arg7[%c0_11, %c0_12] : memref<256x128xf32, #tpu.memory_space<vmem>>, vector<256x128xf32>
      tpu.vector_store %arg7[%c0_11, %c0_12], %12 {strides = array<i32>} : memref<256x128xf32, #tpu.memory_space<vmem>>, vector<256x128xf32>,
    } else {
    }
    %c0 = arith.constant 0 : index
    %c0_1 = arith.constant 0 : index
    %3 = vector.load %arg7[%c0, %c0_1] : memref<256x128xf32, #tpu.memory_space<vmem>>, vector<256x128xf32>
    %c0_2 = arith.constant 0 : index
    %c0_3 = arith.constant 0 : index
    %4 = vector.load %arg3[%c0_2, %c0_3] : memref<256x128xbf16, #tpu.memory_space<vmem>>, vector<256x128xbf16>
    %c0_4 = arith.constant 0 : index
    %c0_5 = arith.constant 0 : index
    %5 = vector.load %arg4[%c0_4, %c0_5] : memref<128x128xbf16, #tpu.memory_space<vmem>>, vector<128x128xbf16>
    %cst = arith.constant dense<0.000000e+00> : vector<256x128xf32>
    %6 = tpu.matmul %4, %5, %cst {dimension_numbers = #tpu.dot_dimension_numbers<[1], [0], [0], [1], [0, 0, 1, 1], [], []>} : vector<256x128xbf16>, vector<128x128xbf16>, vector<256x128xf32> -> vector<256x128xf32>
    %7 = arith.addf %3, %6 : vector<256x128xf32>
    %c0_6 = arith.constant 0 : index
    %c0_7 = arith.constant 0 : index
    %8 = vector.load %arg7[%c0_6, %c0_7] : memref<256x128xf32, #tpu.memory_space<vmem>>, vector<256x128xf32>
    tpu.vector_store %arg7[%c0_6, %c0_7], %7 {strides = array<i32>} : memref<256x128xf32, #tpu.memory_space<vmem>>, vector<256x128xf32>,
    %c0_i32_8 = arith.constant 0 : i32
    %9 = arith.cmpi eq, %arg2, %c0_i32_8 : i32
    %10 = arith.extui %9 : i1 to i32
    %c0_i32_9 = arith.constant 0 : i32
    %11 = arith.cmpi ne, %10, %c0_i32_9 : i32
    scf.if %11 {
      %c0_10 = arith.constant 0 : index
      %c0_11 = arith.constant 0 : index
      %12 = vector.load %arg7[%c0_10, %c0_11] : memref<256x128xf32, #tpu.memory_space<vmem>>, vector<256x128xf32>
      %c0_12 = arith.constant 0 : index
      %c0_13 = arith.constant 0 : index
      %13 = vector.load %arg5[%c0_12, %c0_13] : memref<1x128xf32, #tpu.memory_space<vmem>>, vector<1x128xf32>
      %14 = vector.broadcast %13 : vector<1x128xf32> to vector<256x128xf32>
      %15 = arith.addf %12, %14 : vector<256x128xf32>
      %cst_14 = arith.constant 0.000000e+00 : f32
      %16 = vector.broadcast %cst_14 : f32 to vector<256x128xf32>
      %17 = arith.cmpf oge, %15, %16 : vector<256x128xf32>
      %cst_15 = arith.constant 2.000000e-01 : f32
      %18 = vector.broadcast %cst_15 : f32 to vector<256x128xf32>
      %19 = arith.mulf %18, %15 : vector<256x128xf32>
      %20 = arith.select %17, %15, %19 : vector<256x128xi1>, vector<256x128xf32>
      %c0_16 = arith.constant 0 : index
      %c0_17 = arith.constant 0 : index
      %21 = vector.load %arg6[%c0_16, %c0_17] : memref<256x128xf32, #tpu.memory_space<vmem>>, vector<256x128xf32>
      tpu.vector_store %arg6[%c0_16, %c0_17], %20 {strides = array<i32>} : memref<256x128xf32, #tpu.memory_space<vmem>>, vector<256x128xf32>,
    } else {
    }
    return
  }
  func.func @transform_0(%arg0: i32, %arg1: i32, %arg2: i32) -> (i32, i32) {
    %c0_i32 = arith.constant 0 : i32
    return %arg0, %arg2 : i32, i32
  }
  func.func @transform_1(%arg0: i32, %arg1: i32, %arg2: i32) -> (i32, i32) {
    %c0_i32 = arith.constant 0 : i32
    return %arg2, %arg1 : i32, i32
  }
  func.func @transform_2(%arg0: i32, %arg1: i32, %arg2: i32) -> (i32, i32) {
    %c0_i32 = arith.constant 0 : i32
    %c0_i32_0 = arith.constant 0 : i32
    return %c0_i32, %arg1 : i32, i32
  }
  func.func @transform_3(%arg0: i32, %arg1: i32, %arg2: i32) -> (i32, i32) {
    %c0_i32 = arith.constant 0 : i32
    return %arg0, %arg1 : i32, i32
  }
}

module attributes {stable_mosaic.version = 11 : i64} {
  func.func @_gemm_kernel(%arg0: i32, %arg1: i32, %arg2: i32, %arg3: memref<128x512xbf16, #tpu.memory_space<vmem>>, %arg4: memref<512x128xbf16, #tpu.memory_space<vmem>>, %arg5: memref<1x128xf32, #tpu.memory_space<vmem>>, %arg6: memref<128x128xf32, #tpu.memory_space<vmem>>, %arg7: memref<128x128xf32, #tpu.memory_space<vmem>>) attributes {dimension_semantics = [#tpu.dimension_semantics<parallel>, #tpu.dimension_semantics<parallel>, #tpu.dimension_semantics<arbitrary>], iteration_bounds = array<i64: 1, 1, 2>, scalar_prefetch = 0 : i64, scratch_operands = 1 : i64, tpu.core_type = #tpu.core_type<tc>, window_params = [{transform_indices = @transform_0, window_bounds = array<i64: 128, 512>}, {transform_indices = @transform_1, window_bounds = array<i64: 512, 128>}, {transform_indices = @transform_2, window_bounds = array<i64: 1, 128>}, {transform_indices = @transform_3, window_bounds = array<i64: 128, 128>}]} {
    %c0_i32 = arith.constant 0 : i32
    %0 = arith.cmpi eq, %arg2, %c0_i32 : i32
    %1 = arith.extui %0 : i1 to i32
    %c0_i32_0 = arith.constant 0 : i32
    %2 = arith.cmpi ne, %1, %c0_i32_0 : i32
    scf.if %2 {
      %cst_9 = arith.constant 0.000000e+00 : f32
      %12 = vector.broadcast %cst_9 : f32 to vector<128x128xf32>
      %c0_10 = arith.constant 0 : index
      %c0_11 = arith.constant 0 : index
      %13 = vector.load %arg7[%c0_10, %c0_11] : memref<128x128xf32, #tpu.memory_space<vmem>>, vector<128x128xf32>
      tpu.vector_store %arg7[%c0_10, %c0_11], %12 {strides = array<i32>} : memref<128x128xf32, #tpu.memory_space<vmem>>, vector<128x128xf32>,
    } else {
    }
    %c0 = arith.constant 0 : index
    %c0_1 = arith.constant 0 : index
    %3 = vector.load %arg7[%c0, %c0_1] : memref<128x128xf32, #tpu.memory_space<vmem>>, vector<128x128xf32>
    %c0_2 = arith.constant 0 : index
    %c0_3 = arith.constant 0 : index
    %4 = vector.load %arg3[%c0_2, %c0_3] : memref<128x512xbf16, #tpu.memory_space<vmem>>, vector<128x512xbf16>
    %c0_4 = arith.constant 0 : index
    %c0_5 = arith.constant 0 : index
    %5 = vector.load %arg4[%c0_4, %c0_5] : memref<512x128xbf16, #tpu.memory_space<vmem>>, vector<512x128xbf16>
    %cst = arith.constant dense<0.000000e+00> : vector<128x128xf32>
    %6 = tpu.matmul %4, %5, %cst {dimension_numbers = #tpu.dot_dimension_numbers<[1], [0], [0], [1], [0, 0, 1, 1], [], []>} : vector<128x512xbf16>, vector<512x128xbf16>, vector<128x128xf32> -> vector<128x128xf32>
    %7 = arith.addf %3, %6 : vector<128x128xf32>
    %c0_6 = arith.constant 0 : index
    %c0_7 = arith.constant 0 : index
    %8 = vector.load %arg7[%c0_6, %c0_7] : memref<128x128xf32, #tpu.memory_space<vmem>>, vector<128x128xf32>
    tpu.vector_store %arg7[%c0_6, %c0_7], %7 {strides = array<i32>} : memref<128x128xf32, #tpu.memory_space<vmem>>, vector<128x128xf32>,
    %c1_i32 = arith.constant 1 : i32
    %9 = arith.cmpi eq, %arg2, %c1_i32 : i32
    %10 = arith.extui %9 : i1 to i32
    %c0_i32_8 = arith.constant 0 : i32
    %11 = arith.cmpi ne, %10, %c0_i32_8 : i32
    scf.if %11 {
      %c0_9 = arith.constant 0 : index
      %c0_10 = arith.constant 0 : index
      %12 = vector.load %arg7[%c0_9, %c0_10] : memref<128x128xf32, #tpu.memory_space<vmem>>, vector<128x128xf32>
      %c0_11 = arith.constant 0 : index
      %c0_12 = arith.constant 0 : index
      %13 = vector.load %arg5[%c0_11, %c0_12] : memref<1x128xf32, #tpu.memory_space<vmem>>, vector<1x128xf32>
      %14 = vector.broadcast %13 : vector<1x128xf32> to vector<128x128xf32>
      %15 = arith.addf %12, %14 : vector<128x128xf32>
      %c0_13 = arith.constant 0 : index
      %c0_14 = arith.constant 0 : index
      %16 = vector.load %arg6[%c0_13, %c0_14] : memref<128x128xf32, #tpu.memory_space<vmem>>, vector<128x128xf32>
      tpu.vector_store %arg6[%c0_13, %c0_14], %15 {strides = array<i32>} : memref<128x128xf32, #tpu.memory_space<vmem>>, vector<128x128xf32>,
    } else {
    }
    return
  }
  func.func @transform_0(%arg0: i32, %arg1: i32, %arg2: i32) -> (i32, i32) {
    %c0_i32 = arith.constant 0 : i32
    return %arg0, %arg2 : i32, i32
  }
  func.func @transform_1(%arg0: i32, %arg1: i32, %arg2: i32) -> (i32, i32) {
    %c0_i32 = arith.constant 0 : i32
    return %arg2, %arg1 : i32, i32
  }
  func.func @transform_2(%arg0: i32, %arg1: i32, %arg2: i32) -> (i32, i32) {
    %c0_i32 = arith.constant 0 : i32
    %c0_i32_0 = arith.constant 0 : i32
    return %c0_i32, %arg1 : i32, i32
  }
  func.func @transform_3(%arg0: i32, %arg1: i32, %arg2: i32) -> (i32, i32) {
    %c0_i32 = arith.constant 0 : i32
    return %arg0, %arg1 : i32, i32
  }
}

module attributes {stable_mosaic.version = 11 : i64} {
  func.func @_in_stats_kernel(%arg0: i32, %arg1: i32, %arg2: memref<1x64x128xf32, #tpu.memory_space<vmem>>, %arg3: memref<1x1x128xf32, #tpu.memory_space<vmem>>, %arg4: memref<1x1x128xf32, #tpu.memory_space<vmem>>) attributes {dimension_semantics = [#tpu.dimension_semantics<parallel>, #tpu.dimension_semantics<arbitrary>], iteration_bounds = array<i64: 2, 1>, scalar_prefetch = 0 : i64, scratch_operands = 0 : i64, tpu.core_type = #tpu.core_type<tc>, window_params = [{transform_indices = @transform_0, window_bounds = array<i64: 1, 64, 128>}, {transform_indices = @transform_1, window_bounds = array<i64: 1, 1, 128>}, {transform_indices = @transform_2, window_bounds = array<i64: 1, 1, 128>}]} {
    %c0_i32 = arith.constant 0 : i32
    %0 = arith.cmpi eq, %arg1, %c0_i32 : i32
    %1 = arith.extui %0 : i1 to i32
    %c0_i32_0 = arith.constant 0 : i32
    %2 = arith.cmpi ne, %1, %c0_i32_0 : i32
    scf.if %2 {
      %cst_16 = arith.constant 0.000000e+00 : f32
      %15 = vector.broadcast %cst_16 : f32 to vector<1x1x128xf32>
      %c0_17 = arith.constant 0 : index
      %c0_18 = arith.constant 0 : index
      %c0_19 = arith.constant 0 : index
      %16 = vector.load %arg3[%c0_17, %c0_18, %c0_19] : memref<1x1x128xf32, #tpu.memory_space<vmem>>, vector<1x1x128xf32>
      tpu.vector_store %arg3[%c0_17, %c0_18, %c0_19], %15 {strides = array<i32>} : memref<1x1x128xf32, #tpu.memory_space<vmem>>, vector<1x1x128xf32>,
      %cst_20 = arith.constant 0.000000e+00 : f32
      %17 = vector.broadcast %cst_20 : f32 to vector<1x1x128xf32>
      %c0_21 = arith.constant 0 : index
      %c0_22 = arith.constant 0 : index
      %c0_23 = arith.constant 0 : index
      %18 = vector.load %arg4[%c0_21, %c0_22, %c0_23] : memref<1x1x128xf32, #tpu.memory_space<vmem>>, vector<1x1x128xf32>
      tpu.vector_store %arg4[%c0_21, %c0_22, %c0_23], %17 {strides = array<i32>} : memref<1x1x128xf32, #tpu.memory_space<vmem>>, vector<1x1x128xf32>,
    } else {
    }
    %c0 = arith.constant 0 : index
    %c0_1 = arith.constant 0 : index
    %c0_2 = arith.constant 0 : index
    %3 = vector.load %arg2[%c0, %c0_1, %c0_2] : memref<1x64x128xf32, #tpu.memory_space<vmem>>, vector<1x64x128xf32>
    %c0_3 = arith.constant 0 : index
    %c0_4 = arith.constant 0 : index
    %c0_5 = arith.constant 0 : index
    %4 = vector.load %arg3[%c0_3, %c0_4, %c0_5] : memref<1x1x128xf32, #tpu.memory_space<vmem>>, vector<1x1x128xf32>
    %cst = arith.constant dense<0.000000e+00> : vector<1x128xf32>
    %5 = vector.multi_reduction <add>, %3, %cst [1] : vector<1x64x128xf32> to vector<1x128xf32>
    %6 = vector.shape_cast %5 : vector<1x128xf32> to vector<1x1x128xf32>
    %7 = arith.addf %4, %6 : vector<1x1x128xf32>
    %c0_6 = arith.constant 0 : index
    %c0_7 = arith.constant 0 : index
    %c0_8 = arith.constant 0 : index
    %8 = vector.load %arg3[%c0_6, %c0_7, %c0_8] : memref<1x1x128xf32, #tpu.memory_space<vmem>>, vector<1x1x128xf32>
    tpu.vector_store %arg3[%c0_6, %c0_7, %c0_8], %7 {strides = array<i32>} : memref<1x1x128xf32, #tpu.memory_space<vmem>>, vector<1x1x128xf32>,
    %c0_9 = arith.constant 0 : index
    %c0_10 = arith.constant 0 : index
    %c0_11 = arith.constant 0 : index
    %9 = vector.load %arg4[%c0_9, %c0_10, %c0_11] : memref<1x1x128xf32, #tpu.memory_space<vmem>>, vector<1x1x128xf32>
    %10 = arith.mulf %3, %3 : vector<1x64x128xf32>
    %cst_12 = arith.constant dense<0.000000e+00> : vector<1x128xf32>
    %11 = vector.multi_reduction <add>, %10, %cst_12 [1] : vector<1x64x128xf32> to vector<1x128xf32>
    %12 = vector.shape_cast %11 : vector<1x128xf32> to vector<1x1x128xf32>
    %13 = arith.addf %9, %12 : vector<1x1x128xf32>
    %c0_13 = arith.constant 0 : index
    %c0_14 = arith.constant 0 : index
    %c0_15 = arith.constant 0 : index
    %14 = vector.load %arg4[%c0_13, %c0_14, %c0_15] : memref<1x1x128xf32, #tpu.memory_space<vmem>>, vector<1x1x128xf32>
    tpu.vector_store %arg4[%c0_13, %c0_14, %c0_15], %13 {strides = array<i32>} : memref<1x1x128xf32, #tpu.memory_space<vmem>>, vector<1x1x128xf32>,
    return
  }
  func.func @transform_0(%arg0: i32, %arg1: i32) -> (i32, i32, i32) {
    %c0_i32 = arith.constant 0 : i32
    %c0_i32_0 = arith.constant 0 : i32
    return %arg0, %arg1, %c0_i32 : i32, i32, i32
  }
  func.func @transform_1(%arg0: i32, %arg1: i32) -> (i32, i32, i32) {
    %c0_i32 = arith.constant 0 : i32
    %c0_i32_0 = arith.constant 0 : i32
    %c0_i32_1 = arith.constant 0 : i32
    return %arg0, %c0_i32, %c0_i32_0 : i32, i32, i32
  }
  func.func @transform_2(%arg0: i32, %arg1: i32) -> (i32, i32, i32) {
    %c0_i32 = arith.constant 0 : i32
    %c0_i32_0 = arith.constant 0 : i32
    %c0_i32_1 = arith.constant 0 : i32
    return %arg0, %c0_i32, %c0_i32_0 : i32, i32, i32
  }
}

module attributes {stable_mosaic.version = 11 : i64} {
  func.func @_in_norm_kernel(%arg0: i32, %arg1: i32, %arg2: memref<1x64x128xf32, #tpu.memory_space<vmem>>, %arg3: memref<1x1x128xf32, #tpu.memory_space<vmem>>, %arg4: memref<1x1x128xf32, #tpu.memory_space<vmem>>, %arg5: memref<1x64x128xf32, #tpu.memory_space<vmem>>) attributes {dimension_semantics = [#tpu.dimension_semantics<parallel>, #tpu.dimension_semantics<parallel>], iteration_bounds = array<i64: 2, 1>, scalar_prefetch = 0 : i64, scratch_operands = 0 : i64, tpu.core_type = #tpu.core_type<tc>, window_params = [{transform_indices = @transform_0, window_bounds = array<i64: 1, 64, 128>}, {transform_indices = @transform_1, window_bounds = array<i64: 1, 1, 128>}, {transform_indices = @transform_2, window_bounds = array<i64: 1, 1, 128>}, {transform_indices = @transform_3, window_bounds = array<i64: 1, 64, 128>}]} {
    %c0 = arith.constant 0 : index
    %c0_0 = arith.constant 0 : index
    %c0_1 = arith.constant 0 : index
    %0 = vector.load %arg2[%c0, %c0_0, %c0_1] : memref<1x64x128xf32, #tpu.memory_space<vmem>>, vector<1x64x128xf32>
    %c0_2 = arith.constant 0 : index
    %c0_3 = arith.constant 0 : index
    %c0_4 = arith.constant 0 : index
    %1 = vector.load %arg3[%c0_2, %c0_3, %c0_4] : memref<1x1x128xf32, #tpu.memory_space<vmem>>, vector<1x1x128xf32>
    %cst = arith.constant 1.562500e-02 : f32
    %2 = vector.broadcast %cst : f32 to vector<1x1x128xf32>
    %3 = arith.mulf %1, %2 : vector<1x1x128xf32>
    %c0_5 = arith.constant 0 : index
    %c0_6 = arith.constant 0 : index
    %c0_7 = arith.constant 0 : index
    %4 = vector.load %arg4[%c0_5, %c0_6, %c0_7] : memref<1x1x128xf32, #tpu.memory_space<vmem>>, vector<1x1x128xf32>
    %cst_8 = arith.constant 1.562500e-02 : f32
    %5 = vector.broadcast %cst_8 : f32 to vector<1x1x128xf32>
    %6 = arith.mulf %4, %5 : vector<1x1x128xf32>
    %7 = arith.mulf %3, %3 : vector<1x1x128xf32>
    %8 = arith.subf %6, %7 : vector<1x1x128xf32>
    %9 = vector.broadcast %3 : vector<1x1x128xf32> to vector<1x64x128xf32>
    %10 = arith.subf %0, %9 : vector<1x64x128xf32>
    %cst_9 = arith.constant 9.99999974E-6 : f32
    %11 = vector.broadcast %cst_9 : f32 to vector<1x1x128xf32>
    %12 = arith.addf %8, %11 : vector<1x1x128xf32>
    %13 = math.rsqrt %12 : vector<1x1x128xf32>
    %14 = vector.broadcast %13 : vector<1x1x128xf32> to vector<1x64x128xf32>
    %15 = arith.mulf %10, %14 : vector<1x64x128xf32>
    %cst_10 = arith.constant 0.000000e+00 : f32
    %16 = vector.broadcast %cst_10 : f32 to vector<1x64x128xf32>
    %17 = arith.cmpf oge, %15, %16 : vector<1x64x128xf32>
    %cst_11 = arith.constant 2.000000e-01 : f32
    %18 = vector.broadcast %cst_11 : f32 to vector<1x64x128xf32>
    %19 = arith.mulf %18, %15 : vector<1x64x128xf32>
    %20 = arith.select %17, %15, %19 : vector<1x64x128xi1>, vector<1x64x128xf32>
    %c0_12 = arith.constant 0 : index
    %c0_13 = arith.constant 0 : index
    %c0_14 = arith.constant 0 : index
    %21 = vector.load %arg5[%c0_12, %c0_13, %c0_14] : memref<1x64x128xf32, #tpu.memory_space<vmem>>, vector<1x64x128xf32>
    tpu.vector_store %arg5[%c0_12, %c0_13, %c0_14], %20 {strides = array<i32>} : memref<1x64x128xf32, #tpu.memory_space<vmem>>, vector<1x64x128xf32>,
    return
  }
  func.func @transform_0(%arg0: i32, %arg1: i32) -> (i32, i32, i32) {
    %c0_i32 = arith.constant 0 : i32
    %c0_i32_0 = arith.constant 0 : i32
    return %arg0, %arg1, %c0_i32 : i32, i32, i32
  }
  func.func @transform_1(%arg0: i32, %arg1: i32) -> (i32, i32, i32) {
    %c0_i32 = arith.constant 0 : i32
    %c0_i32_0 = arith.constant 0 : i32
    %c0_i32_1 = arith.constant 0 : i32
    return %arg0, %c0_i32, %c0_i32_0 : i32, i32, i32
  }
  func.func @transform_2(%arg0: i32, %arg1: i32) -> (i32, i32, i32) {
    %c0_i32 = arith.constant 0 : i32
    %c0_i32_0 = arith.constant 0 : i32
    %c0_i32_1 = arith.constant 0 : i32
    return %arg0, %c0_i32, %c0_i32_0 : i32, i32, i32
  }
  func.func @transform_3(%arg0: i32, %arg1: i32) -> (i32, i32, i32) {
    %c0_i32 = arith.constant 0 : i32
    %c0_i32_0 = arith.constant 0 : i32
    return %arg0, %arg1, %c0_i32 : i32, i32, i32
  }
}

module attributes {stable_mosaic.version = 11 : i64} {
  func.func @_gemm_kernel(%arg0: i32, %arg1: i32, %arg2: i32, %arg3: memref<32x512xbf16, #tpu.memory_space<vmem>>, %arg4: memref<512x256xbf16, #tpu.memory_space<vmem>>, %arg5: memref<1x256xf32, #tpu.memory_space<vmem>>, %arg6: memref<32x256xf32, #tpu.memory_space<vmem>>, %arg7: memref<32x256xf32, #tpu.memory_space<vmem>>) attributes {dimension_semantics = [#tpu.dimension_semantics<parallel>, #tpu.dimension_semantics<parallel>, #tpu.dimension_semantics<arbitrary>], iteration_bounds = array<i64: 1, 1, 4>, scalar_prefetch = 0 : i64, scratch_operands = 1 : i64, tpu.core_type = #tpu.core_type<tc>, window_params = [{transform_indices = @transform_0, window_bounds = array<i64: 32, 512>}, {transform_indices = @transform_1, window_bounds = array<i64: 512, 256>}, {transform_indices = @transform_2, window_bounds = array<i64: 1, 256>}, {transform_indices = @transform_3, window_bounds = array<i64: 32, 256>}]} {
    %c0_i32 = arith.constant 0 : i32
    %0 = arith.cmpi eq, %arg2, %c0_i32 : i32
    %1 = arith.extui %0 : i1 to i32
    %c0_i32_0 = arith.constant 0 : i32
    %2 = arith.cmpi ne, %1, %c0_i32_0 : i32
    scf.if %2 {
      %cst_9 = arith.constant 0.000000e+00 : f32
      %12 = vector.broadcast %cst_9 : f32 to vector<32x256xf32>
      %c0_10 = arith.constant 0 : index
      %c0_11 = arith.constant 0 : index
      %13 = vector.load %arg7[%c0_10, %c0_11] : memref<32x256xf32, #tpu.memory_space<vmem>>, vector<32x256xf32>
      tpu.vector_store %arg7[%c0_10, %c0_11], %12 {strides = array<i32>} : memref<32x256xf32, #tpu.memory_space<vmem>>, vector<32x256xf32>,
    } else {
    }
    %c0 = arith.constant 0 : index
    %c0_1 = arith.constant 0 : index
    %3 = vector.load %arg7[%c0, %c0_1] : memref<32x256xf32, #tpu.memory_space<vmem>>, vector<32x256xf32>
    %c0_2 = arith.constant 0 : index
    %c0_3 = arith.constant 0 : index
    %4 = vector.load %arg3[%c0_2, %c0_3] : memref<32x512xbf16, #tpu.memory_space<vmem>>, vector<32x512xbf16>
    %c0_4 = arith.constant 0 : index
    %c0_5 = arith.constant 0 : index
    %5 = vector.load %arg4[%c0_4, %c0_5] : memref<512x256xbf16, #tpu.memory_space<vmem>>, vector<512x256xbf16>
    %cst = arith.constant dense<0.000000e+00> : vector<32x256xf32>
    %6 = tpu.matmul %4, %5, %cst {dimension_numbers = #tpu.dot_dimension_numbers<[1], [0], [0], [1], [0, 0, 1, 1], [], []>} : vector<32x512xbf16>, vector<512x256xbf16>, vector<32x256xf32> -> vector<32x256xf32>
    %7 = arith.addf %3, %6 : vector<32x256xf32>
    %c0_6 = arith.constant 0 : index
    %c0_7 = arith.constant 0 : index
    %8 = vector.load %arg7[%c0_6, %c0_7] : memref<32x256xf32, #tpu.memory_space<vmem>>, vector<32x256xf32>
    tpu.vector_store %arg7[%c0_6, %c0_7], %7 {strides = array<i32>} : memref<32x256xf32, #tpu.memory_space<vmem>>, vector<32x256xf32>,
    %c3_i32 = arith.constant 3 : i32
    %9 = arith.cmpi eq, %arg2, %c3_i32 : i32
    %10 = arith.extui %9 : i1 to i32
    %c0_i32_8 = arith.constant 0 : i32
    %11 = arith.cmpi ne, %10, %c0_i32_8 : i32
    scf.if %11 {
      %c0_9 = arith.constant 0 : index
      %c0_10 = arith.constant 0 : index
      %12 = vector.load %arg7[%c0_9, %c0_10] : memref<32x256xf32, #tpu.memory_space<vmem>>, vector<32x256xf32>
      %c0_11 = arith.constant 0 : index
      %c0_12 = arith.constant 0 : index
      %13 = vector.load %arg5[%c0_11, %c0_12] : memref<1x256xf32, #tpu.memory_space<vmem>>, vector<1x256xf32>
      %14 = vector.broadcast %13 : vector<1x256xf32> to vector<32x256xf32>
      %15 = arith.addf %12, %14 : vector<32x256xf32>
      %c0_13 = arith.constant 0 : index
      %c0_14 = arith.constant 0 : index
      %16 = vector.load %arg6[%c0_13, %c0_14] : memref<32x256xf32, #tpu.memory_space<vmem>>, vector<32x256xf32>
      tpu.vector_store %arg6[%c0_13, %c0_14], %15 {strides = array<i32>} : memref<32x256xf32, #tpu.memory_space<vmem>>, vector<32x256xf32>,
    } else {
    }
    return
  }
  func.func @transform_0(%arg0: i32, %arg1: i32, %arg2: i32) -> (i32, i32) {
    %c0_i32 = arith.constant 0 : i32
    return %arg0, %arg2 : i32, i32
  }
  func.func @transform_1(%arg0: i32, %arg1: i32, %arg2: i32) -> (i32, i32) {
    %c0_i32 = arith.constant 0 : i32
    return %arg2, %arg1 : i32, i32
  }
  func.func @transform_2(%arg0: i32, %arg1: i32, %arg2: i32) -> (i32, i32) {
    %c0_i32 = arith.constant 0 : i32
    %c0_i32_0 = arith.constant 0 : i32
    return %c0_i32, %arg1 : i32, i32
  }
  func.func @transform_3(%arg0: i32, %arg1: i32, %arg2: i32) -> (i32, i32) {
    %c0_i32 = arith.constant 0 : i32
    return %arg0, %arg1 : i32, i32
  }
}

module attributes {stable_mosaic.version = 11 : i64} {
  func.func @_in_stats_kernel(%arg0: i32, %arg1: i32, %arg2: memref<1x16x256xf32, #tpu.memory_space<vmem>>, %arg3: memref<1x1x256xf32, #tpu.memory_space<vmem>>, %arg4: memref<1x1x256xf32, #tpu.memory_space<vmem>>) attributes {dimension_semantics = [#tpu.dimension_semantics<parallel>, #tpu.dimension_semantics<arbitrary>], iteration_bounds = array<i64: 2, 1>, scalar_prefetch = 0 : i64, scratch_operands = 0 : i64, tpu.core_type = #tpu.core_type<tc>, window_params = [{transform_indices = @transform_0, window_bounds = array<i64: 1, 16, 256>}, {transform_indices = @transform_1, window_bounds = array<i64: 1, 1, 256>}, {transform_indices = @transform_2, window_bounds = array<i64: 1, 1, 256>}]} {
    %c0_i32 = arith.constant 0 : i32
    %0 = arith.cmpi eq, %arg1, %c0_i32 : i32
    %1 = arith.extui %0 : i1 to i32
    %c0_i32_0 = arith.constant 0 : i32
    %2 = arith.cmpi ne, %1, %c0_i32_0 : i32
    scf.if %2 {
      %cst_16 = arith.constant 0.000000e+00 : f32
      %15 = vector.broadcast %cst_16 : f32 to vector<1x1x256xf32>
      %c0_17 = arith.constant 0 : index
      %c0_18 = arith.constant 0 : index
      %c0_19 = arith.constant 0 : index
      %16 = vector.load %arg3[%c0_17, %c0_18, %c0_19] : memref<1x1x256xf32, #tpu.memory_space<vmem>>, vector<1x1x256xf32>
      tpu.vector_store %arg3[%c0_17, %c0_18, %c0_19], %15 {strides = array<i32>} : memref<1x1x256xf32, #tpu.memory_space<vmem>>, vector<1x1x256xf32>,
      %cst_20 = arith.constant 0.000000e+00 : f32
      %17 = vector.broadcast %cst_20 : f32 to vector<1x1x256xf32>
      %c0_21 = arith.constant 0 : index
      %c0_22 = arith.constant 0 : index
      %c0_23 = arith.constant 0 : index
      %18 = vector.load %arg4[%c0_21, %c0_22, %c0_23] : memref<1x1x256xf32, #tpu.memory_space<vmem>>, vector<1x1x256xf32>
      tpu.vector_store %arg4[%c0_21, %c0_22, %c0_23], %17 {strides = array<i32>} : memref<1x1x256xf32, #tpu.memory_space<vmem>>, vector<1x1x256xf32>,
    } else {
    }
    %c0 = arith.constant 0 : index
    %c0_1 = arith.constant 0 : index
    %c0_2 = arith.constant 0 : index
    %3 = vector.load %arg2[%c0, %c0_1, %c0_2] : memref<1x16x256xf32, #tpu.memory_space<vmem>>, vector<1x16x256xf32>
    %c0_3 = arith.constant 0 : index
    %c0_4 = arith.constant 0 : index
    %c0_5 = arith.constant 0 : index
    %4 = vector.load %arg3[%c0_3, %c0_4, %c0_5] : memref<1x1x256xf32, #tpu.memory_space<vmem>>, vector<1x1x256xf32>
    %cst = arith.constant dense<0.000000e+00> : vector<1x256xf32>
    %5 = vector.multi_reduction <add>, %3, %cst [1] : vector<1x16x256xf32> to vector<1x256xf32>
    %6 = vector.shape_cast %5 : vector<1x256xf32> to vector<1x1x256xf32>
    %7 = arith.addf %4, %6 : vector<1x1x256xf32>
    %c0_6 = arith.constant 0 : index
    %c0_7 = arith.constant 0 : index
    %c0_8 = arith.constant 0 : index
    %8 = vector.load %arg3[%c0_6, %c0_7, %c0_8] : memref<1x1x256xf32, #tpu.memory_space<vmem>>, vector<1x1x256xf32>
    tpu.vector_store %arg3[%c0_6, %c0_7, %c0_8], %7 {strides = array<i32>} : memref<1x1x256xf32, #tpu.memory_space<vmem>>, vector<1x1x256xf32>,
    %c0_9 = arith.constant 0 : index
    %c0_10 = arith.constant 0 : index
    %c0_11 = arith.constant 0 : index
    %9 = vector.load %arg4[%c0_9, %c0_10, %c0_11] : memref<1x1x256xf32, #tpu.memory_space<vmem>>, vector<1x1x256xf32>
    %10 = arith.mulf %3, %3 : vector<1x16x256xf32>
    %cst_12 = arith.constant dense<0.000000e+00> : vector<1x256xf32>
    %11 = vector.multi_reduction <add>, %10, %cst_12 [1] : vector<1x16x256xf32> to vector<1x256xf32>
    %12 = vector.shape_cast %11 : vector<1x256xf32> to vector<1x1x256xf32>
    %13 = arith.addf %9, %12 : vector<1x1x256xf32>
    %c0_13 = arith.constant 0 : index
    %c0_14 = arith.constant 0 : index
    %c0_15 = arith.constant 0 : index
    %14 = vector.load %arg4[%c0_13, %c0_14, %c0_15] : memref<1x1x256xf32, #tpu.memory_space<vmem>>, vector<1x1x256xf32>
    tpu.vector_store %arg4[%c0_13, %c0_14, %c0_15], %13 {strides = array<i32>} : memref<1x1x256xf32, #tpu.memory_space<vmem>>, vector<1x1x256xf32>,
    return
  }
  func.func @transform_0(%arg0: i32, %arg1: i32) -> (i32, i32, i32) {
    %c0_i32 = arith.constant 0 : i32
    %c0_i32_0 = arith.constant 0 : i32
    return %arg0, %arg1, %c0_i32 : i32, i32, i32
  }
  func.func @transform_1(%arg0: i32, %arg1: i32) -> (i32, i32, i32) {
    %c0_i32 = arith.constant 0 : i32
    %c0_i32_0 = arith.constant 0 : i32
    %c0_i32_1 = arith.constant 0 : i32
    return %arg0, %c0_i32, %c0_i32_0 : i32, i32, i32
  }
  func.func @transform_2(%arg0: i32, %arg1: i32) -> (i32, i32, i32) {
    %c0_i32 = arith.constant 0 : i32
    %c0_i32_0 = arith.constant 0 : i32
    %c0_i32_1 = arith.constant 0 : i32
    return %arg0, %c0_i32, %c0_i32_0 : i32, i32, i32
  }
}

module attributes {stable_mosaic.version = 11 : i64} {
  func.func @_in_norm_kernel(%arg0: i32, %arg1: i32, %arg2: memref<1x16x256xf32, #tpu.memory_space<vmem>>, %arg3: memref<1x1x256xf32, #tpu.memory_space<vmem>>, %arg4: memref<1x1x256xf32, #tpu.memory_space<vmem>>, %arg5: memref<1x16x256xf32, #tpu.memory_space<vmem>>) attributes {dimension_semantics = [#tpu.dimension_semantics<parallel>, #tpu.dimension_semantics<parallel>], iteration_bounds = array<i64: 2, 1>, scalar_prefetch = 0 : i64, scratch_operands = 0 : i64, tpu.core_type = #tpu.core_type<tc>, window_params = [{transform_indices = @transform_0, window_bounds = array<i64: 1, 16, 256>}, {transform_indices = @transform_1, window_bounds = array<i64: 1, 1, 256>}, {transform_indices = @transform_2, window_bounds = array<i64: 1, 1, 256>}, {transform_indices = @transform_3, window_bounds = array<i64: 1, 16, 256>}]} {
    %c0 = arith.constant 0 : index
    %c0_0 = arith.constant 0 : index
    %c0_1 = arith.constant 0 : index
    %0 = vector.load %arg2[%c0, %c0_0, %c0_1] : memref<1x16x256xf32, #tpu.memory_space<vmem>>, vector<1x16x256xf32>
    %c0_2 = arith.constant 0 : index
    %c0_3 = arith.constant 0 : index
    %c0_4 = arith.constant 0 : index
    %1 = vector.load %arg3[%c0_2, %c0_3, %c0_4] : memref<1x1x256xf32, #tpu.memory_space<vmem>>, vector<1x1x256xf32>
    %cst = arith.constant 6.250000e-02 : f32
    %2 = vector.broadcast %cst : f32 to vector<1x1x256xf32>
    %3 = arith.mulf %1, %2 : vector<1x1x256xf32>
    %c0_5 = arith.constant 0 : index
    %c0_6 = arith.constant 0 : index
    %c0_7 = arith.constant 0 : index
    %4 = vector.load %arg4[%c0_5, %c0_6, %c0_7] : memref<1x1x256xf32, #tpu.memory_space<vmem>>, vector<1x1x256xf32>
    %cst_8 = arith.constant 6.250000e-02 : f32
    %5 = vector.broadcast %cst_8 : f32 to vector<1x1x256xf32>
    %6 = arith.mulf %4, %5 : vector<1x1x256xf32>
    %7 = arith.mulf %3, %3 : vector<1x1x256xf32>
    %8 = arith.subf %6, %7 : vector<1x1x256xf32>
    %9 = vector.broadcast %3 : vector<1x1x256xf32> to vector<1x16x256xf32>
    %10 = arith.subf %0, %9 : vector<1x16x256xf32>
    %cst_9 = arith.constant 9.99999974E-6 : f32
    %11 = vector.broadcast %cst_9 : f32 to vector<1x1x256xf32>
    %12 = arith.addf %8, %11 : vector<1x1x256xf32>
    %13 = math.rsqrt %12 : vector<1x1x256xf32>
    %14 = vector.broadcast %13 : vector<1x1x256xf32> to vector<1x16x256xf32>
    %15 = arith.mulf %10, %14 : vector<1x16x256xf32>
    %cst_10 = arith.constant 0.000000e+00 : f32
    %16 = vector.broadcast %cst_10 : f32 to vector<1x16x256xf32>
    %17 = arith.cmpf oge, %15, %16 : vector<1x16x256xf32>
    %cst_11 = arith.constant 2.000000e-01 : f32
    %18 = vector.broadcast %cst_11 : f32 to vector<1x16x256xf32>
    %19 = arith.mulf %18, %15 : vector<1x16x256xf32>
    %20 = arith.select %17, %15, %19 : vector<1x16x256xi1>, vector<1x16x256xf32>
    %c0_12 = arith.constant 0 : index
    %c0_13 = arith.constant 0 : index
    %c0_14 = arith.constant 0 : index
    %21 = vector.load %arg5[%c0_12, %c0_13, %c0_14] : memref<1x16x256xf32, #tpu.memory_space<vmem>>, vector<1x16x256xf32>
    tpu.vector_store %arg5[%c0_12, %c0_13, %c0_14], %20 {strides = array<i32>} : memref<1x16x256xf32, #tpu.memory_space<vmem>>, vector<1x16x256xf32>,
    return
  }
  func.func @transform_0(%arg0: i32, %arg1: i32) -> (i32, i32, i32) {
    %c0_i32 = arith.constant 0 : i32
    %c0_i32_0 = arith.constant 0 : i32
    return %arg0, %arg1, %c0_i32 : i32, i32, i32
  }
  func.func @transform_1(%arg0: i32, %arg1: i32) -> (i32, i32, i32) {
    %c0_i32 = arith.constant 0 : i32
    %c0_i32_0 = arith.constant 0 : i32
    %c0_i32_1 = arith.constant 0 : i32
    return %arg0, %c0_i32, %c0_i32_0 : i32, i32, i32
  }
  func.func @transform_2(%arg0: i32, %arg1: i32) -> (i32, i32, i32) {
    %c0_i32 = arith.constant 0 : i32
    %c0_i32_0 = arith.constant 0 : i32
    %c0_i32_1 = arith.constant 0 : i32
    return %arg0, %c0_i32, %c0_i32_0 : i32, i32, i32
  }
  func.func @transform_3(%arg0: i32, %arg1: i32) -> (i32, i32, i32) {
    %c0_i32 = arith.constant 0 : i32
    %c0_i32_0 = arith.constant 0 : i32
    return %arg0, %arg1, %c0_i32 : i32, i32, i32
  }
}

module attributes {stable_mosaic.version = 11 : i64} {
  func.func @_gemm_kernel(%arg0: i32, %arg1: i32, %arg2: i32, %arg3: memref<24x512xbf16, #tpu.memory_space<vmem>>, %arg4: memref<512x256xbf16, #tpu.memory_space<vmem>>, %arg5: memref<1x256xf32, #tpu.memory_space<vmem>>, %arg6: memref<24x256xf32, #tpu.memory_space<vmem>>, %arg7: memref<24x256xf32, #tpu.memory_space<vmem>>) attributes {dimension_semantics = [#tpu.dimension_semantics<parallel>, #tpu.dimension_semantics<parallel>, #tpu.dimension_semantics<arbitrary>], iteration_bounds = array<i64: 1, 2, 8>, scalar_prefetch = 0 : i64, scratch_operands = 1 : i64, tpu.core_type = #tpu.core_type<tc>, window_params = [{transform_indices = @transform_0, window_bounds = array<i64: 24, 512>}, {transform_indices = @transform_1, window_bounds = array<i64: 512, 256>}, {transform_indices = @transform_2, window_bounds = array<i64: 1, 256>}, {transform_indices = @transform_3, window_bounds = array<i64: 24, 256>}]} {
    %c0_i32 = arith.constant 0 : i32
    %0 = arith.cmpi eq, %arg2, %c0_i32 : i32
    %1 = arith.extui %0 : i1 to i32
    %c0_i32_0 = arith.constant 0 : i32
    %2 = arith.cmpi ne, %1, %c0_i32_0 : i32
    scf.if %2 {
      %cst_9 = arith.constant 0.000000e+00 : f32
      %12 = vector.broadcast %cst_9 : f32 to vector<24x256xf32>
      %c0_10 = arith.constant 0 : index
      %c0_11 = arith.constant 0 : index
      %13 = vector.load %arg7[%c0_10, %c0_11] : memref<24x256xf32, #tpu.memory_space<vmem>>, vector<24x256xf32>
      tpu.vector_store %arg7[%c0_10, %c0_11], %12 {strides = array<i32>} : memref<24x256xf32, #tpu.memory_space<vmem>>, vector<24x256xf32>,
    } else {
    }
    %c0 = arith.constant 0 : index
    %c0_1 = arith.constant 0 : index
    %3 = vector.load %arg7[%c0, %c0_1] : memref<24x256xf32, #tpu.memory_space<vmem>>, vector<24x256xf32>
    %c0_2 = arith.constant 0 : index
    %c0_3 = arith.constant 0 : index
    %4 = vector.load %arg3[%c0_2, %c0_3] : memref<24x512xbf16, #tpu.memory_space<vmem>>, vector<24x512xbf16>
    %c0_4 = arith.constant 0 : index
    %c0_5 = arith.constant 0 : index
    %5 = vector.load %arg4[%c0_4, %c0_5] : memref<512x256xbf16, #tpu.memory_space<vmem>>, vector<512x256xbf16>
    %cst = arith.constant dense<0.000000e+00> : vector<24x256xf32>
    %6 = tpu.matmul %4, %5, %cst {dimension_numbers = #tpu.dot_dimension_numbers<[1], [0], [0], [1], [0, 0, 1, 1], [], []>} : vector<24x512xbf16>, vector<512x256xbf16>, vector<24x256xf32> -> vector<24x256xf32>
    %7 = arith.addf %3, %6 : vector<24x256xf32>
    %c0_6 = arith.constant 0 : index
    %c0_7 = arith.constant 0 : index
    %8 = vector.load %arg7[%c0_6, %c0_7] : memref<24x256xf32, #tpu.memory_space<vmem>>, vector<24x256xf32>
    tpu.vector_store %arg7[%c0_6, %c0_7], %7 {strides = array<i32>} : memref<24x256xf32, #tpu.memory_space<vmem>>, vector<24x256xf32>,
    %c7_i32 = arith.constant 7 : i32
    %9 = arith.cmpi eq, %arg2, %c7_i32 : i32
    %10 = arith.extui %9 : i1 to i32
    %c0_i32_8 = arith.constant 0 : i32
    %11 = arith.cmpi ne, %10, %c0_i32_8 : i32
    scf.if %11 {
      %c0_9 = arith.constant 0 : index
      %c0_10 = arith.constant 0 : index
      %12 = vector.load %arg7[%c0_9, %c0_10] : memref<24x256xf32, #tpu.memory_space<vmem>>, vector<24x256xf32>
      %c0_11 = arith.constant 0 : index
      %c0_12 = arith.constant 0 : index
      %13 = vector.load %arg5[%c0_11, %c0_12] : memref<1x256xf32, #tpu.memory_space<vmem>>, vector<1x256xf32>
      %14 = vector.broadcast %13 : vector<1x256xf32> to vector<24x256xf32>
      %15 = arith.addf %12, %14 : vector<24x256xf32>
      %c0_13 = arith.constant 0 : index
      %c0_14 = arith.constant 0 : index
      %16 = vector.load %arg6[%c0_13, %c0_14] : memref<24x256xf32, #tpu.memory_space<vmem>>, vector<24x256xf32>
      tpu.vector_store %arg6[%c0_13, %c0_14], %15 {strides = array<i32>} : memref<24x256xf32, #tpu.memory_space<vmem>>, vector<24x256xf32>,
    } else {
    }
    return
  }
  func.func @transform_0(%arg0: i32, %arg1: i32, %arg2: i32) -> (i32, i32) {
    %c0_i32 = arith.constant 0 : i32
    return %arg0, %arg2 : i32, i32
  }
  func.func @transform_1(%arg0: i32, %arg1: i32, %arg2: i32) -> (i32, i32) {
    %c0_i32 = arith.constant 0 : i32
    return %arg2, %arg1 : i32, i32
  }
  func.func @transform_2(%arg0: i32, %arg1: i32, %arg2: i32) -> (i32, i32) {
    %c0_i32 = arith.constant 0 : i32
    %c0_i32_0 = arith.constant 0 : i32
    return %c0_i32, %arg1 : i32, i32
  }
  func.func @transform_3(%arg0: i32, %arg1: i32, %arg2: i32) -> (i32, i32) {
    %c0_i32 = arith.constant 0 : i32
    return %arg0, %arg1 : i32, i32
  }
}

module attributes {stable_mosaic.version = 11 : i64} {
  func.func @_in_stats_kernel(%arg0: i32, %arg1: i32, %arg2: memref<1x9x512xf32, #tpu.memory_space<vmem>>, %arg3: memref<1x1x512xf32, #tpu.memory_space<vmem>>, %arg4: memref<1x1x512xf32, #tpu.memory_space<vmem>>) attributes {dimension_semantics = [#tpu.dimension_semantics<parallel>, #tpu.dimension_semantics<arbitrary>], iteration_bounds = array<i64: 2, 1>, scalar_prefetch = 0 : i64, scratch_operands = 0 : i64, tpu.core_type = #tpu.core_type<tc>, window_params = [{transform_indices = @transform_0, window_bounds = array<i64: 1, 9, 512>}, {transform_indices = @transform_1, window_bounds = array<i64: 1, 1, 512>}, {transform_indices = @transform_2, window_bounds = array<i64: 1, 1, 512>}]} {
    %c0_i32 = arith.constant 0 : i32
    %0 = arith.cmpi eq, %arg1, %c0_i32 : i32
    %1 = arith.extui %0 : i1 to i32
    %c0_i32_0 = arith.constant 0 : i32
    %2 = arith.cmpi ne, %1, %c0_i32_0 : i32
    scf.if %2 {
      %cst_16 = arith.constant 0.000000e+00 : f32
      %15 = vector.broadcast %cst_16 : f32 to vector<1x1x512xf32>
      %c0_17 = arith.constant 0 : index
      %c0_18 = arith.constant 0 : index
      %c0_19 = arith.constant 0 : index
      %16 = vector.load %arg3[%c0_17, %c0_18, %c0_19] : memref<1x1x512xf32, #tpu.memory_space<vmem>>, vector<1x1x512xf32>
      tpu.vector_store %arg3[%c0_17, %c0_18, %c0_19], %15 {strides = array<i32>} : memref<1x1x512xf32, #tpu.memory_space<vmem>>, vector<1x1x512xf32>,
      %cst_20 = arith.constant 0.000000e+00 : f32
      %17 = vector.broadcast %cst_20 : f32 to vector<1x1x512xf32>
      %c0_21 = arith.constant 0 : index
      %c0_22 = arith.constant 0 : index
      %c0_23 = arith.constant 0 : index
      %18 = vector.load %arg4[%c0_21, %c0_22, %c0_23] : memref<1x1x512xf32, #tpu.memory_space<vmem>>, vector<1x1x512xf32>
      tpu.vector_store %arg4[%c0_21, %c0_22, %c0_23], %17 {strides = array<i32>} : memref<1x1x512xf32, #tpu.memory_space<vmem>>, vector<1x1x512xf32>,
    } else {
    }
    %c0 = arith.constant 0 : index
    %c0_1 = arith.constant 0 : index
    %c0_2 = arith.constant 0 : index
    %3 = vector.load %arg2[%c0, %c0_1, %c0_2] : memref<1x9x512xf32, #tpu.memory_space<vmem>>, vector<1x9x512xf32>
    %c0_3 = arith.constant 0 : index
    %c0_4 = arith.constant 0 : index
    %c0_5 = arith.constant 0 : index
    %4 = vector.load %arg3[%c0_3, %c0_4, %c0_5] : memref<1x1x512xf32, #tpu.memory_space<vmem>>, vector<1x1x512xf32>
    %cst = arith.constant dense<0.000000e+00> : vector<1x512xf32>
    %5 = vector.multi_reduction <add>, %3, %cst [1] : vector<1x9x512xf32> to vector<1x512xf32>
    %6 = vector.shape_cast %5 : vector<1x512xf32> to vector<1x1x512xf32>
    %7 = arith.addf %4, %6 : vector<1x1x512xf32>
    %c0_6 = arith.constant 0 : index
    %c0_7 = arith.constant 0 : index
    %c0_8 = arith.constant 0 : index
    %8 = vector.load %arg3[%c0_6, %c0_7, %c0_8] : memref<1x1x512xf32, #tpu.memory_space<vmem>>, vector<1x1x512xf32>
    tpu.vector_store %arg3[%c0_6, %c0_7, %c0_8], %7 {strides = array<i32>} : memref<1x1x512xf32, #tpu.memory_space<vmem>>, vector<1x1x512xf32>,
    %c0_9 = arith.constant 0 : index
    %c0_10 = arith.constant 0 : index
    %c0_11 = arith.constant 0 : index
    %9 = vector.load %arg4[%c0_9, %c0_10, %c0_11] : memref<1x1x512xf32, #tpu.memory_space<vmem>>, vector<1x1x512xf32>
    %10 = arith.mulf %3, %3 : vector<1x9x512xf32>
    %cst_12 = arith.constant dense<0.000000e+00> : vector<1x512xf32>
    %11 = vector.multi_reduction <add>, %10, %cst_12 [1] : vector<1x9x512xf32> to vector<1x512xf32>
    %12 = vector.shape_cast %11 : vector<1x512xf32> to vector<1x1x512xf32>
    %13 = arith.addf %9, %12 : vector<1x1x512xf32>
    %c0_13 = arith.constant 0 : index
    %c0_14 = arith.constant 0 : index
    %c0_15 = arith.constant 0 : index
    %14 = vector.load %arg4[%c0_13, %c0_14, %c0_15] : memref<1x1x512xf32, #tpu.memory_space<vmem>>, vector<1x1x512xf32>
    tpu.vector_store %arg4[%c0_13, %c0_14, %c0_15], %13 {strides = array<i32>} : memref<1x1x512xf32, #tpu.memory_space<vmem>>, vector<1x1x512xf32>,
    return
  }
  func.func @transform_0(%arg0: i32, %arg1: i32) -> (i32, i32, i32) {
    %c0_i32 = arith.constant 0 : i32
    %c0_i32_0 = arith.constant 0 : i32
    return %arg0, %arg1, %c0_i32 : i32, i32, i32
  }
  func.func @transform_1(%arg0: i32, %arg1: i32) -> (i32, i32, i32) {
    %c0_i32 = arith.constant 0 : i32
    %c0_i32_0 = arith.constant 0 : i32
    %c0_i32_1 = arith.constant 0 : i32
    return %arg0, %c0_i32, %c0_i32_0 : i32, i32, i32
  }
  func.func @transform_2(%arg0: i32, %arg1: i32) -> (i32, i32, i32) {
    %c0_i32 = arith.constant 0 : i32
    %c0_i32_0 = arith.constant 0 : i32
    %c0_i32_1 = arith.constant 0 : i32
    return %arg0, %c0_i32, %c0_i32_0 : i32, i32, i32
  }
}

module attributes {stable_mosaic.version = 11 : i64} {
  func.func @_in_norm_kernel(%arg0: i32, %arg1: i32, %arg2: memref<1x9x512xf32, #tpu.memory_space<vmem>>, %arg3: memref<1x1x512xf32, #tpu.memory_space<vmem>>, %arg4: memref<1x1x512xf32, #tpu.memory_space<vmem>>, %arg5: memref<1x9x512xf32, #tpu.memory_space<vmem>>) attributes {dimension_semantics = [#tpu.dimension_semantics<parallel>, #tpu.dimension_semantics<parallel>], iteration_bounds = array<i64: 2, 1>, scalar_prefetch = 0 : i64, scratch_operands = 0 : i64, tpu.core_type = #tpu.core_type<tc>, window_params = [{transform_indices = @transform_0, window_bounds = array<i64: 1, 9, 512>}, {transform_indices = @transform_1, window_bounds = array<i64: 1, 1, 512>}, {transform_indices = @transform_2, window_bounds = array<i64: 1, 1, 512>}, {transform_indices = @transform_3, window_bounds = array<i64: 1, 9, 512>}]} {
    %c0 = arith.constant 0 : index
    %c0_0 = arith.constant 0 : index
    %c0_1 = arith.constant 0 : index
    %0 = vector.load %arg2[%c0, %c0_0, %c0_1] : memref<1x9x512xf32, #tpu.memory_space<vmem>>, vector<1x9x512xf32>
    %c0_2 = arith.constant 0 : index
    %c0_3 = arith.constant 0 : index
    %c0_4 = arith.constant 0 : index
    %1 = vector.load %arg3[%c0_2, %c0_3, %c0_4] : memref<1x1x512xf32, #tpu.memory_space<vmem>>, vector<1x1x512xf32>
    %cst = arith.constant 0.111111112 : f32
    %2 = vector.broadcast %cst : f32 to vector<1x1x512xf32>
    %3 = arith.mulf %1, %2 : vector<1x1x512xf32>
    %c0_5 = arith.constant 0 : index
    %c0_6 = arith.constant 0 : index
    %c0_7 = arith.constant 0 : index
    %4 = vector.load %arg4[%c0_5, %c0_6, %c0_7] : memref<1x1x512xf32, #tpu.memory_space<vmem>>, vector<1x1x512xf32>
    %cst_8 = arith.constant 0.111111112 : f32
    %5 = vector.broadcast %cst_8 : f32 to vector<1x1x512xf32>
    %6 = arith.mulf %4, %5 : vector<1x1x512xf32>
    %7 = arith.mulf %3, %3 : vector<1x1x512xf32>
    %8 = arith.subf %6, %7 : vector<1x1x512xf32>
    %9 = vector.broadcast %3 : vector<1x1x512xf32> to vector<1x9x512xf32>
    %10 = arith.subf %0, %9 : vector<1x9x512xf32>
    %cst_9 = arith.constant 9.99999974E-6 : f32
    %11 = vector.broadcast %cst_9 : f32 to vector<1x1x512xf32>
    %12 = arith.addf %8, %11 : vector<1x1x512xf32>
    %13 = math.rsqrt %12 : vector<1x1x512xf32>
    %14 = vector.broadcast %13 : vector<1x1x512xf32> to vector<1x9x512xf32>
    %15 = arith.mulf %10, %14 : vector<1x9x512xf32>
    %cst_10 = arith.constant 0.000000e+00 : f32
    %16 = vector.broadcast %cst_10 : f32 to vector<1x9x512xf32>
    %17 = arith.cmpf oge, %15, %16 : vector<1x9x512xf32>
    %cst_11 = arith.constant 2.000000e-01 : f32
    %18 = vector.broadcast %cst_11 : f32 to vector<1x9x512xf32>
    %19 = arith.mulf %18, %15 : vector<1x9x512xf32>
    %20 = arith.select %17, %15, %19 : vector<1x9x512xi1>, vector<1x9x512xf32>
    %c0_12 = arith.constant 0 : index
    %c0_13 = arith.constant 0 : index
    %c0_14 = arith.constant 0 : index
    %21 = vector.load %arg5[%c0_12, %c0_13, %c0_14] : memref<1x9x512xf32, #tpu.memory_space<vmem>>, vector<1x9x512xf32>
    tpu.vector_store %arg5[%c0_12, %c0_13, %c0_14], %20 {strides = array<i32>} : memref<1x9x512xf32, #tpu.memory_space<vmem>>, vector<1x9x512xf32>,
    return
  }
  func.func @transform_0(%arg0: i32, %arg1: i32) -> (i32, i32, i32) {
    %c0_i32 = arith.constant 0 : i32
    %c0_i32_0 = arith.constant 0 : i32
    return %arg0, %arg1, %c0_i32 : i32, i32, i32
  }
  func.func @transform_1(%arg0: i32, %arg1: i32) -> (i32, i32, i32) {
    %c0_i32 = arith.constant 0 : i32
    %c0_i32_0 = arith.constant 0 : i32
    %c0_i32_1 = arith.constant 0 : i32
    return %arg0, %c0_i32, %c0_i32_0 : i32, i32, i32
  }
  func.func @transform_2(%arg0: i32, %arg1: i32) -> (i32, i32, i32) {
    %c0_i32 = arith.constant 0 : i32
    %c0_i32_0 = arith.constant 0 : i32
    %c0_i32_1 = arith.constant 0 : i32
    return %arg0, %c0_i32, %c0_i32_0 : i32, i32, i32
  }
  func.func @transform_3(%arg0: i32, %arg1: i32) -> (i32, i32, i32) {
    %c0_i32 = arith.constant 0 : i32
    %c0_i32_0 = arith.constant 0 : i32
    return %arg0, %arg1, %c0_i32 : i32, i32, i32
  }
}

module attributes {stable_mosaic.version = 11 : i64} {
  func.func @_gemm_kernel(%arg0: i32, %arg1: i32, %arg2: i32, %arg3: memref<8x512xbf16, #tpu.memory_space<vmem>>, %arg4: memref<512x128xbf16, #tpu.memory_space<vmem>>, %arg5: memref<1x128xf32, #tpu.memory_space<vmem>>, %arg6: memref<8x128xf32, #tpu.memory_space<vmem>>, %arg7: memref<8x128xf32, #tpu.memory_space<vmem>>) attributes {dimension_semantics = [#tpu.dimension_semantics<parallel>, #tpu.dimension_semantics<parallel>, #tpu.dimension_semantics<arbitrary>], iteration_bounds = array<i64: 1, 1, 16>, scalar_prefetch = 0 : i64, scratch_operands = 1 : i64, tpu.core_type = #tpu.core_type<tc>, window_params = [{transform_indices = @transform_0, window_bounds = array<i64: 8, 512>}, {transform_indices = @transform_1, window_bounds = array<i64: 512, 128>}, {transform_indices = @transform_2, window_bounds = array<i64: 1, 128>}, {transform_indices = @transform_3, window_bounds = array<i64: 8, 128>}]} {
    %c0_i32 = arith.constant 0 : i32
    %0 = arith.cmpi eq, %arg2, %c0_i32 : i32
    %1 = arith.extui %0 : i1 to i32
    %c0_i32_0 = arith.constant 0 : i32
    %2 = arith.cmpi ne, %1, %c0_i32_0 : i32
    scf.if %2 {
      %cst_9 = arith.constant 0.000000e+00 : f32
      %12 = vector.broadcast %cst_9 : f32 to vector<8x128xf32>
      %c0_10 = arith.constant 0 : index
      %c0_11 = arith.constant 0 : index
      %13 = vector.load %arg7[%c0_10, %c0_11] : memref<8x128xf32, #tpu.memory_space<vmem>>, vector<8x128xf32>
      tpu.vector_store %arg7[%c0_10, %c0_11], %12 {strides = array<i32>} : memref<8x128xf32, #tpu.memory_space<vmem>>, vector<8x128xf32>,
    } else {
    }
    %c0 = arith.constant 0 : index
    %c0_1 = arith.constant 0 : index
    %3 = vector.load %arg7[%c0, %c0_1] : memref<8x128xf32, #tpu.memory_space<vmem>>, vector<8x128xf32>
    %c0_2 = arith.constant 0 : index
    %c0_3 = arith.constant 0 : index
    %4 = vector.load %arg3[%c0_2, %c0_3] : memref<8x512xbf16, #tpu.memory_space<vmem>>, vector<8x512xbf16>
    %c0_4 = arith.constant 0 : index
    %c0_5 = arith.constant 0 : index
    %5 = vector.load %arg4[%c0_4, %c0_5] : memref<512x128xbf16, #tpu.memory_space<vmem>>, vector<512x128xbf16>
    %cst = arith.constant dense<0.000000e+00> : vector<8x128xf32>
    %6 = tpu.matmul %4, %5, %cst {dimension_numbers = #tpu.dot_dimension_numbers<[1], [0], [0], [1], [0, 0, 1, 1], [], []>} : vector<8x512xbf16>, vector<512x128xbf16>, vector<8x128xf32> -> vector<8x128xf32>
    %7 = arith.addf %3, %6 : vector<8x128xf32>
    %c0_6 = arith.constant 0 : index
    %c0_7 = arith.constant 0 : index
    %8 = vector.load %arg7[%c0_6, %c0_7] : memref<8x128xf32, #tpu.memory_space<vmem>>, vector<8x128xf32>
    tpu.vector_store %arg7[%c0_6, %c0_7], %7 {strides = array<i32>} : memref<8x128xf32, #tpu.memory_space<vmem>>, vector<8x128xf32>,
    %c15_i32 = arith.constant 15 : i32
    %9 = arith.cmpi eq, %arg2, %c15_i32 : i32
    %10 = arith.extui %9 : i1 to i32
    %c0_i32_8 = arith.constant 0 : i32
    %11 = arith.cmpi ne, %10, %c0_i32_8 : i32
    scf.if %11 {
      %c0_9 = arith.constant 0 : index
      %c0_10 = arith.constant 0 : index
      %12 = vector.load %arg7[%c0_9, %c0_10] : memref<8x128xf32, #tpu.memory_space<vmem>>, vector<8x128xf32>
      %c0_11 = arith.constant 0 : index
      %c0_12 = arith.constant 0 : index
      %13 = vector.load %arg5[%c0_11, %c0_12] : memref<1x128xf32, #tpu.memory_space<vmem>>, vector<1x128xf32>
      %14 = vector.broadcast %13 : vector<1x128xf32> to vector<8x128xf32>
      %15 = arith.addf %12, %14 : vector<8x128xf32>
      %c0_13 = arith.constant 0 : index
      %c0_14 = arith.constant 0 : index
      %16 = vector.load %arg6[%c0_13, %c0_14] : memref<8x128xf32, #tpu.memory_space<vmem>>, vector<8x128xf32>
      tpu.vector_store %arg6[%c0_13, %c0_14], %15 {strides = array<i32>} : memref<8x128xf32, #tpu.memory_space<vmem>>, vector<8x128xf32>,
    } else {
    }
    return
  }
  func.func @transform_0(%arg0: i32, %arg1: i32, %arg2: i32) -> (i32, i32) {
    %c0_i32 = arith.constant 0 : i32
    return %arg0, %arg2 : i32, i32
  }
  func.func @transform_1(%arg0: i32, %arg1: i32, %arg2: i32) -> (i32, i32) {
    %c0_i32 = arith.constant 0 : i32
    return %arg2, %arg1 : i32, i32
  }
  func.func @transform_2(%arg0: i32, %arg1: i32, %arg2: i32) -> (i32, i32) {
    %c0_i32 = arith.constant 0 : i32
    %c0_i32_0 = arith.constant 0 : i32
    return %c0_i32, %arg1 : i32, i32
  }
  func.func @transform_3(%arg0: i32, %arg1: i32, %arg2: i32) -> (i32, i32) {
    %c0_i32 = arith.constant 0 : i32
    return %arg0, %arg1 : i32, i32
  }
}

</mosaic_0001>

<llo_original>
// kernel: discriminator_forward.11
$region0: #{discriminator_forward.11}
  #allocation0 [shape = 'u32[]', space=smem, size = 0x4, offset = 0x4, fixed_abs, tag = 'smem constant byte address 0x4 - core index']
  #allocation1 [shape = 'u32[144,128]{1,0:T(1,128)}', space=vmem, size = 0x12000, scoped, tag = 'internal scratch']
  #allocation2 [shape = 'f32[256,128]{1,0:T(8,128)}', space=vmem, size = 0x20000, scoped, tag = 'scratch operand']
  %s0 = inlined_call_operand.vmem [shape: bf16[512,128], index: 0, kind: input, shape index: {}]
  %s1 = inlined_call_operand.vmem [shape: bf16[128,128], index: 1, kind: input, shape index: {}]
  %s2 = inlined_call_operand.vmem [shape: f32[1,128], index: 2, kind: input, shape index: {}]
  %s3 = inlined_call_operand.vmem [shape: f32[512,128], index: 3, kind: output, shape index: {}]
  %s4 = sld [smem:[#allocation0]]
  $region53: #{discriminator_forward.11} parent=0
    _
  %s6 = ssub.s32 1, %s4
  %s7 = scalar_select 0, %s6, %s4
  loop: start=0, step=1, limit=4
  $region2: #{discriminator_forward.11} parent=0 // loop_pre_header
    _
  $region3: #{discriminator_forward.11} parent=0 // loop_header
    %s9 = sphi 0, %s13
    %p10 = scmp.ge.s32.totalorder %s9, 4
    %s16 = sphi 0, %s35
    %s17 = sphi 0, %s31
    %s18 = sphi 0, %s27
    %s19 = sphi 0, %s16
    %s20 = sphi 0, %s17
    %s21 = sphi 0, %s18
    %s22 = sphi 0, %s19
    %s23 = sphi 0, %s20
    %s24 = sphi 0, %s21
    %s40 = sphi 0, %s42
    %s43 = sphi 0, %s40
    %s44 = sphi 0, %s43
    %s60 = sphi 0, %s44
    %s68 = sphi 0, %s70
    %s71 = sphi 0, %s68
    %s72 = sphi 0, %s71
    %s88 = sphi 0, %s72
    %s94 = sphi 0, %s96
    %s97 = sphi 0, %s94
    %s98 = sphi 0, %s97
    %s114 = sphi 0, %s98
    %s122 = sphi 0, %s124
    %s125 = sphi 0, %s122
    %s126 = sphi 0, %s125
    %s142 = sphi 0, %s126
  $region4: #{discriminator_forward.11} parent=0 // loop_header_branch
    %12 = sbr.rel (%p10) target = $region8
  $region5: #{discriminator_forward.11} parent=0 // loop_body
    %s14 = ssub.s32 %s9, 1
    %s15 = ssub.s32 %s9, 2
    %s25 = sadd.s32 1, %s18
    %p26 = scmp.ge.s32.totalorder %s25, 1
    %s27 = scalar_select %p26, 0, %s25
    %s28 = sadd.s32 1, %s17
    %s29 = scalar_select %p26, %s28, %s17
    %p30 = scmp.ge.s32.totalorder %s29, 1
    %s31 = scalar_select %p30, 0, %s29
    %s32 = sadd.s32 1, %s16
    %s33 = scalar_select %p30, %s32, %s16
    %p34 = scmp.ge.s32.totalorder %s33, 2
    %s35 = scalar_select %p34, 0, %s33
    %s36 = ssub.s32 %s16, %s35
    %s37 = ssub.s32 %s18, %s27
    %s38 = sor.u32 %s36, %s37
    %p39 = scmp.eq.s32.totalorder %s38, 0
    %s41 = sadd.s32 %s40, 1
    %s42 = scalar_select %p39, %s40, %s41
    %p45 = pneg %p39
    %p46 = scmp.eq.s32.totalorder %s9, 1
    %p47 = por %p45, %p46
    %p48 = scmp.ne.s32.totalorder %s40, %s43
    %p49 = scmp.eq.s32.totalorder %s9, 0
    %p50 = por %p48, %p49
    %p51 = scmp.ne.s32.totalorder %s40, %s43
    %p52 = scmp.eq.s32.totalorder %s14, 1
    %p53 = por %p51, %p52
    %p54 = scmp.ne.s32.totalorder %s43, %s44
    %p55 = scmp.eq.s32.totalorder %s14, 0
    %p56 = por %p54, %p55
    %p57 = scmp.ne.s32.totalorder %s43, %s44
    %p58 = scmp.eq.s32.totalorder %s15, 1
    %p59 = por %p57, %p58
    %p61 = scmp.ne.s32.totalorder %s44, %s60
    %p62 = scmp.eq.s32.totalorder %s15, 0
    %p63 = por %p61, %p62
    %s64 = ssub.s32 %s18, %s27
    %s65 = ssub.s32 %s17, %s31
    %s66 = sor.u32 %s64, %s65
    %p67 = scmp.eq.s32.totalorder %s66, 0
    %s69 = sadd.s32 %s68, 1
    %s70 = scalar_select %p67, %s68, %s69
    %p73 = pneg %p67
    %p74 = scmp.eq.s32.totalorder %s9, 1
    %p75 = por %p73, %p74
    %p76 = scmp.ne.s32.totalorder %s68, %s71
    %p77 = scmp.eq.s32.totalorder %s9, 0
    %p78 = por %p76, %p77
    %p79 = scmp.ne.s32.totalorder %s68, %s71
    %p80 = scmp.eq.s32.totalorder %s14, 1
    %p81 = por %p79, %p80
    %p82 = scmp.ne.s32.totalorder %s71, %s72
    %p83 = scmp.eq.s32.totalorder %s14, 0
    %p84 = por %p82, %p83
    %p85 = scmp.ne.s32.totalorder %s71, %s72
    %p86 = scmp.eq.s32.totalorder %s15, 1
    %p87 = por %p85, %p86
    %p89 = scmp.ne.s32.totalorder %s72, %s88
    %p90 = scmp.eq.s32.totalorder %s15, 0
    %p91 = por %p89, %p90
    %s92 = ssub.s32 %s17, %s31
    %p93 = scmp.eq.s32.totalorder %s92, 0
    %s95 = sadd.s32 %s94, 1
    %s96 = scalar_select %p93, %s94, %s95
    %p99 = pneg %p93
    %p100 = scmp.eq.s32.totalorder %s9, 1
    %p101 = por %p99, %p100
    %p102 = scmp.ne.s32.totalorder %s94, %s97
    %p103 = scmp.eq.s32.totalorder %s9, 0
    %p104 = por %p102, %p103
    %p105 = scmp.ne.s32.totalorder %s94, %s97
    %p106 = scmp.eq.s32.totalorder %s14, 1
    %p107 = por %p105, %p106
    %p108 = scmp.ne.s32.totalorder %s97, %s98
    %p109 = scmp.eq.s32.totalorder %s14, 0
    %p110 = por %p108, %p109
    %p111 = scmp.ne.s32.totalorder %s97, %s98
    %p112 = scmp.eq.s32.totalorder %s15, 1
    %p113 = por %p111, %p112
    %p115 = scmp.ne.s32.totalorder %s98, %s114
    %p116 = scmp.eq.s32.totalorder %s15, 0
    %p117 = por %p115, %p116
    %s118 = ssub.s32 %s16, %s35
    %s119 = ssub.s32 %s17, %s31
    %s120 = sor.u32 %s118, %s119
    %p121 = scmp.eq.s32.totalorder %s120, 0
    %s123 = sadd.s32 %s122, 1
    %s124 = scalar_select %p121, %s122, %s123
    %p127 = pneg %p121
    %p128 = scmp.eq.s32.totalorder %s9, 1
    %p129 = por %p127, %p128
    %p130 = scmp.ne.s32.totalorder %s122, %s125
    %p131 = scmp.eq.s32.totalorder %s9, 0
    %p132 = por %p130, %p131
    %p133 = scmp.ne.s32.totalorder %s122, %s125
    %p134 = scmp.eq.s32.totalorder %s14, 1
    %p135 = por %p133, %p134
    %p136 = scmp.ne.s32.totalorder %s125, %s126
    %p137 = scmp.eq.s32.totalorder %s14, 0
    %p138 = por %p136, %p137
    %p139 = scmp.ne.s32.totalorder %s125, %s126
    %p140 = scmp.eq.s32.totalorder %s15, 1
    %p141 = por %p139, %p140
    %p143 = scmp.ne.s32.totalorder %s126, %s142
    %p144 = scmp.eq.s32.totalorder %s15, 0
    %p145 = por %p143, %p144
    %p146 = scmp.le.s32.totalorder 1, %s9
    %p147 = scmp.lt.s32.totalorder %s9, 3
    %p148 = pnand %p146, %p147
    %p149 = pneg %p148
    // Predicated region
    $region9: #{discriminator_forward.11} parent=5 // pred_check
      _
    $region10: #{discriminator_forward.11} parent=5 // pred_check_branch
      %151 = sbr.rel (%p148) target = $region12
    $region11: #{discriminator_forward.11} parent=5 // pred_region
      %s152 = ssub.s32 %s9, 1
      // Predicated region
      $region13: #{discriminator_forward.11} parent=11 // pred_check
        %p153 = pneg %p84
      $region14: #{discriminator_forward.11} parent=11 // pred_check_branch
        %155 = sbr.rel (%p153) target = $region16
      $region15: #{discriminator_forward.11} parent=11 // pred_region
        %s156 = smul.u32 16, %s21
        %p157 = scmp.lt.s32.totalorder %s156, 15
        %s158 = scalar_select %p157, %s156, 15
        %p159 = scmp.lt.s32.totalorder %s20, 0
        %s160 = scalar_select %p159, %s20, 0
        %s161 = sadd.s32 %s160, %s158
        %s162 = smul.addr %s161, 4
        %s163 = scalar_lea.vmem %s1, %s162
        %s164 = smul.u32 16, %s21
      $region16: #{discriminator_forward.11} parent=11 // pred_fallthru
        _
      // Predicated region
      $region17: #{discriminator_forward.11} parent=11 // pred_check
        %p165 = pneg %p110
      $region18: #{discriminator_forward.11} parent=11 // pred_check_branch
        %167 = sbr.rel (%p165) target = $region20
      $region19: #{discriminator_forward.11} parent=11 // pred_region
        %p168 = scmp.lt.s32.totalorder %s20, 0
        %s169 = scalar_select %p168, %s20, 0
        %s170 = scalar_lea.vmem %s2, %s169
      $region20: #{discriminator_forward.11} parent=11 // pred_fallthru
        _
    $region12: #{discriminator_forward.11} parent=5 // pred_fallthru
      _
    %p171 = scmp.lt.s32.totalorder %s9, 2
    // Predicated region
    $region21: #{discriminator_forward.11} parent=5 // pred_check
      %p172 = pneg %p171
    $region22: #{discriminator_forward.11} parent=5 // pred_check_branch
      %174 = sbr.rel (%p172) target = $region24
    $region23: #{discriminator_forward.11} parent=5 // pred_region
      // Predicated region
      $region25: #{discriminator_forward.11} parent=23 // pred_check
        %p175 = pneg %p50
      $region26: #{discriminator_forward.11} parent=23 // pred_check_branch
        %177 = sbr.rel (%p175) target = $region28
      $region27: #{discriminator_forward.11} parent=23 // pred_region
        %s178 = smul.u32 32, %s16
        %p179 = scmp.lt.s32.totalorder %s178, 63
        %s180 = scalar_select %p179, %s178, 63
        %p181 = scmp.lt.s32.totalorder %s18, 0
        %s182 = scalar_select %p181, %s18, 0
        %s183 = sadd.s32 %s182, %s180
        %s184 = smul.addr %s183, 4
        %s185 = scalar_lea.vmem %s0, %s184
        %s186 = smul.u32 32, %s16
      $region28: #{discriminator_forward.11} parent=23 // pred_fallthru
        _
    $region24: #{discriminator_forward.11} parent=5 // pred_fallthru
      _
    %p187 = scmp.le.s32.totalorder 1, %s9
    %p188 = scmp.lt.s32.totalorder %s9, 3
    %p189 = pnand %p187, %p188
    %p190 = pneg %p189
    // Predicated region
    $region29: #{discriminator_forward.11} parent=5 // pred_check
      _
    $region30: #{discriminator_forward.11} parent=5 // pred_check_branch
      %192 = sbr.rel (%p189) target = $region32
    $region31: #{discriminator_forward.11} parent=5 // pred_region
      %s193 = ssub.s32 %s9, 1
      %s194 = smul.u32 32, %s19
      %p195 = scmp.lt.s32.totalorder %s194, 63
      %s196 = scalar_select %p195, %s194, 63
      %p197 = scmp.lt.s32.totalorder %s21, 0
      %s198 = scalar_select %p197, %s21, 0
      %s199 = sadd.s32 %s198, %s196
      %s200 = smul.addr %s199, 4
      %s201 = scalar_lea.vmem %s0, %s200
      %p202 = pneg %p56
      %p203 = pneg %p53
      %s204 = smul.u32 16, %s21
      %p205 = scmp.lt.s32.totalorder %s204, 15
      %s206 = scalar_select %p205, %s204, 15
      %p207 = scmp.lt.s32.totalorder %s20, 0
      %s208 = scalar_select %p207, %s20, 0
      %s209 = sadd.s32 %s208, %s206
      %s210 = smul.addr %s209, 4
      %s211 = scalar_lea.vmem %s1, %s210
      %p212 = pneg %p84
      %p213 = pneg %p81
      %p214 = scmp.lt.s32.totalorder %s20, 0
      %s215 = scalar_select %p214, %s20, 0
      %s216 = scalar_lea.vmem %s2, %s215
      %p217 = pneg %p110
      %p218 = pneg %p107
      %p219 = pneg %p138
      %p220 = pneg %p135
      %s221 = smul.u32 32, %s19
      %p222 = scmp.lt.s32.totalorder %s221, 63
      %s223 = scalar_select %p222, %s221, 63
      %p224 = scmp.lt.s32.totalorder %s20, 0
      %s225 = scalar_select %p224, %s20, 0
      %s226 = sadd.s32 %s225, %s223
      %s227 = smul.addr %s226, 8
      %s228 = scalar_lea.vmem %s3, %s227
      %s229 = smul.u32 32, %s19
      %p230 = scmp.lt.s32.totalorder %s229, 63
      %s231 = scalar_select %p230, %s229, 63
      %p232 = scmp.lt.s32.totalorder %s21, 0
      %s233 = scalar_select %p232, %s21, 0
      %s234 = sadd.s32 %s233, %s231
      %s235 = smul.addr %s234, 4
      %s236 = scalar_lea.vmem %s0, %s235
      %s237 = smul.u32 32, %s19
      %s238 = smul.u32 16, %s21
      %p239 = scmp.lt.s32.totalorder %s238, 15
      %s240 = scalar_select %p239, %s238, 15
      %p241 = scmp.lt.s32.totalorder %s20, 0
      %s242 = scalar_select %p241, %s20, 0
      %s243 = sadd.s32 %s242, %s240
      %s244 = smul.addr %s243, 4
      %s245 = scalar_lea.vmem %s1, %s244
      %s246 = smul.u32 16, %s21
      %p247 = scmp.lt.s32.totalorder %s20, 0
      %s248 = scalar_select %p247, %s20, 0
      %s249 = scalar_lea.vmem %s2, %s248
      %s250 = smul.u32 32, %s19
      %p251 = scmp.lt.s32.totalorder %s250, 63
      %s252 = scalar_select %p251, %s250, 63
      %p253 = scmp.lt.s32.totalorder %s20, 0
      %s254 = scalar_select %p253, %s20, 0
      %s255 = sadd.s32 %s254, %s252
      %s256 = smul.addr %s255, 8
      %s257 = scalar_lea.vmem %s3, %s256
      %s258 = smul.u32 32, %s19
      %p260 = scmp.eq.s32.totalorder %s21, 0
      // Predicated region
      $region33: #{discriminator_forward.11} parent=31 // pred_check
        %p261 = pneg %p260
      $region34: #{discriminator_forward.11} parent=31 // pred_check_branch
        %263 = sbr.rel (%p261) target = $region36
      $region35: #{discriminator_forward.11} parent=31 // pred_region
        %264 = vst [vmem:[#allocation2] sm:$0xff] 0.0
        %265 = vst [vmem:[#allocation2 + $0x8] sm:$0xff] 0.0
        %266 = vst [vmem:[#allocation2 + $0x10] sm:$0xff] 0.0
        %267 = vst [vmem:[#allocation2 + $0x18] sm:$0xff] 0.0
        %268 = vst [vmem:[#allocation2 + $0x20] sm:$0xff] 0.0
        %269 = vst [vmem:[#allocation2 + $0x28] sm:$0xff] 0.0
        %270 = vst [vmem:[#allocation2 + $0x30] sm:$0xff] 0.0
        %271 = vst [vmem:[#allocation2 + $0x38] sm:$0xff] 0.0
        %272 = vst [vmem:[#allocation2 + $0x40] sm:$0xff] 0.0
        %273 = vst [vmem:[#allocation2 + $0x48] sm:$0xff] 0.0
        %274 = vst [vmem:[#allocation2 + $0x50] sm:$0xff] 0.0
        %275 = vst [vmem:[#allocation2 + $0x58] sm:$0xff] 0.0
        %276 = vst [vmem:[#allocation2 + $0x60] sm:$0xff] 0.0
        %277 = vst [vmem:[#allocation2 + $0x68] sm:$0xff] 0.0
        %278 = vst [vmem:[#allocation2 + $0x70] sm:$0xff] 0.0
        %279 = vst [vmem:[#allocation2 + $0x78] sm:$0xff] 0.0
        %280 = vst [vmem:[#allocation2 + $0x80] sm:$0xff] 0.0
        %281 = vst [vmem:[#allocation2 + $0x88] sm:$0xff] 0.0
        %282 = vst [vmem:[#allocation2 + $0x90] sm:$0xff] 0.0
        %283 = vst [vmem:[#allocation2 + $0x98] sm:$0xff] 0.0
        %284 = vst [vmem:[#allocation2 + $0xa0] sm:$0xff] 0.0
        %285 = vst [vmem:[#allocation2 + $0xa8] sm:$0xff] 0.0
        %286 = vst [vmem:[#allocation2 + $0xb0] sm:$0xff] 0.0
        %287 = vst [vmem:[#allocation2 + $0xb8] sm:$0xff] 0.0
        %288 = vst [vmem:[#allocation2 + $0xc0] sm:$0xff] 0.0
        %289 = vst [vmem:[#allocation2 + $0xc8] sm:$0xff] 0.0
        %290 = vst [vmem:[#allocation2 + $0xd0] sm:$0xff] 0.0
        %291 = vst [vmem:[#allocation2 + $0xd8] sm:$0xff] 0.0
        %292 = vst [vmem:[#allocation2 + $0xe0] sm:$0xff] 0.0
        %293 = vst [vmem:[#allocation2 + $0xe8] sm:$0xff] 0.0
        %294 = vst [vmem:[#allocation2 + $0xf0] sm:$0xff] 0.0
        %295 = vst [vmem:[#allocation2 + $0xf8] sm:$0xff] 0.0
      $region36: #{discriminator_forward.11} parent=31 // pred_fallthru
        _
      %v296 = vld [vmem:[#allocation2] sm:$0xff]
      %v297 = vld [vmem:[#allocation2 + $0x8] sm:$0xff]
      %v298 = vld [vmem:[#allocation2 + $0x10] sm:$0xff]
      %v299 = vld [vmem:[#allocation2 + $0x18] sm:$0xff]
      %v300 = vld [vmem:[#allocation2 + $0x20] sm:$0xff]
      %v301 = vld [vmem:[#allocation2 + $0x28] sm:$0xff]
      %v302 = vld [vmem:[#allocation2 + $0x30] sm:$0xff]
      %v303 = vld [vmem:[#allocation2 + $0x38] sm:$0xff]
      %v304 = vld [vmem:[#allocation2 + $0x40] sm:$0xff]
      %v305 = vld [vmem:[#allocation2 + $0x48] sm:$0xff]
      %v306 = vld [vmem:[#allocation2 + $0x50] sm:$0xff]
      %v307 = vld [vmem:[#allocation2 + $0x58] sm:$0xff]
      %v308 = vld [vmem:[#allocation2 + $0x60] sm:$0xff]
      %v309 = vld [vmem:[#allocation2 + $0x68] sm:$0xff]
      %v310 = vld [vmem:[#allocation2 + $0x70] sm:$0xff]
      %v311 = vld [vmem:[#allocation2 + $0x78] sm:$0xff]
      %v312 = vld [vmem:[#allocation2 + $0x80] sm:$0xff]
      %v313 = vld [vmem:[#allocation2 + $0x88] sm:$0xff]
      %v314 = vld [vmem:[#allocation2 + $0x90] sm:$0xff]
      %v315 = vld [vmem:[#allocation2 + $0x98] sm:$0xff]
      %v316 = vld [vmem:[#allocation2 + $0xa0] sm:$0xff]
      %v317 = vld [vmem:[#allocation2 + $0xa8] sm:$0xff]
      %v318 = vld [vmem:[#allocation2 + $0xb0] sm:$0xff]
      %v319 = vld [vmem:[#allocation2 + $0xb8] sm:$0xff]
      %v320 = vld [vmem:[#allocation2 + $0xc0] sm:$0xff]
      %v321 = vld [vmem:[#allocation2 + $0xc8] sm:$0xff]
      %v322 = vld [vmem:[#allocation2 + $0xd0] sm:$0xff]
      %v323 = vld [vmem:[#allocation2 + $0xd8] sm:$0xff]
      %v324 = vld [vmem:[#allocation2 + $0xe0] sm:$0xff]
      %v325 = vld [vmem:[#allocation2 + $0xe8] sm:$0xff]
      %v326 = vld [vmem:[#allocation2 + $0xf0] sm:$0xff]
      %v327 = vld [vmem:[#allocation2 + $0xf8] sm:$0xff]
      %v328 = vld [vmem:[%s236] sm:$0xf]
      %v329 = vld [vmem:[%s236 + $0x4] sm:$0xf]
      %v330 = vld [vmem:[%s236 + $0x8] sm:$0xf]
      %v331 = vld [vmem:[%s236 + $0xc] sm:$0xf]
      %v332 = vld [vmem:[%s236 + $0x10] sm:$0xf]
      %v333 = vld [vmem:[%s236 + $0x14] sm:$0xf]
      %v334 = vld [vmem:[%s236 + $0x18] sm:$0xf]
      %v335 = vld [vmem:[%s236 + $0x1c] sm:$0xf]
      %v336 = vld [vmem:[%s236 + $0x20] sm:$0xf]
      %v337 = vld [vmem:[%s236 + $0x24] sm:$0xf]
      %v338 = vld [vmem:[%s236 + $0x28] sm:$0xf]
      %v339 = vld [vmem:[%s236 + $0x2c] sm:$0xf]
      %v340 = vld [vmem:[%s236 + $0x30] sm:$0xf]
      %v341 = vld [vmem:[%s236 + $0x34] sm:$0xf]
      %v342 = vld [vmem:[%s236 + $0x38] sm:$0xf]
      %v343 = vld [vmem:[%s236 + $0x3c] sm:$0xf]
      %v344 = vld [vmem:[%s236 + $0x40] sm:$0xf]
      %v345 = vld [vmem:[%s236 + $0x44] sm:$0xf]
      %v346 = vld [vmem:[%s236 + $0x48] sm:$0xf]
      %v347 = vld [vmem:[%s236 + $0x4c] sm:$0xf]
      %v348 = vld [vmem:[%s236 + $0x50] sm:$0xf]
      %v349 = vld [vmem:[%s236 + $0x54] sm:$0xf]
      %v350 = vld [vmem:[%s236 + $0x58] sm:$0xf]
      %v351 = vld [vmem:[%s236 + $0x5c] sm:$0xf]
      %v352 = vld [vmem:[%s236 + $0x60] sm:$0xf]
      %v353 = vld [vmem:[%s236 + $0x64] sm:$0xf]
      %v354 = vld [vmem:[%s236 + $0x68] sm:$0xf]
      %v355 = vld [vmem:[%s236 + $0x6c] sm:$0xf]
      %v356 = vld [vmem:[%s236 + $0x70] sm:$0xf]
      %v357 = vld [vmem:[%s236 + $0x74] sm:$0xf]
      %v358 = vld [vmem:[%s236 + $0x78] sm:$0xf]
      %v359 = vld [vmem:[%s236 + $0x7c] sm:$0xf]
      %v360 = vld [vmem:[%s245] sm:$0xf]
      %v361 = vld [vmem:[%s245 + $0x4] sm:$0xf]
      %v362 = vld [vmem:[%s245 + $0x8] sm:$0xf]
      %v363 = vld [vmem:[%s245 + $0xc] sm:$0xf]
      %v364 = vld [vmem:[%s245 + $0x10] sm:$0xf]
      %v365 = vld [vmem:[%s245 + $0x14] sm:$0xf]
      %v366 = vld [vmem:[%s245 + $0x18] sm:$0xf]
      %v367 = vld [vmem:[%s245 + $0x1c] sm:$0xf]
      %v368 = vld [vmem:[%s245 + $0x20] sm:$0xf]
      %v369 = vld [vmem:[%s245 + $0x24] sm:$0xf]
      %v370 = vld [vmem:[%s245 + $0x28] sm:$0xf]
      %v371 = vld [vmem:[%s245 + $0x2c] sm:$0xf]
      %v372 = vld [vmem:[%s245 + $0x30] sm:$0xf]
      %v373 = vld [vmem:[%s245 + $0x34] sm:$0xf]
      %v374 = vld [vmem:[%s245 + $0x38] sm:$0xf]
      %v375 = vld [vmem:[%s245 + $0x3c] sm:$0xf]
      %v408 = vunpack.c.l.b16 %v328
      %v409 = vunpack.c.l.b16 %v329
      %v410 = vunpack.c.l.b16 %v330
      %v411 = vunpack.c.l.b16 %v331
      %v412 = vunpack.c.l.b16 %v332
      %v413 = vunpack.c.l.b16 %v333
      %v414 = vunpack.c.l.b16 %v334
      %v415 = vunpack.c.l.b16 %v335
      %v416 = vunpack.c.l.b16 %v336
      %v417 = vunpack.c.l.b16 %v337
      %v418 = vunpack.c.l.b16 %v338
      %v419 = vunpack.c.l.b16 %v339
      %v420 = vunpack.c.l.b16 %v340
      %v421 = vunpack.c.l.b16 %v341
      %v422 = vunpack.c.l.b16 %v342
      %v423 = vunpack.c.l.b16 %v343
      %v424 = vunpack.c.l.b16 %v344
      %v425 = vunpack.c.l.b16 %v345
      %v426 = vunpack.c.l.b16 %v346
      %v427 = vunpack.c.l.b16 %v347
      %v428 = vunpack.c.l.b16 %v348
      %v429 = vunpack.c.l.b16 %v349
      %v430 = vunpack.c.l.b16 %v350
      %v431 = vunpack.c.l.b16 %v351
      %v432 = vunpack.c.l.b16 %v352
      %v433 = vunpack.c.l.b16 %v353
      %v434 = vunpack.c.l.b16 %v354
      %v435 = vunpack.c.l.b16 %v355
      %v436 = vunpack.c.l.b16 %v356
      %v437 = vunpack.c.l.b16 %v357
      %v438 = vunpack.c.l.b16 %v358
      %v439 = vunpack.c.l.b16 %v359
      %v440 = vpack.c.b16 %v409, %v408
      %v441 = vpack.c.b16 %v411, %v410
      %v442 = vpack.c.b16 %v413, %v412
      %v443 = vpack.c.b16 %v415, %v414
      %v444 = vpack.c.b16 %v417, %v416
      %v445 = vpack.c.b16 %v419, %v418
      %v446 = vpack.c.b16 %v421, %v420
      %v447 = vpack.c.b16 %v423, %v422
      %v448 = vpack.c.b16 %v425, %v424
      %v449 = vpack.c.b16 %v427, %v426
      %v450 = vpack.c.b16 %v429, %v428
      %v451 = vpack.c.b16 %v431, %v430
      %v452 = vpack.c.b16 %v433, %v432
      %v453 = vpack.c.b16 %v435, %v434
      %v454 = vpack.c.b16 %v437, %v436
      %v455 = vpack.c.b16 %v439, %v438
      %v488 = vunpack.c.l.b16 %v360
      %v489 = vunpack.c.l.b16 %v361
      %v490 = vunpack.c.l.b16 %v362
      %v491 = vunpack.c.l.b16 %v363
      %v492 = vunpack.c.l.b16 %v364
      %v493 = vunpack.c.l.b16 %v365
      %v494 = vunpack.c.l.b16 %v366
      %v495 = vunpack.c.l.b16 %v367
      %v496 = vunpack.c.l.b16 %v368
      %v497 = vunpack.c.l.b16 %v369
      %v498 = vunpack.c.l.b16 %v370
      %v499 = vunpack.c.l.b16 %v371
      %v500 = vunpack.c.l.b16 %v372
      %v501 = vunpack.c.l.b16 %v373
      %v502 = vunpack.c.l.b16 %v374
      %v503 = vunpack.c.l.b16 %v375
      %v504 = vpack.c.b16 %v489, %v488
      %v505 = vpack.c.b16 %v491, %v490
      %v506 = vpack.c.b16 %v493, %v492
      %v507 = vpack.c.b16 %v495, %v494
      %v508 = vpack.c.b16 %v497, %v496
      %v509 = vpack.c.b16 %v499, %v498
      %v510 = vpack.c.b16 %v501, %v500
      %v511 = vpack.c.b16 %v503, %v502
      %520 = vmatprep.subr.bf16.mxu0 0
      %521 = vmatpush1.bf16.msra.mxu0 %v504
      %522 = vmatprep.subr.bf16.mxu0 0
      %523 = vmatpush1.bf16.msra.mxu0 %v505
      %524 = vmatprep.subr.bf16.mxu0 0
      %525 = vmatpush1.bf16.msra.mxu0 %v506
      %526 = vmatprep.subr.bf16.mxu0 0
      %527 = vmatpush1.bf16.msra.mxu0 %v507
      %528 = vmatprep.subr.bf16.mxu0 0
      %529 = vmatpush1.bf16.msra.mxu0 %v508
      %530 = vmatprep.subr.bf16.mxu0 0
      %531 = vmatpush1.bf16.msra.mxu0 %v509
      %532 = vmatprep.subr.bf16.mxu0 0
      %533 = vmatpush1.bf16.msra.mxu0 %v510
      %534 = vmatprep.subr.bf16.mxu0 0
      %535 = vmatpush1.bf16.msra.mxu0 %v511
      %536 = vmatprep.subr.bf16.mxu0 0
      %537 = vmatpush1.bf16.msra.mxu0 0
      %538 = vmatprep.subr.bf16.mxu0 0
      %539 = vmatpush1.bf16.msra.mxu0 0
      %540 = vmatprep.subr.bf16.mxu0 0
      %541 = vmatpush1.bf16.msra.mxu0 0
      %542 = vmatprep.subr.bf16.mxu0 0
      %543 = vmatpush1.bf16.msra.mxu0 0
      %544 = vmatprep.subr.bf16.mxu0 0
      %545 = vmatpush1.bf16.msra.mxu0 0
      %546 = vmatprep.subr.bf16.mxu0 0
      %547 = vmatpush1.bf16.msra.mxu0 0
      %548 = vmatprep.subr.bf16.mxu0 0
      %549 = vmatpush1.bf16.msra.mxu0 0
      %550 = vmatprep.subr.bf16.mxu0 0
      %551 = vmatpush1.bf16.msra.mxu0 0
      %552 = vmatprep.mubr.bf16.mxu0 0
      %553 = vmatmul.mubr.bf16.gmra.mrb[0].mxu0 %v440
      %v554 = vpop.f32.mrb[0].mxu0
      %v555 = vadd.f32 0.0, %v554
      %v556 = vpop.f32.mrb[0].mxu0
      %v557 = vpop.f32.mrb[0].mxu0
      %v558 = vadd.f32 0.0, %v557
      %v559 = vpop.f32.mrb[0].mxu0
      %560 = vmatprep.mubr.bf16.mxu0 0
      %561 = vmatmul.mubr.bf16.gmra.mrb[0].mxu0 %v441
      %v562 = vpop.f32.mrb[0].mxu0
      %v563 = vadd.f32 0.0, %v562
      %v564 = vpop.f32.mrb[0].mxu0
      %v565 = vpop.f32.mrb[0].mxu0
      %v566 = vadd.f32 0.0, %v565
      %v567 = vpop.f32.mrb[0].mxu0
      %568 = vmatprep.mubr.bf16.mxu0 0
      %569 = vmatmul.mubr.bf16.gmra.mrb[0].mxu0 %v442
      %v570 = vpop.f32.mrb[0].mxu0
      %v571 = vadd.f32 0.0, %v570
      %v572 = vpop.f32.mrb[0].mxu0
      %v573 = vpop.f32.mrb[0].mxu0
      %v574 = vadd.f32 0.0, %v573
      %v575 = vpop.f32.mrb[0].mxu0
      %576 = vmatprep.mubr.bf16.mxu0 0
      %577 = vmatmul.mubr.bf16.gmra.mrb[0].mxu0 %v443
      %v578 = vpop.f32.mrb[0].mxu0
      %v579 = vadd.f32 0.0, %v578
      %v580 = vpop.f32.mrb[0].mxu0
      %v581 = vpop.f32.mrb[0].mxu0
      %v582 = vadd.f32 0.0, %v581
      %v583 = vpop.f32.mrb[0].mxu0
      %584 = vmatprep.mubr.bf16.mxu0 0
      %585 = vmatmul.mubr.bf16.gmra.mrb[0].mxu0 %v444
      %v586 = vpop.f32.mrb[0].mxu0
      %v587 = vadd.f32 0.0, %v586
      %v588 = vpop.f32.mrb[0].mxu0
      %v589 = vpop.f32.mrb[0].mxu0
      %v590 = vadd.f32 0.0, %v589
      %v591 = vpop.f32.mrb[0].mxu0
      %592 = vmatprep.mubr.bf16.mxu0 0
      %593 = vmatmul.mubr.bf16.gmra.mrb[0].mxu0 %v445
      %v594 = vpop.f32.mrb[0].mxu0
      %v595 = vadd.f32 0.0, %v594
      %v596 = vpop.f32.mrb[0].mxu0
      %v597 = vpop.f32.mrb[0].mxu0
      %v598 = vadd.f32 0.0, %v597
      %v599 = vpop.f32.mrb[0].mxu0
      %600 = vmatprep.mubr.bf16.mxu0 0
      %601 = vmatmul.mubr.bf16.gmra.mrb[0].mxu0 %v446
      %v602 = vpop.f32.mrb[0].mxu0
      %v603 = vadd.f32 0.0, %v602
      %v604 = vpop.f32.mrb[0].mxu0
      %v605 = vpop.f32.mrb[0].mxu0
      %v606 = vadd.f32 0.0, %v605
      %v607 = vpop.f32.mrb[0].mxu0
      %608 = vmatprep.mubr.bf16.mxu0 0
      %609 = vmatmul.mubr.bf16.gmra.mrb[0].mxu0 %v447
      %v610 = vpop.f32.mrb[0].mxu0
      %v611 = vadd.f32 0.0, %v610
      %v612 = vpop.f32.mrb[0].mxu0
      %v613 = vpop.f32.mrb[0].mxu0
      %v614 = vadd.f32 0.0, %v613
      %v615 = vpop.f32.mrb[0].mxu0
      %616 = vmatprep.mubr.bf16.mxu0 0
      %617 = vmatmul.mubr.bf16.gmra.mrb[0].mxu0 %v448
      %v618 = vpop.f32.mrb[0].mxu0
      %v619 = vadd.f32 0.0, %v618
      %v620 = vpop.f32.mrb[0].mxu0
      %v621 = vpop.f32.mrb[0].mxu0
      %v622 = vadd.f32 0.0, %v621
      %v623 = vpop.f32.mrb[0].mxu0
      %624 = vmatprep.mubr.bf16.mxu0 0
      %625 = vmatmul.mubr.bf16.gmra.mrb[0].mxu0 %v449
      %v626 = vpop.f32.mrb[0].mxu0
      %v627 = vadd.f32 0.0, %v626
      %v628 = vpop.f32.mrb[0].mxu0
      %v629 = vpop.f32.mrb[0].mxu0
      %v630 = vadd.f32 0.0, %v629
      %v631 = vpop.f32.mrb[0].mxu0
      %632 = vmatprep.mubr.bf16.mxu0 0
      %633 = vmatmul.mubr.bf16.gmra.mrb[0].mxu0 %v450
      %v634 = vpop.f32.mrb[0].mxu0
      %v635 = vadd.f32 0.0, %v634
      %v636 = vpop.f32.mrb[0].mxu0
      %v637 = vpop.f32.mrb[0].mxu0
      %v638 = vadd.f32 0.0, %v637
      %v639 = vpop.f32.mrb[0].mxu0
      %640 = vmatprep.mubr.bf16.mxu0 0
      %641 = vmatmul.mubr.bf16.gmra.mrb[0].mxu0 %v451
      %v642 = vpop.f32.mrb[0].mxu0
      %v643 = vadd.f32 0.0, %v642
      %v644 = vpop.f32.mrb[0].mxu0
      %v645 = vpop.f32.mrb[0].mxu0
      %v646 = vadd.f32 0.0, %v645
      %v647 = vpop.f32.mrb[0].mxu0
      %648 = vmatprep.mubr.bf16.mxu0 0
      %649 = vmatmul.mubr.bf16.gmra.mrb[0].mxu0 %v452
      %v650 = vpop.f32.mrb[0].mxu0
      %v651 = vadd.f32 0.0, %v650
      %v652 = vpop.f32.mrb[0].mxu0
      %v653 = vpop.f32.mrb[0].mxu0
      %v654 = vadd.f32 0.0, %v653
      %v655 = vpop.f32.mrb[0].mxu0
      %656 = vmatprep.mubr.bf16.mxu0 0
      %657 = vmatmul.mubr.bf16.gmra.mrb[0].mxu0 %v453
      %v658 = vpop.f32.mrb[0].mxu0
      %v659 = vadd.f32 0.0, %v658
      %v660 = vpop.f32.mrb[0].mxu0
      %v661 = vpop.f32.mrb[0].mxu0
      %v662 = vadd.f32 0.0, %v661
      %v663 = vpop.f32.mrb[0].mxu0
      %664 = vmatprep.mubr.bf16.mxu0 0
      %665 = vmatmul.mubr.bf16.gmra.mrb[0].mxu0 %v454
      %v666 = vpop.f32.mrb[0].mxu0
      %v667 = vadd.f32 0.0, %v666
      %v668 = vpop.f32.mrb[0].mxu0
      %v669 = vpop.f32.mrb[0].mxu0
      %v670 = vadd.f32 0.0, %v669
      %v671 = vpop.f32.mrb[0].mxu0
      %672 = vmatprep.mubr.bf16.mxu0 0
      %673 = vmatmul.mubr.bf16.gmra.mrb[0].mxu0 %v455
      %v674 = vpop.f32.mrb[0].mxu0
      %v675 = vadd.f32 0.0, %v674
      %v676 = vpop.f32.mrb[0].mxu0
      %v677 = vpop.f32.mrb[0].mxu0
      %v678 = vadd.f32 0.0, %v677
      %v679 = vpop.f32.mrb[0].mxu0
      %680 = vdwg.mxu0
      %v681 = vadd.f32 %v296, %v555
      %v682 = vadd.f32 %v297, %v558
      %v683 = vadd.f32 %v298, %v563
      %v684 = vadd.f32 %v299, %v566
      %v685 = vadd.f32 %v300, %v571
      %v686 = vadd.f32 %v301, %v574
      %v687 = vadd.f32 %v302, %v579
      %v688 = vadd.f32 %v303, %v582
      %v689 = vadd.f32 %v304, %v587
      %v690 = vadd.f32 %v305, %v590
      %v691 = vadd.f32 %v306, %v595
      %v692 = vadd.f32 %v307, %v598
      %v693 = vadd.f32 %v308, %v603
      %v694 = vadd.f32 %v309, %v606
      %v695 = vadd.f32 %v310, %v611
      %v696 = vadd.f32 %v311, %v614
      %v697 = vadd.f32 %v312, %v619
      %v698 = vadd.f32 %v313, %v622
      %v699 = vadd.f32 %v314, %v627
      %v700 = vadd.f32 %v315, %v630
      %v701 = vadd.f32 %v316, %v635
      %v702 = vadd.f32 %v317, %v638
      %v703 = vadd.f32 %v318, %v643
      %v704 = vadd.f32 %v319, %v646
      %v705 = vadd.f32 %v320, %v651
      %v706 = vadd.f32 %v321, %v654
      %v707 = vadd.f32 %v322, %v659
      %v708 = vadd.f32 %v323, %v662
      %v709 = vadd.f32 %v324, %v667
      %v710 = vadd.f32 %v325, %v670
      %v711 = vadd.f32 %v326, %v675
      %v712 = vadd.f32 %v327, %v678
      %713 = vst [vmem:[#allocation2] sm:$0xff] %v681
      %714 = vst [vmem:[#allocation2 + $0x8] sm:$0xff] %v682
      %715 = vst [vmem:[#allocation2 + $0x10] sm:$0xff] %v683
      %716 = vst [vmem:[#allocation2 + $0x18] sm:$0xff] %v684
      %717 = vst [vmem:[#allocation2 + $0x20] sm:$0xff] %v685
      %718 = vst [vmem:[#allocation2 + $0x28] sm:$0xff] %v686
      %719 = vst [vmem:[#allocation2 + $0x30] sm:$0xff] %v687
      %720 = vst [vmem:[#allocation2 + $0x38] sm:$0xff] %v688
      %721 = vst [vmem:[#allocation2 + $0x40] sm:$0xff] %v689
      %722 = vst [vmem:[#allocation2 + $0x48] sm:$0xff] %v690
      %723 = vst [vmem:[#allocation2 + $0x50] sm:$0xff] %v691
      %724 = vst [vmem:[#allocation2 + $0x58] sm:$0xff] %v692
      %725 = vst [vmem:[#allocation2 + $0x60] sm:$0xff] %v693
      %726 = vst [vmem:[#allocation2 + $0x68] sm:$0xff] %v694
      %727 = vst [vmem:[#allocation2 + $0x70] sm:$0xff] %v695
      %728 = vst [vmem:[#allocation2 + $0x78] sm:$0xff] %v696
      %729 = vst [vmem:[#allocation2 + $0x80] sm:$0xff] %v697
      %730 = vst [vmem:[#allocation2 + $0x88] sm:$0xff] %v698
      %731 = vst [vmem:[#allocation2 + $0x90] sm:$0xff] %v699
      %732 = vst [vmem:[#allocation2 + $0x98] sm:$0xff] %v700
      %733 = vst [vmem:[#allocation2 + $0xa0] sm:$0xff] %v701
      %734 = vst [vmem:[#allocation2 + $0xa8] sm:$0xff] %v702
      %735 = vst [vmem:[#allocation2 + $0xb0] sm:$0xff] %v703
      %736 = vst [vmem:[#allocation2 + $0xb8] sm:$0xff] %v704
      %737 = vst [vmem:[#allocation2 + $0xc0] sm:$0xff] %v705
      %738 = vst [vmem:[#allocation2 + $0xc8] sm:$0xff] %v706
      %739 = vst [vmem:[#allocation2 + $0xd0] sm:$0xff] %v707
      %740 = vst [vmem:[#allocation2 + $0xd8] sm:$0xff] %v708
      %741 = vst [vmem:[#allocation2 + $0xe0] sm:$0xff] %v709
      %742 = vst [vmem:[#allocation2 + $0xe8] sm:$0xff] %v710
      %743 = vst [vmem:[#allocation2 + $0xf0] sm:$0xff] %v711
      %744 = vst [vmem:[#allocation2 + $0xf8] sm:$0xff] %v712
      // Predicated region
      $region37: #{discriminator_forward.11} parent=31 // pred_check
        %p745 = pneg %p260
      $region38: #{discriminator_forward.11} parent=31 // pred_check_branch
        %747 = sbr.rel (%p745) target = $region40
      $region39: #{discriminator_forward.11} parent=31 // pred_region
        %v748 = vld [vmem:[#allocation2] sm:$0xff]
        %v749 = vld [vmem:[#allocation2 + $0x8] sm:$0xff]
        %v750 = vld [vmem:[#allocation2 + $0x10] sm:$0xff]
        %v751 = vld [vmem:[#allocation2 + $0x18] sm:$0xff]
        %v752 = vld [vmem:[#allocation2 + $0x20] sm:$0xff]
        %v753 = vld [vmem:[#allocation2 + $0x28] sm:$0xff]
        %v754 = vld [vmem:[#allocation2 + $0x30] sm:$0xff]
        %v755 = vld [vmem:[#allocation2 + $0x38] sm:$0xff]
        %v756 = vld [vmem:[#allocation2 + $0x40] sm:$0xff]
        %v757 = vld [vmem:[#allocation2 + $0x48] sm:$0xff]
        %v758 = vld [vmem:[#allocation2 + $0x50] sm:$0xff]
        %v759 = vld [vmem:[#allocation2 + $0x58] sm:$0xff]
        %v760 = vld [vmem:[#allocation2 + $0x60] sm:$0xff]
        %v761 = vld [vmem:[#allocation2 + $0x68] sm:$0xff]
        %v762 = vld [vmem:[#allocation2 + $0x70] sm:$0xff]
        %v763 = vld [vmem:[#allocation2 + $0x78] sm:$0xff]
        %v764 = vld [vmem:[#allocation2 + $0x80] sm:$0xff]
        %v765 = vld [vmem:[#allocation2 + $0x88] sm:$0xff]
        %v766 = vld [vmem:[#allocation2 + $0x90] sm:$0xff]
        %v767 = vld [vmem:[#allocation2 + $0x98] sm:$0xff]
        %v768 = vld [vmem:[#allocation2 + $0xa0] sm:$0xff]
        %v769 = vld [vmem:[#allocation2 + $0xa8] sm:$0xff]
        %v770 = vld [vmem:[#allocation2 + $0xb0] sm:$0xff]
        %v771 = vld [vmem:[#allocation2 + $0xb8] sm:$0xff]
        %v772 = vld [vmem:[#allocation2 + $0xc0] sm:$0xff]
        %v773 = vld [vmem:[#allocation2 + $0xc8] sm:$0xff]
        %v774 = vld [vmem:[#allocation2 + $0xd0] sm:$0xff]
        %v775 = vld [vmem:[#allocation2 + $0xd8] sm:$0xff]
        %v776 = vld [vmem:[#allocation2 + $0xe0] sm:$0xff]
        %v777 = vld [vmem:[#allocation2 + $0xe8] sm:$0xff]
        %v778 = vld [vmem:[#allocation2 + $0xf0] sm:$0xff]
        %v779 = vld [vmem:[#allocation2 + $0xf8] sm:$0xff]
        %v780 = vld [vmem:[%s249] sm:$0x1]
        %v782 = vlaneseq
        %v783 = vshrl.u32 %v782, 7
        %v784 = vsub.s32 0, %v783
        %v785 = vrot.slane %v780, %v784
        %v787 = vadd.f32 %v748, %v785
        %v788 = vadd.f32 %v749, %v785
        %v789 = vadd.f32 %v750, %v785
        %v790 = vadd.f32 %v751, %v785
        %v791 = vadd.f32 %v752, %v785
        %v792 = vadd.f32 %v753, %v785
        %v793 = vadd.f32 %v754, %v785
        %v794 = vadd.f32 %v755, %v785
        %v795 = vadd.f32 %v756, %v785
        %v796 = vadd.f32 %v757, %v785
        %v797 = vadd.f32 %v758, %v785
        %v798 = vadd.f32 %v759, %v785
        %v799 = vadd.f32 %v760, %v785
        %v800 = vadd.f32 %v761, %v785
        %v801 = vadd.f32 %v762, %v785
        %v802 = vadd.f32 %v763, %v785
        %v803 = vadd.f32 %v764, %v785
        %v804 = vadd.f32 %v765, %v785
        %v805 = vadd.f32 %v766, %v785
        %v806 = vadd.f32 %v767, %v785
        %v807 = vadd.f32 %v768, %v785
        %v808 = vadd.f32 %v769, %v785
        %v809 = vadd.f32 %v770, %v785
        %v810 = vadd.f32 %v771, %v785
        %v811 = vadd.f32 %v772, %v785
        %v812 = vadd.f32 %v773, %v785
        %v813 = vadd.f32 %v774, %v785
        %v814 = vadd.f32 %v775, %v785
        %v815 = vadd.f32 %v776, %v785
        %v816 = vadd.f32 %v777, %v785
        %v817 = vadd.f32 %v778, %v785
        %v818 = vadd.f32 %v779, %v785
        %vm819 = vcmp.ge.f32.partialorder %v787, 0.0
        %vm820 = vcmp.ge.f32.partialorder %v788, 0.0
        %vm821 = vcmp.ge.f32.partialorder %v789, 0.0
        %vm822 = vcmp.ge.f32.partialorder %v790, 0.0
        %vm823 = vcmp.ge.f32.partialorder %v791, 0.0
        %vm824 = vcmp.ge.f32.partialorder %v792, 0.0
        %vm825 = vcmp.ge.f32.partialorder %v793, 0.0
        %vm826 = vcmp.ge.f32.partialorder %v794, 0.0
        %vm827 = vcmp.ge.f32.partialorder %v795, 0.0
        %vm828 = vcmp.ge.f32.partialorder %v796, 0.0
        %vm829 = vcmp.ge.f32.partialorder %v797, 0.0
        %vm830 = vcmp.ge.f32.partialorder %v798, 0.0
        %vm831 = vcmp.ge.f32.partialorder %v799, 0.0
        %vm832 = vcmp.ge.f32.partialorder %v800, 0.0
        %vm833 = vcmp.ge.f32.partialorder %v801, 0.0
        %vm834 = vcmp.ge.f32.partialorder %v802, 0.0
        %vm835 = vcmp.ge.f32.partialorder %v803, 0.0
        %vm836 = vcmp.ge.f32.partialorder %v804, 0.0
        %vm837 = vcmp.ge.f32.partialorder %v805, 0.0
        %vm838 = vcmp.ge.f32.partialorder %v806, 0.0
        %vm839 = vcmp.ge.f32.partialorder %v807, 0.0
        %vm840 = vcmp.ge.f32.partialorder %v808, 0.0
        %vm841 = vcmp.ge.f32.partialorder %v809, 0.0
        %vm842 = vcmp.ge.f32.partialorder %v810, 0.0
        %vm843 = vcmp.ge.f32.partialorder %v811, 0.0
        %vm844 = vcmp.ge.f32.partialorder %v812, 0.0
        %vm845 = vcmp.ge.f32.partialorder %v813, 0.0
        %vm846 = vcmp.ge.f32.partialorder %v814, 0.0
        %vm847 = vcmp.ge.f32.partialorder %v815, 0.0
        %vm848 = vcmp.ge.f32.partialorder %v816, 0.0
        %vm849 = vcmp.ge.f32.partialorder %v817, 0.0
        %vm850 = vcmp.ge.f32.partialorder %v818, 0.0
        %v851 = vmul.f32 %v787, 0.2
        %v852 = vmul.f32 %v788, 0.2
        %v853 = vmul.f32 %v789, 0.2
        %v854 = vmul.f32 %v790, 0.2
        %v855 = vmul.f32 %v791, 0.2
        %v856 = vmul.f32 %v792, 0.2
        %v857 = vmul.f32 %v793, 0.2
        %v858 = vmul.f32 %v794, 0.2
        %v859 = vmul.f32 %v795, 0.2
        %v860 = vmul.f32 %v796, 0.2
        %v861 = vmul.f32 %v797, 0.2
        %v862 = vmul.f32 %v798, 0.2
        %v863 = vmul.f32 %v799, 0.2
        %v864 = vmul.f32 %v800, 0.2
        %v865 = vmul.f32 %v801, 0.2
        %v866 = vmul.f32 %v802, 0.2
        %v867 = vmul.f32 %v803, 0.2
        %v868 = vmul.f32 %v804, 0.2
        %v869 = vmul.f32 %v805, 0.2
        %v870 = vmul.f32 %v806, 0.2
        %v871 = vmul.f32 %v807, 0.2
        %v872 = vmul.f32 %v808, 0.2
        %v873 = vmul.f32 %v809, 0.2
        %v874 = vmul.f32 %v810, 0.2
        %v875 = vmul.f32 %v811, 0.2
        %v876 = vmul.f32 %v812, 0.2
        %v877 = vmul.f32 %v813, 0.2
        %v878 = vmul.f32 %v814, 0.2
        %v879 = vmul.f32 %v815, 0.2
        %v880 = vmul.f32 %v816, 0.2
        %v881 = vmul.f32 %v817, 0.2
        %v882 = vmul.f32 %v818, 0.2
        %v883 = vsel %vm819, %v787, %v851
        %v884 = vsel %vm820, %v788, %v852
        %v885 = vsel %vm821, %v789, %v853
        %v886 = vsel %vm822, %v790, %v854
        %v887 = vsel %vm823, %v791, %v855
        %v888 = vsel %vm824, %v792, %v856
        %v889 = vsel %vm825, %v793, %v857
        %v890 = vsel %vm826, %v794, %v858
        %v891 = vsel %vm827, %v795, %v859
        %v892 = vsel %vm828, %v796, %v860
        %v893 = vsel %vm829, %v797, %v861
        %v894 = vsel %vm830, %v798, %v862
        %v895 = vsel %vm831, %v799, %v863
        %v896 = vsel %vm832, %v800, %v864
        %v897 = vsel %vm833, %v801, %v865
        %v898 = vsel %vm834, %v802, %v866
        %v899 = vsel %vm835, %v803, %v867
        %v900 = vsel %vm836, %v804, %v868
        %v901 = vsel %vm837, %v805, %v869
        %v902 = vsel %vm838, %v806, %v870
        %v903 = vsel %vm839, %v807, %v871
        %v904 = vsel %vm840, %v808, %v872
        %v905 = vsel %vm841, %v809, %v873
        %v906 = vsel %vm842, %v810, %v874
        %v907 = vsel %vm843, %v811, %v875
        %v908 = vsel %vm844, %v812, %v876
        %v909 = vsel %vm845, %v813, %v877
        %v910 = vsel %vm846, %v814, %v878
        %v911 = vsel %vm847, %v815, %v879
        %v912 = vsel %vm848, %v816, %v880
        %v913 = vsel %vm849, %v817, %v881
        %v914 = vsel %vm850, %v818, %v882
        %915 = vst [vmem:[%s257] sm:$0xff] %v883
        %916 = vst [vmem:[%s257 + $0x8] sm:$0xff] %v884
        %917 = vst [vmem:[%s257 + $0x10] sm:$0xff] %v885
        %918 = vst [vmem:[%s257 + $0x18] sm:$0xff] %v886
        %919 = vst [vmem:[%s257 + $0x20] sm:$0xff] %v887
        %920 = vst [vmem:[%s257 + $0x28] sm:$0xff] %v888
        %921 = vst [vmem:[%s257 + $0x30] sm:$0xff] %v889
        %922 = vst [vmem:[%s257 + $0x38] sm:$0xff] %v890
        %923 = vst [vmem:[%s257 + $0x40] sm:$0xff] %v891
        %924 = vst [vmem:[%s257 + $0x48] sm:$0xff] %v892
        %925 = vst [vmem:[%s257 + $0x50] sm:$0xff] %v893
        %926 = vst [vmem:[%s257 + $0x58] sm:$0xff] %v894
        %927 = vst [vmem:[%s257 + $0x60] sm:$0xff] %v895
        %928 = vst [vmem:[%s257 + $0x68] sm:$0xff] %v896
        %929 = vst [vmem:[%s257 + $0x70] sm:$0xff] %v897
        %930 = vst [vmem:[%s257 + $0x78] sm:$0xff] %v898
        %931 = vst [vmem:[%s257 + $0x80] sm:$0xff] %v899
        %932 = vst [vmem:[%s257 + $0x88] sm:$0xff] %v900
        %933 = vst [vmem:[%s257 + $0x90] sm:$0xff] %v901
        %934 = vst [vmem:[%s257 + $0x98] sm:$0xff] %v902
        %935 = vst [vmem:[%s257 + $0xa0] sm:$0xff] %v903
        %936 = vst [vmem:[%s257 + $0xa8] sm:$0xff] %v904
        %937 = vst [vmem:[%s257 + $0xb0] sm:$0xff] %v905
        %938 = vst [vmem:[%s257 + $0xb8] sm:$0xff] %v906
        %939 = vst [vmem:[%s257 + $0xc0] sm:$0xff] %v907
        %940 = vst [vmem:[%s257 + $0xc8] sm:$0xff] %v908
        %941 = vst [vmem:[%s257 + $0xd0] sm:$0xff] %v909
        %942 = vst [vmem:[%s257 + $0xd8] sm:$0xff] %v910
        %943 = vst [vmem:[%s257 + $0xe0] sm:$0xff] %v911
        %944 = vst [vmem:[%s257 + $0xe8] sm:$0xff] %v912
        %945 = vst [vmem:[%s257 + $0xf0] sm:$0xff] %v913
        %946 = vst [vmem:[%s257 + $0xf8] sm:$0xff] %v914
      $region40: #{discriminator_forward.11} parent=31 // pred_fallthru
        _
      %s947 = smul.u32 32, %s19
      %p948 = scmp.lt.s32.totalorder %s947, 63
      %s949 = scalar_select %p948, %s947, 63
      %p950 = scmp.lt.s32.totalorder %s20, 0
      %s951 = scalar_select %p950, %s20, 0
      %s952 = sadd.s32 %s951, %s949
      %s953 = smul.addr %s952, 8
      %s954 = scalar_lea.vmem %s3, %s953
      // Predicated region
      $region41: #{discriminator_forward.11} parent=31 // pred_check
        %p955 = pneg %p135
      $region42: #{discriminator_forward.11} parent=31 // pred_check_branch
        %957 = sbr.rel (%p955) target = $region44
      $region43: #{discriminator_forward.11} parent=31 // pred_region
        %s958 = smul.u32 32, %s19
      $region44: #{discriminator_forward.11} parent=31 // pred_fallthru
        _
    $region32: #{discriminator_forward.11} parent=5 // pred_fallthru
      _
    %p959 = scmp.le.s32.totalorder 2, %s9
    // Predicated region
    $region45: #{discriminator_forward.11} parent=5 // pred_check
      %p960 = pneg %p959
    $region46: #{discriminator_forward.11} parent=5 // pred_check_branch
      %962 = sbr.rel (%p960) target = $region48
    $region47: #{discriminator_forward.11} parent=5 // pred_region
      %s963 = ssub.s32 %s9, 2
      // Predicated region
      $region49: #{discriminator_forward.11} parent=47 // pred_check
        %p964 = pneg %p141
      $region50: #{discriminator_forward.11} parent=47 // pred_check_branch
        %966 = sbr.rel (%p964) target = $region52
      $region51: #{discriminator_forward.11} parent=47 // pred_region
        %s967 = smul.u32 32, %s22
        %p968 = scmp.lt.s32.totalorder %s967, 63
        %s969 = scalar_select %p968, %s967, 63
        %p970 = scmp.lt.s32.totalorder %s23, 0
        %s971 = scalar_select %p970, %s23, 0
        %s972 = sadd.s32 %s971, %s969
        %s973 = smul.addr %s972, 8
        %s974 = scalar_lea.vmem %s3, %s973
      $region52: #{discriminator_forward.11} parent=47 // pred_fallthru
        _
    $region48: #{discriminator_forward.11} parent=5 // pred_fallthru
      _
  $region6: #{discriminator_forward.11} parent=0 // loop_footer
    %s13 = sadd.s32 1, %s9
  $region7: #{discriminator_forward.11} parent=0 // loop_footer_branch
    %8 = sbr.rel target = $region3
  $region8: #{discriminator_forward.11} parent=0 // loop_exit
    _

// kernel: discriminator_forward.13
$region0: #{discriminator_forward.13}
  #allocation0 [shape = 'u32[]', space=smem, size = 0x4, offset = 0x4, fixed_abs, tag = 'smem constant byte address 0x4 - core index']
  #allocation1 [shape = 'u32[144,128]{1,0:T(1,128)}', space=vmem, size = 0x12000, scoped, tag = 'internal scratch']
  %s0 = inlined_call_operand.vmem [shape: f32[2,64,128], index: 0, kind: input, shape index: {}]
  %s1 = inlined_call_operand.vmem [shape: f32[2,1,128], index: 1, kind: output, shape index: {0}]
  %s2 = inlined_call_operand.vmem [shape: f32[2,1,128], index: 2, kind: output, shape index: {1}]
  %3 = xla_tuple %s1, %s2
  %s4 = sld [smem:[#allocation0]]
  $region49: #{discriminator_forward.13} parent=0
    _
  %s6 = ssub.s32 1, %s4
  %s7 = scalar_select 0, %s6, %s4
  loop: start=0, step=1, limit=4
  $region2: #{discriminator_forward.13} parent=0 // loop_pre_header
    _
  $region3: #{discriminator_forward.13} parent=0 // loop_header
    %s9 = sphi 0, %s13
    %p10 = scmp.ge.s32.totalorder %s9, 4
    %s16 = sphi 0, %s28
    %s17 = sphi 0, %s24
    %s18 = sphi 0, %s16
    %s19 = sphi 0, %s17
    %s20 = sphi 0, %s18
    %s21 = sphi 0, %s19
    %s33 = sphi 0, %s35
    %s36 = sphi 0, %s33
    %s37 = sphi 0, %s36
    %s53 = sphi 0, %s37
    %s59 = sphi 0, %s61
    %s62 = sphi 0, %s59
    %s63 = sphi 0, %s62
    %s79 = sphi 0, %s63
    %s85 = sphi 0, %s87
    %s88 = sphi 0, %s85
    %s89 = sphi 0, %s88
    %s105 = sphi 0, %s89
  $region4: #{discriminator_forward.13} parent=0 // loop_header_branch
    %12 = sbr.rel (%p10) target = $region8
  $region5: #{discriminator_forward.13} parent=0 // loop_body
    %s14 = ssub.s32 %s9, 1
    %s15 = ssub.s32 %s9, 2
    %s22 = sadd.s32 1, %s17
    %p23 = scmp.ge.s32.totalorder %s22, 1
    %s24 = scalar_select %p23, 0, %s22
    %s25 = sadd.s32 1, %s16
    %s26 = scalar_select %p23, %s25, %s16
    %p27 = scmp.ge.s32.totalorder %s26, 2
    %s28 = scalar_select %p27, 0, %s26
    %s29 = ssub.s32 %s16, %s28
    %s30 = ssub.s32 %s17, %s24
    %s31 = sor.u32 %s29, %s30
    %p32 = scmp.eq.s32.totalorder %s31, 0
    %s34 = sadd.s32 %s33, 1
    %s35 = scalar_select %p32, %s33, %s34
    %p38 = pneg %p32
    %p39 = scmp.eq.s32.totalorder %s9, 1
    %p40 = por %p38, %p39
    %p41 = scmp.ne.s32.totalorder %s33, %s36
    %p42 = scmp.eq.s32.totalorder %s9, 0
    %p43 = por %p41, %p42
    %p44 = scmp.ne.s32.totalorder %s33, %s36
    %p45 = scmp.eq.s32.totalorder %s14, 1
    %p46 = por %p44, %p45
    %p47 = scmp.ne.s32.totalorder %s36, %s37
    %p48 = scmp.eq.s32.totalorder %s14, 0
    %p49 = por %p47, %p48
    %p50 = scmp.ne.s32.totalorder %s36, %s37
    %p51 = scmp.eq.s32.totalorder %s15, 1
    %p52 = por %p50, %p51
    %p54 = scmp.ne.s32.totalorder %s37, %s53
    %p55 = scmp.eq.s32.totalorder %s15, 0
    %p56 = por %p54, %p55
    %s57 = ssub.s32 %s16, %s28
    %p58 = scmp.eq.s32.totalorder %s57, 0
    %s60 = sadd.s32 %s59, 1
    %s61 = scalar_select %p58, %s59, %s60
    %p64 = pneg %p58
    %p65 = scmp.eq.s32.totalorder %s9, 1
    %p66 = por %p64, %p65
    %p67 = scmp.ne.s32.totalorder %s59, %s62
    %p68 = scmp.eq.s32.totalorder %s9, 0
    %p69 = por %p67, %p68
    %p70 = scmp.ne.s32.totalorder %s59, %s62
    %p71 = scmp.eq.s32.totalorder %s14, 1
    %p72 = por %p70, %p71
    %p73 = scmp.ne.s32.totalorder %s62, %s63
    %p74 = scmp.eq.s32.totalorder %s14, 0
    %p75 = por %p73, %p74
    %p76 = scmp.ne.s32.totalorder %s62, %s63
    %p77 = scmp.eq.s32.totalorder %s15, 1
    %p78 = por %p76, %p77
    %p80 = scmp.ne.s32.totalorder %s63, %s79
    %p81 = scmp.eq.s32.totalorder %s15, 0
    %p82 = por %p80, %p81
    %s83 = ssub.s32 %s16, %s28
    %p84 = scmp.eq.s32.totalorder %s83, 0
    %s86 = sadd.s32 %s85, 1
    %s87 = scalar_select %p84, %s85, %s86
    %p90 = pneg %p84
    %p91 = scmp.eq.s32.totalorder %s9, 1
    %p92 = por %p90, %p91
    %p93 = scmp.ne.s32.totalorder %s85, %s88
    %p94 = scmp.eq.s32.totalorder %s9, 0
    %p95 = por %p93, %p94
    %p96 = scmp.ne.s32.totalorder %s85, %s88
    %p97 = scmp.eq.s32.totalorder %s14, 1
    %p98 = por %p96, %p97
    %p99 = scmp.ne.s32.totalorder %s88, %s89
    %p100 = scmp.eq.s32.totalorder %s14, 0
    %p101 = por %p99, %p100
    %p102 = scmp.ne.s32.totalorder %s88, %s89
    %p103 = scmp.eq.s32.totalorder %s15, 1
    %p104 = por %p102, %p103
    %p106 = scmp.ne.s32.totalorder %s89, %s105
    %p107 = scmp.eq.s32.totalorder %s15, 0
    %p108 = por %p106, %p107
    %p109 = scmp.le.s32.totalorder 1, %s9
    %p110 = scmp.lt.s32.totalorder %s9, 3
    %p111 = pnand %p109, %p110
    %p112 = pneg %p111
    // Predicated region
    $region9: #{discriminator_forward.13} parent=5 // pred_check
      _
    $region10: #{discriminator_forward.13} parent=5 // pred_check_branch
      %114 = sbr.rel (%p111) target = $region12
    $region11: #{discriminator_forward.13} parent=5 // pred_region
      %s115 = ssub.s32 %s9, 1
    $region12: #{discriminator_forward.13} parent=5 // pred_fallthru
      _
    %p116 = scmp.lt.s32.totalorder %s9, 2
    // Predicated region
    $region13: #{discriminator_forward.13} parent=5 // pred_check
      %p117 = pneg %p116
    $region14: #{discriminator_forward.13} parent=5 // pred_check_branch
      %119 = sbr.rel (%p117) target = $region16
    $region15: #{discriminator_forward.13} parent=5 // pred_region
      // Predicated region
      $region17: #{discriminator_forward.13} parent=15 // pred_check
        %p120 = pneg %p43
      $region18: #{discriminator_forward.13} parent=15 // pred_check_branch
        %122 = sbr.rel (%p120) target = $region20
      $region19: #{discriminator_forward.13} parent=15 // pred_region
        %s123 = smul.u32 8, %s17
        %p124 = scmp.lt.s32.totalorder %s16, 1
        %s125 = scalar_select %p124, %s16, 1
        %p126 = scmp.lt.s32.totalorder %s123, 7
        %s127 = scalar_select %p126, %s123, 7
        %s128 = smul.addr %s125, 8
        %s129 = sadd.s32 %s127, %s128
        %s130 = smul.addr %s129, 8
        %s131 = scalar_lea.vmem %s0, %s130
        %s132 = smul.u32 8, %s17
      $region20: #{discriminator_forward.13} parent=15 // pred_fallthru
        _
    $region16: #{discriminator_forward.13} parent=5 // pred_fallthru
      _
    %p133 = scmp.le.s32.totalorder 1, %s9
    %p134 = scmp.lt.s32.totalorder %s9, 3
    %p135 = pnand %p133, %p134
    %p136 = pneg %p135
    // Predicated region
    $region21: #{discriminator_forward.13} parent=5 // pred_check
      _
    $region22: #{discriminator_forward.13} parent=5 // pred_check_branch
      %138 = sbr.rel (%p135) target = $region24
    $region23: #{discriminator_forward.13} parent=5 // pred_region
      %s139 = ssub.s32 %s9, 1
      %s140 = smul.u32 8, %s19
      %p141 = scmp.lt.s32.totalorder %s18, 1
      %s142 = scalar_select %p141, %s18, 1
      %p143 = scmp.lt.s32.totalorder %s140, 7
      %s144 = scalar_select %p143, %s140, 7
      %s145 = smul.addr %s142, 8
      %s146 = sadd.s32 %s144, %s145
      %s147 = smul.addr %s146, 8
      %s148 = scalar_lea.vmem %s0, %s147
      %p149 = pneg %p49
      %p150 = pneg %p46
      %p151 = pneg %p75
      %p152 = pneg %p72
      %p153 = scmp.lt.s32.totalorder %s18, 1
      %s154 = scalar_select %p153, %s18, 1
      %s155 = scalar_lea.vmem %s1, %s154
      %p156 = pneg %p101
      %p157 = pneg %p98
      %p158 = scmp.lt.s32.totalorder %s18, 1
      %s159 = scalar_select %p158, %s18, 1
      %s160 = scalar_lea.vmem %s2, %s159
      %s161 = smul.u32 8, %s19
      %p162 = scmp.lt.s32.totalorder %s18, 1
      %s163 = scalar_select %p162, %s18, 1
      %p164 = scmp.lt.s32.totalorder %s161, 7
      %s165 = scalar_select %p164, %s161, 7
      %s166 = smul.addr %s163, 8
      %s167 = sadd.s32 %s165, %s166
      %s168 = smul.addr %s167, 8
      %s169 = scalar_lea.vmem %s0, %s168
      %s170 = smul.u32 8, %s19
      %p171 = scmp.lt.s32.totalorder %s18, 1
      %s172 = scalar_select %p171, %s18, 1
      %s173 = scalar_lea.vmem %s1, %s172
      %p174 = scmp.lt.s32.totalorder %s18, 1
      %s175 = scalar_select %p174, %s18, 1
      %s176 = scalar_lea.vmem %s2, %s175
      %p177 = scmp.eq.s32.totalorder %s19, 0
      // Predicated region
      $region25: #{discriminator_forward.13} parent=23 // pred_check
        %p178 = pneg %p177
      $region26: #{discriminator_forward.13} parent=23 // pred_check_branch
        %180 = sbr.rel (%p178) target = $region28
      $region27: #{discriminator_forward.13} parent=23 // pred_region
        %181 = vst [vmem:[%s173] sm:$0x1] 0.0
        %182 = vst [vmem:[%s176] sm:$0x1] 0.0
      $region28: #{discriminator_forward.13} parent=23 // pred_fallthru
        _
      %v183 = vld [vmem:[%s169] sm:$0xff]
      %v184 = vld [vmem:[%s169 + $0x8] sm:$0xff]
      %v185 = vld [vmem:[%s169 + $0x10] sm:$0xff]
      %v186 = vld [vmem:[%s169 + $0x18] sm:$0xff]
      %v187 = vld [vmem:[%s169 + $0x20] sm:$0xff]
      %v188 = vld [vmem:[%s169 + $0x28] sm:$0xff]
      %v189 = vld [vmem:[%s169 + $0x30] sm:$0xff]
      %v190 = vld [vmem:[%s169 + $0x38] sm:$0xff]
      %v191 = vld [vmem:[%s173] sm:$0x1]
      %v192 = vadd.f32 %v183, %v184
      %v193 = vadd.f32 %v192, %v185
      %v194 = vadd.f32 %v193, %v186
      %v195 = vadd.f32 %v194, %v187
      %v196 = vadd.f32 %v195, %v188
      %v197 = vadd.f32 %v196, %v189
      %v198 = vadd.f32 %v197, %v190
      %v199 = vrot.slane %v198, 4
      %v200 = vadd.f32 %v198, %v199
      %v201 = vrot.slane %v200, 2
      %v202 = vadd.f32 %v200, %v201
      %v203 = vrot.slane %v202, 1
      %v204 = vadd.f32 %v202, %v203
      %v205 = vadd.f32 %v191, %v204
      %206 = vst [vmem:[%s173] sm:$0x1] %v205
      %v207 = vld [vmem:[%s176] sm:$0x1]
      %v208 = vmul.f32 %v183, %v183
      %v209 = vmul.f32 %v184, %v184
      %v210 = vmul.f32 %v185, %v185
      %v211 = vmul.f32 %v186, %v186
      %v212 = vmul.f32 %v187, %v187
      %v213 = vmul.f32 %v188, %v188
      %v214 = vmul.f32 %v189, %v189
      %v215 = vmul.f32 %v190, %v190
      %v216 = vadd.f32 %v208, %v209
      %v217 = vadd.f32 %v216, %v210
      %v218 = vadd.f32 %v217, %v211
      %v219 = vadd.f32 %v218, %v212
      %v220 = vadd.f32 %v219, %v213
      %v221 = vadd.f32 %v220, %v214
      %v222 = vadd.f32 %v221, %v215
      %v223 = vrot.slane %v222, 4
      %v224 = vadd.f32 %v222, %v223
      %v225 = vrot.slane %v224, 2
      %v226 = vadd.f32 %v224, %v225
      %v227 = vrot.slane %v226, 1
      %v228 = vadd.f32 %v226, %v227
      %v229 = vadd.f32 %v207, %v228
      %230 = vst [vmem:[%s176] sm:$0x1] %v229
      %p231 = scmp.lt.s32.totalorder %s18, 1
      %s232 = scalar_select %p231, %s18, 1
      %s233 = scalar_lea.vmem %s1, %s232
      %p234 = scmp.lt.s32.totalorder %s18, 1
      %s235 = scalar_select %p234, %s18, 1
      %s236 = scalar_lea.vmem %s2, %s235
      // Predicated region
      $region29: #{discriminator_forward.13} parent=23 // pred_check
        %p237 = pneg %p72
      $region30: #{discriminator_forward.13} parent=23 // pred_check_branch
        %239 = sbr.rel (%p237) target = $region32
      $region31: #{discriminator_forward.13} parent=23 // pred_region
        _
      $region32: #{discriminator_forward.13} parent=23 // pred_fallthru
        _
      // Predicated region
      $region33: #{discriminator_forward.13} parent=23 // pred_check
        %p240 = pneg %p98
      $region34: #{discriminator_forward.13} parent=23 // pred_check_branch
        %242 = sbr.rel (%p240) target = $region36
      $region35: #{discriminator_forward.13} parent=23 // pred_region
        _
      $region36: #{discriminator_forward.13} parent=23 // pred_fallthru
        _
    $region24: #{discriminator_forward.13} parent=5 // pred_fallthru
      _
    %p243 = scmp.le.s32.totalorder 2, %s9
    // Predicated region
    $region37: #{discriminator_forward.13} parent=5 // pred_check
      %p244 = pneg %p243
    $region38: #{discriminator_forward.13} parent=5 // pred_check_branch
      %246 = sbr.rel (%p244) target = $region40
    $region39: #{discriminator_forward.13} parent=5 // pred_region
      %s247 = ssub.s32 %s9, 2
      // Predicated region
      $region41: #{discriminator_forward.13} parent=39 // pred_check
        %p248 = pneg %p78
      $region42: #{discriminator_forward.13} parent=39 // pred_check_branch
        %250 = sbr.rel (%p248) target = $region44
      $region43: #{discriminator_forward.13} parent=39 // pred_region
        %p251 = scmp.lt.s32.totalorder %s20, 1
        %s252 = scalar_select %p251, %s20, 1
        %s253 = scalar_lea.vmem %s1, %s252
      $region44: #{discriminator_forward.13} parent=39 // pred_fallthru
        _
      // Predicated region
      $region45: #{discriminator_forward.13} parent=39 // pred_check
        %p254 = pneg %p104
      $region46: #{discriminator_forward.13} parent=39 // pred_check_branch
        %256 = sbr.rel (%p254) target = $region48
      $region47: #{discriminator_forward.13} parent=39 // pred_region
        %p257 = scmp.lt.s32.totalorder %s20, 1
        %s258 = scalar_select %p257, %s20, 1
        %s259 = scalar_lea.vmem %s2, %s258
      $region48: #{discriminator_forward.13} parent=39 // pred_fallthru
        _
    $region40: #{discriminator_forward.13} parent=5 // pred_fallthru
      _
  $region6: #{discriminator_forward.13} parent=0 // loop_footer
    %s13 = sadd.s32 1, %s9
  $region7: #{discriminator_forward.13} parent=0 // loop_footer_branch
    %8 = sbr.rel target = $region3
  $region8: #{discriminator_forward.13} parent=0 // loop_exit
    _

// kernel: discriminator_forward.12
$region0: #{discriminator_forward.12}
  #allocation0 [shape = 'u32[]', space=smem, size = 0x4, offset = 0x4, fixed_abs, tag = 'smem constant byte address 0x4 - core index']
  #allocation1 [shape = 'u32[144,128]{1,0:T(1,128)}', space=vmem, size = 0x12000, scoped, tag = 'internal scratch']
  #allocation2 [shape = 'f32[128,128]{1,0:T(8,128)}', space=vmem, size = 0x10000, scoped, tag = 'scratch operand']
  %s0 = inlined_call_operand.vmem [shape: bf16[128,1024], index: 0, kind: input, shape index: {}]
  %s1 = inlined_call_operand.vmem [shape: bf16[1024,128], index: 1, kind: input, shape index: {}]
  %s2 = inlined_call_operand.vmem [shape: f32[1,128], index: 2, kind: input, shape index: {}]
  %s3 = inlined_call_operand.vmem [shape: f32[128,128], index: 3, kind: output, shape index: {}]
  %s4 = sld [smem:[#allocation0]]
  $region76: #{discriminator_forward.12} parent=0
    _
  %s6 = ssub.s32 1, %s4
  %s7 = scalar_select 0, %s6, %s4
  $region1: #{discriminator_forward.12} parent=0
    #allocation3 [shape = 'u8[262144]{0}', space=vmem, size = 0x40000, scoped, tag = 'input window, operand 0']
    loop: start=0, step=1, limit=4
    $region2: #{discriminator_forward.12} parent=1 // loop_pre_header
      _
    $region3: #{discriminator_forward.12} parent=1 // loop_header
      %s9 = sphi 0, %s13
      %p10 = scmp.ge.s32.totalorder %s9, 4
      %s16 = sphi 0, %s35
      %s17 = sphi 0, %s31
      %s18 = sphi 0, %s27
      %s19 = sphi 0, %s16
      %s20 = sphi 0, %s17
      %s21 = sphi 0, %s18
      %s22 = sphi 0, %s19
      %s23 = sphi 0, %s20
      %s24 = sphi 0, %s21
      %s40 = sphi 0, %s42
      %s43 = sphi 0, %s40
      %s44 = sphi 0, %s43
      %s60 = sphi 0, %s44
      %s68 = sphi 0, %s70
      %s71 = sphi 0, %s68
      %s72 = sphi 0, %s71
      %s88 = sphi 0, %s72
      %s94 = sphi 0, %s96
      %s97 = sphi 0, %s94
      %s98 = sphi 0, %s97
      %s114 = sphi 0, %s98
      %s122 = sphi 0, %s124
      %s125 = sphi 0, %s122
      %s126 = sphi 0, %s125
      %s142 = sphi 0, %s126
    $region4: #{discriminator_forward.12} parent=1 // loop_header_branch
      %12 = sbr.rel (%p10) target = $region8
    $region5: #{discriminator_forward.12} parent=1 // loop_body
      %s14 = ssub.s32 %s9, 1
      %s15 = ssub.s32 %s9, 2
      %s25 = sadd.s32 1, %s18
      %p26 = scmp.ge.s32.totalorder %s25, 2
      %s27 = scalar_select %p26, 0, %s25
      %s28 = sadd.s32 1, %s17
      %s29 = scalar_select %p26, %s28, %s17
      %p30 = scmp.ge.s32.totalorder %s29, 1
      %s31 = scalar_select %p30, 0, %s29
      %s32 = sadd.s32 1, %s16
      %s33 = scalar_select %p30, %s32, %s16
      %p34 = scmp.ge.s32.totalorder %s33, 1
      %s35 = scalar_select %p34, 0, %s33
      %s36 = ssub.s32 %s16, %s35
      %s37 = ssub.s32 %s18, %s27
      %s38 = sor.u32 %s36, %s37
      %p39 = scmp.eq.s32.totalorder %s38, 0
      %s41 = sadd.s32 %s40, 1
      %s42 = scalar_select %p39, %s40, %s41
      %p45 = pneg %p39
      %p46 = scmp.eq.s32.totalorder %s9, 1
      %p47 = por %p45, %p46
      %p48 = scmp.ne.s32.totalorder %s40, %s43
      %p49 = scmp.eq.s32.totalorder %s9, 0
      %p50 = por %p48, %p49
      %p51 = scmp.ne.s32.totalorder %s40, %s43
      %p52 = scmp.eq.s32.totalorder %s14, 1
      %p53 = por %p51, %p52
      %p54 = scmp.ne.s32.totalorder %s43, %s44
      %p55 = scmp.eq.s32.totalorder %s14, 0
      %p56 = por %p54, %p55
      %p57 = scmp.ne.s32.totalorder %s43, %s44
      %p58 = scmp.eq.s32.totalorder %s15, 1
      %p59 = por %p57, %p58
      %p61 = scmp.ne.s32.totalorder %s44, %s60
      %p62 = scmp.eq.s32.totalorder %s15, 0
      %p63 = por %p61, %p62
      %s64 = ssub.s32 %s18, %s27
      %s65 = ssub.s32 %s17, %s31
      %s66 = sor.u32 %s64, %s65
      %p67 = scmp.eq.s32.totalorder %s66, 0
      %s69 = sadd.s32 %s68, 1
      %s70 = scalar_select %p67, %s68, %s69
      %p73 = pneg %p67
      %p74 = scmp.eq.s32.totalorder %s9, 1
      %p75 = por %p73, %p74
      %p76 = scmp.ne.s32.totalorder %s68, %s71
      %p77 = scmp.eq.s32.totalorder %s9, 0
      %p78 = por %p76, %p77
      %p79 = scmp.ne.s32.totalorder %s68, %s71
      %p80 = scmp.eq.s32.totalorder %s14, 1
      %p81 = por %p79, %p80
      %p82 = scmp.ne.s32.totalorder %s71, %s72
      %p83 = scmp.eq.s32.totalorder %s14, 0
      %p84 = por %p82, %p83
      %p85 = scmp.ne.s32.totalorder %s71, %s72
      %p86 = scmp.eq.s32.totalorder %s15, 1
      %p87 = por %p85, %p86
      %p89 = scmp.ne.s32.totalorder %s72, %s88
      %p90 = scmp.eq.s32.totalorder %s15, 0
      %p91 = por %p89, %p90
      %s92 = ssub.s32 %s17, %s31
      %p93 = scmp.eq.s32.totalorder %s92, 0
      %s95 = sadd.s32 %s94, 1
      %s96 = scalar_select %p93, %s94, %s95
      %p99 = pneg %p93
      %p100 = scmp.eq.s32.totalorder %s9, 1
      %p101 = por %p99, %p100
      %p102 = scmp.ne.s32.totalorder %s94, %s97
      %p103 = scmp.eq.s32.totalorder %s9, 0
      %p104 = por %p102, %p103
      %p105 = scmp.ne.s32.totalorder %s94, %s97
      %p106 = scmp.eq.s32.totalorder %s14, 1
      %p107 = por %p105, %p106
      %p108 = scmp.ne.s32.totalorder %s97, %s98
      %p109 = scmp.eq.s32.totalorder %s14, 0
      %p110 = por %p108, %p109
      %p111 = scmp.ne.s32.totalorder %s97, %s98
      %p112 = scmp.eq.s32.totalorder %s15, 1
      %p113 = por %p111, %p112
      %p115 = scmp.ne.s32.totalorder %s98, %s114
      %p116 = scmp.eq.s32.totalorder %s15, 0
      %p117 = por %p115, %p116
      %s118 = ssub.s32 %s16, %s35
      %s119 = ssub.s32 %s17, %s31
      %s120 = sor.u32 %s118, %s119
      %p121 = scmp.eq.s32.totalorder %s120, 0
      %s123 = sadd.s32 %s122, 1
      %s124 = scalar_select %p121, %s122, %s123
      %p127 = pneg %p121
      %p128 = scmp.eq.s32.totalorder %s9, 1
      %p129 = por %p127, %p128
      %p130 = scmp.ne.s32.totalorder %s122, %s125
      %p131 = scmp.eq.s32.totalorder %s9, 0
      %p132 = por %p130, %p131
      %p133 = scmp.ne.s32.totalorder %s122, %s125
      %p134 = scmp.eq.s32.totalorder %s14, 1
      %p135 = por %p133, %p134
      %p136 = scmp.ne.s32.totalorder %s125, %s126
      %p137 = scmp.eq.s32.totalorder %s14, 0
      %p138 = por %p136, %p137
      %p139 = scmp.ne.s32.totalorder %s125, %s126
      %p140 = scmp.eq.s32.totalorder %s15, 1
      %p141 = por %p139, %p140
      %p143 = scmp.ne.s32.totalorder %s126, %s142
      %p144 = scmp.eq.s32.totalorder %s15, 0
      %p145 = por %p143, %p144
      %p146 = scmp.le.s32.totalorder 1, %s9
      %p147 = scmp.lt.s32.totalorder %s9, 3
      %p148 = pnand %p146, %p147
      %p149 = pneg %p148
      // Predicated region
      $region9: #{discriminator_forward.12} parent=5 // pred_check
        _
      $region10: #{discriminator_forward.12} parent=5 // pred_check_branch
        %151 = sbr.rel (%p148) target = $region12
      $region11: #{discriminator_forward.12} parent=5 // pred_region
        %s152 = ssub.s32 %s9, 1
        // Predicated region
        $region13: #{discriminator_forward.12} parent=11 // pred_check
          %p153 = pneg %p110
        $region14: #{discriminator_forward.12} parent=11 // pred_check_branch
          %155 = sbr.rel (%p153) target = $region16
        $region15: #{discriminator_forward.12} parent=11 // pred_region
          %p156 = scmp.lt.s32.totalorder %s20, 0
          %s157 = scalar_select %p156, %s20, 0
          %s158 = scalar_lea.vmem %s2, %s157
        $region16: #{discriminator_forward.12} parent=11 // pred_fallthru
          _
      $region12: #{discriminator_forward.12} parent=5 // pred_fallthru
        _
      %p159 = scmp.lt.s32.totalorder %s9, 2
      // Predicated region
      $region17: #{discriminator_forward.12} parent=5 // pred_check
        %p160 = pneg %p159
      $region18: #{discriminator_forward.12} parent=5 // pred_check_branch
        %162 = sbr.rel (%p160) target = $region20
      $region19: #{discriminator_forward.12} parent=5 // pred_region
        // Predicated region
        $region21: #{discriminator_forward.12} parent=19 // pred_check
          %p163 = pneg %p50
        $region22: #{discriminator_forward.12} parent=19 // pred_check_branch
          %165 = sbr.rel (%p163) target = $region24
        $region23: #{discriminator_forward.12} parent=19 // pred_region
          %s166 = sand.u32 %s40, 1
          %s167 = sand.u32 %s40, 1
          %s168 = smul.addr %s167, 256
          %s169 = scalar_lea.vmem [#allocation3], %s168
          %s170 = smul.u32 16, %s16
          %s171 = smul.u32 4, %s18
          %s172 = smul.addr %s170, 8
          %s173 = sadd.s32 %s171, %s172
          %s174 = smul.addr %s173, 4
          %s175 = scalar_lea.vmem %s0, %s174
          // Predicated region
          $region25: #{discriminator_forward.12} parent=23 // pred_check
            _
          $region26: #{discriminator_forward.12} parent=23 // pred_check_branch
            %177 = sbr.rel (0) target = $region28
          $region27: #{discriminator_forward.12} parent=23 // pred_region
            // Predicated region
            $region29: #{discriminator_forward.12} parent=27 // pred_check
              _
            $region30: #{discriminator_forward.12} parent=27 // pred_check_branch
              %179 = sbr.rel (0) target = $region32
            $region31: #{discriminator_forward.12} parent=27 // pred_region
              loop: start=0, step=1, limit=1
              $region33: #{discriminator_forward.12} parent=31 // loop_pre_header
                _
              $region34: #{discriminator_forward.12} parent=31 // loop_header
                %s181 = sphi 0, %s185
                %p182 = scmp.ge.s32.totalorder %s181, 1
                %s186 = sphi %s175, %s175
                %s187 = sphi %s169, %s169
              $region35: #{discriminator_forward.12} parent=31 // loop_header_branch
                %184 = sbr.rel (%p182) target = $region39
              $region36: #{discriminator_forward.12} parent=31 // loop_body
                %v188 = vld [vmem:[%s186] sm:$0xff]
                %189 = vst [vmem:[%s187] sm:$0xff] %v188
                %v190 = vld [vmem:[%s186 + $0x8] sm:$0xff]
                %191 = vst [vmem:[%s187 + $0x8] sm:$0xff] %v190
                %v192 = vld [vmem:[%s186 + $0x20] sm:$0xff]
                %193 = vst [vmem:[%s187 + $0x10] sm:$0xff] %v192
                %v194 = vld [vmem:[%s186 + $0x28] sm:$0xff]
                %195 = vst [vmem:[%s187 + $0x18] sm:$0xff] %v194
                %v196 = vld [vmem:[%s186 + $0x40] sm:$0xff]
                %197 = vst [vmem:[%s187 + $0x20] sm:$0xff] %v196
                %v198 = vld [vmem:[%s186 + $0x48] sm:$0xff]
                %199 = vst [vmem:[%s187 + $0x28] sm:$0xff] %v198
                %v200 = vld [vmem:[%s186 + $0x60] sm:$0xff]
                %201 = vst [vmem:[%s187 + $0x30] sm:$0xff] %v200
                %v202 = vld [vmem:[%s186 + $0x68] sm:$0xff]
                %203 = vst [vmem:[%s187 + $0x38] sm:$0xff] %v202
                %v204 = vld [vmem:[%s186 + $0x80] sm:$0xff]
                %205 = vst [vmem:[%s187 + $0x40] sm:$0xff] %v204
                %v206 = vld [vmem:[%s186 + $0x88] sm:$0xff]
                %207 = vst [vmem:[%s187 + $0x48] sm:$0xff] %v206
                %v208 = vld [vmem:[%s186 + $0xa0] sm:$0xff]
                %209 = vst [vmem:[%s187 + $0x50] sm:$0xff] %v208
                %v210 = vld [vmem:[%s186 + $0xa8] sm:$0xff]
                %211 = vst [vmem:[%s187 + $0x58] sm:$0xff] %v210
                %v212 = vld [vmem:[%s186 + $0xc0] sm:$0xff]
                %213 = vst [vmem:[%s187 + $0x60] sm:$0xff] %v212
                %v214 = vld [vmem:[%s186 + $0xc8] sm:$0xff]
                %215 = vst [vmem:[%s187 + $0x68] sm:$0xff] %v214
                %v216 = vld [vmem:[%s186 + $0xe0] sm:$0xff]
                %217 = vst [vmem:[%s187 + $0x70] sm:$0xff] %v216
                %v218 = vld [vmem:[%s186 + $0xe8] sm:$0xff]
                %219 = vst [vmem:[%s187 + $0x78] sm:$0xff] %v218
                %v220 = vld [vmem:[%s186 + $0x100] sm:$0xff]
                %221 = vst [vmem:[%s187 + $0x80] sm:$0xff] %v220
                %v222 = vld [vmem:[%s186 + $0x108] sm:$0xff]
                %223 = vst [vmem:[%s187 + $0x88] sm:$0xff] %v222
                %v224 = vld [vmem:[%s186 + $0x120] sm:$0xff]
                %225 = vst [vmem:[%s187 + $0x90] sm:$0xff] %v224
                %v226 = vld [vmem:[%s186 + $0x128] sm:$0xff]
                %227 = vst [vmem:[%s187 + $0x98] sm:$0xff] %v226
                %v228 = vld [vmem:[%s186 + $0x140] sm:$0xff]
                %229 = vst [vmem:[%s187 + $0xa0] sm:$0xff] %v228
                %v230 = vld [vmem:[%s186 + $0x148] sm:$0xff]
                %231 = vst [vmem:[%s187 + $0xa8] sm:$0xff] %v230
                %v232 = vld [vmem:[%s186 + $0x160] sm:$0xff]
                %233 = vst [vmem:[%s187 + $0xb0] sm:$0xff] %v232
                %v234 = vld [vmem:[%s186 + $0x168] sm:$0xff]
                %235 = vst [vmem:[%s187 + $0xb8] sm:$0xff] %v234
                %v236 = vld [vmem:[%s186 + $0x180] sm:$0xff]
                %237 = vst [vmem:[%s187 + $0xc0] sm:$0xff] %v236
                %v238 = vld [vmem:[%s186 + $0x188] sm:$0xff]
                %239 = vst [vmem:[%s187 + $0xc8] sm:$0xff] %v238
                %v240 = vld [vmem:[%s186 + $0x1a0] sm:$0xff]
                %241 = vst [vmem:[%s187 + $0xd0] sm:$0xff] %v240
                %v242 = vld [vmem:[%s186 + $0x1a8] sm:$0xff]
                %243 = vst [vmem:[%s187 + $0xd8] sm:$0xff] %v242
                %v244 = vld [vmem:[%s186 + $0x1c0] sm:$0xff]
                %245 = vst [vmem:[%s187 + $0xe0] sm:$0xff] %v244
                %v246 = vld [vmem:[%s186 + $0x1c8] sm:$0xff]
                %247 = vst [vmem:[%s187 + $0xe8] sm:$0xff] %v246
                %v248 = vld [vmem:[%s186 + $0x1e0] sm:$0xff]
                %249 = vst [vmem:[%s187 + $0xf0] sm:$0xff] %v248
                %v250 = vld [vmem:[%s186 + $0x1e8] sm:$0xff]
                %251 = vst [vmem:[%s187 + $0xf8] sm:$0xff] %v250
              $region37: #{discriminator_forward.12} parent=31 // loop_footer
                %s185 = sadd.s32 1, %s181
              $region38: #{discriminator_forward.12} parent=31 // loop_footer_branch
                %180 = sbr.rel target = $region34
              $region39: #{discriminator_forward.12} parent=31 // loop_exit
                _
            $region32: #{discriminator_forward.12} parent=27 // pred_fallthru
              _
            // Predicated region
            $region40: #{discriminator_forward.12} parent=27 // pred_check
              _
            $region41: #{discriminator_forward.12} parent=27 // pred_check_branch
              %253 = sbr.rel target = $region43
            $region42: #{discriminator_forward.12} parent=27 // pred_region
              _
            $region43: #{discriminator_forward.12} parent=27 // pred_fallthru
              _
          $region28: #{discriminator_forward.12} parent=23 // pred_fallthru
            _
          %254 = vnop
        $region24: #{discriminator_forward.12} parent=19 // pred_fallthru
          _
        // Predicated region
        $region44: #{discriminator_forward.12} parent=19 // pred_check
          %p255 = pneg %p78
        $region45: #{discriminator_forward.12} parent=19 // pred_check_branch
          %257 = sbr.rel (%p255) target = $region47
        $region46: #{discriminator_forward.12} parent=19 // pred_region
          %s258 = smul.u32 64, %s18
          %p259 = scmp.lt.s32.totalorder %s258, 127
          %s260 = scalar_select %p259, %s258, 127
          %p261 = scmp.lt.s32.totalorder %s17, 0
          %s262 = scalar_select %p261, %s17, 0
          %s263 = sadd.s32 %s262, %s260
          %s264 = smul.addr %s263, 4
          %s265 = scalar_lea.vmem %s1, %s264
          %s266 = smul.u32 64, %s18
        $region47: #{discriminator_forward.12} parent=19 // pred_fallthru
          _
      $region20: #{discriminator_forward.12} parent=5 // pred_fallthru
        _
      %p267 = scmp.le.s32.totalorder 1, %s9
      %p268 = scmp.lt.s32.totalorder %s9, 3
      %p269 = pnand %p267, %p268
      %p270 = pneg %p269
      // Predicated region
      $region48: #{discriminator_forward.12} parent=5 // pred_check
        _
      $region49: #{discriminator_forward.12} parent=5 // pred_check_branch
        %272 = sbr.rel (%p269) target = $region51
      $region50: #{discriminator_forward.12} parent=5 // pred_region
        %s273 = ssub.s32 %s9, 1
        %s274 = sand.u32 %s43, 1
        %s275 = sand.u32 %s43, 1
        %s276 = smul.addr %s275, 256
        %s277 = scalar_lea.vmem [#allocation3], %s276
        // Predicated region
        $region52: #{discriminator_forward.12} parent=50 // pred_check
          %p278 = pneg %p56
        $region53: #{discriminator_forward.12} parent=50 // pred_check_branch
          %280 = sbr.rel (%p278) target = $region55
        $region54: #{discriminator_forward.12} parent=50 // pred_region
          _
        $region55: #{discriminator_forward.12} parent=50 // pred_fallthru
          _
        %s281 = sand.u32 %s43, 1
        %s282 = sand.u32 %s43, 1
        %s283 = smul.addr %s282, 256
        %s284 = scalar_lea.vmem [#allocation3], %s283
        %p285 = pneg %p56
        %p286 = pneg %p53
        %s287 = smul.u32 64, %s21
        %p288 = scmp.lt.s32.totalorder %s287, 127
        %s289 = scalar_select %p288, %s287, 127
        %p290 = scmp.lt.s32.totalorder %s20, 0
        %s291 = scalar_select %p290, %s20, 0
        %s292 = sadd.s32 %s291, %s289
        %s293 = smul.addr %s292, 4
        %s294 = scalar_lea.vmem %s1, %s293
        %p295 = pneg %p84
        %p296 = pneg %p81
        %p297 = scmp.lt.s32.totalorder %s20, 0
        %s298 = scalar_select %p297, %s20, 0
        %s299 = scalar_lea.vmem %s2, %s298
        %p300 = pneg %p110
        %p301 = pneg %p107
        %p302 = pneg %p138
        %p303 = pneg %p135
        %s304 = smul.u32 16, %s19
        %p305 = scmp.lt.s32.totalorder %s304, 15
        %s306 = scalar_select %p305, %s304, 15
        %p307 = scmp.lt.s32.totalorder %s20, 0
        %s308 = scalar_select %p307, %s20, 0
        %s309 = sadd.s32 %s308, %s306
        %s310 = smul.addr %s309, 8
        %s311 = scalar_lea.vmem %s3, %s310
        %s312 = smul.u32 16, %s19
        %s313 = smul.u32 4, %s21
        %s314 = smul.u32 64, %s21
        %p315 = scmp.lt.s32.totalorder %s314, 127
        %s316 = scalar_select %p315, %s314, 127
        %p317 = scmp.lt.s32.totalorder %s20, 0
        %s318 = scalar_select %p317, %s20, 0
        %s319 = sadd.s32 %s318, %s316
        %s320 = smul.addr %s319, 4
        %s321 = scalar_lea.vmem %s1, %s320
        %s322 = smul.u32 64, %s21
        %p323 = scmp.lt.s32.totalorder %s20, 0
        %s324 = scalar_select %p323, %s20, 0
        %s325 = scalar_lea.vmem %s2, %s324
        %s326 = smul.u32 16, %s19
        %p327 = scmp.lt.s32.totalorder %s326, 15
        %s328 = scalar_select %p327, %s326, 15
        %p329 = scmp.lt.s32.totalorder %s20, 0
        %s330 = scalar_select %p329, %s20, 0
        %s331 = sadd.s32 %s330, %s328
        %s332 = smul.addr %s331, 8
        %s333 = scalar_lea.vmem %s3, %s332
        %s334 = smul.u32 16, %s19
        %p336 = scmp.eq.s32.totalorder %s21, 0
        // Predicated region
        $region56: #{discriminator_forward.12} parent=50 // pred_check
          %p337 = pneg %p336
        $region57: #{discriminator_forward.12} parent=50 // pred_check_branch
          %339 = sbr.rel (%p337) target = $region59
        $region58: #{discriminator_forward.12} parent=50 // pred_region
          %340 = vst [vmem:[#allocation2] sm:$0xff] 0.0
          %341 = vst [vmem:[#allocation2 + $0x8] sm:$0xff] 0.0
          %342 = vst [vmem:[#allocation2 + $0x10] sm:$0xff] 0.0
          %343 = vst [vmem:[#allocation2 + $0x18] sm:$0xff] 0.0
          %344 = vst [vmem:[#allocation2 + $0x20] sm:$0xff] 0.0
          %345 = vst [vmem:[#allocation2 + $0x28] sm:$0xff] 0.0
          %346 = vst [vmem:[#allocation2 + $0x30] sm:$0xff] 0.0
          %347 = vst [vmem:[#allocation2 + $0x38] sm:$0xff] 0.0
          %348 = vst [vmem:[#allocation2 + $0x40] sm:$0xff] 0.0
          %349 = vst [vmem:[#allocation2 + $0x48] sm:$0xff] 0.0
          %350 = vst [vmem:[#allocation2 + $0x50] sm:$0xff] 0.0
          %351 = vst [vmem:[#allocation2 + $0x58] sm:$0xff] 0.0
          %352 = vst [vmem:[#allocation2 + $0x60] sm:$0xff] 0.0
          %353 = vst [vmem:[#allocation2 + $0x68] sm:$0xff] 0.0
          %354 = vst [vmem:[#allocation2 + $0x70] sm:$0xff] 0.0
          %355 = vst [vmem:[#allocation2 + $0x78] sm:$0xff] 0.0
        $region59: #{discriminator_forward.12} parent=50 // pred_fallthru
          _
        %v356 = vld [vmem:[#allocation2] sm:$0xff]
        %v357 = vld [vmem:[#allocation2 + $0x8] sm:$0xff]
        %v358 = vld [vmem:[#allocation2 + $0x10] sm:$0xff]
        %v359 = vld [vmem:[#allocation2 + $0x18] sm:$0xff]
        %v360 = vld [vmem:[#allocation2 + $0x20] sm:$0xff]
        %v361 = vld [vmem:[#allocation2 + $0x28] sm:$0xff]
        %v362 = vld [vmem:[#allocation2 + $0x30] sm:$0xff]
        %v363 = vld [vmem:[#allocation2 + $0x38] sm:$0xff]
        %v364 = vld [vmem:[#allocation2 + $0x40] sm:$0xff]
        %v365 = vld [vmem:[#allocation2 + $0x48] sm:$0xff]
        %v366 = vld [vmem:[#allocation2 + $0x50] sm:$0xff]
        %v367 = vld [vmem:[#allocation2 + $0x58] sm:$0xff]
        %v368 = vld [vmem:[#allocation2 + $0x60] sm:$0xff]
        %v369 = vld [vmem:[#allocation2 + $0x68] sm:$0xff]
        %v370 = vld [vmem:[#allocation2 + $0x70] sm:$0xff]
        %v371 = vld [vmem:[#allocation2 + $0x78] sm:$0xff]
        %v372 = vld [vmem:[%s277] sm:$0xff]
        %v373 = vld [vmem:[%s277 + $0x8] sm:$0xff]
        %v374 = vld [vmem:[%s277 + $0x10] sm:$0xff]
        %v375 = vld [vmem:[%s277 + $0x18] sm:$0xff]
        %v376 = vld [vmem:[%s277 + $0x20] sm:$0xff]
        %v377 = vld [vmem:[%s277 + $0x28] sm:$0xff]
        %v378 = vld [vmem:[%s277 + $0x30] sm:$0xff]
        %v379 = vld [vmem:[%s277 + $0x38] sm:$0xff]
        %v380 = vld [vmem:[%s277 + $0x40] sm:$0xff]
        %v381 = vld [vmem:[%s277 + $0x48] sm:$0xff]
        %v382 = vld [vmem:[%s277 + $0x50] sm:$0xff]
        %v383 = vld [vmem:[%s277 + $0x58] sm:$0xff]
        %v384 = vld [vmem:[%s277 + $0x60] sm:$0xff]
        %v385 = vld [vmem:[%s277 + $0x68] sm:$0xff]
        %v386 = vld [vmem:[%s277 + $0x70] sm:$0xff]
        %v387 = vld [vmem:[%s277 + $0x78] sm:$0xff]
        %v388 = vld [vmem:[%s277 + $0x80] sm:$0xff]
        %v389 = vld [vmem:[%s277 + $0x88] sm:$0xff]
        %v390 = vld [vmem:[%s277 + $0x90] sm:$0xff]
        %v391 = vld [vmem:[%s277 + $0x98] sm:$0xff]
        %v392 = vld [vmem:[%s277 + $0xa0] sm:$0xff]
        %v393 = vld [vmem:[%s277 + $0xa8] sm:$0xff]
        %v394 = vld [vmem:[%s277 + $0xb0] sm:$0xff]
        %v395 = vld [vmem:[%s277 + $0xb8] sm:$0xff]
        %v396 = vld [vmem:[%s277 + $0xc0] sm:$0xff]
        %v397 = vld [vmem:[%s277 + $0xc8] sm:$0xff]
        %v398 = vld [vmem:[%s277 + $0xd0] sm:$0xff]
        %v399 = vld [vmem:[%s277 + $0xd8] sm:$0xff]
        %v400 = vld [vmem:[%s277 + $0xe0] sm:$0xff]
        %v401 = vld [vmem:[%s277 + $0xe8] sm:$0xff]
        %v402 = vld [vmem:[%s277 + $0xf0] sm:$0xff]
        %v403 = vld [vmem:[%s277 + $0xf8] sm:$0xff]
        %v404 = vld [vmem:[%s321] sm:$0xf]
        %v405 = vld [vmem:[%s321 + $0x4] sm:$0xf]
        %v406 = vld [vmem:[%s321 + $0x8] sm:$0xf]
        %v407 = vld [vmem:[%s321 + $0xc] sm:$0xf]
        %v408 = vld [vmem:[%s321 + $0x10] sm:$0xf]
        %v409 = vld [vmem:[%s321 + $0x14] sm:$0xf]
        %v410 = vld [vmem:[%s321 + $0x18] sm:$0xf]
        %v411 = vld [vmem:[%s321 + $0x1c] sm:$0xf]
        %v412 = vld [vmem:[%s321 + $0x20] sm:$0xf]
        %v413 = vld [vmem:[%s321 + $0x24] sm:$0xf]
        %v414 = vld [vmem:[%s321 + $0x28] sm:$0xf]
        %v415 = vld [vmem:[%s321 + $0x2c] sm:$0xf]
        %v416 = vld [vmem:[%s321 + $0x30] sm:$0xf]
        %v417 = vld [vmem:[%s321 + $0x34] sm:$0xf]
        %v418 = vld [vmem:[%s321 + $0x38] sm:$0xf]
        %v419 = vld [vmem:[%s321 + $0x3c] sm:$0xf]
        %v420 = vld [vmem:[%s321 + $0x40] sm:$0xf]
        %v421 = vld [vmem:[%s321 + $0x44] sm:$0xf]
        %v422 = vld [vmem:[%s321 + $0x48] sm:$0xf]
        %v423 = vld [vmem:[%s321 + $0x4c] sm:$0xf]
        %v424 = vld [vmem:[%s321 + $0x50] sm:$0xf]
        %v425 = vld [vmem:[%s321 + $0x54] sm:$0xf]
        %v426 = vld [vmem:[%s321 + $0x58] sm:$0xf]
        %v427 = vld [vmem:[%s321 + $0x5c] sm:$0xf]
        %v428 = vld [vmem:[%s321 + $0x60] sm:$0xf]
        %v429 = vld [vmem:[%s321 + $0x64] sm:$0xf]
        %v430 = vld [vmem:[%s321 + $0x68] sm:$0xf]
        %v431 = vld [vmem:[%s321 + $0x6c] sm:$0xf]
        %v432 = vld [vmem:[%s321 + $0x70] sm:$0xf]
        %v433 = vld [vmem:[%s321 + $0x74] sm:$0xf]
        %v434 = vld [vmem:[%s321 + $0x78] sm:$0xf]
        %v435 = vld [vmem:[%s321 + $0x7c] sm:$0xf]
        %v436 = vld [vmem:[%s321 + $0x80] sm:$0xf]
        %v437 = vld [vmem:[%s321 + $0x84] sm:$0xf]
        %v438 = vld [vmem:[%s321 + $0x88] sm:$0xf]
        %v439 = vld [vmem:[%s321 + $0x8c] sm:$0xf]
        %v440 = vld [vmem:[%s321 + $0x90] sm:$0xf]
        %v441 = vld [vmem:[%s321 + $0x94] sm:$0xf]
        %v442 = vld [vmem:[%s321 + $0x98] sm:$0xf]
        %v443 = vld [vmem:[%s321 + $0x9c] sm:$0xf]
        %v444 = vld [vmem:[%s321 + $0xa0] sm:$0xf]
        %v445 = vld [vmem:[%s321 + $0xa4] sm:$0xf]
        %v446 = vld [vmem:[%s321 + $0xa8] sm:$0xf]
        %v447 = vld [vmem:[%s321 + $0xac] sm:$0xf]
        %v448 = vld [vmem:[%s321 + $0xb0] sm:$0xf]
        %v449 = vld [vmem:[%s321 + $0xb4] sm:$0xf]
        %v450 = vld [vmem:[%s321 + $0xb8] sm:$0xf]
        %v451 = vld [vmem:[%s321 + $0xbc] sm:$0xf]
        %v452 = vld [vmem:[%s321 + $0xc0] sm:$0xf]
        %v453 = vld [vmem:[%s321 + $0xc4] sm:$0xf]
        %v454 = vld [vmem:[%s321 + $0xc8] sm:$0xf]
        %v455 = vld [vmem:[%s321 + $0xcc] sm:$0xf]
        %v456 = vld [vmem:[%s321 + $0xd0] sm:$0xf]
        %v457 = vld [vmem:[%s321 + $0xd4] sm:$0xf]
        %v458 = vld [vmem:[%s321 + $0xd8] sm:$0xf]
        %v459 = vld [vmem:[%s321 + $0xdc] sm:$0xf]
        %v460 = vld [vmem:[%s321 + $0xe0] sm:$0xf]
        %v461 = vld [vmem:[%s321 + $0xe4] sm:$0xf]
        %v462 = vld [vmem:[%s321 + $0xe8] sm:$0xf]
        %v463 = vld [vmem:[%s321 + $0xec] sm:$0xf]
        %v464 = vld [vmem:[%s321 + $0xf0] sm:$0xf]
        %v465 = vld [vmem:[%s321 + $0xf4] sm:$0xf]
        %v466 = vld [vmem:[%s321 + $0xf8] sm:$0xf]
        %v467 = vld [vmem:[%s321 + $0xfc] sm:$0xf]
        %v500 = vunpack.c.l.b16 %v372
        %v501 = vunpack.c.h.b16 %v372
        %v502 = vunpack.c.l.b16 %v373
        %v503 = vunpack.c.h.b16 %v373
        %v504 = vunpack.c.l.b16 %v374
        %v505 = vunpack.c.h.b16 %v374
        %v506 = vunpack.c.l.b16 %v375
        %v507 = vunpack.c.h.b16 %v375
        %v508 = vunpack.c.l.b16 %v376
        %v509 = vunpack.c.h.b16 %v376
        %v510 = vunpack.c.l.b16 %v377
        %v511 = vunpack.c.h.b16 %v377
        %v512 = vunpack.c.l.b16 %v378
        %v513 = vunpack.c.h.b16 %v378
        %v514 = vunpack.c.l.b16 %v379
        %v515 = vunpack.c.h.b16 %v379
        %v516 = vunpack.c.l.b16 %v380
        %v517 = vunpack.c.h.b16 %v380
        %v518 = vunpack.c.l.b16 %v381
        %v519 = vunpack.c.h.b16 %v381
        %v520 = vunpack.c.l.b16 %v382
        %v521 = vunpack.c.h.b16 %v382
        %v522 = vunpack.c.l.b16 %v383
        %v523 = vunpack.c.h.b16 %v383
        %v524 = vunpack.c.l.b16 %v384
        %v525 = vunpack.c.h.b16 %v384
        %v526 = vunpack.c.l.b16 %v385
        %v527 = vunpack.c.h.b16 %v385
        %v528 = vunpack.c.l.b16 %v386
        %v529 = vunpack.c.h.b16 %v386
        %v530 = vunpack.c.l.b16 %v387
        %v531 = vunpack.c.h.b16 %v387
        %v532 = vunpack.c.l.b16 %v388
        %v533 = vunpack.c.h.b16 %v388
        %v534 = vunpack.c.l.b16 %v389
        %v535 = vunpack.c.h.b16 %v389
        %v536 = vunpack.c.l.b16 %v390
        %v537 = vunpack.c.h.b16 %v390
        %v538 = vunpack.c.l.b16 %v391
        %v539 = vunpack.c.h.b16 %v391
        %v540 = vunpack.c.l.b16 %v392
        %v541 = vunpack.c.h.b16 %v392
        %v542 = vunpack.c.l.b16 %v393
        %v543 = vunpack.c.h.b16 %v393
        %v544 = vunpack.c.l.b16 %v394
        %v545 = vunpack.c.h.b16 %v394
        %v546 = vunpack.c.l.b16 %v395
        %v547 = vunpack.c.h.b16 %v395
        %v548 = vunpack.c.l.b16 %v396
        %v549 = vunpack.c.h.b16 %v396
        %v550 = vunpack.c.l.b16 %v397
        %v551 = vunpack.c.h.b16 %v397
        %v552 = vunpack.c.l.b16 %v398
        %v553 = vunpack.c.h.b16 %v398
        %v554 = vunpack.c.l.b16 %v399
        %v555 = vunpack.c.h.b16 %v399
        %v556 = vunpack.c.l.b16 %v400
        %v557 = vunpack.c.h.b16 %v400
        %v558 = vunpack.c.l.b16 %v401
        %v559 = vunpack.c.h.b16 %v401
        %v560 = vunpack.c.l.b16 %v402
        %v561 = vunpack.c.h.b16 %v402
        %v562 = vunpack.c.l.b16 %v403
        %v563 = vunpack.c.h.b16 %v403
        %v564 = vpack.c.b16 %v504, %v500
        %v565 = vpack.c.b16 %v505, %v501
        %v566 = vpack.c.b16 %v506, %v502
        %v567 = vpack.c.b16 %v507, %v503
        %v568 = vpack.c.b16 %v512, %v508
        %v569 = vpack.c.b16 %v513, %v509
        %v570 = vpack.c.b16 %v514, %v510
        %v571 = vpack.c.b16 %v515, %v511
        %v572 = vpack.c.b16 %v520, %v516
        %v573 = vpack.c.b16 %v521, %v517
        %v574 = vpack.c.b16 %v522, %v518
        %v575 = vpack.c.b16 %v523, %v519
        %v576 = vpack.c.b16 %v528, %v524
        %v577 = vpack.c.b16 %v529, %v525
        %v578 = vpack.c.b16 %v530, %v526
        %v579 = vpack.c.b16 %v531, %v527
        %v580 = vpack.c.b16 %v536, %v532
        %v581 = vpack.c.b16 %v537, %v533
        %v582 = vpack.c.b16 %v538, %v534
        %v583 = vpack.c.b16 %v539, %v535
        %v584 = vpack.c.b16 %v544, %v540
        %v585 = vpack.c.b16 %v545, %v541
        %v586 = vpack.c.b16 %v546, %v542
        %v587 = vpack.c.b16 %v547, %v543
        %v588 = vpack.c.b16 %v552, %v548
        %v589 = vpack.c.b16 %v553, %v549
        %v590 = vpack.c.b16 %v554, %v550
        %v591 = vpack.c.b16 %v555, %v551
        %v592 = vpack.c.b16 %v560, %v556
        %v593 = vpack.c.b16 %v561, %v557
        %v594 = vpack.c.b16 %v562, %v558
        %v595 = vpack.c.b16 %v563, %v559
        %v692 = vunpack.c.l.b16 %v404
        %v693 = vunpack.c.l.b16 %v405
        %v694 = vunpack.c.l.b16 %v406
        %v695 = vunpack.c.l.b16 %v407
        %v696 = vunpack.c.l.b16 %v408
        %v697 = vunpack.c.l.b16 %v409
        %v698 = vunpack.c.l.b16 %v410
        %v699 = vunpack.c.l.b16 %v411
        %v700 = vunpack.c.l.b16 %v412
        %v701 = vunpack.c.l.b16 %v413
        %v702 = vunpack.c.l.b16 %v414
        %v703 = vunpack.c.l.b16 %v415
        %v704 = vunpack.c.l.b16 %v416
        %v705 = vunpack.c.l.b16 %v417
        %v706 = vunpack.c.l.b16 %v418
        %v707 = vunpack.c.l.b16 %v419
        %v708 = vunpack.c.l.b16 %v420
        %v709 = vunpack.c.l.b16 %v421
        %v710 = vunpack.c.l.b16 %v422
        %v711 = vunpack.c.l.b16 %v423
        %v712 = vunpack.c.l.b16 %v424
        %v713 = vunpack.c.l.b16 %v425
        %v714 = vunpack.c.l.b16 %v426
        %v715 = vunpack.c.l.b16 %v427
        %v716 = vunpack.c.l.b16 %v428
        %v717 = vunpack.c.l.b16 %v429
        %v718 = vunpack.c.l.b16 %v430
        %v719 = vunpack.c.l.b16 %v431
        %v720 = vunpack.c.l.b16 %v432
        %v721 = vunpack.c.l.b16 %v433
        %v722 = vunpack.c.l.b16 %v434
        %v723 = vunpack.c.l.b16 %v435
        %v724 = vunpack.c.l.b16 %v436
        %v725 = vunpack.c.l.b16 %v437
        %v726 = vunpack.c.l.b16 %v438
        %v727 = vunpack.c.l.b16 %v439
        %v728 = vunpack.c.l.b16 %v440
        %v729 = vunpack.c.l.b16 %v441
        %v730 = vunpack.c.l.b16 %v442
        %v731 = vunpack.c.l.b16 %v443
        %v732 = vunpack.c.l.b16 %v444
        %v733 = vunpack.c.l.b16 %v445
        %v734 = vunpack.c.l.b16 %v446
        %v735 = vunpack.c.l.b16 %v447
        %v736 = vunpack.c.l.b16 %v448
        %v737 = vunpack.c.l.b16 %v449
        %v738 = vunpack.c.l.b16 %v450
        %v739 = vunpack.c.l.b16 %v451
        %v740 = vunpack.c.l.b16 %v452
        %v741 = vunpack.c.l.b16 %v453
        %v742 = vunpack.c.l.b16 %v454
        %v743 = vunpack.c.l.b16 %v455
        %v744 = vunpack.c.l.b16 %v456
        %v745 = vunpack.c.l.b16 %v457
        %v746 = vunpack.c.l.b16 %v458
        %v747 = vunpack.c.l.b16 %v459
        %v748 = vunpack.c.l.b16 %v460
        %v749 = vunpack.c.l.b16 %v461
        %v750 = vunpack.c.l.b16 %v462
        %v751 = vunpack.c.l.b16 %v463
        %v752 = vunpack.c.l.b16 %v464
        %v753 = vunpack.c.l.b16 %v465
        %v754 = vunpack.c.l.b16 %v466
        %v755 = vunpack.c.l.b16 %v467
        %v756 = vpack.c.b16 %v693, %v692
        %v757 = vpack.c.b16 %v695, %v694
        %v758 = vpack.c.b16 %v697, %v696
        %v759 = vpack.c.b16 %v699, %v698
        %v760 = vpack.c.b16 %v701, %v700
        %v761 = vpack.c.b16 %v703, %v702
        %v762 = vpack.c.b16 %v705, %v704
        %v763 = vpack.c.b16 %v707, %v706
        %v764 = vpack.c.b16 %v709, %v708
        %v765 = vpack.c.b16 %v711, %v710
        %v766 = vpack.c.b16 %v713, %v712
        %v767 = vpack.c.b16 %v715, %v714
        %v768 = vpack.c.b16 %v717, %v716
        %v769 = vpack.c.b16 %v719, %v718
        %v770 = vpack.c.b16 %v721, %v720
        %v771 = vpack.c.b16 %v723, %v722
        %v772 = vpack.c.b16 %v725, %v724
        %v773 = vpack.c.b16 %v727, %v726
        %v774 = vpack.c.b16 %v729, %v728
        %v775 = vpack.c.b16 %v731, %v730
        %v776 = vpack.c.b16 %v733, %v732
        %v777 = vpack.c.b16 %v735, %v734
        %v778 = vpack.c.b16 %v737, %v736
        %v779 = vpack.c.b16 %v739, %v738
        %v780 = vpack.c.b16 %v741, %v740
        %v781 = vpack.c.b16 %v743, %v742
        %v782 = vpack.c.b16 %v745, %v744
        %v783 = vpack.c.b16 %v747, %v746
        %v784 = vpack.c.b16 %v749, %v748
        %v785 = vpack.c.b16 %v751, %v750
        %v786 = vpack.c.b16 %v753, %v752
        %v787 = vpack.c.b16 %v755, %v754
        %820 = vmatprep.subr.bf16.mxu0 0
        %821 = vmatpush1.bf16.msra.mxu0 %v756
        %822 = vmatprep.subr.bf16.mxu0 0
        %823 = vmatpush1.bf16.msra.mxu0 %v757
        %824 = vmatprep.subr.bf16.mxu0 0
        %825 = vmatpush1.bf16.msra.mxu0 %v758
        %826 = vmatprep.subr.bf16.mxu0 0
        %827 = vmatpush1.bf16.msra.mxu0 %v759
        %828 = vmatprep.subr.bf16.mxu0 0
        %829 = vmatpush1.bf16.msra.mxu0 %v760
        %830 = vmatprep.subr.bf16.mxu0 0
        %831 = vmatpush1.bf16.msra.mxu0 %v761
        %832 = vmatprep.subr.bf16.mxu0 0
        %833 = vmatpush1.bf16.msra.mxu0 %v762
        %834 = vmatprep.subr.bf16.mxu0 0
        %835 = vmatpush1.bf16.msra.mxu0 %v763
        %836 = vmatprep.subr.bf16.mxu0 0
        %837 = vmatpush1.bf16.msra.mxu0 %v764
        %838 = vmatprep.subr.bf16.mxu0 0
        %839 = vmatpush1.bf16.msra.mxu0 %v765
        %840 = vmatprep.subr.bf16.mxu0 0
        %841 = vmatpush1.bf16.msra.mxu0 %v766
        %842 = vmatprep.subr.bf16.mxu0 0
        %843 = vmatpush1.bf16.msra.mxu0 %v767
        %844 = vmatprep.subr.bf16.mxu0 0
        %845 = vmatpush1.bf16.msra.mxu0 %v768
        %846 = vmatprep.subr.bf16.mxu0 0
        %847 = vmatpush1.bf16.msra.mxu0 %v769
        %848 = vmatprep.subr.bf16.mxu0 0
        %849 = vmatpush1.bf16.msra.mxu0 %v770
        %850 = vmatprep.subr.bf16.mxu0 0
        %851 = vmatpush1.bf16.msra.mxu0 %v771
        %852 = vmatprep.mubr.bf16.mxu0 %v565
        %853 = vmatmul.mubr.bf16.gmra.mrb[0].mxu0 %v564
        %v854 = vpop.f32.mrb[0].mxu0
        %v855 = vadd.f32 0.0, %v854
        %v856 = vpop.f32.mrb[0].mxu0
        %v857 = vpop.f32.mrb[0].mxu0
        %v858 = vadd.f32 0.0, %v857
        %v859 = vpop.f32.mrb[0].mxu0
        %860 = vmatprep.mubr.bf16.mxu0 %v569
        %861 = vmatmul.mubr.bf16.gmra.mrb[0].mxu0 %v568
        %v862 = vpop.f32.mrb[0].mxu0
        %v863 = vadd.f32 0.0, %v862
        %v864 = vpop.f32.mrb[0].mxu0
        %v865 = vpop.f32.mrb[0].mxu0
        %v866 = vadd.f32 0.0, %v865
        %v867 = vpop.f32.mrb[0].mxu0
        %868 = vmatprep.mubr.bf16.mxu0 %v573
        %869 = vmatmul.mubr.bf16.gmra.mrb[0].mxu0 %v572
        %v870 = vpop.f32.mrb[0].mxu0
        %v871 = vadd.f32 0.0, %v870
        %v872 = vpop.f32.mrb[0].mxu0
        %v873 = vpop.f32.mrb[0].mxu0
        %v874 = vadd.f32 0.0, %v873
        %v875 = vpop.f32.mrb[0].mxu0
        %876 = vmatprep.mubr.bf16.mxu0 %v577
        %877 = vmatmul.mubr.bf16.gmra.mrb[0].mxu0 %v576
        %v878 = vpop.f32.mrb[0].mxu0
        %v879 = vadd.f32 0.0, %v878
        %v880 = vpop.f32.mrb[0].mxu0
        %v881 = vpop.f32.mrb[0].mxu0
        %v882 = vadd.f32 0.0, %v881
        %v883 = vpop.f32.mrb[0].mxu0
        %884 = vmatprep.mubr.bf16.mxu0 %v581
        %885 = vmatmul.mubr.bf16.gmra.mrb[0].mxu0 %v580
        %v886 = vpop.f32.mrb[0].mxu0
        %v887 = vadd.f32 0.0, %v886
        %v888 = vpop.f32.mrb[0].mxu0
        %v889 = vpop.f32.mrb[0].mxu0
        %v890 = vadd.f32 0.0, %v889
        %v891 = vpop.f32.mrb[0].mxu0
        %892 = vmatprep.mubr.bf16.mxu0 %v585
        %893 = vmatmul.mubr.bf16.gmra.mrb[0].mxu0 %v584
        %v894 = vpop.f32.mrb[0].mxu0
        %v895 = vadd.f32 0.0, %v894
        %v896 = vpop.f32.mrb[0].mxu0
        %v897 = vpop.f32.mrb[0].mxu0
        %v898 = vadd.f32 0.0, %v897
        %v899 = vpop.f32.mrb[0].mxu0
        %900 = vmatprep.mubr.bf16.mxu0 %v589
        %901 = vmatmul.mubr.bf16.gmra.mrb[0].mxu0 %v588
        %v902 = vpop.f32.mrb[0].mxu0
        %v903 = vadd.f32 0.0, %v902
        %v904 = vpop.f32.mrb[0].mxu0
        %v905 = vpop.f32.mrb[0].mxu0
        %v906 = vadd.f32 0.0, %v905
        %v907 = vpop.f32.mrb[0].mxu0
        %908 = vmatprep.mubr.bf16.mxu0 %v593
        %909 = vmatmul.mubr.bf16.gmra.mrb[0].mxu0 %v592
        %v910 = vpop.f32.mrb[0].mxu0
        %v911 = vadd.f32 0.0, %v910
        %v912 = vpop.f32.mrb[0].mxu0
        %v913 = vpop.f32.mrb[0].mxu0
        %v914 = vadd.f32 0.0, %v913
        %v915 = vpop.f32.mrb[0].mxu0
        %916 = vdwg.mxu0
        %917 = vmatprep.subr.bf16.mxu0 0
        %918 = vmatpush1.bf16.msra.mxu0 %v772
        %919 = vmatprep.subr.bf16.mxu0 0
        %920 = vmatpush1.bf16.msra.mxu0 %v773
        %921 = vmatprep.subr.bf16.mxu0 0
        %922 = vmatpush1.bf16.msra.mxu0 %v774
        %923 = vmatprep.subr.bf16.mxu0 0
        %924 = vmatpush1.bf16.msra.mxu0 %v775
        %925 = vmatprep.subr.bf16.mxu0 0
        %926 = vmatpush1.bf16.msra.mxu0 %v776
        %927 = vmatprep.subr.bf16.mxu0 0
        %928 = vmatpush1.bf16.msra.mxu0 %v777
        %929 = vmatprep.subr.bf16.mxu0 0
        %930 = vmatpush1.bf16.msra.mxu0 %v778
        %931 = vmatprep.subr.bf16.mxu0 0
        %932 = vmatpush1.bf16.msra.mxu0 %v779
        %933 = vmatprep.subr.bf16.mxu0 0
        %934 = vmatpush1.bf16.msra.mxu0 %v780
        %935 = vmatprep.subr.bf16.mxu0 0
        %936 = vmatpush1.bf16.msra.mxu0 %v781
        %937 = vmatprep.subr.bf16.mxu0 0
        %938 = vmatpush1.bf16.msra.mxu0 %v782
        %939 = vmatprep.subr.bf16.mxu0 0
        %940 = vmatpush1.bf16.msra.mxu0 %v783
        %941 = vmatprep.subr.bf16.mxu0 0
        %942 = vmatpush1.bf16.msra.mxu0 %v784
        %943 = vmatprep.subr.bf16.mxu0 0
        %944 = vmatpush1.bf16.msra.mxu0 %v785
        %945 = vmatprep.subr.bf16.mxu0 0
        %946 = vmatpush1.bf16.msra.mxu0 %v786
        %947 = vmatprep.subr.bf16.mxu0 0
        %948 = vmatpush1.bf16.msra.mxu0 %v787
        %949 = vmatprep.mubr.bf16.mxu0 %v567
        %950 = vmatmul.mubr.bf16.gmra.mrb[0].mxu0 %v566
        %v951 = vpop.f32.mrb[0].mxu0
        %v952 = vadd.f32 %v855, %v951
        %v953 = vpop.f32.mrb[0].mxu0
        %v954 = vpop.f32.mrb[0].mxu0
        %v955 = vadd.f32 %v858, %v954
        %v956 = vpop.f32.mrb[0].mxu0
        %957 = vmatprep.mubr.bf16.mxu0 %v571
        %958 = vmatmul.mubr.bf16.gmra.mrb[0].mxu0 %v570
        %v959 = vpop.f32.mrb[0].mxu0
        %v960 = vadd.f32 %v863, %v959
        %v961 = vpop.f32.mrb[0].mxu0
        %v962 = vpop.f32.mrb[0].mxu0
        %v963 = vadd.f32 %v866, %v962
        %v964 = vpop.f32.mrb[0].mxu0
        %965 = vmatprep.mubr.bf16.mxu0 %v575
        %966 = vmatmul.mubr.bf16.gmra.mrb[0].mxu0 %v574
        %v967 = vpop.f32.mrb[0].mxu0
        %v968 = vadd.f32 %v871, %v967
        %v969 = vpop.f32.mrb[0].mxu0
        %v970 = vpop.f32.mrb[0].mxu0
        %v971 = vadd.f32 %v874, %v970
        %v972 = vpop.f32.mrb[0].mxu0
        %973 = vmatprep.mubr.bf16.mxu0 %v579
        %974 = vmatmul.mubr.bf16.gmra.mrb[0].mxu0 %v578
        %v975 = vpop.f32.mrb[0].mxu0
        %v976 = vadd.f32 %v879, %v975
        %v977 = vpop.f32.mrb[0].mxu0
        %v978 = vpop.f32.mrb[0].mxu0
        %v979 = vadd.f32 %v882, %v978
        %v980 = vpop.f32.mrb[0].mxu0
        %981 = vmatprep.mubr.bf16.mxu0 %v583
        %982 = vmatmul.mubr.bf16.gmra.mrb[0].mxu0 %v582
        %v983 = vpop.f32.mrb[0].mxu0
        %v984 = vadd.f32 %v887, %v983
        %v985 = vpop.f32.mrb[0].mxu0
        %v986 = vpop.f32.mrb[0].mxu0
        %v987 = vadd.f32 %v890, %v986
        %v988 = vpop.f32.mrb[0].mxu0
        %989 = vmatprep.mubr.bf16.mxu0 %v587
        %990 = vmatmul.mubr.bf16.gmra.mrb[0].mxu0 %v586
        %v991 = vpop.f32.mrb[0].mxu0
        %v992 = vadd.f32 %v895, %v991
        %v993 = vpop.f32.mrb[0].mxu0
        %v994 = vpop.f32.mrb[0].mxu0
        %v995 = vadd.f32 %v898, %v994
        %v996 = vpop.f32.mrb[0].mxu0
        %997 = vmatprep.mubr.bf16.mxu0 %v591
        %998 = vmatmul.mubr.bf16.gmra.mrb[0].mxu0 %v590
        %v999 = vpop.f32.mrb[0].mxu0
        %v1000 = vadd.f32 %v903, %v999
        %v1001 = vpop.f32.mrb[0].mxu0
        %v1002 = vpop.f32.mrb[0].mxu0
        %v1003 = vadd.f32 %v906, %v1002
        %v1004 = vpop.f32.mrb[0].mxu0
        %1005 = vmatprep.mubr.bf16.mxu0 %v595
        %1006 = vmatmul.mubr.bf16.gmra.mrb[0].mxu0 %v594
        %v1007 = vpop.f32.mrb[0].mxu0
        %v1008 = vadd.f32 %v911, %v1007
        %v1009 = vpop.f32.mrb[0].mxu0
        %v1010 = vpop.f32.mrb[0].mxu0
        %v1011 = vadd.f32 %v914, %v1010
        %v1012 = vpop.f32.mrb[0].mxu0
        %1013 = vdwg.mxu0
        %v1014 = vadd.f32 %v356, %v952
        %v1015 = vadd.f32 %v357, %v955
        %v1016 = vadd.f32 %v358, %v960
        %v1017 = vadd.f32 %v359, %v963
        %v1018 = vadd.f32 %v360, %v968
        %v1019 = vadd.f32 %v361, %v971
        %v1020 = vadd.f32 %v362, %v976
        %v1021 = vadd.f32 %v363, %v979
        %v1022 = vadd.f32 %v364, %v984
        %v1023 = vadd.f32 %v365, %v987
        %v1024 = vadd.f32 %v366, %v992
        %v1025 = vadd.f32 %v367, %v995
        %v1026 = vadd.f32 %v368, %v1000
        %v1027 = vadd.f32 %v369, %v1003
        %v1028 = vadd.f32 %v370, %v1008
        %v1029 = vadd.f32 %v371, %v1011
        %1030 = vst [vmem:[#allocation2] sm:$0xff] %v1014
        %1031 = vst [vmem:[#allocation2 + $0x8] sm:$0xff] %v1015
        %1032 = vst [vmem:[#allocation2 + $0x10] sm:$0xff] %v1016
        %1033 = vst [vmem:[#allocation2 + $0x18] sm:$0xff] %v1017
        %1034 = vst [vmem:[#allocation2 + $0x20] sm:$0xff] %v1018
        %1035 = vst [vmem:[#allocation2 + $0x28] sm:$0xff] %v1019
        %1036 = vst [vmem:[#allocation2 + $0x30] sm:$0xff] %v1020
        %1037 = vst [vmem:[#allocation2 + $0x38] sm:$0xff] %v1021
        %1038 = vst [vmem:[#allocation2 + $0x40] sm:$0xff] %v1022
        %1039 = vst [vmem:[#allocation2 + $0x48] sm:$0xff] %v1023
        %1040 = vst [vmem:[#allocation2 + $0x50] sm:$0xff] %v1024
        %1041 = vst [vmem:[#allocation2 + $0x58] sm:$0xff] %v1025
        %1042 = vst [vmem:[#allocation2 + $0x60] sm:$0xff] %v1026
        %1043 = vst [vmem:[#allocation2 + $0x68] sm:$0xff] %v1027
        %1044 = vst [vmem:[#allocation2 + $0x70] sm:$0xff] %v1028
        %1045 = vst [vmem:[#allocation2 + $0x78] sm:$0xff] %v1029
        %p1046 = scmp.eq.s32.totalorder %s21, 1
        // Predicated region
        $region60: #{discriminator_forward.12} parent=50 // pred_check
          %p1047 = pneg %p1046
        $region61: #{discriminator_forward.12} parent=50 // pred_check_branch
          %1049 = sbr.rel (%p1047) target = $region63
        $region62: #{discriminator_forward.12} parent=50 // pred_region
          %v1050 = vld [vmem:[#allocation2] sm:$0xff]
          %v1051 = vld [vmem:[#allocation2 + $0x8] sm:$0xff]
          %v1052 = vld [vmem:[#allocation2 + $0x10] sm:$0xff]
          %v1053 = vld [vmem:[#allocation2 + $0x18] sm:$0xff]
          %v1054 = vld [vmem:[#allocation2 + $0x20] sm:$0xff]
          %v1055 = vld [vmem:[#allocation2 + $0x28] sm:$0xff]
          %v1056 = vld [vmem:[#allocation2 + $0x30] sm:$0xff]
          %v1057 = vld [vmem:[#allocation2 + $0x38] sm:$0xff]
          %v1058 = vld [vmem:[#allocation2 + $0x40] sm:$0xff]
          %v1059 = vld [vmem:[#allocation2 + $0x48] sm:$0xff]
          %v1060 = vld [vmem:[#allocation2 + $0x50] sm:$0xff]
          %v1061 = vld [vmem:[#allocation2 + $0x58] sm:$0xff]
          %v1062 = vld [vmem:[#allocation2 + $0x60] sm:$0xff]
          %v1063 = vld [vmem:[#allocation2 + $0x68] sm:$0xff]
          %v1064 = vld [vmem:[#allocation2 + $0x70] sm:$0xff]
          %v1065 = vld [vmem:[#allocation2 + $0x78] sm:$0xff]
          %v1066 = vld [vmem:[%s325] sm:$0x1]
          %v1068 = vlaneseq
          %v1069 = vshrl.u32 %v1068, 7
          %v1070 = vsub.s32 0, %v1069
          %v1071 = vrot.slane %v1066, %v1070
          %v1073 = vadd.f32 %v1050, %v1071
          %v1074 = vadd.f32 %v1051, %v1071
          %v1075 = vadd.f32 %v1052, %v1071
          %v1076 = vadd.f32 %v1053, %v1071
          %v1077 = vadd.f32 %v1054, %v1071
          %v1078 = vadd.f32 %v1055, %v1071
          %v1079 = vadd.f32 %v1056, %v1071
          %v1080 = vadd.f32 %v1057, %v1071
          %v1081 = vadd.f32 %v1058, %v1071
          %v1082 = vadd.f32 %v1059, %v1071
          %v1083 = vadd.f32 %v1060, %v1071
          %v1084 = vadd.f32 %v1061, %v1071
          %v1085 = vadd.f32 %v1062, %v1071
          %v1086 = vadd.f32 %v1063, %v1071
          %v1087 = vadd.f32 %v1064, %v1071
          %v1088 = vadd.f32 %v1065, %v1071
          %1089 = vst [vmem:[%s333] sm:$0xff] %v1073
          %1090 = vst [vmem:[%s333 + $0x8] sm:$0xff] %v1074
          %1091 = vst [vmem:[%s333 + $0x10] sm:$0xff] %v1075
          %1092 = vst [vmem:[%s333 + $0x18] sm:$0xff] %v1076
          %1093 = vst [vmem:[%s333 + $0x20] sm:$0xff] %v1077
          %1094 = vst [vmem:[%s333 + $0x28] sm:$0xff] %v1078
          %1095 = vst [vmem:[%s333 + $0x30] sm:$0xff] %v1079
          %1096 = vst [vmem:[%s333 + $0x38] sm:$0xff] %v1080
          %1097 = vst [vmem:[%s333 + $0x40] sm:$0xff] %v1081
          %1098 = vst [vmem:[%s333 + $0x48] sm:$0xff] %v1082
          %1099 = vst [vmem:[%s333 + $0x50] sm:$0xff] %v1083
          %1100 = vst [vmem:[%s333 + $0x58] sm:$0xff] %v1084
          %1101 = vst [vmem:[%s333 + $0x60] sm:$0xff] %v1085
          %1102 = vst [vmem:[%s333 + $0x68] sm:$0xff] %v1086
          %1103 = vst [vmem:[%s333 + $0x70] sm:$0xff] %v1087
          %1104 = vst [vmem:[%s333 + $0x78] sm:$0xff] %v1088
        $region63: #{discriminator_forward.12} parent=50 // pred_fallthru
          _
        %s1105 = smul.u32 16, %s19
        %p1106 = scmp.lt.s32.totalorder %s1105, 15
        %s1107 = scalar_select %p1106, %s1105, 15
        %p1108 = scmp.lt.s32.totalorder %s20, 0
        %s1109 = scalar_select %p1108, %s20, 0
        %s1110 = sadd.s32 %s1109, %s1107
        %s1111 = smul.addr %s1110, 8
        %s1112 = scalar_lea.vmem %s3, %s1111
        // Predicated region
        $region64: #{discriminator_forward.12} parent=50 // pred_check
          %p1113 = pneg %p135
        $region65: #{discriminator_forward.12} parent=50 // pred_check_branch
          %1115 = sbr.rel (%p1113) target = $region67
        $region66: #{discriminator_forward.12} parent=50 // pred_region
          %s1116 = smul.u32 16, %s19
        $region67: #{discriminator_forward.12} parent=50 // pred_fallthru
          _
        // Predicated region
        $region68: #{discriminator_forward.12} parent=50 // pred_check
          %p1117 = pneg %p135
        $region69: #{discriminator_forward.12} parent=50 // pred_check_branch
          %1119 = sbr.rel (%p1117) target = $region71
        $region70: #{discriminator_forward.12} parent=50 // pred_region
          %s1120 = smul.u32 16, %s19
          %p1121 = scmp.lt.s32.totalorder %s1120, 15
          %s1122 = scalar_select %p1121, %s1120, 15
          %p1123 = scmp.lt.s32.totalorder %s20, 0
          %s1124 = scalar_select %p1123, %s20, 0
          %s1125 = sadd.s32 %s1124, %s1122
          %s1126 = smul.addr %s1125, 8
          %s1127 = scalar_lea.vmem %s3, %s1126
        $region71: #{discriminator_forward.12} parent=50 // pred_fallthru
          _
      $region51: #{discriminator_forward.12} parent=5 // pred_fallthru
        _
      %p1128 = scmp.le.s32.totalorder 2, %s9
      // Predicated region
      $region72: #{discriminator_forward.12} parent=5 // pred_check
        %p1129 = pneg %p1128
      $region73: #{discriminator_forward.12} parent=5 // pred_check_branch
        %1131 = sbr.rel (%p1129) target = $region75
      $region74: #{discriminator_forward.12} parent=5 // pred_region
        %s1132 = ssub.s32 %s9, 2
      $region75: #{discriminator_forward.12} parent=5 // pred_fallthru
        _
    $region6: #{discriminator_forward.12} parent=1 // loop_footer
      %s13 = sadd.s32 1, %s9
    $region7: #{discriminator_forward.12} parent=1 // loop_footer_branch
      %8 = sbr.rel target = $region3
    $region8: #{discriminator_forward.12} parent=1 // loop_exit
      _

// kernel: discriminator_forward.14
$region0: #{discriminator_forward.14}
  #allocation0 [shape = 'u32[]', space=smem, size = 0x4, offset = 0x4, fixed_abs, tag = 'smem constant byte address 0x4 - core index']
  #allocation1 [shape = 'u32[144,128]{1,0:T(1,128)}', space=vmem, size = 0x12000, scoped, tag = 'internal scratch']
  %s0 = inlined_call_operand.vmem [shape: f32[2,64,128], index: 0, kind: input, shape index: {}]
  %s1 = inlined_call_operand.vmem [shape: f32[2,1,128], index: 1, kind: input, shape index: {}]
  %s2 = inlined_call_operand.vmem [shape: f32[2,1,128], index: 2, kind: input, shape index: {}]
  %s3 = inlined_call_operand.vmem [shape: f32[2,64,128], index: 3, kind: output, shape index: {}]
  %s4 = sld [smem:[#allocation0]]
  $region45: #{discriminator_forward.14} parent=0
    _
  %s6 = ssub.s32 1, %s4
  %s7 = scalar_select 0, %s6, %s4
  loop: start=0, step=1, limit=4
  $region2: #{discriminator_forward.14} parent=0 // loop_pre_header
    _
  $region3: #{discriminator_forward.14} parent=0 // loop_header
    %s9 = sphi 0, %s13
    %p10 = scmp.ge.s32.totalorder %s9, 4
    %s16 = sphi 0, %s28
    %s17 = sphi 0, %s24
    %s18 = sphi 0, %s16
    %s19 = sphi 0, %s17
    %s20 = sphi 0, %s18
    %s21 = sphi 0, %s19
    %s33 = sphi 0, %s35
    %s36 = sphi 0, %s33
    %s37 = sphi 0, %s36
    %s53 = sphi 0, %s37
    %s59 = sphi 0, %s61
    %s62 = sphi 0, %s59
    %s63 = sphi 0, %s62
    %s79 = sphi 0, %s63
    %s85 = sphi 0, %s87
    %s88 = sphi 0, %s85
    %s89 = sphi 0, %s88
    %s105 = sphi 0, %s89
    %s113 = sphi 0, %s115
    %s116 = sphi 0, %s113
    %s117 = sphi 0, %s116
    %s133 = sphi 0, %s117
  $region4: #{discriminator_forward.14} parent=0 // loop_header_branch
    %12 = sbr.rel (%p10) target = $region8
  $region5: #{discriminator_forward.14} parent=0 // loop_body
    %s14 = ssub.s32 %s9, 1
    %s15 = ssub.s32 %s9, 2
    %s22 = sadd.s32 1, %s17
    %p23 = scmp.ge.s32.totalorder %s22, 1
    %s24 = scalar_select %p23, 0, %s22
    %s25 = sadd.s32 1, %s16
    %s26 = scalar_select %p23, %s25, %s16
    %p27 = scmp.ge.s32.totalorder %s26, 2
    %s28 = scalar_select %p27, 0, %s26
    %s29 = ssub.s32 %s16, %s28
    %s30 = ssub.s32 %s17, %s24
    %s31 = sor.u32 %s29, %s30
    %p32 = scmp.eq.s32.totalorder %s31, 0
    %s34 = sadd.s32 %s33, 1
    %s35 = scalar_select %p32, %s33, %s34
    %p38 = pneg %p32
    %p39 = scmp.eq.s32.totalorder %s9, 1
    %p40 = por %p38, %p39
    %p41 = scmp.ne.s32.totalorder %s33, %s36
    %p42 = scmp.eq.s32.totalorder %s9, 0
    %p43 = por %p41, %p42
    %p44 = scmp.ne.s32.totalorder %s33, %s36
    %p45 = scmp.eq.s32.totalorder %s14, 1
    %p46 = por %p44, %p45
    %p47 = scmp.ne.s32.totalorder %s36, %s37
    %p48 = scmp.eq.s32.totalorder %s14, 0
    %p49 = por %p47, %p48
    %p50 = scmp.ne.s32.totalorder %s36, %s37
    %p51 = scmp.eq.s32.totalorder %s15, 1
    %p52 = por %p50, %p51
    %p54 = scmp.ne.s32.totalorder %s37, %s53
    %p55 = scmp.eq.s32.totalorder %s15, 0
    %p56 = por %p54, %p55
    %s57 = ssub.s32 %s16, %s28
    %p58 = scmp.eq.s32.totalorder %s57, 0
    %s60 = sadd.s32 %s59, 1
    %s61 = scalar_select %p58, %s59, %s60
    %p64 = pneg %p58
    %p65 = scmp.eq.s32.totalorder %s9, 1
    %p66 = por %p64, %p65
    %p67 = scmp.ne.s32.totalorder %s59, %s62
    %p68 = scmp.eq.s32.totalorder %s9, 0
    %p69 = por %p67, %p68
    %p70 = scmp.ne.s32.totalorder %s59, %s62
    %p71 = scmp.eq.s32.totalorder %s14, 1
    %p72 = por %p70, %p71
    %p73 = scmp.ne.s32.totalorder %s62, %s63
    %p74 = scmp.eq.s32.totalorder %s14, 0
    %p75 = por %p73, %p74
    %p76 = scmp.ne.s32.totalorder %s62, %s63
    %p77 = scmp.eq.s32.totalorder %s15, 1
    %p78 = por %p76, %p77
    %p80 = scmp.ne.s32.totalorder %s63, %s79
    %p81 = scmp.eq.s32.totalorder %s15, 0
    %p82 = por %p80, %p81
    %s83 = ssub.s32 %s16, %s28
    %p84 = scmp.eq.s32.totalorder %s83, 0
    %s86 = sadd.s32 %s85, 1
    %s87 = scalar_select %p84, %s85, %s86
    %p90 = pneg %p84
    %p91 = scmp.eq.s32.totalorder %s9, 1
    %p92 = por %p90, %p91
    %p93 = scmp.ne.s32.totalorder %s85, %s88
    %p94 = scmp.eq.s32.totalorder %s9, 0
    %p95 = por %p93, %p94
    %p96 = scmp.ne.s32.totalorder %s85, %s88
    %p97 = scmp.eq.s32.totalorder %s14, 1
    %p98 = por %p96, %p97
    %p99 = scmp.ne.s32.totalorder %s88, %s89
    %p100 = scmp.eq.s32.totalorder %s14, 0
    %p101 = por %p99, %p100
    %p102 = scmp.ne.s32.totalorder %s88, %s89
    %p103 = scmp.eq.s32.totalorder %s15, 1
    %p104 = por %p102, %p103
    %p106 = scmp.ne.s32.totalorder %s89, %s105
    %p107 = scmp.eq.s32.totalorder %s15, 0
    %p108 = por %p106, %p107
    %s109 = ssub.s32 %s16, %s28
    %s110 = ssub.s32 %s17, %s24
    %s111 = sor.u32 %s109, %s110
    %p112 = scmp.eq.s32.totalorder %s111, 0
    %s114 = sadd.s32 %s113, 1
    %s115 = scalar_select %p112, %s113, %s114
    %p118 = pneg %p112
    %p119 = scmp.eq.s32.totalorder %s9, 1
    %p120 = por %p118, %p119
    %p121 = scmp.ne.s32.totalorder %s113, %s116
    %p122 = scmp.eq.s32.totalorder %s9, 0
    %p123 = por %p121, %p122
    %p124 = scmp.ne.s32.totalorder %s113, %s116
    %p125 = scmp.eq.s32.totalorder %s14, 1
    %p126 = por %p124, %p125
    %p127 = scmp.ne.s32.totalorder %s116, %s117
    %p128 = scmp.eq.s32.totalorder %s14, 0
    %p129 = por %p127, %p128
    %p130 = scmp.ne.s32.totalorder %s116, %s117
    %p131 = scmp.eq.s32.totalorder %s15, 1
    %p132 = por %p130, %p131
    %p134 = scmp.ne.s32.totalorder %s117, %s133
    %p135 = scmp.eq.s32.totalorder %s15, 0
    %p136 = por %p134, %p135
    %p137 = scmp.le.s32.totalorder 1, %s9
    %p138 = scmp.lt.s32.totalorder %s9, 3
    %p139 = pnand %p137, %p138
    %p140 = pneg %p139
    // Predicated region
    $region9: #{discriminator_forward.14} parent=5 // pred_check
      _
    $region10: #{discriminator_forward.14} parent=5 // pred_check_branch
      %142 = sbr.rel (%p139) target = $region12
    $region11: #{discriminator_forward.14} parent=5 // pred_region
      %s143 = ssub.s32 %s9, 1
    $region12: #{discriminator_forward.14} parent=5 // pred_fallthru
      _
    %p144 = scmp.lt.s32.totalorder %s9, 2
    // Predicated region
    $region13: #{discriminator_forward.14} parent=5 // pred_check
      %p145 = pneg %p144
    $region14: #{discriminator_forward.14} parent=5 // pred_check_branch
      %147 = sbr.rel (%p145) target = $region16
    $region15: #{discriminator_forward.14} parent=5 // pred_region
      // Predicated region
      $region17: #{discriminator_forward.14} parent=15 // pred_check
        %p148 = pneg %p43
      $region18: #{discriminator_forward.14} parent=15 // pred_check_branch
        %150 = sbr.rel (%p148) target = $region20
      $region19: #{discriminator_forward.14} parent=15 // pred_region
        %s151 = smul.u32 8, %s17
        %p152 = scmp.lt.s32.totalorder %s16, 1
        %s153 = scalar_select %p152, %s16, 1
        %p154 = scmp.lt.s32.totalorder %s151, 7
        %s155 = scalar_select %p154, %s151, 7
        %s156 = smul.addr %s153, 8
        %s157 = sadd.s32 %s155, %s156
        %s158 = smul.addr %s157, 8
        %s159 = scalar_lea.vmem %s0, %s158
        %s160 = smul.u32 8, %s17
      $region20: #{discriminator_forward.14} parent=15 // pred_fallthru
        _
      // Predicated region
      $region21: #{discriminator_forward.14} parent=15 // pred_check
        %p161 = pneg %p69
      $region22: #{discriminator_forward.14} parent=15 // pred_check_branch
        %163 = sbr.rel (%p161) target = $region24
      $region23: #{discriminator_forward.14} parent=15 // pred_region
        %p164 = scmp.lt.s32.totalorder %s16, 1
        %s165 = scalar_select %p164, %s16, 1
        %s166 = scalar_lea.vmem %s1, %s165
      $region24: #{discriminator_forward.14} parent=15 // pred_fallthru
        _
      // Predicated region
      $region25: #{discriminator_forward.14} parent=15 // pred_check
        %p167 = pneg %p95
      $region26: #{discriminator_forward.14} parent=15 // pred_check_branch
        %169 = sbr.rel (%p167) target = $region28
      $region27: #{discriminator_forward.14} parent=15 // pred_region
        %p170 = scmp.lt.s32.totalorder %s16, 1
        %s171 = scalar_select %p170, %s16, 1
        %s172 = scalar_lea.vmem %s2, %s171
      $region28: #{discriminator_forward.14} parent=15 // pred_fallthru
        _
    $region16: #{discriminator_forward.14} parent=5 // pred_fallthru
      _
    %p173 = scmp.le.s32.totalorder 1, %s9
    %p174 = scmp.lt.s32.totalorder %s9, 3
    %p175 = pnand %p173, %p174
    %p176 = pneg %p175
    // Predicated region
    $region29: #{discriminator_forward.14} parent=5 // pred_check
      _
    $region30: #{discriminator_forward.14} parent=5 // pred_check_branch
      %178 = sbr.rel (%p175) target = $region32
    $region31: #{discriminator_forward.14} parent=5 // pred_region
      %s179 = ssub.s32 %s9, 1
      %s180 = smul.u32 8, %s19
      %p181 = scmp.lt.s32.totalorder %s18, 1
      %s182 = scalar_select %p181, %s18, 1
      %p183 = scmp.lt.s32.totalorder %s180, 7
      %s184 = scalar_select %p183, %s180, 7
      %s185 = smul.addr %s182, 8
      %s186 = sadd.s32 %s184, %s185
      %s187 = smul.addr %s186, 8
      %s188 = scalar_lea.vmem %s0, %s187
      %p189 = pneg %p49
      %p190 = pneg %p46
      %p191 = scmp.lt.s32.totalorder %s18, 1
      %s192 = scalar_select %p191, %s18, 1
      %s193 = scalar_lea.vmem %s1, %s192
      %p194 = pneg %p75
      %p195 = pneg %p72
      %p196 = scmp.lt.s32.totalorder %s18, 1
      %s197 = scalar_select %p196, %s18, 1
      %s198 = scalar_lea.vmem %s2, %s197
      %p199 = pneg %p101
      %p200 = pneg %p98
      %p201 = pneg %p129
      %p202 = pneg %p126
      %s203 = smul.u32 8, %s19
      %p204 = scmp.lt.s32.totalorder %s18, 1
      %s205 = scalar_select %p204, %s18, 1
      %p206 = scmp.lt.s32.totalorder %s203, 7
      %s207 = scalar_select %p206, %s203, 7
      %s208 = smul.addr %s205, 8
      %s209 = sadd.s32 %s207, %s208
      %s210 = smul.addr %s209, 8
      %s211 = scalar_lea.vmem %s3, %s210
      %s212 = smul.u32 8, %s19
      %p213 = scmp.lt.s32.totalorder %s18, 1
      %s214 = scalar_select %p213, %s18, 1
      %p215 = scmp.lt.s32.totalorder %s212, 7
      %s216 = scalar_select %p215, %s212, 7
      %s217 = smul.addr %s214, 8
      %s218 = sadd.s32 %s216, %s217
      %s219 = smul.addr %s218, 8
      %s220 = scalar_lea.vmem %s0, %s219
      %s221 = smul.u32 8, %s19
      %p222 = scmp.lt.s32.totalorder %s18, 1
      %s223 = scalar_select %p222, %s18, 1
      %s224 = scalar_lea.vmem %s1, %s223
      %p225 = scmp.lt.s32.totalorder %s18, 1
      %s226 = scalar_select %p225, %s18, 1
      %s227 = scalar_lea.vmem %s2, %s226
      %s228 = smul.u32 8, %s19
      %p229 = scmp.lt.s32.totalorder %s18, 1
      %s230 = scalar_select %p229, %s18, 1
      %p231 = scmp.lt.s32.totalorder %s228, 7
      %s232 = scalar_select %p231, %s228, 7
      %s233 = smul.addr %s230, 8
      %s234 = sadd.s32 %s232, %s233
      %s235 = smul.addr %s234, 8
      %s236 = scalar_lea.vmem %s3, %s235
      %s237 = smul.u32 8, %s19
      %v238 = vld [vmem:[%s220] sm:$0xff]
      %v239 = vld [vmem:[%s220 + $0x8] sm:$0xff]
      %v240 = vld [vmem:[%s220 + $0x10] sm:$0xff]
      %v241 = vld [vmem:[%s220 + $0x18] sm:$0xff]
      %v242 = vld [vmem:[%s220 + $0x20] sm:$0xff]
      %v243 = vld [vmem:[%s220 + $0x28] sm:$0xff]
      %v244 = vld [vmem:[%s220 + $0x30] sm:$0xff]
      %v245 = vld [vmem:[%s220 + $0x38] sm:$0xff]
      %v246 = vld [vmem:[%s224] sm:$0x1]
      %v247 = vmul.f32 %v246, 0.015625
      %v248 = vld [vmem:[%s227] sm:$0x1]
      %v249 = vmul.f32 %v248, 0.015625
      %v250 = vmul.f32 %v247, %v247
      %v251 = vsub.f32 %v249, %v250
      %v253 = vlaneseq
      %v254 = vshrl.u32 %v253, 7
      %v255 = vsub.s32 0, %v254
      %v256 = vrot.slane %v247, %v255
      %v258 = vsub.f32 %v238, %v256
      %v259 = vsub.f32 %v239, %v256
      %v260 = vsub.f32 %v240, %v256
      %v261 = vsub.f32 %v241, %v256
      %v262 = vsub.f32 %v242, %v256
      %v263 = vsub.f32 %v243, %v256
      %v264 = vsub.f32 %v244, %v256
      %v265 = vsub.f32 %v245, %v256
      %v266 = vadd.f32 %v251, 1e-05
      %v267 = vrsqrt.pop %v266
      %v269 = vlaneseq
      %v270 = vshrl.u32 %v269, 7
      %v271 = vsub.s32 0, %v270
      %v272 = vrot.slane %v267, %v271
      %v274 = vmul.f32 %v258, %v272
      %v275 = vmul.f32 %v259, %v272
      %v276 = vmul.f32 %v260, %v272
      %v277 = vmul.f32 %v261, %v272
      %v278 = vmul.f32 %v262, %v272
      %v279 = vmul.f32 %v263, %v272
      %v280 = vmul.f32 %v264, %v272
      %v281 = vmul.f32 %v265, %v272
      %vm282 = vcmp.ge.f32.partialorder %v274, 0.0
      %vm283 = vcmp.ge.f32.partialorder %v275, 0.0
      %vm284 = vcmp.ge.f32.partialorder %v276, 0.0
      %vm285 = vcmp.ge.f32.partialorder %v277, 0.0
      %vm286 = vcmp.ge.f32.partialorder %v278, 0.0
      %vm287 = vcmp.ge.f32.partialorder %v279, 0.0
      %vm288 = vcmp.ge.f32.partialorder %v280, 0.0
      %vm289 = vcmp.ge.f32.partialorder %v281, 0.0
      %v290 = vmul.f32 %v274, 0.2
      %v291 = vmul.f32 %v275, 0.2
      %v292 = vmul.f32 %v276, 0.2
      %v293 = vmul.f32 %v277, 0.2
      %v294 = vmul.f32 %v278, 0.2
      %v295 = vmul.f32 %v279, 0.2
      %v296 = vmul.f32 %v280, 0.2
      %v297 = vmul.f32 %v281, 0.2
      %v298 = vsel %vm282, %v274, %v290
      %v299 = vsel %vm283, %v275, %v291
      %v300 = vsel %vm284, %v276, %v292
      %v301 = vsel %vm285, %v277, %v293
      %v302 = vsel %vm286, %v278, %v294
      %v303 = vsel %vm287, %v279, %v295
      %v304 = vsel %vm288, %v280, %v296
      %v305 = vsel %vm289, %v281, %v297
      %306 = vst [vmem:[%s236] sm:$0xff] %v298
      %307 = vst [vmem:[%s236 + $0x8] sm:$0xff] %v299
      %308 = vst [vmem:[%s236 + $0x10] sm:$0xff] %v300
      %309 = vst [vmem:[%s236 + $0x18] sm:$0xff] %v301
      %310 = vst [vmem:[%s236 + $0x20] sm:$0xff] %v302
      %311 = vst [vmem:[%s236 + $0x28] sm:$0xff] %v303
      %312 = vst [vmem:[%s236 + $0x30] sm:$0xff] %v304
      %313 = vst [vmem:[%s236 + $0x38] sm:$0xff] %v305
      %s314 = smul.u32 8, %s19
      %p315 = scmp.lt.s32.totalorder %s18, 1
      %s316 = scalar_select %p315, %s18, 1
      %p317 = scmp.lt.s32.totalorder %s314, 7
      %s318 = scalar_select %p317, %s314, 7
      %s319 = smul.addr %s316, 8
      %s320 = sadd.s32 %s318, %s319
      %s321 = smul.addr %s320, 8
      %s322 = scalar_lea.vmem %s3, %s321
      // Predicated region
      $region33: #{discriminator_forward.14} parent=31 // pred_check
        %p323 = pneg %p126
      $region34: #{discriminator_forward.14} parent=31 // pred_check_branch
        %325 = sbr.rel (%p323) target = $region36
      $region35: #{discriminator_forward.14} parent=31 // pred_region
        %s326 = smul.u32 8, %s19
      $region36: #{discriminator_forward.14} parent=31 // pred_fallthru
        _
    $region32: #{discriminator_forward.14} parent=5 // pred_fallthru
      _
    %p327 = scmp.le.s32.totalorder 2, %s9
    // Predicated region
    $region37: #{discriminator_forward.14} parent=5 // pred_check
      %p328 = pneg %p327
    $region38: #{discriminator_forward.14} parent=5 // pred_check_branch
      %330 = sbr.rel (%p328) target = $region40
    $region39: #{discriminator_forward.14} parent=5 // pred_region
      %s331 = ssub.s32 %s9, 2
      // Predicated region
      $region41: #{discriminator_forward.14} parent=39 // pred_check
        %p332 = pneg %p132
      $region42: #{discriminator_forward.14} parent=39 // pred_check_branch
        %334 = sbr.rel (%p332) target = $region44
      $region43: #{discriminator_forward.14} parent=39 // pred_region
        %s335 = smul.u32 8, %s21
        %p336 = scmp.lt.s32.totalorder %s20, 1
        %s337 = scalar_select %p336, %s20, 1
        %p338 = scmp.lt.s32.totalorder %s335, 7
        %s339 = scalar_select %p338, %s335, 7
        %s340 = smul.addr %s337, 8
        %s341 = sadd.s32 %s339, %s340
        %s342 = smul.addr %s341, 8
        %s343 = scalar_lea.vmem %s3, %s342
      $region44: #{discriminator_forward.14} parent=39 // pred_fallthru
        _
    $region40: #{discriminator_forward.14} parent=5 // pred_fallthru
      _
  $region6: #{discriminator_forward.14} parent=0 // loop_footer
    %s13 = sadd.s32 1, %s9
  $region7: #{discriminator_forward.14} parent=0 // loop_footer_branch
    %8 = sbr.rel target = $region3
  $region8: #{discriminator_forward.14} parent=0 // loop_exit
    _

// kernel: discriminator_forward.15
$region0: #{discriminator_forward.15}
  #allocation0 [shape = 'u32[]', space=smem, size = 0x4, offset = 0x4, fixed_abs, tag = 'smem constant byte address 0x4 - core index']
  #allocation1 [shape = 'u32[144,128]{1,0:T(1,128)}', space=vmem, size = 0x12000, scoped, tag = 'internal scratch']
  #allocation2 [shape = 'f32[32,256]{1,0:T(8,128)}', space=vmem, size = 0x8000, scoped, tag = 'scratch operand']
  %s0 = inlined_call_operand.vmem [shape: bf16[32,2048], index: 0, kind: input, shape index: {}]
  %s1 = inlined_call_operand.vmem [shape: bf16[2048,256], index: 1, kind: input, shape index: {}]
  %s2 = inlined_call_operand.vmem [shape: f32[1,256], index: 2, kind: input, shape index: {}]
  %s3 = inlined_call_operand.vmem [shape: f32[32,256], index: 3, kind: output, shape index: {}]
  %s4 = sld [smem:[#allocation0]]
  $region76: #{discriminator_forward.15} parent=0
    _
  %s6 = ssub.s32 1, %s4
  %s7 = scalar_select 0, %s6, %s4
  $region1: #{discriminator_forward.15} parent=0
    #allocation3 [shape = 'u8[65536]{0}', space=vmem, size = 0x10000, scoped, tag = 'input window, operand 0']
    loop: start=0, step=1, limit=6
    $region2: #{discriminator_forward.15} parent=1 // loop_pre_header
      _
    $region3: #{discriminator_forward.15} parent=1 // loop_header
      %s9 = sphi 0, %s13
      %p10 = scmp.ge.s32.totalorder %s9, 6
      %s16 = sphi 0, %s35
      %s17 = sphi 0, %s31
      %s18 = sphi 0, %s27
      %s19 = sphi 0, %s16
      %s20 = sphi 0, %s17
      %s21 = sphi 0, %s18
      %s22 = sphi 0, %s19
      %s23 = sphi 0, %s20
      %s24 = sphi 0, %s21
      %s40 = sphi 0, %s42
      %s43 = sphi 0, %s40
      %s44 = sphi 0, %s43
      %s60 = sphi 0, %s44
      %s68 = sphi 0, %s70
      %s71 = sphi 0, %s68
      %s72 = sphi 0, %s71
      %s88 = sphi 0, %s72
      %s94 = sphi 0, %s96
      %s97 = sphi 0, %s94
      %s98 = sphi 0, %s97
      %s114 = sphi 0, %s98
      %s122 = sphi 0, %s124
      %s125 = sphi 0, %s122
      %s126 = sphi 0, %s125
      %s142 = sphi 0, %s126
    $region4: #{discriminator_forward.15} parent=1 // loop_header_branch
      %12 = sbr.rel (%p10) target = $region8
    $region5: #{discriminator_forward.15} parent=1 // loop_body
      %s14 = ssub.s32 %s9, 1
      %s15 = ssub.s32 %s9, 2
      %s25 = sadd.s32 1, %s18
      %p26 = scmp.ge.s32.totalorder %s25, 4
      %s27 = scalar_select %p26, 0, %s25
      %s28 = sadd.s32 1, %s17
      %s29 = scalar_select %p26, %s28, %s17
      %p30 = scmp.ge.s32.totalorder %s29, 1
      %s31 = scalar_select %p30, 0, %s29
      %s32 = sadd.s32 1, %s16
      %s33 = scalar_select %p30, %s32, %s16
      %p34 = scmp.ge.s32.totalorder %s33, 1
      %s35 = scalar_select %p34, 0, %s33
      %s36 = ssub.s32 %s16, %s35
      %s37 = ssub.s32 %s18, %s27
      %s38 = sor.u32 %s36, %s37
      %p39 = scmp.eq.s32.totalorder %s38, 0
      %s41 = sadd.s32 %s40, 1
      %s42 = scalar_select %p39, %s40, %s41
      %p45 = pneg %p39
      %p46 = scmp.eq.s32.totalorder %s9, 3
      %p47 = por %p45, %p46
      %p48 = scmp.ne.s32.totalorder %s40, %s43
      %p49 = scmp.eq.s32.totalorder %s9, 0
      %p50 = por %p48, %p49
      %p51 = scmp.ne.s32.totalorder %s40, %s43
      %p52 = scmp.eq.s32.totalorder %s14, 3
      %p53 = por %p51, %p52
      %p54 = scmp.ne.s32.totalorder %s43, %s44
      %p55 = scmp.eq.s32.totalorder %s14, 0
      %p56 = por %p54, %p55
      %p57 = scmp.ne.s32.totalorder %s43, %s44
      %p58 = scmp.eq.s32.totalorder %s15, 3
      %p59 = por %p57, %p58
      %p61 = scmp.ne.s32.totalorder %s44, %s60
      %p62 = scmp.eq.s32.totalorder %s15, 0
      %p63 = por %p61, %p62
      %s64 = ssub.s32 %s18, %s27
      %s65 = ssub.s32 %s17, %s31
      %s66 = sor.u32 %s64, %s65
      %p67 = scmp.eq.s32.totalorder %s66, 0
      %s69 = sadd.s32 %s68, 1
      %s70 = scalar_select %p67, %s68, %s69
      %p73 = pneg %p67
      %p74 = scmp.eq.s32.totalorder %s9, 3
      %p75 = por %p73, %p74
      %p76 = scmp.ne.s32.totalorder %s68, %s71
      %p77 = scmp.eq.s32.totalorder %s9, 0
      %p78 = por %p76, %p77
      %p79 = scmp.ne.s32.totalorder %s68, %s71
      %p80 = scmp.eq.s32.totalorder %s14, 3
      %p81 = por %p79, %p80
      %p82 = scmp.ne.s32.totalorder %s71, %s72
      %p83 = scmp.eq.s32.totalorder %s14, 0
      %p84 = por %p82, %p83
      %p85 = scmp.ne.s32.totalorder %s71, %s72
      %p86 = scmp.eq.s32.totalorder %s15, 3
      %p87 = por %p85, %p86
      %p89 = scmp.ne.s32.totalorder %s72, %s88
      %p90 = scmp.eq.s32.totalorder %s15, 0
      %p91 = por %p89, %p90
      %s92 = ssub.s32 %s17, %s31
      %p93 = scmp.eq.s32.totalorder %s92, 0
      %s95 = sadd.s32 %s94, 1
      %s96 = scalar_select %p93, %s94, %s95
      %p99 = pneg %p93
      %p100 = scmp.eq.s32.totalorder %s9, 3
      %p101 = por %p99, %p100
      %p102 = scmp.ne.s32.totalorder %s94, %s97
      %p103 = scmp.eq.s32.totalorder %s9, 0
      %p104 = por %p102, %p103
      %p105 = scmp.ne.s32.totalorder %s94, %s97
      %p106 = scmp.eq.s32.totalorder %s14, 3
      %p107 = por %p105, %p106
      %p108 = scmp.ne.s32.totalorder %s97, %s98
      %p109 = scmp.eq.s32.totalorder %s14, 0
      %p110 = por %p108, %p109
      %p111 = scmp.ne.s32.totalorder %s97, %s98
      %p112 = scmp.eq.s32.totalorder %s15, 3
      %p113 = por %p111, %p112
      %p115 = scmp.ne.s32.totalorder %s98, %s114
      %p116 = scmp.eq.s32.totalorder %s15, 0
      %p117 = por %p115, %p116
      %s118 = ssub.s32 %s16, %s35
      %s119 = ssub.s32 %s17, %s31
      %s120 = sor.u32 %s118, %s119
      %p121 = scmp.eq.s32.totalorder %s120, 0
      %s123 = sadd.s32 %s122, 1
      %s124 = scalar_select %p121, %s122, %s123
      %p127 = pneg %p121
      %p128 = scmp.eq.s32.totalorder %s9, 3
      %p129 = por %p127, %p128
      %p130 = scmp.ne.s32.totalorder %s122, %s125
      %p131 = scmp.eq.s32.totalorder %s9, 0
      %p132 = por %p130, %p131
      %p133 = scmp.ne.s32.totalorder %s122, %s125
      %p134 = scmp.eq.s32.totalorder %s14, 3
      %p135 = por %p133, %p134
      %p136 = scmp.ne.s32.totalorder %s125, %s126
      %p137 = scmp.eq.s32.totalorder %s14, 0
      %p138 = por %p136, %p137
      %p139 = scmp.ne.s32.totalorder %s125, %s126
      %p140 = scmp.eq.s32.totalorder %s15, 3
      %p141 = por %p139, %p140
      %p143 = scmp.ne.s32.totalorder %s126, %s142
      %p144 = scmp.eq.s32.totalorder %s15, 0
      %p145 = por %p143, %p144
      %p146 = scmp.le.s32.totalorder 1, %s9
      %p147 = scmp.lt.s32.totalorder %s9, 5
      %p148 = pnand %p146, %p147
      %p149 = pneg %p148
      // Predicated region
      $region9: #{discriminator_forward.15} parent=5 // pred_check
        _
      $region10: #{discriminator_forward.15} parent=5 // pred_check_branch
        %151 = sbr.rel (%p148) target = $region12
      $region11: #{discriminator_forward.15} parent=5 // pred_region
        %s152 = ssub.s32 %s9, 1
        // Predicated region
        $region13: #{discriminator_forward.15} parent=11 // pred_check
          %p153 = pneg %p110
        $region14: #{discriminator_forward.15} parent=11 // pred_check_branch
          %155 = sbr.rel (%p153) target = $region16
        $region15: #{discriminator_forward.15} parent=11 // pred_region
          %s156 = smul.u32 2, %s20
          %p157 = scmp.lt.s32.totalorder %s156, 1
          %s158 = scalar_select %p157, %s156, 1
          %s159 = scalar_lea.vmem %s2, %s158
          %s160 = smul.u32 2, %s20
        $region16: #{discriminator_forward.15} parent=11 // pred_fallthru
          _
      $region12: #{discriminator_forward.15} parent=5 // pred_fallthru
        _
      %p161 = scmp.lt.s32.totalorder %s9, 4
      // Predicated region
      $region17: #{discriminator_forward.15} parent=5 // pred_check
        %p162 = pneg %p161
      $region18: #{discriminator_forward.15} parent=5 // pred_check_branch
        %164 = sbr.rel (%p162) target = $region20
      $region19: #{discriminator_forward.15} parent=5 // pred_region
        // Predicated region
        $region21: #{discriminator_forward.15} parent=19 // pred_check
          %p165 = pneg %p50
        $region22: #{discriminator_forward.15} parent=19 // pred_check_branch
          %167 = sbr.rel (%p165) target = $region24
        $region23: #{discriminator_forward.15} parent=19 // pred_region
          %s168 = sand.u32 %s40, 1
          %s169 = sand.u32 %s40, 1
          %s170 = smul.addr %s169, 64
          %s171 = scalar_lea.vmem [#allocation3], %s170
          %s172 = smul.u32 4, %s16
          %s173 = smul.u32 4, %s18
          %s174 = smul.addr %s172, 16
          %s175 = sadd.s32 %s173, %s174
          %s176 = smul.addr %s175, 4
          %s177 = scalar_lea.vmem %s0, %s176
          // Predicated region
          $region25: #{discriminator_forward.15} parent=23 // pred_check
            _
          $region26: #{discriminator_forward.15} parent=23 // pred_check_branch
            %179 = sbr.rel (0) target = $region28
          $region27: #{discriminator_forward.15} parent=23 // pred_region
            // Predicated region
            $region29: #{discriminator_forward.15} parent=27 // pred_check
              _
            $region30: #{discriminator_forward.15} parent=27 // pred_check_branch
              %181 = sbr.rel (0) target = $region32
            $region31: #{discriminator_forward.15} parent=27 // pred_region
              loop: start=0, step=1, limit=1
              $region33: #{discriminator_forward.15} parent=31 // loop_pre_header
                _
              $region34: #{discriminator_forward.15} parent=31 // loop_header
                %s183 = sphi 0, %s187
                %p184 = scmp.ge.s32.totalorder %s183, 1
                %s188 = sphi %s177, %s177
                %s189 = sphi %s171, %s171
              $region35: #{discriminator_forward.15} parent=31 // loop_header_branch
                %186 = sbr.rel (%p184) target = $region39
              $region36: #{discriminator_forward.15} parent=31 // loop_body
                %v190 = vld [vmem:[%s188] sm:$0xff]
                %191 = vst [vmem:[%s189] sm:$0xff] %v190
                %v192 = vld [vmem:[%s188 + $0x8] sm:$0xff]
                %193 = vst [vmem:[%s189 + $0x8] sm:$0xff] %v192
                %v194 = vld [vmem:[%s188 + $0x40] sm:$0xff]
                %195 = vst [vmem:[%s189 + $0x10] sm:$0xff] %v194
                %v196 = vld [vmem:[%s188 + $0x48] sm:$0xff]
                %197 = vst [vmem:[%s189 + $0x18] sm:$0xff] %v196
                %v198 = vld [vmem:[%s188 + $0x80] sm:$0xff]
                %199 = vst [vmem:[%s189 + $0x20] sm:$0xff] %v198
                %v200 = vld [vmem:[%s188 + $0x88] sm:$0xff]
                %201 = vst [vmem:[%s189 + $0x28] sm:$0xff] %v200
                %v202 = vld [vmem:[%s188 + $0xc0] sm:$0xff]
                %203 = vst [vmem:[%s189 + $0x30] sm:$0xff] %v202
                %v204 = vld [vmem:[%s188 + $0xc8] sm:$0xff]
                %205 = vst [vmem:[%s189 + $0x38] sm:$0xff] %v204
              $region37: #{discriminator_forward.15} parent=31 // loop_footer
                %s187 = sadd.s32 1, %s183
              $region38: #{discriminator_forward.15} parent=31 // loop_footer_branch
                %182 = sbr.rel target = $region34
              $region39: #{discriminator_forward.15} parent=31 // loop_exit
                _
            $region32: #{discriminator_forward.15} parent=27 // pred_fallthru
              _
            // Predicated region
            $region40: #{discriminator_forward.15} parent=27 // pred_check
              _
            $region41: #{discriminator_forward.15} parent=27 // pred_check_branch
              %207 = sbr.rel target = $region43
            $region42: #{discriminator_forward.15} parent=27 // pred_region
              _
            $region43: #{discriminator_forward.15} parent=27 // pred_fallthru
              _
          $region28: #{discriminator_forward.15} parent=23 // pred_fallthru
            _
          %208 = vnop
        $region24: #{discriminator_forward.15} parent=19 // pred_fallthru
          _
        // Predicated region
        $region44: #{discriminator_forward.15} parent=19 // pred_check
          %p209 = pneg %p78
        $region45: #{discriminator_forward.15} parent=19 // pred_check_branch
          %211 = sbr.rel (%p209) target = $region47
        $region46: #{discriminator_forward.15} parent=19 // pred_region
          %s212 = smul.u32 64, %s18
          %s213 = smul.u32 2, %s17
          %p214 = scmp.lt.s32.totalorder %s212, 255
          %s215 = scalar_select %p214, %s212, 255
          %p216 = scmp.lt.s32.totalorder %s213, 1
          %s217 = scalar_select %p216, %s213, 1
          %s218 = smul.addr %s215, 2
          %s219 = sadd.s32 %s217, %s218
          %s220 = smul.addr %s219, 4
          %s221 = scalar_lea.vmem %s1, %s220
          %s222 = smul.u32 64, %s18
          %s223 = smul.u32 2, %s17
        $region47: #{discriminator_forward.15} parent=19 // pred_fallthru
          _
      $region20: #{discriminator_forward.15} parent=5 // pred_fallthru
        _
      %p224 = scmp.le.s32.totalorder 1, %s9
      %p225 = scmp.lt.s32.totalorder %s9, 5
      %p226 = pnand %p224, %p225
      %p227 = pneg %p226
      // Predicated region
      $region48: #{discriminator_forward.15} parent=5 // pred_check
        _
      $region49: #{discriminator_forward.15} parent=5 // pred_check_branch
        %229 = sbr.rel (%p226) target = $region51
      $region50: #{discriminator_forward.15} parent=5 // pred_region
        %s230 = ssub.s32 %s9, 1
        %s231 = sand.u32 %s43, 1
        %s232 = sand.u32 %s43, 1
        %s233 = smul.addr %s232, 64
        %s234 = scalar_lea.vmem [#allocation3], %s233
        // Predicated region
        $region52: #{discriminator_forward.15} parent=50 // pred_check
          %p235 = pneg %p56
        $region53: #{discriminator_forward.15} parent=50 // pred_check_branch
          %237 = sbr.rel (%p235) target = $region55
        $region54: #{discriminator_forward.15} parent=50 // pred_region
          _
        $region55: #{discriminator_forward.15} parent=50 // pred_fallthru
          _
        %s238 = sand.u32 %s43, 1
        %s239 = sand.u32 %s43, 1
        %s240 = smul.addr %s239, 64
        %s241 = scalar_lea.vmem [#allocation3], %s240
        %p242 = pneg %p56
        %p243 = pneg %p53
        %s244 = smul.u32 64, %s21
        %s245 = smul.u32 2, %s20
        %p246 = scmp.lt.s32.totalorder %s244, 255
        %s247 = scalar_select %p246, %s244, 255
        %p248 = scmp.lt.s32.totalorder %s245, 1
        %s249 = scalar_select %p248, %s245, 1
        %s250 = smul.addr %s247, 2
        %s251 = sadd.s32 %s249, %s250
        %s252 = smul.addr %s251, 4
        %s253 = scalar_lea.vmem %s1, %s252
        %p254 = pneg %p84
        %p255 = pneg %p81
        %s256 = smul.u32 2, %s20
        %p257 = scmp.lt.s32.totalorder %s256, 1
        %s258 = scalar_select %p257, %s256, 1
        %s259 = scalar_lea.vmem %s2, %s258
        %p260 = pneg %p110
        %p261 = pneg %p107
        %p262 = pneg %p138
        %p263 = pneg %p135
        %s264 = smul.u32 4, %s19
        %s265 = smul.u32 2, %s20
        %p266 = scmp.lt.s32.totalorder %s264, 3
        %s267 = scalar_select %p266, %s264, 3
        %p268 = scmp.lt.s32.totalorder %s265, 1
        %s269 = scalar_select %p268, %s265, 1
        %s270 = smul.addr %s267, 2
        %s271 = sadd.s32 %s269, %s270
        %s272 = smul.addr %s271, 8
        %s273 = scalar_lea.vmem %s3, %s272
        %s274 = smul.u32 4, %s19
        %s275 = smul.u32 4, %s21
        %s276 = smul.u32 64, %s21
        %s277 = smul.u32 2, %s20
        %p278 = scmp.lt.s32.totalorder %s276, 255
        %s279 = scalar_select %p278, %s276, 255
        %p280 = scmp.lt.s32.totalorder %s277, 1
        %s281 = scalar_select %p280, %s277, 1
        %s282 = smul.addr %s279, 2
        %s283 = sadd.s32 %s281, %s282
        %s284 = smul.addr %s283, 4
        %s285 = scalar_lea.vmem %s1, %s284
        %s286 = smul.u32 64, %s21
        %s287 = smul.u32 2, %s20
        %s288 = smul.u32 2, %s20
        %p289 = scmp.lt.s32.totalorder %s288, 1
        %s290 = scalar_select %p289, %s288, 1
        %s291 = scalar_lea.vmem %s2, %s290
        %s292 = smul.u32 2, %s20
        %s293 = smul.u32 4, %s19
        %s294 = smul.u32 2, %s20
        %p295 = scmp.lt.s32.totalorder %s293, 3
        %s296 = scalar_select %p295, %s293, 3
        %p297 = scmp.lt.s32.totalorder %s294, 1
        %s298 = scalar_select %p297, %s294, 1
        %s299 = smul.addr %s296, 2
        %s300 = sadd.s32 %s298, %s299
        %s301 = smul.addr %s300, 8
        %s302 = scalar_lea.vmem %s3, %s301
        %s303 = smul.u32 4, %s19
        %s304 = smul.u32 2, %s20
        %p305 = scmp.eq.s32.totalorder %s21, 0
        // Predicated region
        $region56: #{discriminator_forward.15} parent=50 // pred_check
          %p306 = pneg %p305
        $region57: #{discriminator_forward.15} parent=50 // pred_check_branch
          %308 = sbr.rel (%p306) target = $region59
        $region58: #{discriminator_forward.15} parent=50 // pred_region
          %309 = vst [vmem:[#allocation2] sm:$0xff] 0.0
          %310 = vst [vmem:[#allocation2 + $0x8] sm:$0xff] 0.0
          %311 = vst [vmem:[#allocation2 + $0x10] sm:$0xff] 0.0
          %312 = vst [vmem:[#allocation2 + $0x18] sm:$0xff] 0.0
          %313 = vst [vmem:[#allocation2 + $0x20] sm:$0xff] 0.0
          %314 = vst [vmem:[#allocation2 + $0x28] sm:$0xff] 0.0
          %315 = vst [vmem:[#allocation2 + $0x30] sm:$0xff] 0.0
          %316 = vst [vmem:[#allocation2 + $0x38] sm:$0xff] 0.0
        $region59: #{discriminator_forward.15} parent=50 // pred_fallthru
          _
        %v317 = vld [vmem:[#allocation2] sm:$0xff]
        %v318 = vld [vmem:[#allocation2 + $0x8] sm:$0xff]
        %v319 = vld [vmem:[#allocation2 + $0x10] sm:$0xff]
        %v320 = vld [vmem:[#allocation2 + $0x18] sm:$0xff]
        %v321 = vld [vmem:[#allocation2 + $0x20] sm:$0xff]
        %v322 = vld [vmem:[#allocation2 + $0x28] sm:$0xff]
        %v323 = vld [vmem:[#allocation2 + $0x30] sm:$0xff]
        %v324 = vld [vmem:[#allocation2 + $0x38] sm:$0xff]
        %v325 = vld [vmem:[%s234] sm:$0xff]
        %v326 = vld [vmem:[%s234 + $0x8] sm:$0xff]
        %v327 = vld [vmem:[%s234 + $0x10] sm:$0xff]
        %v328 = vld [vmem:[%s234 + $0x18] sm:$0xff]
        %v329 = vld [vmem:[%s234 + $0x20] sm:$0xff]
        %v330 = vld [vmem:[%s234 + $0x28] sm:$0xff]
        %v331 = vld [vmem:[%s234 + $0x30] sm:$0xff]
        %v332 = vld [vmem:[%s234 + $0x38] sm:$0xff]
        %v333 = vld [vmem:[%s285] sm:$0xff]
        %v334 = vld [vmem:[%s285 + $0x8] sm:$0xff]
        %v335 = vld [vmem:[%s285 + $0x10] sm:$0xff]
        %v336 = vld [vmem:[%s285 + $0x18] sm:$0xff]
        %v337 = vld [vmem:[%s285 + $0x20] sm:$0xff]
        %v338 = vld [vmem:[%s285 + $0x28] sm:$0xff]
        %v339 = vld [vmem:[%s285 + $0x30] sm:$0xff]
        %v340 = vld [vmem:[%s285 + $0x38] sm:$0xff]
        %v341 = vld [vmem:[%s285 + $0x40] sm:$0xff]
        %v342 = vld [vmem:[%s285 + $0x48] sm:$0xff]
        %v343 = vld [vmem:[%s285 + $0x50] sm:$0xff]
        %v344 = vld [vmem:[%s285 + $0x58] sm:$0xff]
        %v345 = vld [vmem:[%s285 + $0x60] sm:$0xff]
        %v346 = vld [vmem:[%s285 + $0x68] sm:$0xff]
        %v347 = vld [vmem:[%s285 + $0x70] sm:$0xff]
        %v348 = vld [vmem:[%s285 + $0x78] sm:$0xff]
        %v349 = vld [vmem:[%s285 + $0x80] sm:$0xff]
        %v350 = vld [vmem:[%s285 + $0x88] sm:$0xff]
        %v351 = vld [vmem:[%s285 + $0x90] sm:$0xff]
        %v352 = vld [vmem:[%s285 + $0x98] sm:$0xff]
        %v353 = vld [vmem:[%s285 + $0xa0] sm:$0xff]
        %v354 = vld [vmem:[%s285 + $0xa8] sm:$0xff]
        %v355 = vld [vmem:[%s285 + $0xb0] sm:$0xff]
        %v356 = vld [vmem:[%s285 + $0xb8] sm:$0xff]
        %v357 = vld [vmem:[%s285 + $0xc0] sm:$0xff]
        %v358 = vld [vmem:[%s285 + $0xc8] sm:$0xff]
        %v359 = vld [vmem:[%s285 + $0xd0] sm:$0xff]
        %v360 = vld [vmem:[%s285 + $0xd8] sm:$0xff]
        %v361 = vld [vmem:[%s285 + $0xe0] sm:$0xff]
        %v362 = vld [vmem:[%s285 + $0xe8] sm:$0xff]
        %v363 = vld [vmem:[%s285 + $0xf0] sm:$0xff]
        %v364 = vld [vmem:[%s285 + $0xf8] sm:$0xff]
        %v365 = vld [vmem:[%s285 + $0x100] sm:$0xff]
        %v366 = vld [vmem:[%s285 + $0x108] sm:$0xff]
        %v367 = vld [vmem:[%s285 + $0x110] sm:$0xff]
        %v368 = vld [vmem:[%s285 + $0x118] sm:$0xff]
        %v369 = vld [vmem:[%s285 + $0x120] sm:$0xff]
        %v370 = vld [vmem:[%s285 + $0x128] sm:$0xff]
        %v371 = vld [vmem:[%s285 + $0x130] sm:$0xff]
        %v372 = vld [vmem:[%s285 + $0x138] sm:$0xff]
        %v373 = vld [vmem:[%s285 + $0x140] sm:$0xff]
        %v374 = vld [vmem:[%s285 + $0x148] sm:$0xff]
        %v375 = vld [vmem:[%s285 + $0x150] sm:$0xff]
        %v376 = vld [vmem:[%s285 + $0x158] sm:$0xff]
        %v377 = vld [vmem:[%s285 + $0x160] sm:$0xff]
        %v378 = vld [vmem:[%s285 + $0x168] sm:$0xff]
        %v379 = vld [vmem:[%s285 + $0x170] sm:$0xff]
        %v380 = vld [vmem:[%s285 + $0x178] sm:$0xff]
        %v381 = vld [vmem:[%s285 + $0x180] sm:$0xff]
        %v382 = vld [vmem:[%s285 + $0x188] sm:$0xff]
        %v383 = vld [vmem:[%s285 + $0x190] sm:$0xff]
        %v384 = vld [vmem:[%s285 + $0x198] sm:$0xff]
        %v385 = vld [vmem:[%s285 + $0x1a0] sm:$0xff]
        %v386 = vld [vmem:[%s285 + $0x1a8] sm:$0xff]
        %v387 = vld [vmem:[%s285 + $0x1b0] sm:$0xff]
        %v388 = vld [vmem:[%s285 + $0x1b8] sm:$0xff]
        %v389 = vld [vmem:[%s285 + $0x1c0] sm:$0xff]
        %v390 = vld [vmem:[%s285 + $0x1c8] sm:$0xff]
        %v391 = vld [vmem:[%s285 + $0x1d0] sm:$0xff]
        %v392 = vld [vmem:[%s285 + $0x1d8] sm:$0xff]
        %v393 = vld [vmem:[%s285 + $0x1e0] sm:$0xff]
        %v394 = vld [vmem:[%s285 + $0x1e8] sm:$0xff]
        %v395 = vld [vmem:[%s285 + $0x1f0] sm:$0xff]
        %v396 = vld [vmem:[%s285 + $0x1f8] sm:$0xff]
        %v405 = vunpack.c.l.b16 %v325
        %v406 = vunpack.c.h.b16 %v325
        %v407 = vunpack.c.l.b16 %v326
        %v408 = vunpack.c.h.b16 %v326
        %v409 = vunpack.c.l.b16 %v327
        %v410 = vunpack.c.h.b16 %v327
        %v411 = vunpack.c.l.b16 %v328
        %v412 = vunpack.c.h.b16 %v328
        %v413 = vunpack.c.l.b16 %v329
        %v414 = vunpack.c.h.b16 %v329
        %v415 = vunpack.c.l.b16 %v330
        %v416 = vunpack.c.h.b16 %v330
        %v417 = vunpack.c.l.b16 %v331
        %v418 = vunpack.c.h.b16 %v331
        %v419 = vunpack.c.l.b16 %v332
        %v420 = vunpack.c.h.b16 %v332
        %v421 = vpack.c.b16 %v409, %v405
        %v422 = vpack.c.b16 %v410, %v406
        %v423 = vpack.c.b16 %v411, %v407
        %v424 = vpack.c.b16 %v412, %v408
        %v425 = vpack.c.b16 %v417, %v413
        %v426 = vpack.c.b16 %v418, %v414
        %v427 = vpack.c.b16 %v419, %v415
        %v428 = vpack.c.b16 %v420, %v416
        %v501 = vunpack.c.l.b16 %v333
        %v502 = vunpack.c.h.b16 %v333
        %v503 = vunpack.c.l.b16 %v334
        %v504 = vunpack.c.h.b16 %v334
        %v505 = vunpack.c.l.b16 %v335
        %v506 = vunpack.c.h.b16 %v335
        %v507 = vunpack.c.l.b16 %v336
        %v508 = vunpack.c.h.b16 %v336
        %v509 = vunpack.c.l.b16 %v337
        %v510 = vunpack.c.h.b16 %v337
        %v511 = vunpack.c.l.b16 %v338
        %v512 = vunpack.c.h.b16 %v338
        %v513 = vunpack.c.l.b16 %v339
        %v514 = vunpack.c.h.b16 %v339
        %v515 = vunpack.c.l.b16 %v340
        %v516 = vunpack.c.h.b16 %v340
        %v517 = vunpack.c.l.b16 %v341
        %v518 = vunpack.c.h.b16 %v341
        %v519 = vunpack.c.l.b16 %v342
        %v520 = vunpack.c.h.b16 %v342
        %v521 = vunpack.c.l.b16 %v343
        %v522 = vunpack.c.h.b16 %v343
        %v523 = vunpack.c.l.b16 %v344
        %v524 = vunpack.c.h.b16 %v344
        %v525 = vunpack.c.l.b16 %v345
        %v526 = vunpack.c.h.b16 %v345
        %v527 = vunpack.c.l.b16 %v346
        %v528 = vunpack.c.h.b16 %v346
        %v529 = vunpack.c.l.b16 %v347
        %v530 = vunpack.c.h.b16 %v347
        %v531 = vunpack.c.l.b16 %v348
        %v532 = vunpack.c.h.b16 %v348
        %v533 = vunpack.c.l.b16 %v349
        %v534 = vunpack.c.h.b16 %v349
        %v535 = vunpack.c.l.b16 %v350
        %v536 = vunpack.c.h.b16 %v350
        %v537 = vunpack.c.l.b16 %v351
        %v538 = vunpack.c.h.b16 %v351
        %v539 = vunpack.c.l.b16 %v352
        %v540 = vunpack.c.h.b16 %v352
        %v541 = vunpack.c.l.b16 %v353
        %v542 = vunpack.c.h.b16 %v353
        %v543 = vunpack.c.l.b16 %v354
        %v544 = vunpack.c.h.b16 %v354
        %v545 = vunpack.c.l.b16 %v355
        %v546 = vunpack.c.h.b16 %v355
        %v547 = vunpack.c.l.b16 %v356
        %v548 = vunpack.c.h.b16 %v356
        %v549 = vunpack.c.l.b16 %v357
        %v550 = vunpack.c.h.b16 %v357
        %v551 = vunpack.c.l.b16 %v358
        %v552 = vunpack.c.h.b16 %v358
        %v553 = vunpack.c.l.b16 %v359
        %v554 = vunpack.c.h.b16 %v359
        %v555 = vunpack.c.l.b16 %v360
        %v556 = vunpack.c.h.b16 %v360
        %v557 = vunpack.c.l.b16 %v361
        %v558 = vunpack.c.h.b16 %v361
        %v559 = vunpack.c.l.b16 %v362
        %v560 = vunpack.c.h.b16 %v362
        %v561 = vunpack.c.l.b16 %v363
        %v562 = vunpack.c.h.b16 %v363
        %v563 = vunpack.c.l.b16 %v364
        %v564 = vunpack.c.h.b16 %v364
        %v565 = vunpack.c.l.b16 %v365
        %v566 = vunpack.c.h.b16 %v365
        %v567 = vunpack.c.l.b16 %v366
        %v568 = vunpack.c.h.b16 %v366
        %v569 = vunpack.c.l.b16 %v367
        %v570 = vunpack.c.h.b16 %v367
        %v571 = vunpack.c.l.b16 %v368
        %v572 = vunpack.c.h.b16 %v368
        %v573 = vunpack.c.l.b16 %v369
        %v574 = vunpack.c.h.b16 %v369
        %v575 = vunpack.c.l.b16 %v370
        %v576 = vunpack.c.h.b16 %v370
        %v577 = vunpack.c.l.b16 %v371
        %v578 = vunpack.c.h.b16 %v371
        %v579 = vunpack.c.l.b16 %v372
        %v580 = vunpack.c.h.b16 %v372
        %v581 = vunpack.c.l.b16 %v373
        %v582 = vunpack.c.h.b16 %v373
        %v583 = vunpack.c.l.b16 %v374
        %v584 = vunpack.c.h.b16 %v374
        %v585 = vunpack.c.l.b16 %v375
        %v586 = vunpack.c.h.b16 %v375
        %v587 = vunpack.c.l.b16 %v376
        %v588 = vunpack.c.h.b16 %v376
        %v589 = vunpack.c.l.b16 %v377
        %v590 = vunpack.c.h.b16 %v377
        %v591 = vunpack.c.l.b16 %v378
        %v592 = vunpack.c.h.b16 %v378
        %v593 = vunpack.c.l.b16 %v379
        %v594 = vunpack.c.h.b16 %v379
        %v595 = vunpack.c.l.b16 %v380
        %v596 = vunpack.c.h.b16 %v380
        %v597 = vunpack.c.l.b16 %v381
        %v598 = vunpack.c.h.b16 %v381
        %v599 = vunpack.c.l.b16 %v382
        %v600 = vunpack.c.h.b16 %v382
        %v601 = vunpack.c.l.b16 %v383
        %v602 = vunpack.c.h.b16 %v383
        %v603 = vunpack.c.l.b16 %v384
        %v604 = vunpack.c.h.b16 %v384
        %v605 = vunpack.c.l.b16 %v385
        %v606 = vunpack.c.h.b16 %v385
        %v607 = vunpack.c.l.b16 %v386
        %v608 = vunpack.c.h.b16 %v386
        %v609 = vunpack.c.l.b16 %v387
        %v610 = vunpack.c.h.b16 %v387
        %v611 = vunpack.c.l.b16 %v388
        %v612 = vunpack.c.h.b16 %v388
        %v613 = vunpack.c.l.b16 %v389
        %v614 = vunpack.c.h.b16 %v389
        %v615 = vunpack.c.l.b16 %v390
        %v616 = vunpack.c.h.b16 %v390
        %v617 = vunpack.c.l.b16 %v391
        %v618 = vunpack.c.h.b16 %v391
        %v619 = vunpack.c.l.b16 %v392
        %v620 = vunpack.c.h.b16 %v392
        %v621 = vunpack.c.l.b16 %v393
        %v622 = vunpack.c.h.b16 %v393
        %v623 = vunpack.c.l.b16 %v394
        %v624 = vunpack.c.h.b16 %v394
        %v625 = vunpack.c.l.b16 %v395
        %v626 = vunpack.c.h.b16 %v395
        %v627 = vunpack.c.l.b16 %v396
        %v628 = vunpack.c.h.b16 %v396
        %v629 = vpack.c.b16 %v503, %v501
        %v630 = vpack.c.b16 %v504, %v502
        %v631 = vpack.c.b16 %v507, %v505
        %v632 = vpack.c.b16 %v508, %v506
        %v633 = vpack.c.b16 %v511, %v509
        %v634 = vpack.c.b16 %v512, %v510
        %v635 = vpack.c.b16 %v515, %v513
        %v636 = vpack.c.b16 %v516, %v514
        %v637 = vpack.c.b16 %v519, %v517
        %v638 = vpack.c.b16 %v520, %v518
        %v639 = vpack.c.b16 %v523, %v521
        %v640 = vpack.c.b16 %v524, %v522
        %v641 = vpack.c.b16 %v527, %v525
        %v642 = vpack.c.b16 %v528, %v526
        %v643 = vpack.c.b16 %v531, %v529
        %v644 = vpack.c.b16 %v532, %v530
        %v645 = vpack.c.b16 %v535, %v533
        %v646 = vpack.c.b16 %v536, %v534
        %v647 = vpack.c.b16 %v539, %v537
        %v648 = vpack.c.b16 %v540, %v538
        %v649 = vpack.c.b16 %v543, %v541
        %v650 = vpack.c.b16 %v544, %v542
        %v651 = vpack.c.b16 %v547, %v545
        %v652 = vpack.c.b16 %v548, %v546
        %v653 = vpack.c.b16 %v551, %v549
        %v654 = vpack.c.b16 %v552, %v550
        %v655 = vpack.c.b16 %v555, %v553
        %v656 = vpack.c.b16 %v556, %v554
        %v657 = vpack.c.b16 %v559, %v557
        %v658 = vpack.c.b16 %v560, %v558
        %v659 = vpack.c.b16 %v563, %v561
        %v660 = vpack.c.b16 %v564, %v562
        %v661 = vpack.c.b16 %v567, %v565
        %v662 = vpack.c.b16 %v568, %v566
        %v663 = vpack.c.b16 %v571, %v569
        %v664 = vpack.c.b16 %v572, %v570
        %v665 = vpack.c.b16 %v575, %v573
        %v666 = vpack.c.b16 %v576, %v574
        %v667 = vpack.c.b16 %v579, %v577
        %v668 = vpack.c.b16 %v580, %v578
        %v669 = vpack.c.b16 %v583, %v581
        %v670 = vpack.c.b16 %v584, %v582
        %v671 = vpack.c.b16 %v587, %v585
        %v672 = vpack.c.b16 %v588, %v586
        %v673 = vpack.c.b16 %v591, %v589
        %v674 = vpack.c.b16 %v592, %v590
        %v675 = vpack.c.b16 %v595, %v593
        %v676 = vpack.c.b16 %v596, %v594
        %v677 = vpack.c.b16 %v599, %v597
        %v678 = vpack.c.b16 %v600, %v598
        %v679 = vpack.c.b16 %v603, %v601
        %v680 = vpack.c.b16 %v604, %v602
        %v681 = vpack.c.b16 %v607, %v605
        %v682 = vpack.c.b16 %v608, %v606
        %v683 = vpack.c.b16 %v611, %v609
        %v684 = vpack.c.b16 %v612, %v610
        %v685 = vpack.c.b16 %v615, %v613
        %v686 = vpack.c.b16 %v616, %v614
        %v687 = vpack.c.b16 %v619, %v617
        %v688 = vpack.c.b16 %v620, %v618
        %v689 = vpack.c.b16 %v623, %v621
        %v690 = vpack.c.b16 %v624, %v622
        %v691 = vpack.c.b16 %v627, %v625
        %v692 = vpack.c.b16 %v628, %v626
        %757 = vmatprep.subr.bf16.mxu0 %v630
        %758 = vmatpush1.bf16.msra.mxu0 %v629
        %759 = vmatprep.subr.bf16.mxu0 %v632
        %760 = vmatpush1.bf16.msra.mxu0 %v631
        %761 = vmatprep.subr.bf16.mxu0 %v634
        %762 = vmatpush1.bf16.msra.mxu0 %v633
        %763 = vmatprep.subr.bf16.mxu0 %v636
        %764 = vmatpush1.bf16.msra.mxu0 %v635
        %765 = vmatprep.subr.bf16.mxu0 %v638
        %766 = vmatpush1.bf16.msra.mxu0 %v637
        %767 = vmatprep.subr.bf16.mxu0 %v640
        %768 = vmatpush1.bf16.msra.mxu0 %v639
        %769 = vmatprep.subr.bf16.mxu0 %v642
        %770 = vmatpush1.bf16.msra.mxu0 %v641
        %771 = vmatprep.subr.bf16.mxu0 %v644
        %772 = vmatpush1.bf16.msra.mxu0 %v643
        %773 = vmatprep.subr.bf16.mxu0 %v646
        %774 = vmatpush1.bf16.msra.mxu0 %v645
        %775 = vmatprep.subr.bf16.mxu0 %v648
        %776 = vmatpush1.bf16.msra.mxu0 %v647
        %777 = vmatprep.subr.bf16.mxu0 %v650
        %778 = vmatpush1.bf16.msra.mxu0 %v649
        %779 = vmatprep.subr.bf16.mxu0 %v652
        %780 = vmatpush1.bf16.msra.mxu0 %v651
        %781 = vmatprep.subr.bf16.mxu0 %v654
        %782 = vmatpush1.bf16.msra.mxu0 %v653
        %783 = vmatprep.subr.bf16.mxu0 %v656
        %784 = vmatpush1.bf16.msra.mxu0 %v655
        %785 = vmatprep.subr.bf16.mxu0 %v658
        %786 = vmatpush1.bf16.msra.mxu0 %v657
        %787 = vmatprep.subr.bf16.mxu0 %v660
        %788 = vmatpush1.bf16.msra.mxu0 %v659
        %789 = vmatprep.mubr.bf16.mxu0 %v422
        %790 = vmatmul.mubr.bf16.gmra.mrb[0].mxu0 %v421
        %v791 = vpop.f32.mrb[0].mxu0
        %v792 = vadd.f32 0.0, %v791
        %v793 = vpop.f32.mrb[0].mxu0
        %v794 = vadd.f32 0.0, %v793
        %v795 = vpop.f32.mrb[0].mxu0
        %v796 = vadd.f32 0.0, %v795
        %v797 = vpop.f32.mrb[0].mxu0
        %v798 = vadd.f32 0.0, %v797
        %799 = vmatprep.mubr.bf16.mxu0 %v426
        %800 = vmatmul.mubr.bf16.gmra.mrb[0].mxu0 %v425
        %v801 = vpop.f32.mrb[0].mxu0
        %v802 = vadd.f32 0.0, %v801
        %v803 = vpop.f32.mrb[0].mxu0
        %v804 = vadd.f32 0.0, %v803
        %v805 = vpop.f32.mrb[0].mxu0
        %v806 = vadd.f32 0.0, %v805
        %v807 = vpop.f32.mrb[0].mxu0
        %v808 = vadd.f32 0.0, %v807
        %809 = vdwg.mxu0
        %810 = vmatprep.subr.bf16.mxu0 %v662
        %811 = vmatpush1.bf16.msra.mxu0 %v661
        %812 = vmatprep.subr.bf16.mxu0 %v664
        %813 = vmatpush1.bf16.msra.mxu0 %v663
        %814 = vmatprep.subr.bf16.mxu0 %v666
        %815 = vmatpush1.bf16.msra.mxu0 %v665
        %816 = vmatprep.subr.bf16.mxu0 %v668
        %817 = vmatpush1.bf16.msra.mxu0 %v667
        %818 = vmatprep.subr.bf16.mxu0 %v670
        %819 = vmatpush1.bf16.msra.mxu0 %v669
        %820 = vmatprep.subr.bf16.mxu0 %v672
        %821 = vmatpush1.bf16.msra.mxu0 %v671
        %822 = vmatprep.subr.bf16.mxu0 %v674
        %823 = vmatpush1.bf16.msra.mxu0 %v673
        %824 = vmatprep.subr.bf16.mxu0 %v676
        %825 = vmatpush1.bf16.msra.mxu0 %v675
        %826 = vmatprep.subr.bf16.mxu0 %v678
        %827 = vmatpush1.bf16.msra.mxu0 %v677
        %828 = vmatprep.subr.bf16.mxu0 %v680
        %829 = vmatpush1.bf16.msra.mxu0 %v679
        %830 = vmatprep.subr.bf16.mxu0 %v682
        %831 = vmatpush1.bf16.msra.mxu0 %v681
        %832 = vmatprep.subr.bf16.mxu0 %v684
        %833 = vmatpush1.bf16.msra.mxu0 %v683
        %834 = vmatprep.subr.bf16.mxu0 %v686
        %835 = vmatpush1.bf16.msra.mxu0 %v685
        %836 = vmatprep.subr.bf16.mxu0 %v688
        %837 = vmatpush1.bf16.msra.mxu0 %v687
        %838 = vmatprep.subr.bf16.mxu0 %v690
        %839 = vmatpush1.bf16.msra.mxu0 %v689
        %840 = vmatprep.subr.bf16.mxu0 %v692
        %841 = vmatpush1.bf16.msra.mxu0 %v691
        %842 = vmatprep.mubr.bf16.mxu0 %v424
        %843 = vmatmul.mubr.bf16.gmra.mrb[0].mxu0 %v423
        %v844 = vpop.f32.mrb[0].mxu0
        %v845 = vadd.f32 %v792, %v844
        %v846 = vpop.f32.mrb[0].mxu0
        %v847 = vadd.f32 %v794, %v846
        %v848 = vpop.f32.mrb[0].mxu0
        %v849 = vadd.f32 %v796, %v848
        %v850 = vpop.f32.mrb[0].mxu0
        %v851 = vadd.f32 %v798, %v850
        %852 = vmatprep.mubr.bf16.mxu0 %v428
        %853 = vmatmul.mubr.bf16.gmra.mrb[0].mxu0 %v427
        %v854 = vpop.f32.mrb[0].mxu0
        %v855 = vadd.f32 %v802, %v854
        %v856 = vpop.f32.mrb[0].mxu0
        %v857 = vadd.f32 %v804, %v856
        %v858 = vpop.f32.mrb[0].mxu0
        %v859 = vadd.f32 %v806, %v858
        %v860 = vpop.f32.mrb[0].mxu0
        %v861 = vadd.f32 %v808, %v860
        %862 = vdwg.mxu0
        %v863 = vadd.f32 %v317, %v845
        %v864 = vadd.f32 %v318, %v847
        %v865 = vadd.f32 %v319, %v849
        %v866 = vadd.f32 %v320, %v851
        %v867 = vadd.f32 %v321, %v855
        %v868 = vadd.f32 %v322, %v857
        %v869 = vadd.f32 %v323, %v859
        %v870 = vadd.f32 %v324, %v861
        %871 = vst [vmem:[#allocation2] sm:$0xff] %v863
        %872 = vst [vmem:[#allocation2 + $0x8] sm:$0xff] %v864
        %873 = vst [vmem:[#allocation2 + $0x10] sm:$0xff] %v865
        %874 = vst [vmem:[#allocation2 + $0x18] sm:$0xff] %v866
        %875 = vst [vmem:[#allocation2 + $0x20] sm:$0xff] %v867
        %876 = vst [vmem:[#allocation2 + $0x28] sm:$0xff] %v868
        %877 = vst [vmem:[#allocation2 + $0x30] sm:$0xff] %v869
        %878 = vst [vmem:[#allocation2 + $0x38] sm:$0xff] %v870
        %p879 = scmp.eq.s32.totalorder %s21, 3
        // Predicated region
        $region60: #{discriminator_forward.15} parent=50 // pred_check
          %p880 = pneg %p879
        $region61: #{discriminator_forward.15} parent=50 // pred_check_branch
          %882 = sbr.rel (%p880) target = $region63
        $region62: #{discriminator_forward.15} parent=50 // pred_region
          %v883 = vld [vmem:[#allocation2] sm:$0xff]
          %v884 = vld [vmem:[#allocation2 + $0x8] sm:$0xff]
          %v885 = vld [vmem:[#allocation2 + $0x10] sm:$0xff]
          %v886 = vld [vmem:[#allocation2 + $0x18] sm:$0xff]
          %v887 = vld [vmem:[#allocation2 + $0x20] sm:$0xff]
          %v888 = vld [vmem:[#allocation2 + $0x28] sm:$0xff]
          %v889 = vld [vmem:[#allocation2 + $0x30] sm:$0xff]
          %v890 = vld [vmem:[#allocation2 + $0x38] sm:$0xff]
          %v891 = vld [vmem:[%s291] sm:$0x3]
          %v893 = vlaneseq
          %v894 = vshrl.u32 %v893, 7
          %v895 = vsub.s32 0, %v894
          %v896 = vrot.slane %v891, %v895
          %v897 = vlaneseq
          %v898 = vshrl.u32 %v897, 7
          %v899 = vsub.s32 1, %v898
          %v900 = vrot.slane %v891, %v899
          %v903 = vadd.f32 %v883, %v896
          %v904 = vadd.f32 %v884, %v900
          %v905 = vadd.f32 %v885, %v896
          %v906 = vadd.f32 %v886, %v900
          %v907 = vadd.f32 %v887, %v896
          %v908 = vadd.f32 %v888, %v900
          %v909 = vadd.f32 %v889, %v896
          %v910 = vadd.f32 %v890, %v900
          %911 = vst [vmem:[%s302] sm:$0xff] %v903
          %912 = vst [vmem:[%s302 + $0x8] sm:$0xff] %v904
          %913 = vst [vmem:[%s302 + $0x10] sm:$0xff] %v905
          %914 = vst [vmem:[%s302 + $0x18] sm:$0xff] %v906
          %915 = vst [vmem:[%s302 + $0x20] sm:$0xff] %v907
          %916 = vst [vmem:[%s302 + $0x28] sm:$0xff] %v908
          %917 = vst [vmem:[%s302 + $0x30] sm:$0xff] %v909
          %918 = vst [vmem:[%s302 + $0x38] sm:$0xff] %v910
        $region63: #{discriminator_forward.15} parent=50 // pred_fallthru
          _
        %s919 = smul.u32 4, %s19
        %s920 = smul.u32 2, %s20
        %p921 = scmp.lt.s32.totalorder %s919, 3
        %s922 = scalar_select %p921, %s919, 3
        %p923 = scmp.lt.s32.totalorder %s920, 1
        %s924 = scalar_select %p923, %s920, 1
        %s925 = smul.addr %s922, 2
        %s926 = sadd.s32 %s924, %s925
        %s927 = smul.addr %s926, 8
        %s928 = scalar_lea.vmem %s3, %s927
        // Predicated region
        $region64: #{discriminator_forward.15} parent=50 // pred_check
          %p929 = pneg %p135
        $region65: #{discriminator_forward.15} parent=50 // pred_check_branch
          %931 = sbr.rel (%p929) target = $region67
        $region66: #{discriminator_forward.15} parent=50 // pred_region
          %s932 = smul.u32 4, %s19
          %s933 = smul.u32 2, %s20
        $region67: #{discriminator_forward.15} parent=50 // pred_fallthru
          _
        // Predicated region
        $region68: #{discriminator_forward.15} parent=50 // pred_check
          %p934 = pneg %p135
        $region69: #{discriminator_forward.15} parent=50 // pred_check_branch
          %936 = sbr.rel (%p934) target = $region71
        $region70: #{discriminator_forward.15} parent=50 // pred_region
          %s937 = smul.u32 4, %s19
          %s938 = smul.u32 2, %s20
          %p939 = scmp.lt.s32.totalorder %s937, 3
          %s940 = scalar_select %p939, %s937, 3
          %p941 = scmp.lt.s32.totalorder %s938, 1
          %s942 = scalar_select %p941, %s938, 1
          %s943 = smul.addr %s940, 2
          %s944 = sadd.s32 %s942, %s943
          %s945 = smul.addr %s944, 8
          %s946 = scalar_lea.vmem %s3, %s945
        $region71: #{discriminator_forward.15} parent=50 // pred_fallthru
          _
      $region51: #{discriminator_forward.15} parent=5 // pred_fallthru
        _
      %p947 = scmp.le.s32.totalorder 2, %s9
      // Predicated region
      $region72: #{discriminator_forward.15} parent=5 // pred_check
        %p948 = pneg %p947
      $region73: #{discriminator_forward.15} parent=5 // pred_check_branch
        %950 = sbr.rel (%p948) target = $region75
      $region74: #{discriminator_forward.15} parent=5 // pred_region
        %s951 = ssub.s32 %s9, 2
      $region75: #{discriminator_forward.15} parent=5 // pred_fallthru
        _
    $region6: #{discriminator_forward.15} parent=1 // loop_footer
      %s13 = sadd.s32 1, %s9
    $region7: #{discriminator_forward.15} parent=1 // loop_footer_branch
      %8 = sbr.rel target = $region3
    $region8: #{discriminator_forward.15} parent=1 // loop_exit
      _

// kernel: discriminator_forward.16
$region0: #{discriminator_forward.16}
  #allocation0 [shape = 'u32[]', space=smem, size = 0x4, offset = 0x4, fixed_abs, tag = 'smem constant byte address 0x4 - core index']
  #allocation1 [shape = 'u32[144,128]{1,0:T(1,128)}', space=vmem, size = 0x12000, scoped, tag = 'internal scratch']
  %s0 = inlined_call_operand.vmem [shape: f32[2,16,256], index: 0, kind: input, shape index: {}]
  %s1 = inlined_call_operand.vmem [shape: f32[2,1,256], index: 1, kind: output, shape index: {0}]
  %s2 = inlined_call_operand.vmem [shape: f32[2,1,256], index: 2, kind: output, shape index: {1}]
  %3 = xla_tuple %s1, %s2
  %s4 = sld [smem:[#allocation0]]
  $region49: #{discriminator_forward.16} parent=0
    _
  %s6 = ssub.s32 1, %s4
  %s7 = scalar_select 0, %s6, %s4
  loop: start=0, step=1, limit=4
  $region2: #{discriminator_forward.16} parent=0 // loop_pre_header
    _
  $region3: #{discriminator_forward.16} parent=0 // loop_header
    %s9 = sphi 0, %s13
    %p10 = scmp.ge.s32.totalorder %s9, 4
    %s16 = sphi 0, %s28
    %s17 = sphi 0, %s24
    %s18 = sphi 0, %s16
    %s19 = sphi 0, %s17
    %s20 = sphi 0, %s18
    %s21 = sphi 0, %s19
    %s33 = sphi 0, %s35
    %s36 = sphi 0, %s33
    %s37 = sphi 0, %s36
    %s53 = sphi 0, %s37
    %s59 = sphi 0, %s61
    %s62 = sphi 0, %s59
    %s63 = sphi 0, %s62
    %s79 = sphi 0, %s63
    %s85 = sphi 0, %s87
    %s88 = sphi 0, %s85
    %s89 = sphi 0, %s88
    %s105 = sphi 0, %s89
  $region4: #{discriminator_forward.16} parent=0 // loop_header_branch
    %12 = sbr.rel (%p10) target = $region8
  $region5: #{discriminator_forward.16} parent=0 // loop_body
    %s14 = ssub.s32 %s9, 1
    %s15 = ssub.s32 %s9, 2
    %s22 = sadd.s32 1, %s17
    %p23 = scmp.ge.s32.totalorder %s22, 1
    %s24 = scalar_select %p23, 0, %s22
    %s25 = sadd.s32 1, %s16
    %s26 = scalar_select %p23, %s25, %s16
    %p27 = scmp.ge.s32.totalorder %s26, 2
    %s28 = scalar_select %p27, 0, %s26
    %s29 = ssub.s32 %s16, %s28
    %s30 = ssub.s32 %s17, %s24
    %s31 = sor.u32 %s29, %s30
    %p32 = scmp.eq.s32.totalorder %s31, 0
    %s34 = sadd.s32 %s33, 1
    %s35 = scalar_select %p32, %s33, %s34
    %p38 = pneg %p32
    %p39 = scmp.eq.s32.totalorder %s9, 1
    %p40 = por %p38, %p39
    %p41 = scmp.ne.s32.totalorder %s33, %s36
    %p42 = scmp.eq.s32.totalorder %s9, 0
    %p43 = por %p41, %p42
    %p44 = scmp.ne.s32.totalorder %s33, %s36
    %p45 = scmp.eq.s32.totalorder %s14, 1
    %p46 = por %p44, %p45
    %p47 = scmp.ne.s32.totalorder %s36, %s37
    %p48 = scmp.eq.s32.totalorder %s14, 0
    %p49 = por %p47, %p48
    %p50 = scmp.ne.s32.totalorder %s36, %s37
    %p51 = scmp.eq.s32.totalorder %s15, 1
    %p52 = por %p50, %p51
    %p54 = scmp.ne.s32.totalorder %s37, %s53
    %p55 = scmp.eq.s32.totalorder %s15, 0
    %p56 = por %p54, %p55
    %s57 = ssub.s32 %s16, %s28
    %p58 = scmp.eq.s32.totalorder %s57, 0
    %s60 = sadd.s32 %s59, 1
    %s61 = scalar_select %p58, %s59, %s60
    %p64 = pneg %p58
    %p65 = scmp.eq.s32.totalorder %s9, 1
    %p66 = por %p64, %p65
    %p67 = scmp.ne.s32.totalorder %s59, %s62
    %p68 = scmp.eq.s32.totalorder %s9, 0
    %p69 = por %p67, %p68
    %p70 = scmp.ne.s32.totalorder %s59, %s62
    %p71 = scmp.eq.s32.totalorder %s14, 1
    %p72 = por %p70, %p71
    %p73 = scmp.ne.s32.totalorder %s62, %s63
    %p74 = scmp.eq.s32.totalorder %s14, 0
    %p75 = por %p73, %p74
    %p76 = scmp.ne.s32.totalorder %s62, %s63
    %p77 = scmp.eq.s32.totalorder %s15, 1
    %p78 = por %p76, %p77
    %p80 = scmp.ne.s32.totalorder %s63, %s79
    %p81 = scmp.eq.s32.totalorder %s15, 0
    %p82 = por %p80, %p81
    %s83 = ssub.s32 %s16, %s28
    %p84 = scmp.eq.s32.totalorder %s83, 0
    %s86 = sadd.s32 %s85, 1
    %s87 = scalar_select %p84, %s85, %s86
    %p90 = pneg %p84
    %p91 = scmp.eq.s32.totalorder %s9, 1
    %p92 = por %p90, %p91
    %p93 = scmp.ne.s32.totalorder %s85, %s88
    %p94 = scmp.eq.s32.totalorder %s9, 0
    %p95 = por %p93, %p94
    %p96 = scmp.ne.s32.totalorder %s85, %s88
    %p97 = scmp.eq.s32.totalorder %s14, 1
    %p98 = por %p96, %p97
    %p99 = scmp.ne.s32.totalorder %s88, %s89
    %p100 = scmp.eq.s32.totalorder %s14, 0
    %p101 = por %p99, %p100
    %p102 = scmp.ne.s32.totalorder %s88, %s89
    %p103 = scmp.eq.s32.totalorder %s15, 1
    %p104 = por %p102, %p103
    %p106 = scmp.ne.s32.totalorder %s89, %s105
    %p107 = scmp.eq.s32.totalorder %s15, 0
    %p108 = por %p106, %p107
    %p109 = scmp.le.s32.totalorder 1, %s9
    %p110 = scmp.lt.s32.totalorder %s9, 3
    %p111 = pnand %p109, %p110
    %p112 = pneg %p111
    // Predicated region
    $region9: #{discriminator_forward.16} parent=5 // pred_check
      _
    $region10: #{discriminator_forward.16} parent=5 // pred_check_branch
      %114 = sbr.rel (%p111) target = $region12
    $region11: #{discriminator_forward.16} parent=5 // pred_region
      %s115 = ssub.s32 %s9, 1
    $region12: #{discriminator_forward.16} parent=5 // pred_fallthru
      _
    %p116 = scmp.lt.s32.totalorder %s9, 2
    // Predicated region
    $region13: #{discriminator_forward.16} parent=5 // pred_check
      %p117 = pneg %p116
    $region14: #{discriminator_forward.16} parent=5 // pred_check_branch
      %119 = sbr.rel (%p117) target = $region16
    $region15: #{discriminator_forward.16} parent=5 // pred_region
      // Predicated region
      $region17: #{discriminator_forward.16} parent=15 // pred_check
        %p120 = pneg %p43
      $region18: #{discriminator_forward.16} parent=15 // pred_check_branch
        %122 = sbr.rel (%p120) target = $region20
      $region19: #{discriminator_forward.16} parent=15 // pred_region
        %s123 = smul.u32 2, %s17
        %p124 = scmp.lt.s32.totalorder %s16, 1
        %s125 = scalar_select %p124, %s16, 1
        %p126 = scmp.lt.s32.totalorder %s123, 1
        %s127 = scalar_select %p126, %s123, 1
        %s128 = smul.addr %s127, 2
        %s129 = smul.addr %s125, 4
        %s130 = sadd.s32 %s128, %s129
        %s131 = smul.addr %s130, 8
        %s132 = scalar_lea.vmem %s0, %s131
        %s133 = smul.u32 2, %s17
      $region20: #{discriminator_forward.16} parent=15 // pred_fallthru
        _
    $region16: #{discriminator_forward.16} parent=5 // pred_fallthru
      _
    %p134 = scmp.le.s32.totalorder 1, %s9
    %p135 = scmp.lt.s32.totalorder %s9, 3
    %p136 = pnand %p134, %p135
    %p137 = pneg %p136
    // Predicated region
    $region21: #{discriminator_forward.16} parent=5 // pred_check
      _
    $region22: #{discriminator_forward.16} parent=5 // pred_check_branch
      %139 = sbr.rel (%p136) target = $region24
    $region23: #{discriminator_forward.16} parent=5 // pred_region
      %s140 = ssub.s32 %s9, 1
      %s141 = smul.u32 2, %s19
      %p142 = scmp.lt.s32.totalorder %s18, 1
      %s143 = scalar_select %p142, %s18, 1
      %p144 = scmp.lt.s32.totalorder %s141, 1
      %s145 = scalar_select %p144, %s141, 1
      %s146 = smul.addr %s145, 2
      %s147 = smul.addr %s143, 4
      %s148 = sadd.s32 %s146, %s147
      %s149 = smul.addr %s148, 8
      %s150 = scalar_lea.vmem %s0, %s149
      %p151 = pneg %p49
      %p152 = pneg %p46
      %p153 = pneg %p75
      %p154 = pneg %p72
      %p155 = scmp.lt.s32.totalorder %s18, 1
      %s156 = scalar_select %p155, %s18, 1
      %s157 = smul.addr %s156, 2
      %s158 = scalar_lea.vmem %s1, %s157
      %p159 = pneg %p101
      %p160 = pneg %p98
      %p161 = scmp.lt.s32.totalorder %s18, 1
      %s162 = scalar_select %p161, %s18, 1
      %s163 = smul.addr %s162, 2
      %s164 = scalar_lea.vmem %s2, %s163
      %s165 = smul.u32 2, %s19
      %p166 = scmp.lt.s32.totalorder %s18, 1
      %s167 = scalar_select %p166, %s18, 1
      %p168 = scmp.lt.s32.totalorder %s165, 1
      %s169 = scalar_select %p168, %s165, 1
      %s170 = smul.addr %s169, 2
      %s171 = smul.addr %s167, 4
      %s172 = sadd.s32 %s170, %s171
      %s173 = smul.addr %s172, 8
      %s174 = scalar_lea.vmem %s0, %s173
      %s175 = smul.u32 2, %s19
      %p176 = scmp.lt.s32.totalorder %s18, 1
      %s177 = scalar_select %p176, %s18, 1
      %s178 = smul.addr %s177, 2
      %s179 = scalar_lea.vmem %s1, %s178
      %p180 = scmp.lt.s32.totalorder %s18, 1
      %s181 = scalar_select %p180, %s18, 1
      %s182 = smul.addr %s181, 2
      %s183 = scalar_lea.vmem %s2, %s182
      %p184 = scmp.eq.s32.totalorder %s19, 0
      // Predicated region
      $region25: #{discriminator_forward.16} parent=23 // pred_check
        %p185 = pneg %p184
      $region26: #{discriminator_forward.16} parent=23 // pred_check_branch
        %187 = sbr.rel (%p185) target = $region28
      $region27: #{discriminator_forward.16} parent=23 // pred_region
        %v188 = vlaneseq
        %vm189 = vcmp.ge.s32.totalorder %v188, 0
        %vm190 = vcmp.lt.s32.totalorder %v188, 256
        %vm191 = vmand %vm189, %vm190
        %192 = vst.msk [vmem:[%s179] sm:$0x3] %vm191, 0.0
        %193 = vst.msk [vmem:[%s183] sm:$0x3] %vm191, 0.0
      $region28: #{discriminator_forward.16} parent=23 // pred_fallthru
        _
      %v194 = vld [vmem:[%s174] sm:$0xff]
      %v195 = vld [vmem:[%s174 + $0x8] sm:$0xff]
      %v196 = vld [vmem:[%s174 + $0x10] sm:$0xff]
      %v197 = vld [vmem:[%s174 + $0x18] sm:$0xff]
      %v198 = vld [vmem:[%s179] sm:$0x3]
      %v199 = vadd.f32 %v194, %v196
      %v200 = vrot.slane %v199, 4
      %v201 = vadd.f32 %v199, %v200
      %v202 = vrot.slane %v201, 2
      %v203 = vadd.f32 %v201, %v202
      %v204 = vrot.slane %v203, 1
      %v205 = vadd.f32 %v203, %v204
      %v206 = vadd.f32 %v195, %v197
      %v207 = vrot.slane %v206, 4
      %v208 = vadd.f32 %v206, %v207
      %v209 = vrot.slane %v208, 2
      %v210 = vadd.f32 %v208, %v209
      %v211 = vrot.slane %v210, 1
      %v212 = vadd.f32 %v210, %v211
      %v215 = vcombine.low %v205, %v212
      %v217 = vunpack.c.l.s4 1966171168
      %v218 = vunpack.c.0.s8 %v217
      %v219 = vlaneseq
      %v220 = vshrl.u32 %v219, 7
      %v221 = vsub.s32 %v218, %v220
      %v222 = vrot.slane %v215, %v221
      %v224 = vunpack.c.l.s4 1966171168
      %v225 = vunpack.c.0.s8 %v224
      %v226 = vlaneseq
      %v227 = vshrl.u32 %v226, 7
      %v228 = vsub.s32 %v225, %v227
      %v229 = vrot.slane %v222, %v228
      %v231 = vadd.f32 %v198, %v229
      %v232 = vlaneseq
      %vm233 = vcmp.ge.s32.totalorder %v232, 0
      %vm234 = vcmp.lt.s32.totalorder %v232, 256
      %vm235 = vmand %vm233, %vm234
      %236 = vst.msk [vmem:[%s179] sm:$0x3] %vm235, %v231
      %v237 = vld [vmem:[%s183] sm:$0x3]
      %v238 = vmul.f32 %v194, %v194
      %v239 = vmul.f32 %v195, %v195
      %v240 = vmul.f32 %v196, %v196
      %v241 = vmul.f32 %v197, %v197
      %v242 = vadd.f32 %v238, %v240
      %v243 = vrot.slane %v242, 4
      %v244 = vadd.f32 %v242, %v243
      %v245 = vrot.slane %v244, 2
      %v246 = vadd.f32 %v244, %v245
      %v247 = vrot.slane %v246, 1
      %v248 = vadd.f32 %v246, %v247
      %v249 = vadd.f32 %v239, %v241
      %v250 = vrot.slane %v249, 4
      %v251 = vadd.f32 %v249, %v250
      %v252 = vrot.slane %v251, 2
      %v253 = vadd.f32 %v251, %v252
      %v254 = vrot.slane %v253, 1
      %v255 = vadd.f32 %v253, %v254
      %v258 = vcombine.low %v248, %v255
      %v260 = vunpack.c.l.s4 1966171168
      %v261 = vunpack.c.0.s8 %v260
      %v262 = vlaneseq
      %v263 = vshrl.u32 %v262, 7
      %v264 = vsub.s32 %v261, %v263
      %v265 = vrot.slane %v258, %v264
      %v267 = vunpack.c.l.s4 1966171168
      %v268 = vunpack.c.0.s8 %v267
      %v269 = vlaneseq
      %v270 = vshrl.u32 %v269, 7
      %v271 = vsub.s32 %v268, %v270
      %v272 = vrot.slane %v265, %v271
      %v274 = vadd.f32 %v237, %v272
      %275 = vst.msk [vmem:[%s183] sm:$0x3] %vm235, %v274
      %p276 = scmp.lt.s32.totalorder %s18, 1
      %s277 = scalar_select %p276, %s18, 1
      %s278 = smul.addr %s277, 2
      %s279 = scalar_lea.vmem %s1, %s278
      %p280 = scmp.lt.s32.totalorder %s18, 1
      %s281 = scalar_select %p280, %s18, 1
      %s282 = smul.addr %s281, 2
      %s283 = scalar_lea.vmem %s2, %s282
      // Predicated region
      $region29: #{discriminator_forward.16} parent=23 // pred_check
        %p284 = pneg %p72
      $region30: #{discriminator_forward.16} parent=23 // pred_check_branch
        %286 = sbr.rel (%p284) target = $region32
      $region31: #{discriminator_forward.16} parent=23 // pred_region
        _
      $region32: #{discriminator_forward.16} parent=23 // pred_fallthru
        _
      // Predicated region
      $region33: #{discriminator_forward.16} parent=23 // pred_check
        %p287 = pneg %p98
      $region34: #{discriminator_forward.16} parent=23 // pred_check_branch
        %289 = sbr.rel (%p287) target = $region36
      $region35: #{discriminator_forward.16} parent=23 // pred_region
        _
      $region36: #{discriminator_forward.16} parent=23 // pred_fallthru
        _
    $region24: #{discriminator_forward.16} parent=5 // pred_fallthru
      _
    %p290 = scmp.le.s32.totalorder 2, %s9
    // Predicated region
    $region37: #{discriminator_forward.16} parent=5 // pred_check
      %p291 = pneg %p290
    $region38: #{discriminator_forward.16} parent=5 // pred_check_branch
      %293 = sbr.rel (%p291) target = $region40
    $region39: #{discriminator_forward.16} parent=5 // pred_region
      %s294 = ssub.s32 %s9, 2
      // Predicated region
      $region41: #{discriminator_forward.16} parent=39 // pred_check
        %p295 = pneg %p78
      $region42: #{discriminator_forward.16} parent=39 // pred_check_branch
        %297 = sbr.rel (%p295) target = $region44
      $region43: #{discriminator_forward.16} parent=39 // pred_region
        %p298 = scmp.lt.s32.totalorder %s20, 1
        %s299 = scalar_select %p298, %s20, 1
        %s300 = smul.addr %s299, 2
        %s301 = scalar_lea.vmem %s1, %s300
      $region44: #{discriminator_forward.16} parent=39 // pred_fallthru
        _
      // Predicated region
      $region45: #{discriminator_forward.16} parent=39 // pred_check
        %p302 = pneg %p104
      $region46: #{discriminator_forward.16} parent=39 // pred_check_branch
        %304 = sbr.rel (%p302) target = $region48
      $region47: #{discriminator_forward.16} parent=39 // pred_region
        %p305 = scmp.lt.s32.totalorder %s20, 1
        %s306 = scalar_select %p305, %s20, 1
        %s307 = smul.addr %s306, 2
        %s308 = scalar_lea.vmem %s2, %s307
      $region48: #{discriminator_forward.16} parent=39 // pred_fallthru
        _
    $region40: #{discriminator_forward.16} parent=5 // pred_fallthru
      _
  $region6: #{discriminator_forward.16} parent=0 // loop_footer
    %s13 = sadd.s32 1, %s9
  $region7: #{discriminator_forward.16} parent=0 // loop_footer_branch
    %8 = sbr.rel target = $region3
  $region8: #{discriminator_forward.16} parent=0 // loop_exit
    _

// kernel: discriminator_forward.17
$region0: #{discriminator_forward.17}
  #allocation0 [shape = 'u32[]', space=smem, size = 0x4, offset = 0x4, fixed_abs, tag = 'smem constant byte address 0x4 - core index']
  #allocation1 [shape = 'u32[144,128]{1,0:T(1,128)}', space=vmem, size = 0x12000, scoped, tag = 'internal scratch']
  %s0 = inlined_call_operand.vmem [shape: f32[2,16,256], index: 0, kind: input, shape index: {}]
  %s1 = inlined_call_operand.vmem [shape: f32[2,1,256], index: 1, kind: input, shape index: {}]
  %s2 = inlined_call_operand.vmem [shape: f32[2,1,256], index: 2, kind: input, shape index: {}]
  %s3 = inlined_call_operand.vmem [shape: f32[2,16,256], index: 3, kind: output, shape index: {}]
  %s4 = sld [smem:[#allocation0]]
  $region45: #{discriminator_forward.17} parent=0
    _
  %s6 = ssub.s32 1, %s4
  %s7 = scalar_select 0, %s6, %s4
  loop: start=0, step=1, limit=4
  $region2: #{discriminator_forward.17} parent=0 // loop_pre_header
    _
  $region3: #{discriminator_forward.17} parent=0 // loop_header
    %s9 = sphi 0, %s13
    %p10 = scmp.ge.s32.totalorder %s9, 4
    %s16 = sphi 0, %s28
    %s17 = sphi 0, %s24
    %s18 = sphi 0, %s16
    %s19 = sphi 0, %s17
    %s20 = sphi 0, %s18
    %s21 = sphi 0, %s19
    %s33 = sphi 0, %s35
    %s36 = sphi 0, %s33
    %s37 = sphi 0, %s36
    %s53 = sphi 0, %s37
    %s59 = sphi 0, %s61
    %s62 = sphi 0, %s59
    %s63 = sphi 0, %s62
    %s79 = sphi 0, %s63
    %s85 = sphi 0, %s87
    %s88 = sphi 0, %s85
    %s89 = sphi 0, %s88
    %s105 = sphi 0, %s89
    %s113 = sphi 0, %s115
    %s116 = sphi 0, %s113
    %s117 = sphi 0, %s116
    %s133 = sphi 0, %s117
  $region4: #{discriminator_forward.17} parent=0 // loop_header_branch
    %12 = sbr.rel (%p10) target = $region8
  $region5: #{discriminator_forward.17} parent=0 // loop_body
    %s14 = ssub.s32 %s9, 1
    %s15 = ssub.s32 %s9, 2
    %s22 = sadd.s32 1, %s17
    %p23 = scmp.ge.s32.totalorder %s22, 1
    %s24 = scalar_select %p23, 0, %s22
    %s25 = sadd.s32 1, %s16
    %s26 = scalar_select %p23, %s25, %s16
    %p27 = scmp.ge.s32.totalorder %s26, 2
    %s28 = scalar_select %p27, 0, %s26
    %s29 = ssub.s32 %s16, %s28
    %s30 = ssub.s32 %s17, %s24
    %s31 = sor.u32 %s29, %s30
    %p32 = scmp.eq.s32.totalorder %s31, 0
    %s34 = sadd.s32 %s33, 1
    %s35 = scalar_select %p32, %s33, %s34
    %p38 = pneg %p32
    %p39 = scmp.eq.s32.totalorder %s9, 1
    %p40 = por %p38, %p39
    %p41 = scmp.ne.s32.totalorder %s33, %s36
    %p42 = scmp.eq.s32.totalorder %s9, 0
    %p43 = por %p41, %p42
    %p44 = scmp.ne.s32.totalorder %s33, %s36
    %p45 = scmp.eq.s32.totalorder %s14, 1
    %p46 = por %p44, %p45
    %p47 = scmp.ne.s32.totalorder %s36, %s37
    %p48 = scmp.eq.s32.totalorder %s14, 0
    %p49 = por %p47, %p48
    %p50 = scmp.ne.s32.totalorder %s36, %s37
    %p51 = scmp.eq.s32.totalorder %s15, 1
    %p52 = por %p50, %p51
    %p54 = scmp.ne.s32.totalorder %s37, %s53
    %p55 = scmp.eq.s32.totalorder %s15, 0
    %p56 = por %p54, %p55
    %s57 = ssub.s32 %s16, %s28
    %p58 = scmp.eq.s32.totalorder %s57, 0
    %s60 = sadd.s32 %s59, 1
    %s61 = scalar_select %p58, %s59, %s60
    %p64 = pneg %p58
    %p65 = scmp.eq.s32.totalorder %s9, 1
    %p66 = por %p64, %p65
    %p67 = scmp.ne.s32.totalorder %s59, %s62
    %p68 = scmp.eq.s32.totalorder %s9, 0
    %p69 = por %p67, %p68
    %p70 = scmp.ne.s32.totalorder %s59, %s62
    %p71 = scmp.eq.s32.totalorder %s14, 1
    %p72 = por %p70, %p71
    %p73 = scmp.ne.s32.totalorder %s62, %s63
    %p74 = scmp.eq.s32.totalorder %s14, 0
    %p75 = por %p73, %p74
    %p76 = scmp.ne.s32.totalorder %s62, %s63
    %p77 = scmp.eq.s32.totalorder %s15, 1
    %p78 = por %p76, %p77
    %p80 = scmp.ne.s32.totalorder %s63, %s79
    %p81 = scmp.eq.s32.totalorder %s15, 0
    %p82 = por %p80, %p81
    %s83 = ssub.s32 %s16, %s28
    %p84 = scmp.eq.s32.totalorder %s83, 0
    %s86 = sadd.s32 %s85, 1
    %s87 = scalar_select %p84, %s85, %s86
    %p90 = pneg %p84
    %p91 = scmp.eq.s32.totalorder %s9, 1
    %p92 = por %p90, %p91
    %p93 = scmp.ne.s32.totalorder %s85, %s88
    %p94 = scmp.eq.s32.totalorder %s9, 0
    %p95 = por %p93, %p94
    %p96 = scmp.ne.s32.totalorder %s85, %s88
    %p97 = scmp.eq.s32.totalorder %s14, 1
    %p98 = por %p96, %p97
    %p99 = scmp.ne.s32.totalorder %s88, %s89
    %p100 = scmp.eq.s32.totalorder %s14, 0
    %p101 = por %p99, %p100
    %p102 = scmp.ne.s32.totalorder %s88, %s89
    %p103 = scmp.eq.s32.totalorder %s15, 1
    %p104 = por %p102, %p103
    %p106 = scmp.ne.s32.totalorder %s89, %s105
    %p107 = scmp.eq.s32.totalorder %s15, 0
    %p108 = por %p106, %p107
    %s109 = ssub.s32 %s16, %s28
    %s110 = ssub.s32 %s17, %s24
    %s111 = sor.u32 %s109, %s110
    %p112 = scmp.eq.s32.totalorder %s111, 0
    %s114 = sadd.s32 %s113, 1
    %s115 = scalar_select %p112, %s113, %s114
    %p118 = pneg %p112
    %p119 = scmp.eq.s32.totalorder %s9, 1
    %p120 = por %p118, %p119
    %p121 = scmp.ne.s32.totalorder %s113, %s116
    %p122 = scmp.eq.s32.totalorder %s9, 0
    %p123 = por %p121, %p122
    %p124 = scmp.ne.s32.totalorder %s113, %s116
    %p125 = scmp.eq.s32.totalorder %s14, 1
    %p126 = por %p124, %p125
    %p127 = scmp.ne.s32.totalorder %s116, %s117
    %p128 = scmp.eq.s32.totalorder %s14, 0
    %p129 = por %p127, %p128
    %p130 = scmp.ne.s32.totalorder %s116, %s117
    %p131 = scmp.eq.s32.totalorder %s15, 1
    %p132 = por %p130, %p131
    %p134 = scmp.ne.s32.totalorder %s117, %s133
    %p135 = scmp.eq.s32.totalorder %s15, 0
    %p136 = por %p134, %p135
    %p137 = scmp.le.s32.totalorder 1, %s9
    %p138 = scmp.lt.s32.totalorder %s9, 3
    %p139 = pnand %p137, %p138
    %p140 = pneg %p139
    // Predicated region
    $region9: #{discriminator_forward.17} parent=5 // pred_check
      _
    $region10: #{discriminator_forward.17} parent=5 // pred_check_branch
      %142 = sbr.rel (%p139) target = $region12
    $region11: #{discriminator_forward.17} parent=5 // pred_region
      %s143 = ssub.s32 %s9, 1
    $region12: #{discriminator_forward.17} parent=5 // pred_fallthru
      _
    %p144 = scmp.lt.s32.totalorder %s9, 2
    // Predicated region
    $region13: #{discriminator_forward.17} parent=5 // pred_check
      %p145 = pneg %p144
    $region14: #{discriminator_forward.17} parent=5 // pred_check_branch
      %147 = sbr.rel (%p145) target = $region16
    $region15: #{discriminator_forward.17} parent=5 // pred_region
      // Predicated region
      $region17: #{discriminator_forward.17} parent=15 // pred_check
        %p148 = pneg %p43
      $region18: #{discriminator_forward.17} parent=15 // pred_check_branch
        %150 = sbr.rel (%p148) target = $region20
      $region19: #{discriminator_forward.17} parent=15 // pred_region
        %s151 = smul.u32 2, %s17
        %p152 = scmp.lt.s32.totalorder %s16, 1
        %s153 = scalar_select %p152, %s16, 1
        %p154 = scmp.lt.s32.totalorder %s151, 1
        %s155 = scalar_select %p154, %s151, 1
        %s156 = smul.addr %s155, 2
        %s157 = smul.addr %s153, 4
        %s158 = sadd.s32 %s156, %s157
        %s159 = smul.addr %s158, 8
        %s160 = scalar_lea.vmem %s0, %s159
        %s161 = smul.u32 2, %s17
      $region20: #{discriminator_forward.17} parent=15 // pred_fallthru
        _
      // Predicated region
      $region21: #{discriminator_forward.17} parent=15 // pred_check
        %p162 = pneg %p69
      $region22: #{discriminator_forward.17} parent=15 // pred_check_branch
        %164 = sbr.rel (%p162) target = $region24
      $region23: #{discriminator_forward.17} parent=15 // pred_region
        %p165 = scmp.lt.s32.totalorder %s16, 1
        %s166 = scalar_select %p165, %s16, 1
        %s167 = smul.addr %s166, 2
        %s168 = scalar_lea.vmem %s1, %s167
      $region24: #{discriminator_forward.17} parent=15 // pred_fallthru
        _
      // Predicated region
      $region25: #{discriminator_forward.17} parent=15 // pred_check
        %p169 = pneg %p95
      $region26: #{discriminator_forward.17} parent=15 // pred_check_branch
        %171 = sbr.rel (%p169) target = $region28
      $region27: #{discriminator_forward.17} parent=15 // pred_region
        %p172 = scmp.lt.s32.totalorder %s16, 1
        %s173 = scalar_select %p172, %s16, 1
        %s174 = smul.addr %s173, 2
        %s175 = scalar_lea.vmem %s2, %s174
      $region28: #{discriminator_forward.17} parent=15 // pred_fallthru
        _
    $region16: #{discriminator_forward.17} parent=5 // pred_fallthru
      _
    %p176 = scmp.le.s32.totalorder 1, %s9
    %p177 = scmp.lt.s32.totalorder %s9, 3
    %p178 = pnand %p176, %p177
    %p179 = pneg %p178
    // Predicated region
    $region29: #{discriminator_forward.17} parent=5 // pred_check
      _
    $region30: #{discriminator_forward.17} parent=5 // pred_check_branch
      %181 = sbr.rel (%p178) target = $region32
    $region31: #{discriminator_forward.17} parent=5 // pred_region
      %s182 = ssub.s32 %s9, 1
      %s183 = smul.u32 2, %s19
      %p184 = scmp.lt.s32.totalorder %s18, 1
      %s185 = scalar_select %p184, %s18, 1
      %p186 = scmp.lt.s32.totalorder %s183, 1
      %s187 = scalar_select %p186, %s183, 1
      %s188 = smul.addr %s187, 2
      %s189 = smul.addr %s185, 4
      %s190 = sadd.s32 %s188, %s189
      %s191 = smul.addr %s190, 8
      %s192 = scalar_lea.vmem %s0, %s191
      %p193 = pneg %p49
      %p194 = pneg %p46
      %p195 = scmp.lt.s32.totalorder %s18, 1
      %s196 = scalar_select %p195, %s18, 1
      %s197 = smul.addr %s196, 2
      %s198 = scalar_lea.vmem %s1, %s197
      %p199 = pneg %p75
      %p200 = pneg %p72
      %p201 = scmp.lt.s32.totalorder %s18, 1
      %s202 = scalar_select %p201, %s18, 1
      %s203 = smul.addr %s202, 2
      %s204 = scalar_lea.vmem %s2, %s203
      %p205 = pneg %p101
      %p206 = pneg %p98
      %p207 = pneg %p129
      %p208 = pneg %p126
      %s209 = smul.u32 2, %s19
      %p210 = scmp.lt.s32.totalorder %s18, 1
      %s211 = scalar_select %p210, %s18, 1
      %p212 = scmp.lt.s32.totalorder %s209, 1
      %s213 = scalar_select %p212, %s209, 1
      %s214 = smul.addr %s213, 2
      %s215 = smul.addr %s211, 4
      %s216 = sadd.s32 %s214, %s215
      %s217 = smul.addr %s216, 8
      %s218 = scalar_lea.vmem %s3, %s217
      %s219 = smul.u32 2, %s19
      %p220 = scmp.lt.s32.totalorder %s18, 1
      %s221 = scalar_select %p220, %s18, 1
      %p222 = scmp.lt.s32.totalorder %s219, 1
      %s223 = scalar_select %p222, %s219, 1
      %s224 = smul.addr %s223, 2
      %s225 = smul.addr %s221, 4
      %s226 = sadd.s32 %s224, %s225
      %s227 = smul.addr %s226, 8
      %s228 = scalar_lea.vmem %s0, %s227
      %s229 = smul.u32 2, %s19
      %p230 = scmp.lt.s32.totalorder %s18, 1
      %s231 = scalar_select %p230, %s18, 1
      %s232 = smul.addr %s231, 2
      %s233 = scalar_lea.vmem %s1, %s232
      %p234 = scmp.lt.s32.totalorder %s18, 1
      %s235 = scalar_select %p234, %s18, 1
      %s236 = smul.addr %s235, 2
      %s237 = scalar_lea.vmem %s2, %s236
      %s238 = smul.u32 2, %s19
      %p239 = scmp.lt.s32.totalorder %s18, 1
      %s240 = scalar_select %p239, %s18, 1
      %p241 = scmp.lt.s32.totalorder %s238, 1
      %s242 = scalar_select %p241, %s238, 1
      %s243 = smul.addr %s242, 2
      %s244 = smul.addr %s240, 4
      %s245 = sadd.s32 %s243, %s244
      %s246 = smul.addr %s245, 8
      %s247 = scalar_lea.vmem %s3, %s246
      %s248 = smul.u32 2, %s19
      %v249 = vld [vmem:[%s228] sm:$0xff]
      %v250 = vld [vmem:[%s228 + $0x8] sm:$0xff]
      %v251 = vld [vmem:[%s228 + $0x10] sm:$0xff]
      %v252 = vld [vmem:[%s228 + $0x18] sm:$0xff]
      %v253 = vld [vmem:[%s233] sm:$0x3]
      %v254 = vmul.f32 %v253, 0.0625
      %v255 = vld [vmem:[%s237] sm:$0x3]
      %v256 = vmul.f32 %v255, 0.0625
      %v257 = vmul.f32 %v254, %v254
      %v258 = vsub.f32 %v256, %v257
      %v260 = vlaneseq
      %v261 = vshrl.u32 %v260, 7
      %v262 = vsub.s32 0, %v261
      %v263 = vrot.slane %v254, %v262
      %v264 = vlaneseq
      %v265 = vshrl.u32 %v264, 7
      %v266 = vsub.s32 1, %v265
      %v267 = vrot.slane %v254, %v266
      %v270 = vsub.f32 %v249, %v263
      %v271 = vsub.f32 %v250, %v267
      %v272 = vsub.f32 %v251, %v263
      %v273 = vsub.f32 %v252, %v267
      %v274 = vadd.f32 %v258, 1e-05
      %v275 = vrsqrt.pop %v274
      %v277 = vlaneseq
      %v278 = vshrl.u32 %v277, 7
      %v279 = vsub.s32 0, %v278
      %v280 = vrot.slane %v275, %v279
      %v281 = vlaneseq
      %v282 = vshrl.u32 %v281, 7
      %v283 = vsub.s32 1, %v282
      %v284 = vrot.slane %v275, %v283
      %v287 = vmul.f32 %v270, %v280
      %v288 = vmul.f32 %v271, %v284
      %v289 = vmul.f32 %v272, %v280
      %v290 = vmul.f32 %v273, %v284
      %vm291 = vcmp.ge.f32.partialorder %v287, 0.0
      %vm292 = vcmp.ge.f32.partialorder %v288, 0.0
      %vm293 = vcmp.ge.f32.partialorder %v289, 0.0
      %vm294 = vcmp.ge.f32.partialorder %v290, 0.0
      %v295 = vmul.f32 %v287, 0.2
      %v296 = vmul.f32 %v288, 0.2
      %v297 = vmul.f32 %v289, 0.2
      %v298 = vmul.f32 %v290, 0.2
      %v299 = vsel %vm291, %v287, %v295
      %v300 = vsel %vm292, %v288, %v296
      %v301 = vsel %vm293, %v289, %v297
      %v302 = vsel %vm294, %v290, %v298
      %303 = vst [vmem:[%s247] sm:$0xff] %v299
      %304 = vst [vmem:[%s247 + $0x8] sm:$0xff] %v300
      %305 = vst [vmem:[%s247 + $0x10] sm:$0xff] %v301
      %306 = vst [vmem:[%s247 + $0x18] sm:$0xff] %v302
      %s307 = smul.u32 2, %s19
      %p308 = scmp.lt.s32.totalorder %s18, 1
      %s309 = scalar_select %p308, %s18, 1
      %p310 = scmp.lt.s32.totalorder %s307, 1
      %s311 = scalar_select %p310, %s307, 1
      %s312 = smul.addr %s311, 2
      %s313 = smul.addr %s309, 4
      %s314 = sadd.s32 %s312, %s313
      %s315 = smul.addr %s314, 8
      %s316 = scalar_lea.vmem %s3, %s315
      // Predicated region
      $region33: #{discriminator_forward.17} parent=31 // pred_check
        %p317 = pneg %p126
      $region34: #{discriminator_forward.17} parent=31 // pred_check_branch
        %319 = sbr.rel (%p317) target = $region36
      $region35: #{discriminator_forward.17} parent=31 // pred_region
        %s320 = smul.u32 2, %s19
      $region36: #{discriminator_forward.17} parent=31 // pred_fallthru
        _
    $region32: #{discriminator_forward.17} parent=5 // pred_fallthru
      _
    %p321 = scmp.le.s32.totalorder 2, %s9
    // Predicated region
    $region37: #{discriminator_forward.17} parent=5 // pred_check
      %p322 = pneg %p321
    $region38: #{discriminator_forward.17} parent=5 // pred_check_branch
      %324 = sbr.rel (%p322) target = $region40
    $region39: #{discriminator_forward.17} parent=5 // pred_region
      %s325 = ssub.s32 %s9, 2
      // Predicated region
      $region41: #{discriminator_forward.17} parent=39 // pred_check
        %p326 = pneg %p132
      $region42: #{discriminator_forward.17} parent=39 // pred_check_branch
        %328 = sbr.rel (%p326) target = $region44
      $region43: #{discriminator_forward.17} parent=39 // pred_region
        %s329 = smul.u32 2, %s21
        %p330 = scmp.lt.s32.totalorder %s20, 1
        %s331 = scalar_select %p330, %s20, 1
        %p332 = scmp.lt.s32.totalorder %s329, 1
        %s333 = scalar_select %p332, %s329, 1
        %s334 = smul.addr %s333, 2
        %s335 = smul.addr %s331, 4
        %s336 = sadd.s32 %s334, %s335
        %s337 = smul.addr %s336, 8
        %s338 = scalar_lea.vmem %s3, %s337
      $region44: #{discriminator_forward.17} parent=39 // pred_fallthru
        _
    $region40: #{discriminator_forward.17} parent=5 // pred_fallthru
      _
  $region6: #{discriminator_forward.17} parent=0 // loop_footer
    %s13 = sadd.s32 1, %s9
  $region7: #{discriminator_forward.17} parent=0 // loop_footer_branch
    %8 = sbr.rel target = $region3
  $region8: #{discriminator_forward.17} parent=0 // loop_exit
    _

// kernel: discriminator_forward.18
$region0: #{discriminator_forward.18}
  #allocation0 [shape = 'u32[]', space=smem, size = 0x4, offset = 0x4, fixed_abs, tag = 'smem constant byte address 0x4 - core index']
  #allocation1 [shape = 'u32[144,128]{1,0:T(1,128)}', space=vmem, size = 0x12000, scoped, tag = 'internal scratch']
  #allocation2 [shape = 'f32[24,256]{1,0:T(8,128)}', space=vmem, size = 0x6000, scoped, tag = 'scratch operand']
  %s0 = inlined_call_operand.vmem [shape: bf16[24,4096], index: 0, kind: input, shape index: {}]
  %s1 = inlined_call_operand.vmem [shape: bf16[4096,512], index: 1, kind: input, shape index: {}]
  %s2 = inlined_call_operand.vmem [shape: f32[1,512], index: 2, kind: input, shape index: {}]
  %s3 = inlined_call_operand.vmem [shape: f32[24,512], index: 3, kind: output, shape index: {}]
  %s4 = sld [smem:[#allocation0]]
  $region133: #{discriminator_forward.18} parent=0
    _
  %s6 = ssub.s32 1, %s4
  %s7 = scalar_select 0, %s6, %s4
  $region1: #{discriminator_forward.18} parent=0
    #allocation3 [shape = 'u8[49152]{0}', space=vmem, size = 0xc000, scoped, tag = 'input window, operand 0']
    #allocation4 [shape = 'u8[524288]{0}', space=vmem, size = 0x80000, scoped, tag = 'input window, operand 1']
    #allocation5 [shape = 'u8[49152]{0}', space=vmem, size = 0xc000, scoped, tag = 'output window, operand 0']
    loop: start=0, step=1, limit=18
    $region2: #{discriminator_forward.18} parent=1 // loop_pre_header
      _
    $region3: #{discriminator_forward.18} parent=1 // loop_header
      %s9 = sphi 0, %s13
      %p10 = scmp.ge.s32.totalorder %s9, 18
      %s16 = sphi 0, %s35
      %s17 = sphi 0, %s31
      %s18 = sphi 0, %s27
      %s19 = sphi 0, %s16
      %s20 = sphi 0, %s17
      %s21 = sphi 0, %s18
      %s22 = sphi 0, %s19
      %s23 = sphi 0, %s20
      %s24 = sphi 0, %s21
      %s40 = sphi 0, %s42
      %s43 = sphi 0, %s40
      %s44 = sphi 0, %s43
      %s60 = sphi 0, %s44
      %s68 = sphi 0, %s70
      %s71 = sphi 0, %s68
      %s72 = sphi 0, %s71
      %s88 = sphi 0, %s72
      %s94 = sphi 0, %s96
      %s97 = sphi 0, %s94
      %s98 = sphi 0, %s97
      %s114 = sphi 0, %s98
      %s122 = sphi 0, %s124
      %s125 = sphi 0, %s122
      %s126 = sphi 0, %s125
      %s142 = sphi 0, %s126
    $region4: #{discriminator_forward.18} parent=1 // loop_header_branch
      %12 = sbr.rel (%p10) target = $region8
    $region5: #{discriminator_forward.18} parent=1 // loop_body
      %s14 = ssub.s32 %s9, 1
      %s15 = ssub.s32 %s9, 2
      %s25 = sadd.s32 1, %s18
      %p26 = scmp.ge.s32.totalorder %s25, 8
      %s27 = scalar_select %p26, 0, %s25
      %s28 = sadd.s32 1, %s17
      %s29 = scalar_select %p26, %s28, %s17
      %p30 = scmp.ge.s32.totalorder %s29, 2
      %s31 = scalar_select %p30, 0, %s29
      %s32 = sadd.s32 1, %s16
      %s33 = scalar_select %p30, %s32, %s16
      %p34 = scmp.ge.s32.totalorder %s33, 1
      %s35 = scalar_select %p34, 0, %s33
      %s36 = ssub.s32 %s16, %s35
      %s37 = ssub.s32 %s18, %s27
      %s38 = sor.u32 %s36, %s37
      %p39 = scmp.eq.s32.totalorder %s38, 0
      %s41 = sadd.s32 %s40, 1
      %s42 = scalar_select %p39, %s40, %s41
      %p45 = pneg %p39
      %p46 = scmp.eq.s32.totalorder %s9, 15
      %p47 = por %p45, %p46
      %p48 = scmp.ne.s32.totalorder %s40, %s43
      %p49 = scmp.eq.s32.totalorder %s9, 0
      %p50 = por %p48, %p49
      %p51 = scmp.ne.s32.totalorder %s40, %s43
      %p52 = scmp.eq.s32.totalorder %s14, 15
      %p53 = por %p51, %p52
      %p54 = scmp.ne.s32.totalorder %s43, %s44
      %p55 = scmp.eq.s32.totalorder %s14, 0
      %p56 = por %p54, %p55
      %p57 = scmp.ne.s32.totalorder %s43, %s44
      %p58 = scmp.eq.s32.totalorder %s15, 15
      %p59 = por %p57, %p58
      %p61 = scmp.ne.s32.totalorder %s44, %s60
      %p62 = scmp.eq.s32.totalorder %s15, 0
      %p63 = por %p61, %p62
      %s64 = ssub.s32 %s18, %s27
      %s65 = ssub.s32 %s17, %s31
      %s66 = sor.u32 %s64, %s65
      %p67 = scmp.eq.s32.totalorder %s66, 0
      %s69 = sadd.s32 %s68, 1
      %s70 = scalar_select %p67, %s68, %s69
      %p73 = pneg %p67
      %p74 = scmp.eq.s32.totalorder %s9, 15
      %p75 = por %p73, %p74
      %p76 = scmp.ne.s32.totalorder %s68, %s71
      %p77 = scmp.eq.s32.totalorder %s9, 0
      %p78 = por %p76, %p77
      %p79 = scmp.ne.s32.totalorder %s68, %s71
      %p80 = scmp.eq.s32.totalorder %s14, 15
      %p81 = por %p79, %p80
      %p82 = scmp.ne.s32.totalorder %s71, %s72
      %p83 = scmp.eq.s32.totalorder %s14, 0
      %p84 = por %p82, %p83
      %p85 = scmp.ne.s32.totalorder %s71, %s72
      %p86 = scmp.eq.s32.totalorder %s15, 15
      %p87 = por %p85, %p86
      %p89 = scmp.ne.s32.totalorder %s72, %s88
      %p90 = scmp.eq.s32.totalorder %s15, 0
      %p91 = por %p89, %p90
      %s92 = ssub.s32 %s17, %s31
      %p93 = scmp.eq.s32.totalorder %s92, 0
      %s95 = sadd.s32 %s94, 1
      %s96 = scalar_select %p93, %s94, %s95
      %p99 = pneg %p93
      %p100 = scmp.eq.s32.totalorder %s9, 15
      %p101 = por %p99, %p100
      %p102 = scmp.ne.s32.totalorder %s94, %s97
      %p103 = scmp.eq.s32.totalorder %s9, 0
      %p104 = por %p102, %p103
      %p105 = scmp.ne.s32.totalorder %s94, %s97
      %p106 = scmp.eq.s32.totalorder %s14, 15
      %p107 = por %p105, %p106
      %p108 = scmp.ne.s32.totalorder %s97, %s98
      %p109 = scmp.eq.s32.totalorder %s14, 0
      %p110 = por %p108, %p109
      %p111 = scmp.ne.s32.totalorder %s97, %s98
      %p112 = scmp.eq.s32.totalorder %s15, 15
      %p113 = por %p111, %p112
      %p115 = scmp.ne.s32.totalorder %s98, %s114
      %p116 = scmp.eq.s32.totalorder %s15, 0
      %p117 = por %p115, %p116
      %s118 = ssub.s32 %s16, %s35
      %s119 = ssub.s32 %s17, %s31
      %s120 = sor.u32 %s118, %s119
      %p121 = scmp.eq.s32.totalorder %s120, 0
      %s123 = sadd.s32 %s122, 1
      %s124 = scalar_select %p121, %s122, %s123
      %p127 = pneg %p121
      %p128 = scmp.eq.s32.totalorder %s9, 15
      %p129 = por %p127, %p128
      %p130 = scmp.ne.s32.totalorder %s122, %s125
      %p131 = scmp.eq.s32.totalorder %s9, 0
      %p132 = por %p130, %p131
      %p133 = scmp.ne.s32.totalorder %s122, %s125
      %p134 = scmp.eq.s32.totalorder %s14, 15
      %p135 = por %p133, %p134
      %p136 = scmp.ne.s32.totalorder %s125, %s126
      %p137 = scmp.eq.s32.totalorder %s14, 0
      %p138 = por %p136, %p137
      %p139 = scmp.ne.s32.totalorder %s125, %s126
      %p140 = scmp.eq.s32.totalorder %s15, 15
      %p141 = por %p139, %p140
      %p143 = scmp.ne.s32.totalorder %s126, %s142
      %p144 = scmp.eq.s32.totalorder %s15, 0
      %p145 = por %p143, %p144
      %p146 = scmp.le.s32.totalorder 1, %s9
      %p147 = scmp.lt.s32.totalorder %s9, 17
      %p148 = pnand %p146, %p147
      %p149 = pneg %p148
      // Predicated region
      $region9: #{discriminator_forward.18} parent=5 // pred_check
        _
      $region10: #{discriminator_forward.18} parent=5 // pred_check_branch
        %151 = sbr.rel (%p148) target = $region12
      $region11: #{discriminator_forward.18} parent=5 // pred_region
        %s152 = ssub.s32 %s9, 1
      $region12: #{discriminator_forward.18} parent=5 // pred_fallthru
        _
      %p153 = scmp.lt.s32.totalorder %s9, 16
      // Predicated region
      $region13: #{discriminator_forward.18} parent=5 // pred_check
        %p154 = pneg %p153
      $region14: #{discriminator_forward.18} parent=5 // pred_check_branch
        %156 = sbr.rel (%p154) target = $region16
      $region15: #{discriminator_forward.18} parent=5 // pred_region
        // Predicated region
        $region17: #{discriminator_forward.18} parent=15 // pred_check
          %p157 = pneg %p50
        $region18: #{discriminator_forward.18} parent=15 // pred_check_branch
          %159 = sbr.rel (%p157) target = $region20
        $region19: #{discriminator_forward.18} parent=15 // pred_region
          %s160 = sand.u32 %s40, 1
          %s161 = sand.u32 %s40, 1
          %s162 = smul.addr %s161, 48
          %s163 = scalar_lea.vmem [#allocation3], %s162
          %s164 = smul.u32 3, %s16
          %s165 = smul.u32 4, %s18
          %s166 = smul.addr %s164, 32
          %s167 = sadd.s32 %s165, %s166
          %s168 = smul.addr %s167, 4
          %s169 = scalar_lea.vmem %s0, %s168
          // Predicated region
          $region21: #{discriminator_forward.18} parent=19 // pred_check
            _
          $region22: #{discriminator_forward.18} parent=19 // pred_check_branch
            %171 = sbr.rel (0) target = $region24
          $region23: #{discriminator_forward.18} parent=19 // pred_region
            // Predicated region
            $region25: #{discriminator_forward.18} parent=23 // pred_check
              _
            $region26: #{discriminator_forward.18} parent=23 // pred_check_branch
              %173 = sbr.rel (0) target = $region28
            $region27: #{discriminator_forward.18} parent=23 // pred_region
              loop: start=0, step=1, limit=1
              $region29: #{discriminator_forward.18} parent=27 // loop_pre_header
                _
              $region30: #{discriminator_forward.18} parent=27 // loop_header
                %s175 = sphi 0, %s179
                %p176 = scmp.ge.s32.totalorder %s175, 1
                %s180 = sphi %s169, %s169
                %s181 = sphi %s163, %s163
              $region31: #{discriminator_forward.18} parent=27 // loop_header_branch
                %178 = sbr.rel (%p176) target = $region35
              $region32: #{discriminator_forward.18} parent=27 // loop_body
                %v182 = vld [vmem:[%s180] sm:$0xff]
                %183 = vst [vmem:[%s181] sm:$0xff] %v182
                %v184 = vld [vmem:[%s180 + $0x8] sm:$0xff]
                %185 = vst [vmem:[%s181 + $0x8] sm:$0xff] %v184
                %v186 = vld [vmem:[%s180 + $0x80] sm:$0xff]
                %187 = vst [vmem:[%s181 + $0x10] sm:$0xff] %v186
                %v188 = vld [vmem:[%s180 + $0x88] sm:$0xff]
                %189 = vst [vmem:[%s181 + $0x18] sm:$0xff] %v188
                %v190 = vld [vmem:[%s180 + $0x100] sm:$0xff]
                %191 = vst [vmem:[%s181 + $0x20] sm:$0xff] %v190
                %v192 = vld [vmem:[%s180 + $0x108] sm:$0xff]
                %193 = vst [vmem:[%s181 + $0x28] sm:$0xff] %v192
              $region33: #{discriminator_forward.18} parent=27 // loop_footer
                %s179 = sadd.s32 1, %s175
              $region34: #{discriminator_forward.18} parent=27 // loop_footer_branch
                %174 = sbr.rel target = $region30
              $region35: #{discriminator_forward.18} parent=27 // loop_exit
                _
            $region28: #{discriminator_forward.18} parent=23 // pred_fallthru
              _
            // Predicated region
            $region36: #{discriminator_forward.18} parent=23 // pred_check
              _
            $region37: #{discriminator_forward.18} parent=23 // pred_check_branch
              %195 = sbr.rel target = $region39
            $region38: #{discriminator_forward.18} parent=23 // pred_region
              _
            $region39: #{discriminator_forward.18} parent=23 // pred_fallthru
              _
          $region24: #{discriminator_forward.18} parent=19 // pred_fallthru
            _
          %196 = vnop
        $region20: #{discriminator_forward.18} parent=15 // pred_fallthru
          _
        // Predicated region
        $region40: #{discriminator_forward.18} parent=15 // pred_check
          %p197 = pneg %p78
        $region41: #{discriminator_forward.18} parent=15 // pred_check_branch
          %199 = sbr.rel (%p197) target = $region43
        $region42: #{discriminator_forward.18} parent=15 // pred_region
          %s200 = sand.u32 %s68, 1
          %s201 = sand.u32 %s68, 1
          %s202 = smul.addr %s201, 512
          %s203 = scalar_lea.vmem [#allocation4], %s202
          %s204 = smul.u32 64, %s18
          %s205 = smul.u32 2, %s17
          %s206 = smul.addr %s204, 4
          %s207 = sadd.s32 %s205, %s206
          %s208 = smul.addr %s207, 4
          %s209 = scalar_lea.vmem %s1, %s208
          // Predicated region
          $region44: #{discriminator_forward.18} parent=42 // pred_check
            _
          $region45: #{discriminator_forward.18} parent=42 // pred_check_branch
            %211 = sbr.rel (0) target = $region47
          $region46: #{discriminator_forward.18} parent=42 // pred_region
            // Predicated region
            $region48: #{discriminator_forward.18} parent=46 // pred_check
              _
            $region49: #{discriminator_forward.18} parent=46 // pred_check_branch
              %213 = sbr.rel (0) target = $region51
            $region50: #{discriminator_forward.18} parent=46 // pred_region
              // Predicated region
              $region63: #{discriminator_forward.18} parent=50 // pred_check
                _
              $region64: #{discriminator_forward.18} parent=50 // pred_check_branch
                %354 = sbr.rel (0) target = $region66
              $region65: #{discriminator_forward.18} parent=50 // pred_region
                loop: start=0, step=1, limit=1
                $region67: #{discriminator_forward.18} parent=65 // loop_pre_header
                  _
                $region68: #{discriminator_forward.18} parent=65 // loop_header
                  %s356 = sphi 0, %s360
                  %p357 = scmp.ge.s32.totalorder %s356, 1
                  %s361 = sphi %s209, %s209
                  %s362 = sphi %s203, %s203
                $region69: #{discriminator_forward.18} parent=65 // loop_header_branch
                  %359 = sbr.rel (%p357) target = $region73
                $region70: #{discriminator_forward.18} parent=65 // loop_body
                  %v363 = vld [vmem:[%s361] sm:$0xff]
                  %364 = vst [vmem:[%s362] sm:$0xff] %v363
                  %v365 = vld [vmem:[%s361 + $0x10] sm:$0xff]
                  %366 = vst [vmem:[%s362 + $0x8] sm:$0xff] %v365
                  %v367 = vld [vmem:[%s361 + $0x20] sm:$0xff]
                  %368 = vst [vmem:[%s362 + $0x10] sm:$0xff] %v367
                  %v369 = vld [vmem:[%s361 + $0x30] sm:$0xff]
                  %370 = vst [vmem:[%s362 + $0x18] sm:$0xff] %v369
                  %v371 = vld [vmem:[%s361 + $0x40] sm:$0xff]
                  %372 = vst [vmem:[%s362 + $0x20] sm:$0xff] %v371
                  %v373 = vld [vmem:[%s361 + $0x50] sm:$0xff]
                  %374 = vst [vmem:[%s362 + $0x28] sm:$0xff] %v373
                  %v375 = vld [vmem:[%s361 + $0x60] sm:$0xff]
                  %376 = vst [vmem:[%s362 + $0x30] sm:$0xff] %v375
                  %v377 = vld [vmem:[%s361 + $0x70] sm:$0xff]
                  %378 = vst [vmem:[%s362 + $0x38] sm:$0xff] %v377
                  %v379 = vld [vmem:[%s361 + $0x80] sm:$0xff]
                  %380 = vst [vmem:[%s362 + $0x40] sm:$0xff] %v379
                  %v381 = vld [vmem:[%s361 + $0x90] sm:$0xff]
                  %382 = vst [vmem:[%s362 + $0x48] sm:$0xff] %v381
                  %v383 = vld [vmem:[%s361 + $0xa0] sm:$0xff]
                  %384 = vst [vmem:[%s362 + $0x50] sm:$0xff] %v383
                  %v385 = vld [vmem:[%s361 + $0xb0] sm:$0xff]
                  %386 = vst [vmem:[%s362 + $0x58] sm:$0xff] %v385
                  %v387 = vld [vmem:[%s361 + $0xc0] sm:$0xff]
                  %388 = vst [vmem:[%s362 + $0x60] sm:$0xff] %v387
                  %v389 = vld [vmem:[%s361 + $0xd0] sm:$0xff]
                  %390 = vst [vmem:[%s362 + $0x68] sm:$0xff] %v389
                  %v391 = vld [vmem:[%s361 + $0xe0] sm:$0xff]
                  %392 = vst [vmem:[%s362 + $0x70] sm:$0xff] %v391
                  %v393 = vld [vmem:[%s361 + $0xf0] sm:$0xff]
                  %394 = vst [vmem:[%s362 + $0x78] sm:$0xff] %v393
                  %v395 = vld [vmem:[%s361 + $0x100] sm:$0xff]
                  %396 = vst [vmem:[%s362 + $0x80] sm:$0xff] %v395
                  %v397 = vld [vmem:[%s361 + $0x110] sm:$0xff]
                  %398 = vst [vmem:[%s362 + $0x88] sm:$0xff] %v397
                  %v399 = vld [vmem:[%s361 + $0x120] sm:$0xff]
                  %400 = vst [vmem:[%s362 + $0x90] sm:$0xff] %v399
                  %v401 = vld [vmem:[%s361 + $0x130] sm:$0xff]
                  %402 = vst [vmem:[%s362 + $0x98] sm:$0xff] %v401
                  %v403 = vld [vmem:[%s361 + $0x140] sm:$0xff]
                  %404 = vst [vmem:[%s362 + $0xa0] sm:$0xff] %v403
                  %v405 = vld [vmem:[%s361 + $0x150] sm:$0xff]
                  %406 = vst [vmem:[%s362 + $0xa8] sm:$0xff] %v405
                  %v407 = vld [vmem:[%s361 + $0x160] sm:$0xff]
                  %408 = vst [vmem:[%s362 + $0xb0] sm:$0xff] %v407
                  %v409 = vld [vmem:[%s361 + $0x170] sm:$0xff]
                  %410 = vst [vmem:[%s362 + $0xb8] sm:$0xff] %v409
                  %v411 = vld [vmem:[%s361 + $0x180] sm:$0xff]
                  %412 = vst [vmem:[%s362 + $0xc0] sm:$0xff] %v411
                  %v413 = vld [vmem:[%s361 + $0x190] sm:$0xff]
                  %414 = vst [vmem:[%s362 + $0xc8] sm:$0xff] %v413
                  %v415 = vld [vmem:[%s361 + $0x1a0] sm:$0xff]
                  %416 = vst [vmem:[%s362 + $0xd0] sm:$0xff] %v415
                  %v417 = vld [vmem:[%s361 + $0x1b0] sm:$0xff]
                  %418 = vst [vmem:[%s362 + $0xd8] sm:$0xff] %v417
                  %v419 = vld [vmem:[%s361 + $0x1c0] sm:$0xff]
                  %420 = vst [vmem:[%s362 + $0xe0] sm:$0xff] %v419
                  %v421 = vld [vmem:[%s361 + $0x1d0] sm:$0xff]
                  %422 = vst [vmem:[%s362 + $0xe8] sm:$0xff] %v421
                  %v423 = vld [vmem:[%s361 + $0x1e0] sm:$0xff]
                  %424 = vst [vmem:[%s362 + $0xf0] sm:$0xff] %v423
                  %v425 = vld [vmem:[%s361 + $0x1f0] sm:$0xff]
                  %426 = vst [vmem:[%s362 + $0xf8] sm:$0xff] %v425
                  %v427 = vld [vmem:[%s361 + $0x200] sm:$0xff]
                  %428 = vst [vmem:[%s362 + $0x100] sm:$0xff] %v427
                  %v429 = vld [vmem:[%s361 + $0x210] sm:$0xff]
                  %430 = vst [vmem:[%s362 + $0x108] sm:$0xff] %v429
                  %v431 = vld [vmem:[%s361 + $0x220] sm:$0xff]
                  %432 = vst [vmem:[%s362 + $0x110] sm:$0xff] %v431
                  %v433 = vld [vmem:[%s361 + $0x230] sm:$0xff]
                  %434 = vst [vmem:[%s362 + $0x118] sm:$0xff] %v433
                  %v435 = vld [vmem:[%s361 + $0x240] sm:$0xff]
                  %436 = vst [vmem:[%s362 + $0x120] sm:$0xff] %v435
                  %v437 = vld [vmem:[%s361 + $0x250] sm:$0xff]
                  %438 = vst [vmem:[%s362 + $0x128] sm:$0xff] %v437
                  %v439 = vld [vmem:[%s361 + $0x260] sm:$0xff]
                  %440 = vst [vmem:[%s362 + $0x130] sm:$0xff] %v439
                  %v441 = vld [vmem:[%s361 + $0x270] sm:$0xff]
                  %442 = vst [vmem:[%s362 + $0x138] sm:$0xff] %v441
                  %v443 = vld [vmem:[%s361 + $0x280] sm:$0xff]
                  %444 = vst [vmem:[%s362 + $0x140] sm:$0xff] %v443
                  %v445 = vld [vmem:[%s361 + $0x290] sm:$0xff]
                  %446 = vst [vmem:[%s362 + $0x148] sm:$0xff] %v445
                  %v447 = vld [vmem:[%s361 + $0x2a0] sm:$0xff]
                  %448 = vst [vmem:[%s362 + $0x150] sm:$0xff] %v447
                  %v449 = vld [vmem:[%s361 + $0x2b0] sm:$0xff]
                  %450 = vst [vmem:[%s362 + $0x158] sm:$0xff] %v449
                  %v451 = vld [vmem:[%s361 + $0x2c0] sm:$0xff]
                  %452 = vst [vmem:[%s362 + $0x160] sm:$0xff] %v451
                  %v453 = vld [vmem:[%s361 + $0x2d0] sm:$0xff]
                  %454 = vst [vmem:[%s362 + $0x168] sm:$0xff] %v453
                  %v455 = vld [vmem:[%s361 + $0x2e0] sm:$0xff]
                  %456 = vst [vmem:[%s362 + $0x170] sm:$0xff] %v455
                  %v457 = vld [vmem:[%s361 + $0x2f0] sm:$0xff]
                  %458 = vst [vmem:[%s362 + $0x178] sm:$0xff] %v457
                  %v459 = vld [vmem:[%s361 + $0x300] sm:$0xff]
                  %460 = vst [vmem:[%s362 + $0x180] sm:$0xff] %v459
                  %v461 = vld [vmem:[%s361 + $0x310] sm:$0xff]
                  %462 = vst [vmem:[%s362 + $0x188] sm:$0xff] %v461
                  %v463 = vld [vmem:[%s361 + $0x320] sm:$0xff]
                  %464 = vst [vmem:[%s362 + $0x190] sm:$0xff] %v463
                  %v465 = vld [vmem:[%s361 + $0x330] sm:$0xff]
                  %466 = vst [vmem:[%s362 + $0x198] sm:$0xff] %v465
                  %v467 = vld [vmem:[%s361 + $0x340] sm:$0xff]
                  %468 = vst [vmem:[%s362 + $0x1a0] sm:$0xff] %v467
                  %v469 = vld [vmem:[%s361 + $0x350] sm:$0xff]
                  %470 = vst [vmem:[%s362 + $0x1a8] sm:$0xff] %v469
                  %v471 = vld [vmem:[%s361 + $0x360] sm:$0xff]
                  %472 = vst [vmem:[%s362 + $0x1b0] sm:$0xff] %v471
                  %v473 = vld [vmem:[%s361 + $0x370] sm:$0xff]
                  %474 = vst [vmem:[%s362 + $0x1b8] sm:$0xff] %v473
                  %v475 = vld [vmem:[%s361 + $0x380] sm:$0xff]
                  %476 = vst [vmem:[%s362 + $0x1c0] sm:$0xff] %v475
                  %v477 = vld [vmem:[%s361 + $0x390] sm:$0xff]
                  %478 = vst [vmem:[%s362 + $0x1c8] sm:$0xff] %v477
                  %v479 = vld [vmem:[%s361 + $0x3a0] sm:$0xff]
                  %480 = vst [vmem:[%s362 + $0x1d0] sm:$0xff] %v479
                  %v481 = vld [vmem:[%s361 + $0x3b0] sm:$0xff]
                  %482 = vst [vmem:[%s362 + $0x1d8] sm:$0xff] %v481
                  %v483 = vld [vmem:[%s361 + $0x3c0] sm:$0xff]
                  %484 = vst [vmem:[%s362 + $0x1e0] sm:$0xff] %v483
                  %v485 = vld [vmem:[%s361 + $0x3d0] sm:$0xff]
                  %486 = vst [vmem:[%s362 + $0x1e8] sm:$0xff] %v485
                  %v487 = vld [vmem:[%s361 + $0x3e0] sm:$0xff]
                  %488 = vst [vmem:[%s362 + $0x1f0] sm:$0xff] %v487
                  %v489 = vld [vmem:[%s361 + $0x3f0] sm:$0xff]
                  %490 = vst [vmem:[%s362 + $0x1f8] sm:$0xff] %v489
                $region71: #{discriminator_forward.18} parent=65 // loop_footer
                  %s360 = sadd.s32 1, %s356
                $region72: #{discriminator_forward.18} parent=65 // loop_footer_branch
                  %355 = sbr.rel target = $region68
                $region73: #{discriminator_forward.18} parent=65 // loop_exit
                  _
              $region66: #{discriminator_forward.18} parent=50 // pred_fallthru
                _
              // Predicated region
              $region74: #{discriminator_forward.18} parent=50 // pred_check
                _
              $region75: #{discriminator_forward.18} parent=50 // pred_check_branch
                %492 = sbr.rel target = $region77
              $region76: #{discriminator_forward.18} parent=50 // pred_region
                _
              $region77: #{discriminator_forward.18} parent=50 // pred_fallthru
                _
            $region51: #{discriminator_forward.18} parent=46 // pred_fallthru
              _
            // Predicated region
            $region52: #{discriminator_forward.18} parent=46 // pred_check
              _
            $region53: #{discriminator_forward.18} parent=46 // pred_check_branch
              %215 = sbr.rel target = $region55
            $region54: #{discriminator_forward.18} parent=46 // pred_region
              loop: start=0, step=1, limit=1
              $region56: #{discriminator_forward.18} parent=54 // loop_pre_header
                _
              $region57: #{discriminator_forward.18} parent=54 // loop_header
                %s218 = sphi 0, %s222
                %p219 = scmp.ge.s32.totalorder %s218, 1
                %s223 = sphi %s209, %s209
                %s224 = sphi %s203, %s203
              $region58: #{discriminator_forward.18} parent=54 // loop_header_branch
                %221 = sbr.rel (%p219) target = $region62
              $region59: #{discriminator_forward.18} parent=54 // loop_body
                %v225 = vld [vmem:[%s223] sm:$0xff]
                %226 = vst [vmem:[%s224] sm:$0xff] %v225
                %v227 = vld [vmem:[%s223 + $0x10] sm:$0xff]
                %228 = vst [vmem:[%s224 + $0x8] sm:$0xff] %v227
                %v229 = vld [vmem:[%s223 + $0x20] sm:$0xff]
                %230 = vst [vmem:[%s224 + $0x10] sm:$0xff] %v229
                %v231 = vld [vmem:[%s223 + $0x30] sm:$0xff]
                %232 = vst [vmem:[%s224 + $0x18] sm:$0xff] %v231
                %v233 = vld [vmem:[%s223 + $0x40] sm:$0xff]
                %234 = vst [vmem:[%s224 + $0x20] sm:$0xff] %v233
                %v235 = vld [vmem:[%s223 + $0x50] sm:$0xff]
                %236 = vst [vmem:[%s224 + $0x28] sm:$0xff] %v235
                %v237 = vld [vmem:[%s223 + $0x60] sm:$0xff]
                %238 = vst [vmem:[%s224 + $0x30] sm:$0xff] %v237
                %v239 = vld [vmem:[%s223 + $0x70] sm:$0xff]
                %240 = vst [vmem:[%s224 + $0x38] sm:$0xff] %v239
                %v241 = vld [vmem:[%s223 + $0x80] sm:$0xff]
                %242 = vst [vmem:[%s224 + $0x40] sm:$0xff] %v241
                %v243 = vld [vmem:[%s223 + $0x90] sm:$0xff]
                %244 = vst [vmem:[%s224 + $0x48] sm:$0xff] %v243
                %v245 = vld [vmem:[%s223 + $0xa0] sm:$0xff]
                %246 = vst [vmem:[%s224 + $0x50] sm:$0xff] %v245
                %v247 = vld [vmem:[%s223 + $0xb0] sm:$0xff]
                %248 = vst [vmem:[%s224 + $0x58] sm:$0xff] %v247
                %v249 = vld [vmem:[%s223 + $0xc0] sm:$0xff]
                %250 = vst [vmem:[%s224 + $0x60] sm:$0xff] %v249
                %v251 = vld [vmem:[%s223 + $0xd0] sm:$0xff]
                %252 = vst [vmem:[%s224 + $0x68] sm:$0xff] %v251
                %v253 = vld [vmem:[%s223 + $0xe0] sm:$0xff]
                %254 = vst [vmem:[%s224 + $0x70] sm:$0xff] %v253
                %v255 = vld [vmem:[%s223 + $0xf0] sm:$0xff]
                %256 = vst [vmem:[%s224 + $0x78] sm:$0xff] %v255
                %v257 = vld [vmem:[%s223 + $0x100] sm:$0xff]
                %258 = vst [vmem:[%s224 + $0x80] sm:$0xff] %v257
                %v259 = vld [vmem:[%s223 + $0x110] sm:$0xff]
                %260 = vst [vmem:[%s224 + $0x88] sm:$0xff] %v259
                %v261 = vld [vmem:[%s223 + $0x120] sm:$0xff]
                %262 = vst [vmem:[%s224 + $0x90] sm:$0xff] %v261
                %v263 = vld [vmem:[%s223 + $0x130] sm:$0xff]
                %264 = vst [vmem:[%s224 + $0x98] sm:$0xff] %v263
                %v265 = vld [vmem:[%s223 + $0x140] sm:$0xff]
                %266 = vst [vmem:[%s224 + $0xa0] sm:$0xff] %v265
                %v267 = vld [vmem:[%s223 + $0x150] sm:$0xff]
                %268 = vst [vmem:[%s224 + $0xa8] sm:$0xff] %v267
                %v269 = vld [vmem:[%s223 + $0x160] sm:$0xff]
                %270 = vst [vmem:[%s224 + $0xb0] sm:$0xff] %v269
                %v271 = vld [vmem:[%s223 + $0x170] sm:$0xff]
                %272 = vst [vmem:[%s224 + $0xb8] sm:$0xff] %v271
                %v273 = vld [vmem:[%s223 + $0x180] sm:$0xff]
                %274 = vst [vmem:[%s224 + $0xc0] sm:$0xff] %v273
                %v275 = vld [vmem:[%s223 + $0x190] sm:$0xff]
                %276 = vst [vmem:[%s224 + $0xc8] sm:$0xff] %v275
                %v277 = vld [vmem:[%s223 + $0x1a0] sm:$0xff]
                %278 = vst [vmem:[%s224 + $0xd0] sm:$0xff] %v277
                %v279 = vld [vmem:[%s223 + $0x1b0] sm:$0xff]
                %280 = vst [vmem:[%s224 + $0xd8] sm:$0xff] %v279
                %v281 = vld [vmem:[%s223 + $0x1c0] sm:$0xff]
                %282 = vst [vmem:[%s224 + $0xe0] sm:$0xff] %v281
                %v283 = vld [vmem:[%s223 + $0x1d0] sm:$0xff]
                %284 = vst [vmem:[%s224 + $0xe8] sm:$0xff] %v283
                %v285 = vld [vmem:[%s223 + $0x1e0] sm:$0xff]
                %286 = vst [vmem:[%s224 + $0xf0] sm:$0xff] %v285
                %v287 = vld [vmem:[%s223 + $0x1f0] sm:$0xff]
                %288 = vst [vmem:[%s224 + $0xf8] sm:$0xff] %v287
                %v289 = vld [vmem:[%s223 + $0x200] sm:$0xff]
                %290 = vst [vmem:[%s224 + $0x100] sm:$0xff] %v289
                %v291 = vld [vmem:[%s223 + $0x210] sm:$0xff]
                %292 = vst [vmem:[%s224 + $0x108] sm:$0xff] %v291
                %v293 = vld [vmem:[%s223 + $0x220] sm:$0xff]
                %294 = vst [vmem:[%s224 + $0x110] sm:$0xff] %v293
                %v295 = vld [vmem:[%s223 + $0x230] sm:$0xff]
                %296 = vst [vmem:[%s224 + $0x118] sm:$0xff] %v295
                %v297 = vld [vmem:[%s223 + $0x240] sm:$0xff]
                %298 = vst [vmem:[%s224 + $0x120] sm:$0xff] %v297
                %v299 = vld [vmem:[%s223 + $0x250] sm:$0xff]
                %300 = vst [vmem:[%s224 + $0x128] sm:$0xff] %v299
                %v301 = vld [vmem:[%s223 + $0x260] sm:$0xff]
                %302 = vst [vmem:[%s224 + $0x130] sm:$0xff] %v301
                %v303 = vld [vmem:[%s223 + $0x270] sm:$0xff]
                %304 = vst [vmem:[%s224 + $0x138] sm:$0xff] %v303
                %v305 = vld [vmem:[%s223 + $0x280] sm:$0xff]
                %306 = vst [vmem:[%s224 + $0x140] sm:$0xff] %v305
                %v307 = vld [vmem:[%s223 + $0x290] sm:$0xff]
                %308 = vst [vmem:[%s224 + $0x148] sm:$0xff] %v307
                %v309 = vld [vmem:[%s223 + $0x2a0] sm:$0xff]
                %310 = vst [vmem:[%s224 + $0x150] sm:$0xff] %v309
                %v311 = vld [vmem:[%s223 + $0x2b0] sm:$0xff]
                %312 = vst [vmem:[%s224 + $0x158] sm:$0xff] %v311
                %v313 = vld [vmem:[%s223 + $0x2c0] sm:$0xff]
                %314 = vst [vmem:[%s224 + $0x160] sm:$0xff] %v313
                %v315 = vld [vmem:[%s223 + $0x2d0] sm:$0xff]
                %316 = vst [vmem:[%s224 + $0x168] sm:$0xff] %v315
                %v317 = vld [vmem:[%s223 + $0x2e0] sm:$0xff]
                %318 = vst [vmem:[%s224 + $0x170] sm:$0xff] %v317
                %v319 = vld [vmem:[%s223 + $0x2f0] sm:$0xff]
                %320 = vst [vmem:[%s224 + $0x178] sm:$0xff] %v319
                %v321 = vld [vmem:[%s223 + $0x300] sm:$0xff]
                %322 = vst [vmem:[%s224 + $0x180] sm:$0xff] %v321
                %v323 = vld [vmem:[%s223 + $0x310] sm:$0xff]
                %324 = vst [vmem:[%s224 + $0x188] sm:$0xff] %v323
                %v325 = vld [vmem:[%s223 + $0x320] sm:$0xff]
                %326 = vst [vmem:[%s224 + $0x190] sm:$0xff] %v325
                %v327 = vld [vmem:[%s223 + $0x330] sm:$0xff]
                %328 = vst [vmem:[%s224 + $0x198] sm:$0xff] %v327
                %v329 = vld [vmem:[%s223 + $0x340] sm:$0xff]
                %330 = vst [vmem:[%s224 + $0x1a0] sm:$0xff] %v329
                %v331 = vld [vmem:[%s223 + $0x350] sm:$0xff]
                %332 = vst [vmem:[%s224 + $0x1a8] sm:$0xff] %v331
                %v333 = vld [vmem:[%s223 + $0x360] sm:$0xff]
                %334 = vst [vmem:[%s224 + $0x1b0] sm:$0xff] %v333
                %v335 = vld [vmem:[%s223 + $0x370] sm:$0xff]
                %336 = vst [vmem:[%s224 + $0x1b8] sm:$0xff] %v335
                %v337 = vld [vmem:[%s223 + $0x380] sm:$0xff]
                %338 = vst [vmem:[%s224 + $0x1c0] sm:$0xff] %v337
                %v339 = vld [vmem:[%s223 + $0x390] sm:$0xff]
                %340 = vst [vmem:[%s224 + $0x1c8] sm:$0xff] %v339
                %v341 = vld [vmem:[%s223 + $0x3a0] sm:$0xff]
                %342 = vst [vmem:[%s224 + $0x1d0] sm:$0xff] %v341
                %v343 = vld [vmem:[%s223 + $0x3b0] sm:$0xff]
                %344 = vst [vmem:[%s224 + $0x1d8] sm:$0xff] %v343
                %v345 = vld [vmem:[%s223 + $0x3c0] sm:$0xff]
                %346 = vst [vmem:[%s224 + $0x1e0] sm:$0xff] %v345
                %v347 = vld [vmem:[%s223 + $0x3d0] sm:$0xff]
                %348 = vst [vmem:[%s224 + $0x1e8] sm:$0xff] %v347
                %v349 = vld [vmem:[%s223 + $0x3e0] sm:$0xff]
                %350 = vst [vmem:[%s224 + $0x1f0] sm:$0xff] %v349
                %v351 = vld [vmem:[%s223 + $0x3f0] sm:$0xff]
                %352 = vst [vmem:[%s224 + $0x1f8] sm:$0xff] %v351
              $region60: #{discriminator_forward.18} parent=54 // loop_footer
                %s222 = sadd.s32 1, %s218
              $region61: #{discriminator_forward.18} parent=54 // loop_footer_branch
                %217 = sbr.rel target = $region57
              $region62: #{discriminator_forward.18} parent=54 // loop_exit
                _
            $region55: #{discriminator_forward.18} parent=46 // pred_fallthru
              _
          $region47: #{discriminator_forward.18} parent=42 // pred_fallthru
            _
          %493 = vnop
        $region43: #{discriminator_forward.18} parent=15 // pred_fallthru
          _
        // Predicated region
        $region78: #{discriminator_forward.18} parent=15 // pred_check
          %p494 = pneg %p104
        $region79: #{discriminator_forward.18} parent=15 // pred_check_branch
          %496 = sbr.rel (%p494) target = $region81
        $region80: #{discriminator_forward.18} parent=15 // pred_region
          %s497 = smul.u32 2, %s17
          %p498 = scmp.lt.s32.totalorder %s497, 3
          %s499 = scalar_select %p498, %s497, 3
          %s500 = scalar_lea.vmem %s2, %s499
          %s501 = smul.u32 2, %s17
        $region81: #{discriminator_forward.18} parent=15 // pred_fallthru
          _
      $region16: #{discriminator_forward.18} parent=5 // pred_fallthru
        _
      %p502 = scmp.le.s32.totalorder 1, %s9
      %p503 = scmp.lt.s32.totalorder %s9, 17
      %p504 = pnand %p502, %p503
      %p505 = pneg %p504
      // Predicated region
      $region82: #{discriminator_forward.18} parent=5 // pred_check
        _
      $region83: #{discriminator_forward.18} parent=5 // pred_check_branch
        %507 = sbr.rel (%p504) target = $region85
      $region84: #{discriminator_forward.18} parent=5 // pred_region
        %s508 = ssub.s32 %s9, 1
        %s509 = sand.u32 %s43, 1
        %s510 = sand.u32 %s43, 1
        %s511 = smul.addr %s510, 48
        %s512 = scalar_lea.vmem [#allocation3], %s511
        // Predicated region
        $region86: #{discriminator_forward.18} parent=84 // pred_check
          %p513 = pneg %p56
        $region87: #{discriminator_forward.18} parent=84 // pred_check_branch
          %515 = sbr.rel (%p513) target = $region89
        $region88: #{discriminator_forward.18} parent=84 // pred_region
          _
        $region89: #{discriminator_forward.18} parent=84 // pred_fallthru
          _
        %s516 = sand.u32 %s71, 1
        %s517 = sand.u32 %s71, 1
        %s518 = smul.addr %s517, 512
        %s519 = scalar_lea.vmem [#allocation4], %s518
        // Predicated region
        $region90: #{discriminator_forward.18} parent=84 // pred_check
          %p520 = pneg %p84
        $region91: #{discriminator_forward.18} parent=84 // pred_check_branch
          %522 = sbr.rel (%p520) target = $region93
        $region92: #{discriminator_forward.18} parent=84 // pred_region
          _
        $region93: #{discriminator_forward.18} parent=84 // pred_fallthru
          _
        %s523 = sand.u32 %s43, 1
        %s524 = sand.u32 %s43, 1
        %s525 = smul.addr %s524, 48
        %s526 = scalar_lea.vmem [#allocation3], %s525
        %p527 = pneg %p56
        %p528 = pneg %p53
        %s529 = sand.u32 %s71, 1
        %s530 = sand.u32 %s71, 1
        %s531 = smul.addr %s530, 512
        %s532 = scalar_lea.vmem [#allocation4], %s531
        %p533 = pneg %p84
        %p534 = pneg %p81
        %s535 = smul.u32 2, %s20
        %p536 = scmp.lt.s32.totalorder %s535, 3
        %s537 = scalar_select %p536, %s535, 3
        %s538 = scalar_lea.vmem %s2, %s537
        %p539 = pneg %p110
        %p540 = pneg %p107
        %p541 = pneg %p138
        %p542 = pneg %p135
        %s543 = sand.u32 %s125, 1
        %s544 = sand.u32 %s125, 1
        %s545 = smul.addr %s544, 48
        %s546 = scalar_lea.vmem [#allocation5], %s545
        %s547 = smul.u32 3, %s19
        %s548 = smul.u32 4, %s21
        %s549 = smul.u32 64, %s21
        %s550 = smul.u32 2, %s20
        %s551 = smul.u32 2, %s20
        %p552 = scmp.lt.s32.totalorder %s551, 3
        %s553 = scalar_select %p552, %s551, 3
        %s554 = scalar_lea.vmem %s2, %s553
        %s555 = smul.u32 2, %s20
        %s556 = smul.u32 3, %s19
        %s557 = smul.u32 2, %s20
        %p558 = scmp.eq.s32.totalorder %s21, 0
        // Predicated region
        $region94: #{discriminator_forward.18} parent=84 // pred_check
          %p559 = pneg %p558
        $region95: #{discriminator_forward.18} parent=84 // pred_check_branch
          %561 = sbr.rel (%p559) target = $region97
        $region96: #{discriminator_forward.18} parent=84 // pred_region
          %562 = vst [vmem:[#allocation2] sm:$0xff] 0.0
          %563 = vst [vmem:[#allocation2 + $0x8] sm:$0xff] 0.0
          %564 = vst [vmem:[#allocation2 + $0x10] sm:$0xff] 0.0
          %565 = vst [vmem:[#allocation2 + $0x18] sm:$0xff] 0.0
          %566 = vst [vmem:[#allocation2 + $0x20] sm:$0xff] 0.0
          %567 = vst [vmem:[#allocation2 + $0x28] sm:$0xff] 0.0
        $region97: #{discriminator_forward.18} parent=84 // pred_fallthru
          _
        %v568 = vld [vmem:[#allocation2] sm:$0xff]
        %v569 = vld [vmem:[#allocation2 + $0x8] sm:$0xff]
        %v570 = vld [vmem:[#allocation2 + $0x10] sm:$0xff]
        %v571 = vld [vmem:[#allocation2 + $0x18] sm:$0xff]
        %v572 = vld [vmem:[#allocation2 + $0x20] sm:$0xff]
        %v573 = vld [vmem:[#allocation2 + $0x28] sm:$0xff]
        %v574 = vld [vmem:[%s512] sm:$0xff]
        %v575 = vld [vmem:[%s512 + $0x8] sm:$0xff]
        %v576 = vld [vmem:[%s512 + $0x10] sm:$0xff]
        %v577 = vld [vmem:[%s512 + $0x18] sm:$0xff]
        %v578 = vld [vmem:[%s512 + $0x20] sm:$0xff]
        %v579 = vld [vmem:[%s512 + $0x28] sm:$0xff]
        %v580 = vld [vmem:[%s519] sm:$0xff]
        %v581 = vld [vmem:[%s519 + $0x8] sm:$0xff]
        %v582 = vld [vmem:[%s519 + $0x10] sm:$0xff]
        %v583 = vld [vmem:[%s519 + $0x18] sm:$0xff]
        %v584 = vld [vmem:[%s519 + $0x20] sm:$0xff]
        %v585 = vld [vmem:[%s519 + $0x28] sm:$0xff]
        %v586 = vld [vmem:[%s519 + $0x30] sm:$0xff]
        %v587 = vld [vmem:[%s519 + $0x38] sm:$0xff]
        %v588 = vld [vmem:[%s519 + $0x40] sm:$0xff]
        %v589 = vld [vmem:[%s519 + $0x48] sm:$0xff]
        %v590 = vld [vmem:[%s519 + $0x50] sm:$0xff]
        %v591 = vld [vmem:[%s519 + $0x58] sm:$0xff]
        %v592 = vld [vmem:[%s519 + $0x60] sm:$0xff]
        %v593 = vld [vmem:[%s519 + $0x68] sm:$0xff]
        %v594 = vld [vmem:[%s519 + $0x70] sm:$0xff]
        %v595 = vld [vmem:[%s519 + $0x78] sm:$0xff]
        %v596 = vld [vmem:[%s519 + $0x80] sm:$0xff]
        %v597 = vld [vmem:[%s519 + $0x88] sm:$0xff]
        %v598 = vld [vmem:[%s519 + $0x90] sm:$0xff]
        %v599 = vld [vmem:[%s519 + $0x98] sm:$0xff]
        %v600 = vld [vmem:[%s519 + $0xa0] sm:$0xff]
        %v601 = vld [vmem:[%s519 + $0xa8] sm:$0xff]
        %v602 = vld [vmem:[%s519 + $0xb0] sm:$0xff]
        %v603 = vld [vmem:[%s519 + $0xb8] sm:$0xff]
        %v604 = vld [vmem:[%s519 + $0xc0] sm:$0xff]
        %v605 = vld [vmem:[%s519 + $0xc8] sm:$0xff]
        %v606 = vld [vmem:[%s519 + $0xd0] sm:$0xff]
        %v607 = vld [vmem:[%s519 + $0xd8] sm:$0xff]
        %v608 = vld [vmem:[%s519 + $0xe0] sm:$0xff]
        %v609 = vld [vmem:[%s519 + $0xe8] sm:$0xff]
        %v610 = vld [vmem:[%s519 + $0xf0] sm:$0xff]
        %v611 = vld [vmem:[%s519 + $0xf8] sm:$0xff]
        %v612 = vld [vmem:[%s519 + $0x100] sm:$0xff]
        %v613 = vld [vmem:[%s519 + $0x108] sm:$0xff]
        %v614 = vld [vmem:[%s519 + $0x110] sm:$0xff]
        %v615 = vld [vmem:[%s519 + $0x118] sm:$0xff]
        %v616 = vld [vmem:[%s519 + $0x120] sm:$0xff]
        %v617 = vld [vmem:[%s519 + $0x128] sm:$0xff]
        %v618 = vld [vmem:[%s519 + $0x130] sm:$0xff]
        %v619 = vld [vmem:[%s519 + $0x138] sm:$0xff]
        %v620 = vld [vmem:[%s519 + $0x140] sm:$0xff]
        %v621 = vld [vmem:[%s519 + $0x148] sm:$0xff]
        %v622 = vld [vmem:[%s519 + $0x150] sm:$0xff]
        %v623 = vld [vmem:[%s519 + $0x158] sm:$0xff]
        %v624 = vld [vmem:[%s519 + $0x160] sm:$0xff]
        %v625 = vld [vmem:[%s519 + $0x168] sm:$0xff]
        %v626 = vld [vmem:[%s519 + $0x170] sm:$0xff]
        %v627 = vld [vmem:[%s519 + $0x178] sm:$0xff]
        %v628 = vld [vmem:[%s519 + $0x180] sm:$0xff]
        %v629 = vld [vmem:[%s519 + $0x188] sm:$0xff]
        %v630 = vld [vmem:[%s519 + $0x190] sm:$0xff]
        %v631 = vld [vmem:[%s519 + $0x198] sm:$0xff]
        %v632 = vld [vmem:[%s519 + $0x1a0] sm:$0xff]
        %v633 = vld [vmem:[%s519 + $0x1a8] sm:$0xff]
        %v634 = vld [vmem:[%s519 + $0x1b0] sm:$0xff]
        %v635 = vld [vmem:[%s519 + $0x1b8] sm:$0xff]
        %v636 = vld [vmem:[%s519 + $0x1c0] sm:$0xff]
        %v637 = vld [vmem:[%s519 + $0x1c8] sm:$0xff]
        %v638 = vld [vmem:[%s519 + $0x1d0] sm:$0xff]
        %v639 = vld [vmem:[%s519 + $0x1d8] sm:$0xff]
        %v640 = vld [vmem:[%s519 + $0x1e0] sm:$0xff]
        %v641 = vld [vmem:[%s519 + $0x1e8] sm:$0xff]
        %v642 = vld [vmem:[%s519 + $0x1f0] sm:$0xff]
        %v643 = vld [vmem:[%s519 + $0x1f8] sm:$0xff]
        %v650 = vunpack.c.l.b16 %v574
        %v651 = vunpack.c.h.b16 %v574
        %v652 = vunpack.c.l.b16 %v575
        %v653 = vunpack.c.h.b16 %v575
        %v654 = vunpack.c.l.b16 %v576
        %v655 = vunpack.c.h.b16 %v576
        %v656 = vunpack.c.l.b16 %v577
        %v657 = vunpack.c.h.b16 %v577
        %v658 = vunpack.c.l.b16 %v578
        %v659 = vunpack.c.h.b16 %v578
        %v660 = vunpack.c.l.b16 %v579
        %v661 = vunpack.c.h.b16 %v579
        %v662 = vpack.c.b16 %v654, %v650
        %v663 = vpack.c.b16 %v655, %v651
        %v664 = vpack.c.b16 %v656, %v652
        %v665 = vpack.c.b16 %v657, %v653
        %v666 = vpack.c.b16 %v658, %v658
        %v667 = vpack.c.b16 %v659, %v659
        %v668 = vpack.c.b16 %v660, %v660
        %v669 = vpack.c.b16 %v661, %v661
        %v742 = vunpack.c.l.b16 %v580
        %v743 = vunpack.c.h.b16 %v580
        %v744 = vunpack.c.l.b16 %v581
        %v745 = vunpack.c.h.b16 %v581
        %v746 = vunpack.c.l.b16 %v582
        %v747 = vunpack.c.h.b16 %v582
        %v748 = vunpack.c.l.b16 %v583
        %v749 = vunpack.c.h.b16 %v583
        %v750 = vunpack.c.l.b16 %v584
        %v751 = vunpack.c.h.b16 %v584
        %v752 = vunpack.c.l.b16 %v585
        %v753 = vunpack.c.h.b16 %v585
        %v754 = vunpack.c.l.b16 %v586
        %v755 = vunpack.c.h.b16 %v586
        %v756 = vunpack.c.l.b16 %v587
        %v757 = vunpack.c.h.b16 %v587
        %v758 = vunpack.c.l.b16 %v588
        %v759 = vunpack.c.h.b16 %v588
        %v760 = vunpack.c.l.b16 %v589
        %v761 = vunpack.c.h.b16 %v589
        %v762 = vunpack.c.l.b16 %v590
        %v763 = vunpack.c.h.b16 %v590
        %v764 = vunpack.c.l.b16 %v591
        %v765 = vunpack.c.h.b16 %v591
        %v766 = vunpack.c.l.b16 %v592
        %v767 = vunpack.c.h.b16 %v592
        %v768 = vunpack.c.l.b16 %v593
        %v769 = vunpack.c.h.b16 %v593
        %v770 = vunpack.c.l.b16 %v594
        %v771 = vunpack.c.h.b16 %v594
        %v772 = vunpack.c.l.b16 %v595
        %v773 = vunpack.c.h.b16 %v595
        %v774 = vunpack.c.l.b16 %v596
        %v775 = vunpack.c.h.b16 %v596
        %v776 = vunpack.c.l.b16 %v597
        %v777 = vunpack.c.h.b16 %v597
        %v778 = vunpack.c.l.b16 %v598
        %v779 = vunpack.c.h.b16 %v598
        %v780 = vunpack.c.l.b16 %v599
        %v781 = vunpack.c.h.b16 %v599
        %v782 = vunpack.c.l.b16 %v600
        %v783 = vunpack.c.h.b16 %v600
        %v784 = vunpack.c.l.b16 %v601
        %v785 = vunpack.c.h.b16 %v601
        %v786 = vunpack.c.l.b16 %v602
        %v787 = vunpack.c.h.b16 %v602
        %v788 = vunpack.c.l.b16 %v603
        %v789 = vunpack.c.h.b16 %v603
        %v790 = vunpack.c.l.b16 %v604
        %v791 = vunpack.c.h.b16 %v604
        %v792 = vunpack.c.l.b16 %v605
        %v793 = vunpack.c.h.b16 %v605
        %v794 = vunpack.c.l.b16 %v606
        %v795 = vunpack.c.h.b16 %v606
        %v796 = vunpack.c.l.b16 %v607
        %v797 = vunpack.c.h.b16 %v607
        %v798 = vunpack.c.l.b16 %v608
        %v799 = vunpack.c.h.b16 %v608
        %v800 = vunpack.c.l.b16 %v609
        %v801 = vunpack.c.h.b16 %v609
        %v802 = vunpack.c.l.b16 %v610
        %v803 = vunpack.c.h.b16 %v610
        %v804 = vunpack.c.l.b16 %v611
        %v805 = vunpack.c.h.b16 %v611
        %v806 = vunpack.c.l.b16 %v612
        %v807 = vunpack.c.h.b16 %v612
        %v808 = vunpack.c.l.b16 %v613
        %v809 = vunpack.c.h.b16 %v613
        %v810 = vunpack.c.l.b16 %v614
        %v811 = vunpack.c.h.b16 %v614
        %v812 = vunpack.c.l.b16 %v615
        %v813 = vunpack.c.h.b16 %v615
        %v814 = vunpack.c.l.b16 %v616
        %v815 = vunpack.c.h.b16 %v616
        %v816 = vunpack.c.l.b16 %v617
        %v817 = vunpack.c.h.b16 %v617
        %v818 = vunpack.c.l.b16 %v618
        %v819 = vunpack.c.h.b16 %v618
        %v820 = vunpack.c.l.b16 %v619
        %v821 = vunpack.c.h.b16 %v619
        %v822 = vunpack.c.l.b16 %v620
        %v823 = vunpack.c.h.b16 %v620
        %v824 = vunpack.c.l.b16 %v621
        %v825 = vunpack.c.h.b16 %v621
        %v826 = vunpack.c.l.b16 %v622
        %v827 = vunpack.c.h.b16 %v622
        %v828 = vunpack.c.l.b16 %v623
        %v829 = vunpack.c.h.b16 %v623
        %v830 = vunpack.c.l.b16 %v624
        %v831 = vunpack.c.h.b16 %v624
        %v832 = vunpack.c.l.b16 %v625
        %v833 = vunpack.c.h.b16 %v625
        %v834 = vunpack.c.l.b16 %v626
        %v835 = vunpack.c.h.b16 %v626
        %v836 = vunpack.c.l.b16 %v627
        %v837 = vunpack.c.h.b16 %v627
        %v838 = vunpack.c.l.b16 %v628
        %v839 = vunpack.c.h.b16 %v628
        %v840 = vunpack.c.l.b16 %v629
        %v841 = vunpack.c.h.b16 %v629
        %v842 = vunpack.c.l.b16 %v630
        %v843 = vunpack.c.h.b16 %v630
        %v844 = vunpack.c.l.b16 %v631
        %v845 = vunpack.c.h.b16 %v631
        %v846 = vunpack.c.l.b16 %v632
        %v847 = vunpack.c.h.b16 %v632
        %v848 = vunpack.c.l.b16 %v633
        %v849 = vunpack.c.h.b16 %v633
        %v850 = vunpack.c.l.b16 %v634
        %v851 = vunpack.c.h.b16 %v634
        %v852 = vunpack.c.l.b16 %v635
        %v853 = vunpack.c.h.b16 %v635
        %v854 = vunpack.c.l.b16 %v636
        %v855 = vunpack.c.h.b16 %v636
        %v856 = vunpack.c.l.b16 %v637
        %v857 = vunpack.c.h.b16 %v637
        %v858 = vunpack.c.l.b16 %v638
        %v859 = vunpack.c.h.b16 %v638
        %v860 = vunpack.c.l.b16 %v639
        %v861 = vunpack.c.h.b16 %v639
        %v862 = vunpack.c.l.b16 %v640
        %v863 = vunpack.c.h.b16 %v640
        %v864 = vunpack.c.l.b16 %v641
        %v865 = vunpack.c.h.b16 %v641
        %v866 = vunpack.c.l.b16 %v642
        %v867 = vunpack.c.h.b16 %v642
        %v868 = vunpack.c.l.b16 %v643
        %v869 = vunpack.c.h.b16 %v643
        %v870 = vpack.c.b16 %v744, %v742
        %v871 = vpack.c.b16 %v745, %v743
        %v872 = vpack.c.b16 %v748, %v746
        %v873 = vpack.c.b16 %v749, %v747
        %v874 = vpack.c.b16 %v752, %v750
        %v875 = vpack.c.b16 %v753, %v751
        %v876 = vpack.c.b16 %v756, %v754
        %v877 = vpack.c.b16 %v757, %v755
        %v878 = vpack.c.b16 %v760, %v758
        %v879 = vpack.c.b16 %v761, %v759
        %v880 = vpack.c.b16 %v764, %v762
        %v881 = vpack.c.b16 %v765, %v763
        %v882 = vpack.c.b16 %v768, %v766
        %v883 = vpack.c.b16 %v769, %v767
        %v884 = vpack.c.b16 %v772, %v770
        %v885 = vpack.c.b16 %v773, %v771
        %v886 = vpack.c.b16 %v776, %v774
        %v887 = vpack.c.b16 %v777, %v775
        %v888 = vpack.c.b16 %v780, %v778
        %v889 = vpack.c.b16 %v781, %v779
        %v890 = vpack.c.b16 %v784, %v782
        %v891 = vpack.c.b16 %v785, %v783
        %v892 = vpack.c.b16 %v788, %v786
        %v893 = vpack.c.b16 %v789, %v787
        %v894 = vpack.c.b16 %v792, %v790
        %v895 = vpack.c.b16 %v793, %v791
        %v896 = vpack.c.b16 %v796, %v794
        %v897 = vpack.c.b16 %v797, %v795
        %v898 = vpack.c.b16 %v800, %v798
        %v899 = vpack.c.b16 %v801, %v799
        %v900 = vpack.c.b16 %v804, %v802
        %v901 = vpack.c.b16 %v805, %v803
        %v902 = vpack.c.b16 %v808, %v806
        %v903 = vpack.c.b16 %v809, %v807
        %v904 = vpack.c.b16 %v812, %v810
        %v905 = vpack.c.b16 %v813, %v811
        %v906 = vpack.c.b16 %v816, %v814
        %v907 = vpack.c.b16 %v817, %v815
        %v908 = vpack.c.b16 %v820, %v818
        %v909 = vpack.c.b16 %v821, %v819
        %v910 = vpack.c.b16 %v824, %v822
        %v911 = vpack.c.b16 %v825, %v823
        %v912 = vpack.c.b16 %v828, %v826
        %v913 = vpack.c.b16 %v829, %v827
        %v914 = vpack.c.b16 %v832, %v830
        %v915 = vpack.c.b16 %v833, %v831
        %v916 = vpack.c.b16 %v836, %v834
        %v917 = vpack.c.b16 %v837, %v835
        %v918 = vpack.c.b16 %v840, %v838
        %v919 = vpack.c.b16 %v841, %v839
        %v920 = vpack.c.b16 %v844, %v842
        %v921 = vpack.c.b16 %v845, %v843
        %v922 = vpack.c.b16 %v848, %v846
        %v923 = vpack.c.b16 %v849, %v847
        %v924 = vpack.c.b16 %v852, %v850
        %v925 = vpack.c.b16 %v853, %v851
        %v926 = vpack.c.b16 %v856, %v854
        %v927 = vpack.c.b16 %v857, %v855
        %v928 = vpack.c.b16 %v860, %v858
        %v929 = vpack.c.b16 %v861, %v859
        %v930 = vpack.c.b16 %v864, %v862
        %v931 = vpack.c.b16 %v865, %v863
        %v932 = vpack.c.b16 %v868, %v866
        %v933 = vpack.c.b16 %v869, %v867
        %998 = vmatprep.subr.bf16.mxu0 %v871
        %999 = vmatpush1.bf16.msra.mxu0 %v870
        %1000 = vmatprep.subr.bf16.mxu0 %v873
        %1001 = vmatpush1.bf16.msra.mxu0 %v872
        %1002 = vmatprep.subr.bf16.mxu0 %v875
        %1003 = vmatpush1.bf16.msra.mxu0 %v874
        %1004 = vmatprep.subr.bf16.mxu0 %v877
        %1005 = vmatpush1.bf16.msra.mxu0 %v876
        %1006 = vmatprep.subr.bf16.mxu0 %v879
        %1007 = vmatpush1.bf16.msra.mxu0 %v878
        %1008 = vmatprep.subr.bf16.mxu0 %v881
        %1009 = vmatpush1.bf16.msra.mxu0 %v880
        %1010 = vmatprep.subr.bf16.mxu0 %v883
        %1011 = vmatpush1.bf16.msra.mxu0 %v882
        %1012 = vmatprep.subr.bf16.mxu0 %v885
        %1013 = vmatpush1.bf16.msra.mxu0 %v884
        %1014 = vmatprep.subr.bf16.mxu0 %v887
        %1015 = vmatpush1.bf16.msra.mxu0 %v886
        %1016 = vmatprep.subr.bf16.mxu0 %v889
        %1017 = vmatpush1.bf16.msra.mxu0 %v888
        %1018 = vmatprep.subr.bf16.mxu0 %v891
        %1019 = vmatpush1.bf16.msra.mxu0 %v890
        %1020 = vmatprep.subr.bf16.mxu0 %v893
        %1021 = vmatpush1.bf16.msra.mxu0 %v892
        %1022 = vmatprep.subr.bf16.mxu0 %v895
        %1023 = vmatpush1.bf16.msra.mxu0 %v894
        %1024 = vmatprep.subr.bf16.mxu0 %v897
        %1025 = vmatpush1.bf16.msra.mxu0 %v896
        %1026 = vmatprep.subr.bf16.mxu0 %v899
        %1027 = vmatpush1.bf16.msra.mxu0 %v898
        %1028 = vmatprep.subr.bf16.mxu0 %v901
        %1029 = vmatpush1.bf16.msra.mxu0 %v900
        %1030 = vmatprep.mubr.bf16.mxu0 %v663
        %1031 = vmatmul.mubr.bf16.gmra.mrb[0].mxu0 %v662
        %v1032 = vpop.f32.mrb[0].mxu0
        %v1033 = vadd.f32 0.0, %v1032
        %v1034 = vpop.f32.mrb[0].mxu0
        %v1035 = vadd.f32 0.0, %v1034
        %v1036 = vpop.f32.mrb[0].mxu0
        %v1037 = vadd.f32 0.0, %v1036
        %v1038 = vpop.f32.mrb[0].mxu0
        %v1039 = vadd.f32 0.0, %v1038
        %1040 = vmatprep.mubr.bf16.mxu0 %v667
        %1041 = vmatmul.mubr.bf16.gmra.mrb[0].mxu0 %v666
        %v1042 = vpop.f32.mrb[0].mxu0
        %v1043 = vadd.f32 0.0, %v1042
        %v1044 = vpop.f32.mrb[0].mxu0
        %v1045 = vadd.f32 0.0, %v1044
        %v1046 = vpop.f32.mrb[0].mxu0
        %v1047 = vpop.f32.mrb[0].mxu0
        %1048 = vdwg.mxu0
        %1049 = vmatprep.subr.bf16.mxu0 %v903
        %1050 = vmatpush1.bf16.msra.mxu0 %v902
        %1051 = vmatprep.subr.bf16.mxu0 %v905
        %1052 = vmatpush1.bf16.msra.mxu0 %v904
        %1053 = vmatprep.subr.bf16.mxu0 %v907
        %1054 = vmatpush1.bf16.msra.mxu0 %v906
        %1055 = vmatprep.subr.bf16.mxu0 %v909
        %1056 = vmatpush1.bf16.msra.mxu0 %v908
        %1057 = vmatprep.subr.bf16.mxu0 %v911
        %1058 = vmatpush1.bf16.msra.mxu0 %v910
        %1059 = vmatprep.subr.bf16.mxu0 %v913
        %1060 = vmatpush1.bf16.msra.mxu0 %v912
        %1061 = vmatprep.subr.bf16.mxu0 %v915
        %1062 = vmatpush1.bf16.msra.mxu0 %v914
        %1063 = vmatprep.subr.bf16.mxu0 %v917
        %1064 = vmatpush1.bf16.msra.mxu0 %v916
        %1065 = vmatprep.subr.bf16.mxu0 %v919
        %1066 = vmatpush1.bf16.msra.mxu0 %v918
        %1067 = vmatprep.subr.bf16.mxu0 %v921
        %1068 = vmatpush1.bf16.msra.mxu0 %v920
        %1069 = vmatprep.subr.bf16.mxu0 %v923
        %1070 = vmatpush1.bf16.msra.mxu0 %v922
        %1071 = vmatprep.subr.bf16.mxu0 %v925
        %1072 = vmatpush1.bf16.msra.mxu0 %v924
        %1073 = vmatprep.subr.bf16.mxu0 %v927
        %1074 = vmatpush1.bf16.msra.mxu0 %v926
        %1075 = vmatprep.subr.bf16.mxu0 %v929
        %1076 = vmatpush1.bf16.msra.mxu0 %v928
        %1077 = vmatprep.subr.bf16.mxu0 %v931
        %1078 = vmatpush1.bf16.msra.mxu0 %v930
        %1079 = vmatprep.subr.bf16.mxu0 %v933
        %1080 = vmatpush1.bf16.msra.mxu0 %v932
        %1081 = vmatprep.mubr.bf16.mxu0 %v665
        %1082 = vmatmul.mubr.bf16.gmra.mrb[0].mxu0 %v664
        %v1083 = vpop.f32.mrb[0].mxu0
        %v1084 = vadd.f32 %v1033, %v1083
        %v1085 = vpop.f32.mrb[0].mxu0
        %v1086 = vadd.f32 %v1035, %v1085
        %v1087 = vpop.f32.mrb[0].mxu0
        %v1088 = vadd.f32 %v1037, %v1087
        %v1089 = vpop.f32.mrb[0].mxu0
        %v1090 = vadd.f32 %v1039, %v1089
        %1091 = vmatprep.mubr.bf16.mxu0 %v669
        %1092 = vmatmul.mubr.bf16.gmra.mrb[0].mxu0 %v668
        %v1093 = vpop.f32.mrb[0].mxu0
        %v1094 = vadd.f32 %v1043, %v1093
        %v1095 = vpop.f32.mrb[0].mxu0
        %v1096 = vadd.f32 %v1045, %v1095
        %v1097 = vpop.f32.mrb[0].mxu0
        %v1098 = vpop.f32.mrb[0].mxu0
        %1099 = vdwg.mxu0
        %v1100 = vadd.f32 %v568, %v1084
        %v1101 = vadd.f32 %v569, %v1086
        %v1102 = vadd.f32 %v570, %v1088
        %v1103 = vadd.f32 %v571, %v1090
        %v1104 = vadd.f32 %v572, %v1094
        %v1105 = vadd.f32 %v573, %v1096
        %1106 = vst [vmem:[#allocation2] sm:$0xff] %v1100
        %1107 = vst [vmem:[#allocation2 + $0x8] sm:$0xff] %v1101
        %1108 = vst [vmem:[#allocation2 + $0x10] sm:$0xff] %v1102
        %1109 = vst [vmem:[#allocation2 + $0x18] sm:$0xff] %v1103
        %1110 = vst [vmem:[#allocation2 + $0x20] sm:$0xff] %v1104
        %1111 = vst [vmem:[#allocation2 + $0x28] sm:$0xff] %v1105
        %p1112 = scmp.eq.s32.totalorder %s21, 7
        // Predicated region
        $region98: #{discriminator_forward.18} parent=84 // pred_check
          %p1113 = pneg %p1112
        $region99: #{discriminator_forward.18} parent=84 // pred_check_branch
          %1115 = sbr.rel (%p1113) target = $region101
        $region100: #{discriminator_forward.18} parent=84 // pred_region
          %v1116 = vld [vmem:[#allocation2] sm:$0xff]
          %v1117 = vld [vmem:[#allocation2 + $0x8] sm:$0xff]
          %v1118 = vld [vmem:[#allocation2 + $0x10] sm:$0xff]
          %v1119 = vld [vmem:[#allocation2 + $0x18] sm:$0xff]
          %v1120 = vld [vmem:[#allocation2 + $0x20] sm:$0xff]
          %v1121 = vld [vmem:[#allocation2 + $0x28] sm:$0xff]
          %v1122 = vld [vmem:[%s554] sm:$0x3]
          %v1124 = vlaneseq
          %v1125 = vshrl.u32 %v1124, 7
          %v1126 = vsub.s32 0, %v1125
          %v1127 = vrot.slane %v1122, %v1126
          %v1128 = vlaneseq
          %v1129 = vshrl.u32 %v1128, 7
          %v1130 = vsub.s32 1, %v1129
          %v1131 = vrot.slane %v1122, %v1130
          %v1134 = vadd.f32 %v1116, %v1127
          %v1135 = vadd.f32 %v1117, %v1131
          %v1136 = vadd.f32 %v1118, %v1127
          %v1137 = vadd.f32 %v1119, %v1131
          %v1138 = vadd.f32 %v1120, %v1127
          %v1139 = vadd.f32 %v1121, %v1131
          %1140 = vst [vmem:[%s546] sm:$0xff] %v1134
          %1141 = vst [vmem:[%s546 + $0x8] sm:$0xff] %v1135
          %1142 = vst [vmem:[%s546 + $0x10] sm:$0xff] %v1136
          %1143 = vst [vmem:[%s546 + $0x18] sm:$0xff] %v1137
          %1144 = vst [vmem:[%s546 + $0x20] sm:$0xff] %v1138
          %1145 = vst [vmem:[%s546 + $0x28] sm:$0xff] %v1139
        $region101: #{discriminator_forward.18} parent=84 // pred_fallthru
          _
        %s1146 = sand.u32 %s125, 1
        %s1147 = sand.u32 %s125, 1
        %s1148 = smul.addr %s1147, 48
        %s1149 = scalar_lea.vmem [#allocation5], %s1148
        // Predicated region
        $region102: #{discriminator_forward.18} parent=84 // pred_check
          %p1150 = pneg %p135
        $region103: #{discriminator_forward.18} parent=84 // pred_check_branch
          %1152 = sbr.rel (%p1150) target = $region105
        $region104: #{discriminator_forward.18} parent=84 // pred_region
          %s1153 = smul.u32 3, %s19
          %s1154 = smul.u32 2, %s20
          %s1155 = smul.addr %s1153, 4
          %s1156 = sadd.s32 %s1154, %s1155
          %s1157 = smul.addr %s1156, 8
          %s1158 = scalar_lea.vmem %s3, %s1157
          // Predicated region
          $region106: #{discriminator_forward.18} parent=104 // pred_check
            _
          $region107: #{discriminator_forward.18} parent=104 // pred_check_branch
            %1160 = sbr.rel (0) target = $region109
          $region108: #{discriminator_forward.18} parent=104 // pred_region
            // Predicated region
            $region110: #{discriminator_forward.18} parent=108 // pred_check
              _
            $region111: #{discriminator_forward.18} parent=108 // pred_check_branch
              %1162 = sbr.rel (0) target = $region113
            $region112: #{discriminator_forward.18} parent=108 // pred_region
              loop: start=0, step=1, limit=1
              $region114: #{discriminator_forward.18} parent=112 // loop_pre_header
                _
              $region115: #{discriminator_forward.18} parent=112 // loop_header
                %s1164 = sphi 0, %s1168
                %p1165 = scmp.ge.s32.totalorder %s1164, 1
                %s1169 = sphi %s1149, %s1149
                %s1170 = sphi %s1158, %s1158
              $region116: #{discriminator_forward.18} parent=112 // loop_header_branch
                %1167 = sbr.rel (%p1165) target = $region120
              $region117: #{discriminator_forward.18} parent=112 // loop_body
                %v1171 = vld [vmem:[%s1169] sm:$0xff]
                %1172 = vst [vmem:[%s1170] sm:$0xff] %v1171
                %v1173 = vld [vmem:[%s1169 + $0x8] sm:$0xff]
                %1174 = vst [vmem:[%s1170 + $0x8] sm:$0xff] %v1173
                %v1175 = vld [vmem:[%s1169 + $0x10] sm:$0xff]
                %1176 = vst [vmem:[%s1170 + $0x20] sm:$0xff] %v1175
                %v1177 = vld [vmem:[%s1169 + $0x18] sm:$0xff]
                %1178 = vst [vmem:[%s1170 + $0x28] sm:$0xff] %v1177
                %v1179 = vld [vmem:[%s1169 + $0x20] sm:$0xff]
                %1180 = vst [vmem:[%s1170 + $0x40] sm:$0xff] %v1179
                %v1181 = vld [vmem:[%s1169 + $0x28] sm:$0xff]
                %1182 = vst [vmem:[%s1170 + $0x48] sm:$0xff] %v1181
              $region118: #{discriminator_forward.18} parent=112 // loop_footer
                %s1168 = sadd.s32 1, %s1164
              $region119: #{discriminator_forward.18} parent=112 // loop_footer_branch
                %1163 = sbr.rel target = $region115
              $region120: #{discriminator_forward.18} parent=112 // loop_exit
                _
            $region113: #{discriminator_forward.18} parent=108 // pred_fallthru
              _
            // Predicated region
            $region121: #{discriminator_forward.18} parent=108 // pred_check
              _
            $region122: #{discriminator_forward.18} parent=108 // pred_check_branch
              %1184 = sbr.rel target = $region124
            $region123: #{discriminator_forward.18} parent=108 // pred_region
              _
            $region124: #{discriminator_forward.18} parent=108 // pred_fallthru
              _
          $region109: #{discriminator_forward.18} parent=104 // pred_fallthru
            _
          %1185 = vnop
        $region105: #{discriminator_forward.18} parent=84 // pred_fallthru
          _
      $region85: #{discriminator_forward.18} parent=5 // pred_fallthru
        _
      %p1186 = scmp.le.s32.totalorder 2, %s9
      // Predicated region
      $region125: #{discriminator_forward.18} parent=5 // pred_check
        %p1187 = pneg %p1186
      $region126: #{discriminator_forward.18} parent=5 // pred_check_branch
        %1189 = sbr.rel (%p1187) target = $region128
      $region127: #{discriminator_forward.18} parent=5 // pred_region
        %s1190 = ssub.s32 %s9, 2
        // Predicated region
        $region129: #{discriminator_forward.18} parent=127 // pred_check
          %p1191 = pneg %p141
        $region130: #{discriminator_forward.18} parent=127 // pred_check_branch
          %1193 = sbr.rel (%p1191) target = $region132
        $region131: #{discriminator_forward.18} parent=127 // pred_region
          %s1194 = sand.u32 %s126, 1
          %s1195 = sand.u32 %s126, 1
          %s1196 = smul.addr %s1195, 48
          %s1197 = scalar_lea.vmem [#allocation5], %s1196
        $region132: #{discriminator_forward.18} parent=127 // pred_fallthru
          _
      $region128: #{discriminator_forward.18} parent=5 // pred_fallthru
        _
    $region6: #{discriminator_forward.18} parent=1 // loop_footer
      %s13 = sadd.s32 1, %s9
    $region7: #{discriminator_forward.18} parent=1 // loop_footer_branch
      %8 = sbr.rel target = $region3
    $region8: #{discriminator_forward.18} parent=1 // loop_exit
      _

// kernel: discriminator_forward.19
$region0: #{discriminator_forward.19}
  #allocation0 [shape = 'u32[]', space=smem, size = 0x4, offset = 0x4, fixed_abs, tag = 'smem constant byte address 0x4 - core index']
  #allocation1 [shape = 'u32[144,128]{1,0:T(1,128)}', space=vmem, size = 0x12000, scoped, tag = 'internal scratch']
  %s0 = inlined_call_operand.vmem [shape: f32[2,9,512], index: 0, kind: input, shape index: {}]
  %s1 = inlined_call_operand.vmem [shape: f32[2,1,512], index: 1, kind: output, shape index: {0}]
  %s2 = inlined_call_operand.vmem [shape: f32[2,1,512], index: 2, kind: output, shape index: {1}]
  %3 = xla_tuple %s1, %s2
  %s4 = sld [smem:[#allocation0]]
  $region49: #{discriminator_forward.19} parent=0
    _
  %s6 = ssub.s32 1, %s4
  %s7 = scalar_select 0, %s6, %s4
  loop: start=0, step=1, limit=4
  $region2: #{discriminator_forward.19} parent=0 // loop_pre_header
    _
  $region3: #{discriminator_forward.19} parent=0 // loop_header
    %s9 = sphi 0, %s13
    %p10 = scmp.ge.s32.totalorder %s9, 4
    %s16 = sphi 0, %s28
    %s17 = sphi 0, %s24
    %s18 = sphi 0, %s16
    %s19 = sphi 0, %s17
    %s20 = sphi 0, %s18
    %s21 = sphi 0, %s19
    %s33 = sphi 0, %s35
    %s36 = sphi 0, %s33
    %s37 = sphi 0, %s36
    %s53 = sphi 0, %s37
    %s59 = sphi 0, %s61
    %s62 = sphi 0, %s59
    %s63 = sphi 0, %s62
    %s79 = sphi 0, %s63
    %s85 = sphi 0, %s87
    %s88 = sphi 0, %s85
    %s89 = sphi 0, %s88
    %s105 = sphi 0, %s89
  $region4: #{discriminator_forward.19} parent=0 // loop_header_branch
    %12 = sbr.rel (%p10) target = $region8
  $region5: #{discriminator_forward.19} parent=0 // loop_body
    %s14 = ssub.s32 %s9, 1
    %s15 = ssub.s32 %s9, 2
    %s22 = sadd.s32 1, %s17
    %p23 = scmp.ge.s32.totalorder %s22, 1
    %s24 = scalar_select %p23, 0, %s22
    %s25 = sadd.s32 1, %s16
    %s26 = scalar_select %p23, %s25, %s16
    %p27 = scmp.ge.s32.totalorder %s26, 2
    %s28 = scalar_select %p27, 0, %s26
    %s29 = ssub.s32 %s16, %s28
    %s30 = ssub.s32 %s17, %s24
    %s31 = sor.u32 %s29, %s30
    %p32 = scmp.eq.s32.totalorder %s31, 0
    %s34 = sadd.s32 %s33, 1
    %s35 = scalar_select %p32, %s33, %s34
    %p38 = pneg %p32
    %p39 = scmp.eq.s32.totalorder %s9, 1
    %p40 = por %p38, %p39
    %p41 = scmp.ne.s32.totalorder %s33, %s36
    %p42 = scmp.eq.s32.totalorder %s9, 0
    %p43 = por %p41, %p42
    %p44 = scmp.ne.s32.totalorder %s33, %s36
    %p45 = scmp.eq.s32.totalorder %s14, 1
    %p46 = por %p44, %p45
    %p47 = scmp.ne.s32.totalorder %s36, %s37
    %p48 = scmp.eq.s32.totalorder %s14, 0
    %p49 = por %p47, %p48
    %p50 = scmp.ne.s32.totalorder %s36, %s37
    %p51 = scmp.eq.s32.totalorder %s15, 1
    %p52 = por %p50, %p51
    %p54 = scmp.ne.s32.totalorder %s37, %s53
    %p55 = scmp.eq.s32.totalorder %s15, 0
    %p56 = por %p54, %p55
    %s57 = ssub.s32 %s16, %s28
    %p58 = scmp.eq.s32.totalorder %s57, 0
    %s60 = sadd.s32 %s59, 1
    %s61 = scalar_select %p58, %s59, %s60
    %p64 = pneg %p58
    %p65 = scmp.eq.s32.totalorder %s9, 1
    %p66 = por %p64, %p65
    %p67 = scmp.ne.s32.totalorder %s59, %s62
    %p68 = scmp.eq.s32.totalorder %s9, 0
    %p69 = por %p67, %p68
    %p70 = scmp.ne.s32.totalorder %s59, %s62
    %p71 = scmp.eq.s32.totalorder %s14, 1
    %p72 = por %p70, %p71
    %p73 = scmp.ne.s32.totalorder %s62, %s63
    %p74 = scmp.eq.s32.totalorder %s14, 0
    %p75 = por %p73, %p74
    %p76 = scmp.ne.s32.totalorder %s62, %s63
    %p77 = scmp.eq.s32.totalorder %s15, 1
    %p78 = por %p76, %p77
    %p80 = scmp.ne.s32.totalorder %s63, %s79
    %p81 = scmp.eq.s32.totalorder %s15, 0
    %p82 = por %p80, %p81
    %s83 = ssub.s32 %s16, %s28
    %p84 = scmp.eq.s32.totalorder %s83, 0
    %s86 = sadd.s32 %s85, 1
    %s87 = scalar_select %p84, %s85, %s86
    %p90 = pneg %p84
    %p91 = scmp.eq.s32.totalorder %s9, 1
    %p92 = por %p90, %p91
    %p93 = scmp.ne.s32.totalorder %s85, %s88
    %p94 = scmp.eq.s32.totalorder %s9, 0
    %p95 = por %p93, %p94
    %p96 = scmp.ne.s32.totalorder %s85, %s88
    %p97 = scmp.eq.s32.totalorder %s14, 1
    %p98 = por %p96, %p97
    %p99 = scmp.ne.s32.totalorder %s88, %s89
    %p100 = scmp.eq.s32.totalorder %s14, 0
    %p101 = por %p99, %p100
    %p102 = scmp.ne.s32.totalorder %s88, %s89
    %p103 = scmp.eq.s32.totalorder %s15, 1
    %p104 = por %p102, %p103
    %p106 = scmp.ne.s32.totalorder %s89, %s105
    %p107 = scmp.eq.s32.totalorder %s15, 0
    %p108 = por %p106, %p107
    %p109 = scmp.le.s32.totalorder 1, %s9
    %p110 = scmp.lt.s32.totalorder %s9, 3
    %p111 = pnand %p109, %p110
    %p112 = pneg %p111
    // Predicated region
    $region9: #{discriminator_forward.19} parent=5 // pred_check
      _
    $region10: #{discriminator_forward.19} parent=5 // pred_check_branch
      %114 = sbr.rel (%p111) target = $region12
    $region11: #{discriminator_forward.19} parent=5 // pred_region
      %s115 = ssub.s32 %s9, 1
    $region12: #{discriminator_forward.19} parent=5 // pred_fallthru
      _
    %p116 = scmp.lt.s32.totalorder %s9, 2
    // Predicated region
    $region13: #{discriminator_forward.19} parent=5 // pred_check
      %p117 = pneg %p116
    $region14: #{discriminator_forward.19} parent=5 // pred_check_branch
      %119 = sbr.rel (%p117) target = $region16
    $region15: #{discriminator_forward.19} parent=5 // pred_region
      // Predicated region
      $region17: #{discriminator_forward.19} parent=15 // pred_check
        %p120 = pneg %p43
      $region18: #{discriminator_forward.19} parent=15 // pred_check_branch
        %122 = sbr.rel (%p120) target = $region20
      $region19: #{discriminator_forward.19} parent=15 // pred_region
        %s123 = smul.u32 2, %s17
        %p124 = scmp.lt.s32.totalorder %s16, 1
        %s125 = scalar_select %p124, %s16, 1
        %p126 = scmp.lt.s32.totalorder %s123, 1
        %s127 = scalar_select %p126, %s123, 1
        %s128 = smul.addr %s127, 4
        %s129 = smul.addr %s125, 8
        %s130 = sadd.s32 %s128, %s129
        %s131 = smul.addr %s130, 8
        %s132 = scalar_lea.vmem %s0, %s131
        %s133 = smul.u32 2, %s17
      $region20: #{discriminator_forward.19} parent=15 // pred_fallthru
        _
    $region16: #{discriminator_forward.19} parent=5 // pred_fallthru
      _
    %p134 = scmp.le.s32.totalorder 1, %s9
    %p135 = scmp.lt.s32.totalorder %s9, 3
    %p136 = pnand %p134, %p135
    %p137 = pneg %p136
    // Predicated region
    $region21: #{discriminator_forward.19} parent=5 // pred_check
      _
    $region22: #{discriminator_forward.19} parent=5 // pred_check_branch
      %139 = sbr.rel (%p136) target = $region24
    $region23: #{discriminator_forward.19} parent=5 // pred_region
      %s140 = ssub.s32 %s9, 1
      %s141 = smul.u32 2, %s19
      %p142 = scmp.lt.s32.totalorder %s18, 1
      %s143 = scalar_select %p142, %s18, 1
      %p144 = scmp.lt.s32.totalorder %s141, 1
      %s145 = scalar_select %p144, %s141, 1
      %s146 = smul.addr %s145, 4
      %s147 = smul.addr %s143, 8
      %s148 = sadd.s32 %s146, %s147
      %s149 = smul.addr %s148, 8
      %s150 = scalar_lea.vmem %s0, %s149
      %p151 = pneg %p49
      %p152 = pneg %p46
      %p153 = pneg %p75
      %p154 = pneg %p72
      %p155 = scmp.lt.s32.totalorder %s18, 1
      %s156 = scalar_select %p155, %s18, 1
      %s157 = smul.addr %s156, 4
      %s158 = scalar_lea.vmem %s1, %s157
      %p159 = pneg %p101
      %p160 = pneg %p98
      %p161 = scmp.lt.s32.totalorder %s18, 1
      %s162 = scalar_select %p161, %s18, 1
      %s163 = smul.addr %s162, 4
      %s164 = scalar_lea.vmem %s2, %s163
      %s165 = smul.u32 2, %s19
      %p166 = scmp.lt.s32.totalorder %s18, 1
      %s167 = scalar_select %p166, %s18, 1
      %p168 = scmp.lt.s32.totalorder %s165, 1
      %s169 = scalar_select %p168, %s165, 1
      %s170 = smul.addr %s169, 4
      %s171 = smul.addr %s167, 8
      %s172 = sadd.s32 %s170, %s171
      %s173 = smul.addr %s172, 8
      %s174 = scalar_lea.vmem %s0, %s173
      %s175 = smul.u32 2, %s19
      %p176 = scmp.lt.s32.totalorder %s18, 1
      %s177 = scalar_select %p176, %s18, 1
      %s178 = smul.addr %s177, 4
      %s179 = scalar_lea.vmem %s1, %s178
      %p180 = scmp.lt.s32.totalorder %s18, 1
      %s181 = scalar_select %p180, %s18, 1
      %s182 = smul.addr %s181, 4
      %s183 = scalar_lea.vmem %s2, %s182
      %p184 = scmp.eq.s32.totalorder %s19, 0
      // Predicated region
      $region25: #{discriminator_forward.19} parent=23 // pred_check
        %p185 = pneg %p184
      $region26: #{discriminator_forward.19} parent=23 // pred_check_branch
        %187 = sbr.rel (%p185) target = $region28
      $region27: #{discriminator_forward.19} parent=23 // pred_region
        %v188 = vlaneseq
        %vm189 = vcmp.ge.s32.totalorder %v188, 0
        %vm190 = vcmp.lt.s32.totalorder %v188, 512
        %vm191 = vmand %vm189, %vm190
        %192 = vst.msk [vmem:[%s179] sm:$0xf] %vm191, 0.0
        %193 = vst.msk [vmem:[%s183] sm:$0xf] %vm191, 0.0
      $region28: #{discriminator_forward.19} parent=23 // pred_fallthru
        _
      %v194 = vld [vmem:[%s174] sm:$0xff]
      %v195 = vld [vmem:[%s174 + $0x8] sm:$0xff]
      %v196 = vld [vmem:[%s174 + $0x10] sm:$0xff]
      %v197 = vld [vmem:[%s174 + $0x18] sm:$0xff]
      %v198 = vld [vmem:[%s174 + $0x20] sm:$0x1]
      %v199 = vld [vmem:[%s174 + $0x28] sm:$0x1]
      %v200 = vld [vmem:[%s174 + $0x30] sm:$0x1]
      %v201 = vld [vmem:[%s174 + $0x38] sm:$0x1]
      %v202 = vld [vmem:[%s179] sm:$0xf]
      %vm203 = vcmask 1040384
      %v204 = vsel %vm203, %v198, 0.0
      %v205 = vadd.f32 %v194, %v204
      %v206 = vrot.slane %v205, 4
      %v207 = vadd.f32 %v205, %v206
      %v208 = vrot.slane %v207, 2
      %v209 = vadd.f32 %v207, %v208
      %v210 = vrot.slane %v209, 1
      %v211 = vadd.f32 %v209, %v210
      %v212 = vsel %vm203, %v199, 0.0
      %v213 = vadd.f32 %v195, %v212
      %v214 = vrot.slane %v213, 4
      %v215 = vadd.f32 %v213, %v214
      %v216 = vrot.slane %v215, 2
      %v217 = vadd.f32 %v215, %v216
      %v218 = vrot.slane %v217, 1
      %v219 = vadd.f32 %v217, %v218
      %v220 = vsel %vm203, %v200, 0.0
      %v221 = vadd.f32 %v196, %v220
      %v222 = vrot.slane %v221, 4
      %v223 = vadd.f32 %v221, %v222
      %v224 = vrot.slane %v223, 2
      %v225 = vadd.f32 %v223, %v224
      %v226 = vrot.slane %v225, 1
      %v227 = vadd.f32 %v225, %v226
      %v228 = vsel %vm203, %v201, 0.0
      %v229 = vadd.f32 %v197, %v228
      %v230 = vrot.slane %v229, 4
      %v231 = vadd.f32 %v229, %v230
      %v232 = vrot.slane %v231, 2
      %v233 = vadd.f32 %v231, %v232
      %v234 = vrot.slane %v233, 1
      %v235 = vadd.f32 %v233, %v234
      %v240 = vcombine.low %v211, %v219
      %v241 = vcombine.low %v227, %v235
      %v243 = vunpack.c.l.s4 1966171168
      %v244 = vunpack.c.0.s8 %v243
      %v245 = vlaneseq
      %v246 = vshrl.u32 %v245, 7
      %v247 = vsub.s32 %v244, %v246
      %v248 = vrot.slane %v240, %v247
      %v250 = vunpack.c.l.s4 1966171168
      %v251 = vunpack.c.0.s8 %v250
      %v252 = vlaneseq
      %v253 = vshrl.u32 %v252, 7
      %v254 = vsub.s32 %v251, %v253
      %v255 = vrot.slane %v241, %v254
      %v256 = vcombine.low %v248, %v255
      %v258 = vunpack.c.l.s4 1966171168
      %v259 = vunpack.c.0.s8 %v258
      %v260 = vlaneseq
      %v261 = vshrl.u32 %v260, 7
      %v262 = vsub.s32 %v259, %v261
      %v263 = vrot.slane %v256, %v262
      %v265 = vadd.f32 %v202, %v263
      %v266 = vlaneseq
      %vm267 = vcmp.ge.s32.totalorder %v266, 0
      %vm268 = vcmp.lt.s32.totalorder %v266, 512
      %vm269 = vmand %vm267, %vm268
      %270 = vst.msk [vmem:[%s179] sm:$0xf] %vm269, %v265
      %v271 = vld [vmem:[%s183] sm:$0xf]
      %v272 = vmul.f32 %v194, %v194
      %v273 = vmul.f32 %v195, %v195
      %v274 = vmul.f32 %v196, %v196
      %v275 = vmul.f32 %v197, %v197
      %v276 = vmul.f32 %v198, %v198
      %v277 = vmul.f32 %v199, %v199
      %v278 = vmul.f32 %v200, %v200
      %v279 = vmul.f32 %v201, %v201
      %v280 = vsel %vm203, %v276, 0.0
      %v281 = vadd.f32 %v272, %v280
      %v282 = vrot.slane %v281, 4
      %v283 = vadd.f32 %v281, %v282
      %v284 = vrot.slane %v283, 2
      %v285 = vadd.f32 %v283, %v284
      %v286 = vrot.slane %v285, 1
      %v287 = vadd.f32 %v285, %v286
      %v288 = vsel %vm203, %v277, 0.0
      %v289 = vadd.f32 %v273, %v288
      %v290 = vrot.slane %v289, 4
      %v291 = vadd.f32 %v289, %v290
      %v292 = vrot.slane %v291, 2
      %v293 = vadd.f32 %v291, %v292
      %v294 = vrot.slane %v293, 1
      %v295 = vadd.f32 %v293, %v294
      %v296 = vsel %vm203, %v278, 0.0
      %v297 = vadd.f32 %v274, %v296
      %v298 = vrot.slane %v297, 4
      %v299 = vadd.f32 %v297, %v298
      %v300 = vrot.slane %v299, 2
      %v301 = vadd.f32 %v299, %v300
      %v302 = vrot.slane %v301, 1
      %v303 = vadd.f32 %v301, %v302
      %v304 = vsel %vm203, %v279, 0.0
      %v305 = vadd.f32 %v275, %v304
      %v306 = vrot.slane %v305, 4
      %v307 = vadd.f32 %v305, %v306
      %v308 = vrot.slane %v307, 2
      %v309 = vadd.f32 %v307, %v308
      %v310 = vrot.slane %v309, 1
      %v311 = vadd.f32 %v309, %v310
      %v316 = vcombine.low %v287, %v295
      %v317 = vcombine.low %v303, %v311
      %v319 = vunpack.c.l.s4 1966171168
      %v320 = vunpack.c.0.s8 %v319
      %v321 = vlaneseq
      %v322 = vshrl.u32 %v321, 7
      %v323 = vsub.s32 %v320, %v322
      %v324 = vrot.slane %v316, %v323
      %v326 = vunpack.c.l.s4 1966171168
      %v327 = vunpack.c.0.s8 %v326
      %v328 = vlaneseq
      %v329 = vshrl.u32 %v328, 7
      %v330 = vsub.s32 %v327, %v329
      %v331 = vrot.slane %v317, %v330
      %v332 = vcombine.low %v324, %v331
      %v334 = vunpack.c.l.s4 1966171168
      %v335 = vunpack.c.0.s8 %v334
      %v336 = vlaneseq
      %v337 = vshrl.u32 %v336, 7
      %v338 = vsub.s32 %v335, %v337
      %v339 = vrot.slane %v332, %v338
      %v341 = vadd.f32 %v271, %v339
      %342 = vst.msk [vmem:[%s183] sm:$0xf] %vm269, %v341
      %p343 = scmp.lt.s32.totalorder %s18, 1
      %s344 = scalar_select %p343, %s18, 1
      %s345 = smul.addr %s344, 4
      %s346 = scalar_lea.vmem %s1, %s345
      %p347 = scmp.lt.s32.totalorder %s18, 1
      %s348 = scalar_select %p347, %s18, 1
      %s349 = smul.addr %s348, 4
      %s350 = scalar_lea.vmem %s2, %s349
      // Predicated region
      $region29: #{discriminator_forward.19} parent=23 // pred_check
        %p351 = pneg %p72
      $region30: #{discriminator_forward.19} parent=23 // pred_check_branch
        %353 = sbr.rel (%p351) target = $region32
      $region31: #{discriminator_forward.19} parent=23 // pred_region
        _
      $region32: #{discriminator_forward.19} parent=23 // pred_fallthru
        _
      // Predicated region
      $region33: #{discriminator_forward.19} parent=23 // pred_check
        %p354 = pneg %p98
      $region34: #{discriminator_forward.19} parent=23 // pred_check_branch
        %356 = sbr.rel (%p354) target = $region36
      $region35: #{discriminator_forward.19} parent=23 // pred_region
        _
      $region36: #{discriminator_forward.19} parent=23 // pred_fallthru
        _
    $region24: #{discriminator_forward.19} parent=5 // pred_fallthru
      _
    %p357 = scmp.le.s32.totalorder 2, %s9
    // Predicated region
    $region37: #{discriminator_forward.19} parent=5 // pred_check
      %p358 = pneg %p357
    $region38: #{discriminator_forward.19} parent=5 // pred_check_branch
      %360 = sbr.rel (%p358) target = $region40
    $region39: #{discriminator_forward.19} parent=5 // pred_region
      %s361 = ssub.s32 %s9, 2
      // Predicated region
      $region41: #{discriminator_forward.19} parent=39 // pred_check
        %p362 = pneg %p78
      $region42: #{discriminator_forward.19} parent=39 // pred_check_branch
        %364 = sbr.rel (%p362) target = $region44
      $region43: #{discriminator_forward.19} parent=39 // pred_region
        %p365 = scmp.lt.s32.totalorder %s20, 1
        %s366 = scalar_select %p365, %s20, 1
        %s367 = smul.addr %s366, 4
        %s368 = scalar_lea.vmem %s1, %s367
      $region44: #{discriminator_forward.19} parent=39 // pred_fallthru
        _
      // Predicated region
      $region45: #{discriminator_forward.19} parent=39 // pred_check
        %p369 = pneg %p104
      $region46: #{discriminator_forward.19} parent=39 // pred_check_branch
        %371 = sbr.rel (%p369) target = $region48
      $region47: #{discriminator_forward.19} parent=39 // pred_region
        %p372 = scmp.lt.s32.totalorder %s20, 1
        %s373 = scalar_select %p372, %s20, 1
        %s374 = smul.addr %s373, 4
        %s375 = scalar_lea.vmem %s2, %s374
      $region48: #{discriminator_forward.19} parent=39 // pred_fallthru
        _
    $region40: #{discriminator_forward.19} parent=5 // pred_fallthru
      _
  $region6: #{discriminator_forward.19} parent=0 // loop_footer
    %s13 = sadd.s32 1, %s9
  $region7: #{discriminator_forward.19} parent=0 // loop_footer_branch
    %8 = sbr.rel target = $region3
  $region8: #{discriminator_forward.19} parent=0 // loop_exit
    _

// kernel: discriminator_forward.20
$region0: #{discriminator_forward.20}
  #allocation0 [shape = 'u32[]', space=smem, size = 0x4, offset = 0x4, fixed_abs, tag = 'smem constant byte address 0x4 - core index']
  #allocation1 [shape = 'u32[144,128]{1,0:T(1,128)}', space=vmem, size = 0x12000, scoped, tag = 'internal scratch']
  %s0 = inlined_call_operand.vmem [shape: f32[2,9,512], index: 0, kind: input, shape index: {}]
  %s1 = inlined_call_operand.vmem [shape: f32[2,1,512], index: 1, kind: input, shape index: {}]
  %s2 = inlined_call_operand.vmem [shape: f32[2,1,512], index: 2, kind: input, shape index: {}]
  %s3 = inlined_call_operand.vmem [shape: f32[2,9,512], index: 3, kind: output, shape index: {}]
  %s4 = sld [smem:[#allocation0]]
  $region45: #{discriminator_forward.20} parent=0
    _
  %s6 = ssub.s32 1, %s4
  %s7 = scalar_select 0, %s6, %s4
  loop: start=0, step=1, limit=4
  $region2: #{discriminator_forward.20} parent=0 // loop_pre_header
    _
  $region3: #{discriminator_forward.20} parent=0 // loop_header
    %s9 = sphi 0, %s13
    %p10 = scmp.ge.s32.totalorder %s9, 4
    %s16 = sphi 0, %s28
    %s17 = sphi 0, %s24
    %s18 = sphi 0, %s16
    %s19 = sphi 0, %s17
    %s20 = sphi 0, %s18
    %s21 = sphi 0, %s19
    %s33 = sphi 0, %s35
    %s36 = sphi 0, %s33
    %s37 = sphi 0, %s36
    %s53 = sphi 0, %s37
    %s59 = sphi 0, %s61
    %s62 = sphi 0, %s59
    %s63 = sphi 0, %s62
    %s79 = sphi 0, %s63
    %s85 = sphi 0, %s87
    %s88 = sphi 0, %s85
    %s89 = sphi 0, %s88
    %s105 = sphi 0, %s89
    %s113 = sphi 0, %s115
    %s116 = sphi 0, %s113
    %s117 = sphi 0, %s116
    %s133 = sphi 0, %s117
  $region4: #{discriminator_forward.20} parent=0 // loop_header_branch
    %12 = sbr.rel (%p10) target = $region8
  $region5: #{discriminator_forward.20} parent=0 // loop_body
    %s14 = ssub.s32 %s9, 1
    %s15 = ssub.s32 %s9, 2
    %s22 = sadd.s32 1, %s17
    %p23 = scmp.ge.s32.totalorder %s22, 1
    %s24 = scalar_select %p23, 0, %s22
    %s25 = sadd.s32 1, %s16
    %s26 = scalar_select %p23, %s25, %s16
    %p27 = scmp.ge.s32.totalorder %s26, 2
    %s28 = scalar_select %p27, 0, %s26
    %s29 = ssub.s32 %s16, %s28
    %s30 = ssub.s32 %s17, %s24
    %s31 = sor.u32 %s29, %s30
    %p32 = scmp.eq.s32.totalorder %s31, 0
    %s34 = sadd.s32 %s33, 1
    %s35 = scalar_select %p32, %s33, %s34
    %p38 = pneg %p32
    %p39 = scmp.eq.s32.totalorder %s9, 1
    %p40 = por %p38, %p39
    %p41 = scmp.ne.s32.totalorder %s33, %s36
    %p42 = scmp.eq.s32.totalorder %s9, 0
    %p43 = por %p41, %p42
    %p44 = scmp.ne.s32.totalorder %s33, %s36
    %p45 = scmp.eq.s32.totalorder %s14, 1
    %p46 = por %p44, %p45
    %p47 = scmp.ne.s32.totalorder %s36, %s37
    %p48 = scmp.eq.s32.totalorder %s14, 0
    %p49 = por %p47, %p48
    %p50 = scmp.ne.s32.totalorder %s36, %s37
    %p51 = scmp.eq.s32.totalorder %s15, 1
    %p52 = por %p50, %p51
    %p54 = scmp.ne.s32.totalorder %s37, %s53
    %p55 = scmp.eq.s32.totalorder %s15, 0
    %p56 = por %p54, %p55
    %s57 = ssub.s32 %s16, %s28
    %p58 = scmp.eq.s32.totalorder %s57, 0
    %s60 = sadd.s32 %s59, 1
    %s61 = scalar_select %p58, %s59, %s60
    %p64 = pneg %p58
    %p65 = scmp.eq.s32.totalorder %s9, 1
    %p66 = por %p64, %p65
    %p67 = scmp.ne.s32.totalorder %s59, %s62
    %p68 = scmp.eq.s32.totalorder %s9, 0
    %p69 = por %p67, %p68
    %p70 = scmp.ne.s32.totalorder %s59, %s62
    %p71 = scmp.eq.s32.totalorder %s14, 1
    %p72 = por %p70, %p71
    %p73 = scmp.ne.s32.totalorder %s62, %s63
    %p74 = scmp.eq.s32.totalorder %s14, 0
    %p75 = por %p73, %p74
    %p76 = scmp.ne.s32.totalorder %s62, %s63
    %p77 = scmp.eq.s32.totalorder %s15, 1
    %p78 = por %p76, %p77
    %p80 = scmp.ne.s32.totalorder %s63, %s79
    %p81 = scmp.eq.s32.totalorder %s15, 0
    %p82 = por %p80, %p81
    %s83 = ssub.s32 %s16, %s28
    %p84 = scmp.eq.s32.totalorder %s83, 0
    %s86 = sadd.s32 %s85, 1
    %s87 = scalar_select %p84, %s85, %s86
    %p90 = pneg %p84
    %p91 = scmp.eq.s32.totalorder %s9, 1
    %p92 = por %p90, %p91
    %p93 = scmp.ne.s32.totalorder %s85, %s88
    %p94 = scmp.eq.s32.totalorder %s9, 0
    %p95 = por %p93, %p94
    %p96 = scmp.ne.s32.totalorder %s85, %s88
    %p97 = scmp.eq.s32.totalorder %s14, 1
    %p98 = por %p96, %p97
    %p99 = scmp.ne.s32.totalorder %s88, %s89
    %p100 = scmp.eq.s32.totalorder %s14, 0
    %p101 = por %p99, %p100
    %p102 = scmp.ne.s32.totalorder %s88, %s89
    %p103 = scmp.eq.s32.totalorder %s15, 1
    %p104 = por %p102, %p103
    %p106 = scmp.ne.s32.totalorder %s89, %s105
    %p107 = scmp.eq.s32.totalorder %s15, 0
    %p108 = por %p106, %p107
    %s109 = ssub.s32 %s16, %s28
    %s110 = ssub.s32 %s17, %s24
    %s111 = sor.u32 %s109, %s110
    %p112 = scmp.eq.s32.totalorder %s111, 0
    %s114 = sadd.s32 %s113, 1
    %s115 = scalar_select %p112, %s113, %s114
    %p118 = pneg %p112
    %p119 = scmp.eq.s32.totalorder %s9, 1
    %p120 = por %p118, %p119
    %p121 = scmp.ne.s32.totalorder %s113, %s116
    %p122 = scmp.eq.s32.totalorder %s9, 0
    %p123 = por %p121, %p122
    %p124 = scmp.ne.s32.totalorder %s113, %s116
    %p125 = scmp.eq.s32.totalorder %s14, 1
    %p126 = por %p124, %p125
    %p127 = scmp.ne.s32.totalorder %s116, %s117
    %p128 = scmp.eq.s32.totalorder %s14, 0
    %p129 = por %p127, %p128
    %p130 = scmp.ne.s32.totalorder %s116, %s117
    %p131 = scmp.eq.s32.totalorder %s15, 1
    %p132 = por %p130, %p131
    %p134 = scmp.ne.s32.totalorder %s117, %s133
    %p135 = scmp.eq.s32.totalorder %s15, 0
    %p136 = por %p134, %p135
    %p137 = scmp.le.s32.totalorder 1, %s9
    %p138 = scmp.lt.s32.totalorder %s9, 3
    %p139 = pnand %p137, %p138
    %p140 = pneg %p139
    // Predicated region
    $region9: #{discriminator_forward.20} parent=5 // pred_check
      _
    $region10: #{discriminator_forward.20} parent=5 // pred_check_branch
      %142 = sbr.rel (%p139) target = $region12
    $region11: #{discriminator_forward.20} parent=5 // pred_region
      %s143 = ssub.s32 %s9, 1
    $region12: #{discriminator_forward.20} parent=5 // pred_fallthru
      _
    %p144 = scmp.lt.s32.totalorder %s9, 2
    // Predicated region
    $region13: #{discriminator_forward.20} parent=5 // pred_check
      %p145 = pneg %p144
    $region14: #{discriminator_forward.20} parent=5 // pred_check_branch
      %147 = sbr.rel (%p145) target = $region16
    $region15: #{discriminator_forward.20} parent=5 // pred_region
      // Predicated region
      $region17: #{discriminator_forward.20} parent=15 // pred_check
        %p148 = pneg %p43
      $region18: #{discriminator_forward.20} parent=15 // pred_check_branch
        %150 = sbr.rel (%p148) target = $region20
      $region19: #{discriminator_forward.20} parent=15 // pred_region
        %s151 = smul.u32 2, %s17
        %p152 = scmp.lt.s32.totalorder %s16, 1
        %s153 = scalar_select %p152, %s16, 1
        %p154 = scmp.lt.s32.totalorder %s151, 1
        %s155 = scalar_select %p154, %s151, 1
        %s156 = smul.addr %s155, 4
        %s157 = smul.addr %s153, 8
        %s158 = sadd.s32 %s156, %s157
        %s159 = smul.addr %s158, 8
        %s160 = scalar_lea.vmem %s0, %s159
        %s161 = smul.u32 2, %s17
      $region20: #{discriminator_forward.20} parent=15 // pred_fallthru
        _
      // Predicated region
      $region21: #{discriminator_forward.20} parent=15 // pred_check
        %p162 = pneg %p69
      $region22: #{discriminator_forward.20} parent=15 // pred_check_branch
        %164 = sbr.rel (%p162) target = $region24
      $region23: #{discriminator_forward.20} parent=15 // pred_region
        %p165 = scmp.lt.s32.totalorder %s16, 1
        %s166 = scalar_select %p165, %s16, 1
        %s167 = smul.addr %s166, 4
        %s168 = scalar_lea.vmem %s1, %s167
      $region24: #{discriminator_forward.20} parent=15 // pred_fallthru
        _
      // Predicated region
      $region25: #{discriminator_forward.20} parent=15 // pred_check
        %p169 = pneg %p95
      $region26: #{discriminator_forward.20} parent=15 // pred_check_branch
        %171 = sbr.rel (%p169) target = $region28
      $region27: #{discriminator_forward.20} parent=15 // pred_region
        %p172 = scmp.lt.s32.totalorder %s16, 1
        %s173 = scalar_select %p172, %s16, 1
        %s174 = smul.addr %s173, 4
        %s175 = scalar_lea.vmem %s2, %s174
      $region28: #{discriminator_forward.20} parent=15 // pred_fallthru
        _
    $region16: #{discriminator_forward.20} parent=5 // pred_fallthru
      _
    %p176 = scmp.le.s32.totalorder 1, %s9
    %p177 = scmp.lt.s32.totalorder %s9, 3
    %p178 = pnand %p176, %p177
    %p179 = pneg %p178
    // Predicated region
    $region29: #{discriminator_forward.20} parent=5 // pred_check
      _
    $region30: #{discriminator_forward.20} parent=5 // pred_check_branch
      %181 = sbr.rel (%p178) target = $region32
    $region31: #{discriminator_forward.20} parent=5 // pred_region
      %s182 = ssub.s32 %s9, 1
      %s183 = smul.u32 2, %s19
      %p184 = scmp.lt.s32.totalorder %s18, 1
      %s185 = scalar_select %p184, %s18, 1
      %p186 = scmp.lt.s32.totalorder %s183, 1
      %s187 = scalar_select %p186, %s183, 1
      %s188 = smul.addr %s187, 4
      %s189 = smul.addr %s185, 8
      %s190 = sadd.s32 %s188, %s189
      %s191 = smul.addr %s190, 8
      %s192 = scalar_lea.vmem %s0, %s191
      %p193 = pneg %p49
      %p194 = pneg %p46
      %p195 = scmp.lt.s32.totalorder %s18, 1
      %s196 = scalar_select %p195, %s18, 1
      %s197 = smul.addr %s196, 4
      %s198 = scalar_lea.vmem %s1, %s197
      %p199 = pneg %p75
      %p200 = pneg %p72
      %p201 = scmp.lt.s32.totalorder %s18, 1
      %s202 = scalar_select %p201, %s18, 1
      %s203 = smul.addr %s202, 4
      %s204 = scalar_lea.vmem %s2, %s203
      %p205 = pneg %p101
      %p206 = pneg %p98
      %p207 = pneg %p129
      %p208 = pneg %p126
      %s209 = smul.u32 2, %s19
      %p210 = scmp.lt.s32.totalorder %s18, 1
      %s211 = scalar_select %p210, %s18, 1
      %p212 = scmp.lt.s32.totalorder %s209, 1
      %s213 = scalar_select %p212, %s209, 1
      %s214 = smul.addr %s213, 4
      %s215 = smul.addr %s211, 8
      %s216 = sadd.s32 %s214, %s215
      %s217 = smul.addr %s216, 8
      %s218 = scalar_lea.vmem %s3, %s217
      %s219 = smul.u32 2, %s19
      %p220 = scmp.lt.s32.totalorder %s18, 1
      %s221 = scalar_select %p220, %s18, 1
      %p222 = scmp.lt.s32.totalorder %s219, 1
      %s223 = scalar_select %p222, %s219, 1
      %s224 = smul.addr %s223, 4
      %s225 = smul.addr %s221, 8
      %s226 = sadd.s32 %s224, %s225
      %s227 = smul.addr %s226, 8
      %s228 = scalar_lea.vmem %s0, %s227
      %s229 = smul.u32 2, %s19
      %p230 = scmp.lt.s32.totalorder %s18, 1
      %s231 = scalar_select %p230, %s18, 1
      %s232 = smul.addr %s231, 4
      %s233 = scalar_lea.vmem %s1, %s232
      %p234 = scmp.lt.s32.totalorder %s18, 1
      %s235 = scalar_select %p234, %s18, 1
      %s236 = smul.addr %s235, 4
      %s237 = scalar_lea.vmem %s2, %s236
      %s238 = smul.u32 2, %s19
      %p239 = scmp.lt.s32.totalorder %s18, 1
      %s240 = scalar_select %p239, %s18, 1
      %p241 = scmp.lt.s32.totalorder %s238, 1
      %s242 = scalar_select %p241, %s238, 1
      %s243 = smul.addr %s242, 4
      %s244 = smul.addr %s240, 8
      %s245 = sadd.s32 %s243, %s244
      %s246 = smul.addr %s245, 8
      %s247 = scalar_lea.vmem %s3, %s246
      %s248 = smul.u32 2, %s19
      %v249 = vld [vmem:[%s228] sm:$0xff]
      %v250 = vld [vmem:[%s228 + $0x8] sm:$0xff]
      %v251 = vld [vmem:[%s228 + $0x10] sm:$0xff]
      %v252 = vld [vmem:[%s228 + $0x18] sm:$0xff]
      %v253 = vld [vmem:[%s228 + $0x20] sm:$0x1]
      %v254 = vld [vmem:[%s228 + $0x28] sm:$0x1]
      %v255 = vld [vmem:[%s228 + $0x30] sm:$0x1]
      %v256 = vld [vmem:[%s228 + $0x38] sm:$0x1]
      %v257 = vld [vmem:[%s233] sm:$0xf]
      %v258 = vmul.f32 %v257, 0.11111111
      %v259 = vld [vmem:[%s237] sm:$0xf]
      %v260 = vmul.f32 %v259, 0.11111111
      %v261 = vmul.f32 %v258, %v258
      %v262 = vsub.f32 %v260, %v261
      %v264 = vlaneseq
      %v265 = vshrl.u32 %v264, 7
      %v266 = vsub.s32 0, %v265
      %v267 = vrot.slane %v258, %v266
      %v268 = vlaneseq
      %v269 = vshrl.u32 %v268, 7
      %v270 = vsub.s32 1, %v269
      %v271 = vrot.slane %v258, %v270
      %v272 = vlaneseq
      %v273 = vshrl.u32 %v272, 7
      %v274 = vsub.s32 2, %v273
      %v275 = vrot.slane %v258, %v274
      %v276 = vlaneseq
      %v277 = vshrl.u32 %v276, 7
      %v278 = vsub.s32 3, %v277
      %v279 = vrot.slane %v258, %v278
      %v284 = vsub.f32 %v249, %v267
      %v285 = vsub.f32 %v250, %v271
      %v286 = vsub.f32 %v251, %v275
      %v287 = vsub.f32 %v252, %v279
      %v288 = vsub.f32 %v253, %v267
      %v289 = vsub.f32 %v254, %v271
      %v290 = vsub.f32 %v255, %v275
      %v291 = vsub.f32 %v256, %v279
      %v292 = vadd.f32 %v262, 1e-05
      %v293 = vrsqrt.pop %v292
      %v295 = vlaneseq
      %v296 = vshrl.u32 %v295, 7
      %v297 = vsub.s32 0, %v296
      %v298 = vrot.slane %v293, %v297
      %v299 = vlaneseq
      %v300 = vshrl.u32 %v299, 7
      %v301 = vsub.s32 1, %v300
      %v302 = vrot.slane %v293, %v301
      %v303 = vlaneseq
      %v304 = vshrl.u32 %v303, 7
      %v305 = vsub.s32 2, %v304
      %v306 = vrot.slane %v293, %v305
      %v307 = vlaneseq
      %v308 = vshrl.u32 %v307, 7
      %v309 = vsub.s32 3, %v308
      %v310 = vrot.slane %v293, %v309
      %v315 = vmul.f32 %v284, %v298
      %v316 = vmul.f32 %v285, %v302
      %v317 = vmul.f32 %v286, %v306
      %v318 = vmul.f32 %v287, %v310
      %v319 = vmul.f32 %v288, %v298
      %v320 = vmul.f32 %v289, %v302
      %v321 = vmul.f32 %v290, %v306
      %v322 = vmul.f32 %v291, %v310
      %vm323 = vcmp.ge.f32.partialorder %v315, 0.0
      %vm324 = vcmp.ge.f32.partialorder %v316, 0.0
      %vm325 = vcmp.ge.f32.partialorder %v317, 0.0
      %vm326 = vcmp.ge.f32.partialorder %v318, 0.0
      %vm327 = vcmp.ge.f32.partialorder %v319, 0.0
      %vm328 = vcmp.ge.f32.partialorder %v320, 0.0
      %vm329 = vcmp.ge.f32.partialorder %v321, 0.0
      %vm330 = vcmp.ge.f32.partialorder %v322, 0.0
      %v331 = vmul.f32 %v315, 0.2
      %v332 = vmul.f32 %v316, 0.2
      %v333 = vmul.f32 %v317, 0.2
      %v334 = vmul.f32 %v318, 0.2
      %v335 = vmul.f32 %v319, 0.2
      %v336 = vmul.f32 %v320, 0.2
      %v337 = vmul.f32 %v321, 0.2
      %v338 = vmul.f32 %v322, 0.2
      %v339 = vsel %vm323, %v315, %v331
      %v340 = vsel %vm324, %v316, %v332
      %v341 = vsel %vm325, %v317, %v333
      %v342 = vsel %vm326, %v318, %v334
      %v343 = vsel %vm327, %v319, %v335
      %v344 = vsel %vm328, %v320, %v336
      %v345 = vsel %vm329, %v321, %v337
      %v346 = vsel %vm330, %v322, %v338
      %347 = vst [vmem:[%s247] sm:$0xff] %v339
      %348 = vst [vmem:[%s247 + $0x8] sm:$0xff] %v340
      %349 = vst [vmem:[%s247 + $0x10] sm:$0xff] %v341
      %350 = vst [vmem:[%s247 + $0x18] sm:$0xff] %v342
      %351 = vst [vmem:[%s247 + $0x20] sm:$0x1] %v343
      %352 = vst [vmem:[%s247 + $0x28] sm:$0x1] %v344
      %353 = vst [vmem:[%s247 + $0x30] sm:$0x1] %v345
      %354 = vst [vmem:[%s247 + $0x38] sm:$0x1] %v346
      %s355 = smul.u32 2, %s19
      %p356 = scmp.lt.s32.totalorder %s18, 1
      %s357 = scalar_select %p356, %s18, 1
      %p358 = scmp.lt.s32.totalorder %s355, 1
      %s359 = scalar_select %p358, %s355, 1
      %s360 = smul.addr %s359, 4
      %s361 = smul.addr %s357, 8
      %s362 = sadd.s32 %s360, %s361
      %s363 = smul.addr %s362, 8
      %s364 = scalar_lea.vmem %s3, %s363
      // Predicated region
      $region33: #{discriminator_forward.20} parent=31 // pred_check
        %p365 = pneg %p126
      $region34: #{discriminator_forward.20} parent=31 // pred_check_branch
        %367 = sbr.rel (%p365) target = $region36
      $region35: #{discriminator_forward.20} parent=31 // pred_region
        %s368 = smul.u32 2, %s19
      $region36: #{discriminator_forward.20} parent=31 // pred_fallthru
        _
    $region32: #{discriminator_forward.20} parent=5 // pred_fallthru
      _
    %p369 = scmp.le.s32.totalorder 2, %s9
    // Predicated region
    $region37: #{discriminator_forward.20} parent=5 // pred_check
      %p370 = pneg %p369
    $region38: #{discriminator_forward.20} parent=5 // pred_check_branch
      %372 = sbr.rel (%p370) target = $region40
    $region39: #{discriminator_forward.20} parent=5 // pred_region
      %s373 = ssub.s32 %s9, 2
      // Predicated region
      $region41: #{discriminator_forward.20} parent=39 // pred_check
        %p374 = pneg %p132
      $region42: #{discriminator_forward.20} parent=39 // pred_check_branch
        %376 = sbr.rel (%p374) target = $region44
      $region43: #{discriminator_forward.20} parent=39 // pred_region
        %s377 = smul.u32 2, %s21
        %p378 = scmp.lt.s32.totalorder %s20, 1
        %s379 = scalar_select %p378, %s20, 1
        %p380 = scmp.lt.s32.totalorder %s377, 1
        %s381 = scalar_select %p380, %s377, 1
        %s382 = smul.addr %s381, 4
        %s383 = smul.addr %s379, 8
        %s384 = sadd.s32 %s382, %s383
        %s385 = smul.addr %s384, 8
        %s386 = scalar_lea.vmem %s3, %s385
      $region44: #{discriminator_forward.20} parent=39 // pred_fallthru
        _
    $region40: #{discriminator_forward.20} parent=5 // pred_fallthru
      _
  $region6: #{discriminator_forward.20} parent=0 // loop_footer
    %s13 = sadd.s32 1, %s9
  $region7: #{discriminator_forward.20} parent=0 // loop_footer_branch
    %8 = sbr.rel target = $region3
  $region8: #{discriminator_forward.20} parent=0 // loop_exit
    _

// kernel: discriminator_forward.21
$region0: #{discriminator_forward.21}
  #allocation0 [shape = 'u32[]', space=smem, size = 0x4, offset = 0x4, fixed_abs, tag = 'smem constant byte address 0x4 - core index']
  #allocation1 [shape = 'u32[144,128]{1,0:T(1,128)}', space=vmem, size = 0x12000, scoped, tag = 'internal scratch']
  #allocation2 [shape = 'f32[8,128]{1,0:T(8,128)}', space=vmem, size = 0x1000, scoped, tag = 'scratch operand']
  %s0 = inlined_call_operand.vmem [shape: bf16[8,8192], index: 0, kind: input, shape index: {}]
  %s1 = inlined_call_operand.vmem [shape: bf16[8192,128], index: 1, kind: input, shape index: {}]
  %s2 = inlined_call_operand.vmem [shape: f32[1,128], index: 2, kind: input, shape index: {}]
  %s3 = inlined_call_operand.vmem [shape: f32[8,128], index: 3, kind: output, shape index: {}]
  %s4 = sld [smem:[#allocation0]]
  $region53: #{discriminator_forward.21} parent=0
    _
  %s6 = ssub.s32 1, %s4
  %s7 = scalar_select 0, %s6, %s4
  loop: start=0, step=1, limit=18
  $region2: #{discriminator_forward.21} parent=0 // loop_pre_header
    _
  $region3: #{discriminator_forward.21} parent=0 // loop_header
    %s9 = sphi 0, %s13
    %p10 = scmp.ge.s32.totalorder %s9, 18
    %s16 = sphi 0, %s35
    %s17 = sphi 0, %s31
    %s18 = sphi 0, %s27
    %s19 = sphi 0, %s16
    %s20 = sphi 0, %s17
    %s21 = sphi 0, %s18
    %s22 = sphi 0, %s19
    %s23 = sphi 0, %s20
    %s24 = sphi 0, %s21
    %s40 = sphi 0, %s42
    %s43 = sphi 0, %s40
    %s44 = sphi 0, %s43
    %s60 = sphi 0, %s44
    %s68 = sphi 0, %s70
    %s71 = sphi 0, %s68
    %s72 = sphi 0, %s71
    %s88 = sphi 0, %s72
    %s94 = sphi 0, %s96
    %s97 = sphi 0, %s94
    %s98 = sphi 0, %s97
    %s114 = sphi 0, %s98
    %s122 = sphi 0, %s124
    %s125 = sphi 0, %s122
    %s126 = sphi 0, %s125
    %s142 = sphi 0, %s126
  $region4: #{discriminator_forward.21} parent=0 // loop_header_branch
    %12 = sbr.rel (%p10) target = $region8
  $region5: #{discriminator_forward.21} parent=0 // loop_body
    %s14 = ssub.s32 %s9, 1
    %s15 = ssub.s32 %s9, 2
    %s25 = sadd.s32 1, %s18
    %p26 = scmp.ge.s32.totalorder %s25, 16
    %s27 = scalar_select %p26, 0, %s25
    %s28 = sadd.s32 1, %s17
    %s29 = scalar_select %p26, %s28, %s17
    %p30 = scmp.ge.s32.totalorder %s29, 1
    %s31 = scalar_select %p30, 0, %s29
    %s32 = sadd.s32 1, %s16
    %s33 = scalar_select %p30, %s32, %s16
    %p34 = scmp.ge.s32.totalorder %s33, 1
    %s35 = scalar_select %p34, 0, %s33
    %s36 = ssub.s32 %s16, %s35
    %s37 = ssub.s32 %s18, %s27
    %s38 = sor.u32 %s36, %s37
    %p39 = scmp.eq.s32.totalorder %s38, 0
    %s41 = sadd.s32 %s40, 1
    %s42 = scalar_select %p39, %s40, %s41
    %p45 = pneg %p39
    %p46 = scmp.eq.s32.totalorder %s9, 15
    %p47 = por %p45, %p46
    %p48 = scmp.ne.s32.totalorder %s40, %s43
    %p49 = scmp.eq.s32.totalorder %s9, 0
    %p50 = por %p48, %p49
    %p51 = scmp.ne.s32.totalorder %s40, %s43
    %p52 = scmp.eq.s32.totalorder %s14, 15
    %p53 = por %p51, %p52
    %p54 = scmp.ne.s32.totalorder %s43, %s44
    %p55 = scmp.eq.s32.totalorder %s14, 0
    %p56 = por %p54, %p55
    %p57 = scmp.ne.s32.totalorder %s43, %s44
    %p58 = scmp.eq.s32.totalorder %s15, 15
    %p59 = por %p57, %p58
    %p61 = scmp.ne.s32.totalorder %s44, %s60
    %p62 = scmp.eq.s32.totalorder %s15, 0
    %p63 = por %p61, %p62
    %s64 = ssub.s32 %s18, %s27
    %s65 = ssub.s32 %s17, %s31
    %s66 = sor.u32 %s64, %s65
    %p67 = scmp.eq.s32.totalorder %s66, 0
    %s69 = sadd.s32 %s68, 1
    %s70 = scalar_select %p67, %s68, %s69
    %p73 = pneg %p67
    %p74 = scmp.eq.s32.totalorder %s9, 15
    %p75 = por %p73, %p74
    %p76 = scmp.ne.s32.totalorder %s68, %s71
    %p77 = scmp.eq.s32.totalorder %s9, 0
    %p78 = por %p76, %p77
    %p79 = scmp.ne.s32.totalorder %s68, %s71
    %p80 = scmp.eq.s32.totalorder %s14, 15
    %p81 = por %p79, %p80
    %p82 = scmp.ne.s32.totalorder %s71, %s72
    %p83 = scmp.eq.s32.totalorder %s14, 0
    %p84 = por %p82, %p83
    %p85 = scmp.ne.s32.totalorder %s71, %s72
    %p86 = scmp.eq.s32.totalorder %s15, 15
    %p87 = por %p85, %p86
    %p89 = scmp.ne.s32.totalorder %s72, %s88
    %p90 = scmp.eq.s32.totalorder %s15, 0
    %p91 = por %p89, %p90
    %s92 = ssub.s32 %s17, %s31
    %p93 = scmp.eq.s32.totalorder %s92, 0
    %s95 = sadd.s32 %s94, 1
    %s96 = scalar_select %p93, %s94, %s95
    %p99 = pneg %p93
    %p100 = scmp.eq.s32.totalorder %s9, 15
    %p101 = por %p99, %p100
    %p102 = scmp.ne.s32.totalorder %s94, %s97
    %p103 = scmp.eq.s32.totalorder %s9, 0
    %p104 = por %p102, %p103
    %p105 = scmp.ne.s32.totalorder %s94, %s97
    %p106 = scmp.eq.s32.totalorder %s14, 15
    %p107 = por %p105, %p106
    %p108 = scmp.ne.s32.totalorder %s97, %s98
    %p109 = scmp.eq.s32.totalorder %s14, 0
    %p110 = por %p108, %p109
    %p111 = scmp.ne.s32.totalorder %s97, %s98
    %p112 = scmp.eq.s32.totalorder %s15, 15
    %p113 = por %p111, %p112
    %p115 = scmp.ne.s32.totalorder %s98, %s114
    %p116 = scmp.eq.s32.totalorder %s15, 0
    %p117 = por %p115, %p116
    %s118 = ssub.s32 %s16, %s35
    %s119 = ssub.s32 %s17, %s31
    %s120 = sor.u32 %s118, %s119
    %p121 = scmp.eq.s32.totalorder %s120, 0
    %s123 = sadd.s32 %s122, 1
    %s124 = scalar_select %p121, %s122, %s123
    %p127 = pneg %p121
    %p128 = scmp.eq.s32.totalorder %s9, 15
    %p129 = por %p127, %p128
    %p130 = scmp.ne.s32.totalorder %s122, %s125
    %p131 = scmp.eq.s32.totalorder %s9, 0
    %p132 = por %p130, %p131
    %p133 = scmp.ne.s32.totalorder %s122, %s125
    %p134 = scmp.eq.s32.totalorder %s14, 15
    %p135 = por %p133, %p134
    %p136 = scmp.ne.s32.totalorder %s125, %s126
    %p137 = scmp.eq.s32.totalorder %s14, 0
    %p138 = por %p136, %p137
    %p139 = scmp.ne.s32.totalorder %s125, %s126
    %p140 = scmp.eq.s32.totalorder %s15, 15
    %p141 = por %p139, %p140
    %p143 = scmp.ne.s32.totalorder %s126, %s142
    %p144 = scmp.eq.s32.totalorder %s15, 0
    %p145 = por %p143, %p144
    %p146 = scmp.le.s32.totalorder 1, %s9
    %p147 = scmp.lt.s32.totalorder %s9, 17
    %p148 = pnand %p146, %p147
    %p149 = pneg %p148
    // Predicated region
    $region9: #{discriminator_forward.21} parent=5 // pred_check
      _
    $region10: #{discriminator_forward.21} parent=5 // pred_check_branch
      %151 = sbr.rel (%p148) target = $region12
    $region11: #{discriminator_forward.21} parent=5 // pred_region
      %s152 = ssub.s32 %s9, 1
      // Predicated region
      $region13: #{discriminator_forward.21} parent=11 // pred_check
        %p153 = pneg %p110
      $region14: #{discriminator_forward.21} parent=11 // pred_check_branch
        %155 = sbr.rel (%p153) target = $region16
      $region15: #{discriminator_forward.21} parent=11 // pred_region
        %p156 = scmp.lt.s32.totalorder %s20, 0
        %s157 = scalar_select %p156, %s20, 0
        %s158 = scalar_lea.vmem %s2, %s157
      $region16: #{discriminator_forward.21} parent=11 // pred_fallthru
        _
    $region12: #{discriminator_forward.21} parent=5 // pred_fallthru
      _
    %p159 = scmp.lt.s32.totalorder %s9, 16
    // Predicated region
    $region17: #{discriminator_forward.21} parent=5 // pred_check
      %p160 = pneg %p159
    $region18: #{discriminator_forward.21} parent=5 // pred_check_branch
      %162 = sbr.rel (%p160) target = $region20
    $region19: #{discriminator_forward.21} parent=5 // pred_region
      // Predicated region
      $region21: #{discriminator_forward.21} parent=19 // pred_check
        %p163 = pneg %p50
      $region22: #{discriminator_forward.21} parent=19 // pred_check_branch
        %165 = sbr.rel (%p163) target = $region24
      $region23: #{discriminator_forward.21} parent=19 // pred_region
        %s166 = smul.u32 4, %s18
        %p167 = scmp.lt.s32.totalorder %s16, 0
        %s168 = scalar_select %p167, %s16, 0
        %p169 = scmp.lt.s32.totalorder %s166, 63
        %s170 = scalar_select %p169, %s166, 63
        %s171 = smul.addr %s168, 64
        %s172 = sadd.s32 %s170, %s171
        %s173 = smul.addr %s172, 4
        %s174 = scalar_lea.vmem %s0, %s173
        %s175 = smul.u32 4, %s18
      $region24: #{discriminator_forward.21} parent=19 // pred_fallthru
        _
      // Predicated region
      $region25: #{discriminator_forward.21} parent=19 // pred_check
        %p176 = pneg %p78
      $region26: #{discriminator_forward.21} parent=19 // pred_check_branch
        %178 = sbr.rel (%p176) target = $region28
      $region27: #{discriminator_forward.21} parent=19 // pred_region
        %s179 = smul.u32 64, %s18
        %p180 = scmp.lt.s32.totalorder %s179, 1023
        %s181 = scalar_select %p180, %s179, 1023
        %p182 = scmp.lt.s32.totalorder %s17, 0
        %s183 = scalar_select %p182, %s17, 0
        %s184 = sadd.s32 %s183, %s181
        %s185 = smul.addr %s184, 4
        %s186 = scalar_lea.vmem %s1, %s185
        %s187 = smul.u32 64, %s18
      $region28: #{discriminator_forward.21} parent=19 // pred_fallthru
        _
    $region20: #{discriminator_forward.21} parent=5 // pred_fallthru
      _
    %p188 = scmp.le.s32.totalorder 1, %s9
    %p189 = scmp.lt.s32.totalorder %s9, 17
    %p190 = pnand %p188, %p189
    %p191 = pneg %p190
    // Predicated region
    $region29: #{discriminator_forward.21} parent=5 // pred_check
      _
    $region30: #{discriminator_forward.21} parent=5 // pred_check_branch
      %193 = sbr.rel (%p190) target = $region32
    $region31: #{discriminator_forward.21} parent=5 // pred_region
      %s194 = ssub.s32 %s9, 1
      %s195 = smul.u32 4, %s21
      %p196 = scmp.lt.s32.totalorder %s19, 0
      %s197 = scalar_select %p196, %s19, 0
      %p198 = scmp.lt.s32.totalorder %s195, 63
      %s199 = scalar_select %p198, %s195, 63
      %s200 = smul.addr %s197, 64
      %s201 = sadd.s32 %s199, %s200
      %s202 = smul.addr %s201, 4
      %s203 = scalar_lea.vmem %s0, %s202
      %p204 = pneg %p56
      %p205 = pneg %p53
      %s206 = smul.u32 64, %s21
      %p207 = scmp.lt.s32.totalorder %s206, 1023
      %s208 = scalar_select %p207, %s206, 1023
      %p209 = scmp.lt.s32.totalorder %s20, 0
      %s210 = scalar_select %p209, %s20, 0
      %s211 = sadd.s32 %s210, %s208
      %s212 = smul.addr %s211, 4
      %s213 = scalar_lea.vmem %s1, %s212
      %p214 = pneg %p84
      %p215 = pneg %p81
      %p216 = scmp.lt.s32.totalorder %s20, 0
      %s217 = scalar_select %p216, %s20, 0
      %s218 = scalar_lea.vmem %s2, %s217
      %p219 = pneg %p110
      %p220 = pneg %p107
      %p221 = pneg %p138
      %p222 = pneg %p135
      %p223 = scmp.lt.s32.totalorder %s19, 0
      %s224 = scalar_select %p223, %s19, 0
      %p225 = scmp.lt.s32.totalorder %s20, 0
      %s226 = scalar_select %p225, %s20, 0
      %s227 = sadd.s32 %s226, %s224
      %s228 = smul.addr %s227, 8
      %s229 = scalar_lea.vmem %s3, %s228
      %s230 = smul.u32 4, %s21
      %p231 = scmp.lt.s32.totalorder %s19, 0
      %s232 = scalar_select %p231, %s19, 0
      %p233 = scmp.lt.s32.totalorder %s230, 63
      %s234 = scalar_select %p233, %s230, 63
      %s235 = smul.addr %s232, 64
      %s236 = sadd.s32 %s234, %s235
      %s237 = smul.addr %s236, 4
      %s238 = scalar_lea.vmem %s0, %s237
      %s239 = smul.u32 4, %s21
      %s240 = smul.u32 64, %s21
      %p241 = scmp.lt.s32.totalorder %s240, 1023
      %s242 = scalar_select %p241, %s240, 1023
      %p243 = scmp.lt.s32.totalorder %s20, 0
      %s244 = scalar_select %p243, %s20, 0
      %s245 = sadd.s32 %s244, %s242
      %s246 = smul.addr %s245, 4
      %s247 = scalar_lea.vmem %s1, %s246
      %s248 = smul.u32 64, %s21
      %p249 = scmp.lt.s32.totalorder %s20, 0
      %s250 = scalar_select %p249, %s20, 0
      %s251 = scalar_lea.vmem %s2, %s250
      %p252 = scmp.lt.s32.totalorder %s19, 0
      %s253 = scalar_select %p252, %s19, 0
      %p254 = scmp.lt.s32.totalorder %s20, 0
      %s255 = scalar_select %p254, %s20, 0
      %s256 = sadd.s32 %s255, %s253
      %s257 = smul.addr %s256, 8
      %s258 = scalar_lea.vmem %s3, %s257
      %p260 = scmp.eq.s32.totalorder %s21, 0
      // Predicated region
      $region33: #{discriminator_forward.21} parent=31 // pred_check
        %p261 = pneg %p260
      $region34: #{discriminator_forward.21} parent=31 // pred_check_branch
        %263 = sbr.rel (%p261) target = $region36
      $region35: #{discriminator_forward.21} parent=31 // pred_region
        %264 = vst [vmem:[#allocation2] sm:$0xff] 0.0
      $region36: #{discriminator_forward.21} parent=31 // pred_fallthru
        _
      %v265 = vld [vmem:[#allocation2] sm:$0xff]
      %v266 = vld [vmem:[%s238] sm:$0xff]
      %v267 = vld [vmem:[%s238 + $0x8] sm:$0xff]
      %v268 = vld [vmem:[%s247] sm:$0xf]
      %v269 = vld [vmem:[%s247 + $0x4] sm:$0xf]
      %v270 = vld [vmem:[%s247 + $0x8] sm:$0xf]
      %v271 = vld [vmem:[%s247 + $0xc] sm:$0xf]
      %v272 = vld [vmem:[%s247 + $0x10] sm:$0xf]
      %v273 = vld [vmem:[%s247 + $0x14] sm:$0xf]
      %v274 = vld [vmem:[%s247 + $0x18] sm:$0xf]
      %v275 = vld [vmem:[%s247 + $0x1c] sm:$0xf]
      %v276 = vld [vmem:[%s247 + $0x20] sm:$0xf]
      %v277 = vld [vmem:[%s247 + $0x24] sm:$0xf]
      %v278 = vld [vmem:[%s247 + $0x28] sm:$0xf]
      %v279 = vld [vmem:[%s247 + $0x2c] sm:$0xf]
      %v280 = vld [vmem:[%s247 + $0x30] sm:$0xf]
      %v281 = vld [vmem:[%s247 + $0x34] sm:$0xf]
      %v282 = vld [vmem:[%s247 + $0x38] sm:$0xf]
      %v283 = vld [vmem:[%s247 + $0x3c] sm:$0xf]
      %v284 = vld [vmem:[%s247 + $0x40] sm:$0xf]
      %v285 = vld [vmem:[%s247 + $0x44] sm:$0xf]
      %v286 = vld [vmem:[%s247 + $0x48] sm:$0xf]
      %v287 = vld [vmem:[%s247 + $0x4c] sm:$0xf]
      %v288 = vld [vmem:[%s247 + $0x50] sm:$0xf]
      %v289 = vld [vmem:[%s247 + $0x54] sm:$0xf]
      %v290 = vld [vmem:[%s247 + $0x58] sm:$0xf]
      %v291 = vld [vmem:[%s247 + $0x5c] sm:$0xf]
      %v292 = vld [vmem:[%s247 + $0x60] sm:$0xf]
      %v293 = vld [vmem:[%s247 + $0x64] sm:$0xf]
      %v294 = vld [vmem:[%s247 + $0x68] sm:$0xf]
      %v295 = vld [vmem:[%s247 + $0x6c] sm:$0xf]
      %v296 = vld [vmem:[%s247 + $0x70] sm:$0xf]
      %v297 = vld [vmem:[%s247 + $0x74] sm:$0xf]
      %v298 = vld [vmem:[%s247 + $0x78] sm:$0xf]
      %v299 = vld [vmem:[%s247 + $0x7c] sm:$0xf]
      %v300 = vld [vmem:[%s247 + $0x80] sm:$0xf]
      %v301 = vld [vmem:[%s247 + $0x84] sm:$0xf]
      %v302 = vld [vmem:[%s247 + $0x88] sm:$0xf]
      %v303 = vld [vmem:[%s247 + $0x8c] sm:$0xf]
      %v304 = vld [vmem:[%s247 + $0x90] sm:$0xf]
      %v305 = vld [vmem:[%s247 + $0x94] sm:$0xf]
      %v306 = vld [vmem:[%s247 + $0x98] sm:$0xf]
      %v307 = vld [vmem:[%s247 + $0x9c] sm:$0xf]
      %v308 = vld [vmem:[%s247 + $0xa0] sm:$0xf]
      %v309 = vld [vmem:[%s247 + $0xa4] sm:$0xf]
      %v310 = vld [vmem:[%s247 + $0xa8] sm:$0xf]
      %v311 = vld [vmem:[%s247 + $0xac] sm:$0xf]
      %v312 = vld [vmem:[%s247 + $0xb0] sm:$0xf]
      %v313 = vld [vmem:[%s247 + $0xb4] sm:$0xf]
      %v314 = vld [vmem:[%s247 + $0xb8] sm:$0xf]
      %v315 = vld [vmem:[%s247 + $0xbc] sm:$0xf]
      %v316 = vld [vmem:[%s247 + $0xc0] sm:$0xf]
      %v317 = vld [vmem:[%s247 + $0xc4] sm:$0xf]
      %v318 = vld [vmem:[%s247 + $0xc8] sm:$0xf]
      %v319 = vld [vmem:[%s247 + $0xcc] sm:$0xf]
      %v320 = vld [vmem:[%s247 + $0xd0] sm:$0xf]
      %v321 = vld [vmem:[%s247 + $0xd4] sm:$0xf]
      %v322 = vld [vmem:[%s247 + $0xd8] sm:$0xf]
      %v323 = vld [vmem:[%s247 + $0xdc] sm:$0xf]
      %v324 = vld [vmem:[%s247 + $0xe0] sm:$0xf]
      %v325 = vld [vmem:[%s247 + $0xe4] sm:$0xf]
      %v326 = vld [vmem:[%s247 + $0xe8] sm:$0xf]
      %v327 = vld [vmem:[%s247 + $0xec] sm:$0xf]
      %v328 = vld [vmem:[%s247 + $0xf0] sm:$0xf]
      %v329 = vld [vmem:[%s247 + $0xf4] sm:$0xf]
      %v330 = vld [vmem:[%s247 + $0xf8] sm:$0xf]
      %v331 = vld [vmem:[%s247 + $0xfc] sm:$0xf]
      %v334 = vunpack.c.l.b16 %v266
      %v335 = vunpack.c.h.b16 %v266
      %v336 = vunpack.c.l.b16 %v267
      %v337 = vunpack.c.h.b16 %v267
      %v338 = vpack.c.b16 %v334, %v334
      %v339 = vpack.c.b16 %v335, %v335
      %v340 = vpack.c.b16 %v336, %v336
      %v341 = vpack.c.b16 %v337, %v337
      %v410 = vunpack.c.l.b16 %v268
      %v411 = vunpack.c.l.b16 %v269
      %v412 = vunpack.c.l.b16 %v270
      %v413 = vunpack.c.l.b16 %v271
      %v414 = vunpack.c.l.b16 %v272
      %v415 = vunpack.c.l.b16 %v273
      %v416 = vunpack.c.l.b16 %v274
      %v417 = vunpack.c.l.b16 %v275
      %v418 = vunpack.c.l.b16 %v276
      %v419 = vunpack.c.l.b16 %v277
      %v420 = vunpack.c.l.b16 %v278
      %v421 = vunpack.c.l.b16 %v279
      %v422 = vunpack.c.l.b16 %v280
      %v423 = vunpack.c.l.b16 %v281
      %v424 = vunpack.c.l.b16 %v282
      %v425 = vunpack.c.l.b16 %v283
      %v426 = vunpack.c.l.b16 %v284
      %v427 = vunpack.c.l.b16 %v285
      %v428 = vunpack.c.l.b16 %v286
      %v429 = vunpack.c.l.b16 %v287
      %v430 = vunpack.c.l.b16 %v288
      %v431 = vunpack.c.l.b16 %v289
      %v432 = vunpack.c.l.b16 %v290
      %v433 = vunpack.c.l.b16 %v291
      %v434 = vunpack.c.l.b16 %v292
      %v435 = vunpack.c.l.b16 %v293
      %v436 = vunpack.c.l.b16 %v294
      %v437 = vunpack.c.l.b16 %v295
      %v438 = vunpack.c.l.b16 %v296
      %v439 = vunpack.c.l.b16 %v297
      %v440 = vunpack.c.l.b16 %v298
      %v441 = vunpack.c.l.b16 %v299
      %v442 = vunpack.c.l.b16 %v300
      %v443 = vunpack.c.l.b16 %v301
      %v444 = vunpack.c.l.b16 %v302
      %v445 = vunpack.c.l.b16 %v303
      %v446 = vunpack.c.l.b16 %v304
      %v447 = vunpack.c.l.b16 %v305
      %v448 = vunpack.c.l.b16 %v306
      %v449 = vunpack.c.l.b16 %v307
      %v450 = vunpack.c.l.b16 %v308
      %v451 = vunpack.c.l.b16 %v309
      %v452 = vunpack.c.l.b16 %v310
      %v453 = vunpack.c.l.b16 %v311
      %v454 = vunpack.c.l.b16 %v312
      %v455 = vunpack.c.l.b16 %v313
      %v456 = vunpack.c.l.b16 %v314
      %v457 = vunpack.c.l.b16 %v315
      %v458 = vunpack.c.l.b16 %v316
      %v459 = vunpack.c.l.b16 %v317
      %v460 = vunpack.c.l.b16 %v318
      %v461 = vunpack.c.l.b16 %v319
      %v462 = vunpack.c.l.b16 %v320
      %v463 = vunpack.c.l.b16 %v321
      %v464 = vunpack.c.l.b16 %v322
      %v465 = vunpack.c.l.b16 %v323
      %v466 = vunpack.c.l.b16 %v324
      %v467 = vunpack.c.l.b16 %v325
      %v468 = vunpack.c.l.b16 %v326
      %v469 = vunpack.c.l.b16 %v327
      %v470 = vunpack.c.l.b16 %v328
      %v471 = vunpack.c.l.b16 %v329
      %v472 = vunpack.c.l.b16 %v330
      %v473 = vunpack.c.l.b16 %v331
      %v474 = vpack.c.b16 %v411, %v410
      %v475 = vpack.c.b16 %v413, %v412
      %v476 = vpack.c.b16 %v415, %v414
      %v477 = vpack.c.b16 %v417, %v416
      %v478 = vpack.c.b16 %v419, %v418
      %v479 = vpack.c.b16 %v421, %v420
      %v480 = vpack.c.b16 %v423, %v422
      %v481 = vpack.c.b16 %v425, %v424
      %v482 = vpack.c.b16 %v427, %v426
      %v483 = vpack.c.b16 %v429, %v428
      %v484 = vpack.c.b16 %v431, %v430
      %v485 = vpack.c.b16 %v433, %v432
      %v486 = vpack.c.b16 %v435, %v434
      %v487 = vpack.c.b16 %v437, %v436
      %v488 = vpack.c.b16 %v439, %v438
      %v489 = vpack.c.b16 %v441, %v440
      %v490 = vpack.c.b16 %v443, %v442
      %v491 = vpack.c.b16 %v445, %v444
      %v492 = vpack.c.b16 %v447, %v446
      %v493 = vpack.c.b16 %v449, %v448
      %v494 = vpack.c.b16 %v451, %v450
      %v495 = vpack.c.b16 %v453, %v452
      %v496 = vpack.c.b16 %v455, %v454
      %v497 = vpack.c.b16 %v457, %v456
      %v498 = vpack.c.b16 %v459, %v458
      %v499 = vpack.c.b16 %v461, %v460
      %v500 = vpack.c.b16 %v463, %v462
      %v501 = vpack.c.b16 %v465, %v464
      %v502 = vpack.c.b16 %v467, %v466
      %v503 = vpack.c.b16 %v469, %v468
      %v504 = vpack.c.b16 %v471, %v470
      %v505 = vpack.c.b16 %v473, %v472
      %538 = vmatprep.subr.bf16.mxu0 0
      %539 = vmatpush1.bf16.msra.mxu0 %v474
      %540 = vmatprep.subr.bf16.mxu0 0
      %541 = vmatpush1.bf16.msra.mxu0 %v475
      %542 = vmatprep.subr.bf16.mxu0 0
      %543 = vmatpush1.bf16.msra.mxu0 %v476
      %544 = vmatprep.subr.bf16.mxu0 0
      %545 = vmatpush1.bf16.msra.mxu0 %v477
      %546 = vmatprep.subr.bf16.mxu0 0
      %547 = vmatpush1.bf16.msra.mxu0 %v478
      %548 = vmatprep.subr.bf16.mxu0 0
      %549 = vmatpush1.bf16.msra.mxu0 %v479
      %550 = vmatprep.subr.bf16.mxu0 0
      %551 = vmatpush1.bf16.msra.mxu0 %v480
      %552 = vmatprep.subr.bf16.mxu0 0
      %553 = vmatpush1.bf16.msra.mxu0 %v481
      %554 = vmatprep.subr.bf16.mxu0 0
      %555 = vmatpush1.bf16.msra.mxu0 %v482
      %556 = vmatprep.subr.bf16.mxu0 0
      %557 = vmatpush1.bf16.msra.mxu0 %v483
      %558 = vmatprep.subr.bf16.mxu0 0
      %559 = vmatpush1.bf16.msra.mxu0 %v484
      %560 = vmatprep.subr.bf16.mxu0 0
      %561 = vmatpush1.bf16.msra.mxu0 %v485
      %562 = vmatprep.subr.bf16.mxu0 0
      %563 = vmatpush1.bf16.msra.mxu0 %v486
      %564 = vmatprep.subr.bf16.mxu0 0
      %565 = vmatpush1.bf16.msra.mxu0 %v487
      %566 = vmatprep.subr.bf16.mxu0 0
      %567 = vmatpush1.bf16.msra.mxu0 %v488
      %568 = vmatprep.subr.bf16.mxu0 0
      %569 = vmatpush1.bf16.msra.mxu0 %v489
      %570 = vmatprep.mubr.bf16.mxu0 %v339
      %571 = vmatmul.mubr.bf16.gmra.mrb[0].mxu0 %v338
      %v572 = vpop.f32.mrb[0].mxu0
      %v573 = vadd.f32 0.0, %v572
      %v574 = vpop.f32.mrb[0].mxu0
      %v575 = vpop.f32.mrb[0].mxu0
      %v576 = vpop.f32.mrb[0].mxu0
      %577 = vdwg.mxu0
      %578 = vmatprep.subr.bf16.mxu0 0
      %579 = vmatpush1.bf16.msra.mxu0 %v490
      %580 = vmatprep.subr.bf16.mxu0 0
      %581 = vmatpush1.bf16.msra.mxu0 %v491
      %582 = vmatprep.subr.bf16.mxu0 0
      %583 = vmatpush1.bf16.msra.mxu0 %v492
      %584 = vmatprep.subr.bf16.mxu0 0
      %585 = vmatpush1.bf16.msra.mxu0 %v493
      %586 = vmatprep.subr.bf16.mxu0 0
      %587 = vmatpush1.bf16.msra.mxu0 %v494
      %588 = vmatprep.subr.bf16.mxu0 0
      %589 = vmatpush1.bf16.msra.mxu0 %v495
      %590 = vmatprep.subr.bf16.mxu0 0
      %591 = vmatpush1.bf16.msra.mxu0 %v496
      %592 = vmatprep.subr.bf16.mxu0 0
      %593 = vmatpush1.bf16.msra.mxu0 %v497
      %594 = vmatprep.subr.bf16.mxu0 0
      %595 = vmatpush1.bf16.msra.mxu0 %v498
      %596 = vmatprep.subr.bf16.mxu0 0
      %597 = vmatpush1.bf16.msra.mxu0 %v499
      %598 = vmatprep.subr.bf16.mxu0 0
      %599 = vmatpush1.bf16.msra.mxu0 %v500
      %600 = vmatprep.subr.bf16.mxu0 0
      %601 = vmatpush1.bf16.msra.mxu0 %v501
      %602 = vmatprep.subr.bf16.mxu0 0
      %603 = vmatpush1.bf16.msra.mxu0 %v502
      %604 = vmatprep.subr.bf16.mxu0 0
      %605 = vmatpush1.bf16.msra.mxu0 %v503
      %606 = vmatprep.subr.bf16.mxu0 0
      %607 = vmatpush1.bf16.msra.mxu0 %v504
      %608 = vmatprep.subr.bf16.mxu0 0
      %609 = vmatpush1.bf16.msra.mxu0 %v505
      %610 = vmatprep.mubr.bf16.mxu0 %v341
      %611 = vmatmul.mubr.bf16.gmra.mrb[0].mxu0 %v340
      %v612 = vpop.f32.mrb[0].mxu0
      %v613 = vadd.f32 %v573, %v612
      %v614 = vpop.f32.mrb[0].mxu0
      %v615 = vpop.f32.mrb[0].mxu0
      %v616 = vpop.f32.mrb[0].mxu0
      %617 = vdwg.mxu0
      %v618 = vadd.f32 %v265, %v613
      %619 = vst [vmem:[#allocation2] sm:$0xff] %v618
      %p620 = scmp.eq.s32.totalorder %s21, 15
      // Predicated region
      $region37: #{discriminator_forward.21} parent=31 // pred_check
        %p621 = pneg %p620
      $region38: #{discriminator_forward.21} parent=31 // pred_check_branch
        %623 = sbr.rel (%p621) target = $region40
      $region39: #{discriminator_forward.21} parent=31 // pred_region
        %v624 = vld [vmem:[#allocation2] sm:$0xff]
        %v625 = vld [vmem:[%s251] sm:$0x1]
        %v627 = vlaneseq
        %v628 = vshrl.u32 %v627, 7
        %v629 = vsub.s32 0, %v628
        %v630 = vrot.slane %v625, %v629
        %v632 = vadd.f32 %v624, %v630
        %633 = vst [vmem:[%s258] sm:$0xff] %v632
      $region40: #{discriminator_forward.21} parent=31 // pred_fallthru
        _
      %p634 = scmp.lt.s32.totalorder %s19, 0
      %s635 = scalar_select %p634, %s19, 0
      %p636 = scmp.lt.s32.totalorder %s20, 0
      %s637 = scalar_select %p636, %s20, 0
      %s638 = sadd.s32 %s637, %s635
      %s639 = smul.addr %s638, 8
      %s640 = scalar_lea.vmem %s3, %s639
      // Predicated region
      $region41: #{discriminator_forward.21} parent=31 // pred_check
        %p641 = pneg %p135
      $region42: #{discriminator_forward.21} parent=31 // pred_check_branch
        %643 = sbr.rel (%p641) target = $region44
      $region43: #{discriminator_forward.21} parent=31 // pred_region
        _
      $region44: #{discriminator_forward.21} parent=31 // pred_fallthru
        _
      // Predicated region
      $region45: #{discriminator_forward.21} parent=31 // pred_check
        %p644 = pneg %p135
      $region46: #{discriminator_forward.21} parent=31 // pred_check_branch
        %646 = sbr.rel (%p644) target = $region48
      $region47: #{discriminator_forward.21} parent=31 // pred_region
        %p647 = scmp.lt.s32.totalorder %s19, 0
        %s648 = scalar_select %p647, %s19, 0
        %p649 = scmp.lt.s32.totalorder %s20, 0
        %s650 = scalar_select %p649, %s20, 0
        %s651 = sadd.s32 %s650, %s648
        %s652 = smul.addr %s651, 8
        %s653 = scalar_lea.vmem %s3, %s652
      $region48: #{discriminator_forward.21} parent=31 // pred_fallthru
        _
    $region32: #{discriminator_forward.21} parent=5 // pred_fallthru
      _
    %p654 = scmp.le.s32.totalorder 2, %s9
    // Predicated region
    $region49: #{discriminator_forward.21} parent=5 // pred_check
      %p655 = pneg %p654
    $region50: #{discriminator_forward.21} parent=5 // pred_check_branch
      %657 = sbr.rel (%p655) target = $region52
    $region51: #{discriminator_forward.21} parent=5 // pred_region
      %s658 = ssub.s32 %s9, 2
    $region52: #{discriminator_forward.21} parent=5 // pred_fallthru
      _
  $region6: #{discriminator_forward.21} parent=0 // loop_footer
    %s13 = sadd.s32 1, %s9
  $region7: #{discriminator_forward.21} parent=0 // loop_footer_branch
    %8 = sbr.rel target = $region3
  $region8: #{discriminator_forward.21} parent=0 // loop_exit
    _

</llo_original>
